<compile_context>
chip_gen: v7x
topology: tpu7x:2x2x1
jax: 0.10.0
libtpu: 0.0.40
codegen_flags: <defaults>
</compile_context>

<pallas_src>
import jax
import jax.numpy as jnp
from jax import lax
from jax.experimental import pallas as pl
from jax.experimental.pallas import tpu as pltpu

NUM_FEATURES = 9     # module builds 9 embedding tables
VOCAB = 100          # torch.nn.Embedding(100, hidden_channels)
LANE = 128           # vocab padded to a full lane width


def atom_encoder_kernel(x_ref, emb_ref, o_ref, onehot_ref):
    # x_ref:      (F, TM)            int32  transposed tile of feature indices
    # emb_ref:    (P, H, F*VPAD)     bf16   fused table split into P exact planes
    # o_ref:      (H, TM)            f32    transposed output tile (lane-dense)
    # onehot_ref: (F*VPAD, TM)       bf16   VMEM scratch for the fused one-hot^T
    f, tm = x_ref.shape
    n_planes, h, fk = emb_ref.shape
    vpad = fk // f

    # vocab index along sublanes, rows along lanes.
    vocab_iota = lax.broadcasted_iota(jnp.int32, (vpad, tm), 0)   # (VPAD, TM)

    # Build the fused transposed one-hot: feature i occupies sublane rows
    # [i*VPAD, (i+1)*VPAD).  ids is a lane-dense row; the compare broadcasts
    # along the cheap sublane direction.  0/1 are exact in bf16.
    for i in range(f):  # static unrolled loop over the 9 feature columns
        ids = x_ref[i:i + 1, :]                                   # (1, TM)
        onehot_ref[i * vpad:(i + 1) * vpad, :] = (
            vocab_iota == ids).astype(jnp.bfloat16)

    oh = onehot_ref[...]                                          # (FK, TM) bf16

    # P single-pass bf16 MXU matmuls, f32 accumulation.  bf16*bf16 products are
    # exact in f32 and the plane split is exact, so this matches an f32 gather
    # up to f32 summation-order rounding.
    acc = jnp.dot(emb_ref[0], oh, preferred_element_type=jnp.float32)
    for p in range(1, n_planes):
        acc = acc + jnp.dot(emb_ref[p], oh, preferred_element_type=jnp.float32)

    o_ref[...] = acc


def atom_encoder(x, emb_tables, *, tile_m=1024, num_planes=3):
    """x: (N,) or (N, F) integer indices in [0, VOCAB); emb_tables: (F, VOCAB, H) f32.

    Returns (N, H) f32 = sum_i emb_tables[i][x[:, i]].
    """
    if x.ndim == 1:                     # mirror PyTorch's x.unsqueeze(1)
        x = x[:, None]
    x = x.astype(jnp.int32)
    n, f = x.shape
    ftab, v, h = emb_tables.shape
    assert f <= ftab, "more feature columns than embedding tables"

    # Pad vocab to a lane multiple, fuse tables into one operand, transpose so
    # H sits on the MXU M axis, and split into exact bf16 planes.
    vpad = max(LANE, ((v + LANE - 1) // LANE) * LANE)
    fk = f * vpad
    emb = jnp.pad(emb_tables[:f].astype(jnp.float32),
                  ((0, 0), (0, vpad - v), (0, 0)))
    emb_t = emb.reshape(fk, h).T                      # (H, F*VPAD) f32

    planes = []
    resid = emb_t
    for _ in range(num_planes - 1):
        p = resid.astype(jnp.bfloat16)
        planes.append(p)
        resid = resid - p.astype(jnp.float32)
    planes.append(resid.astype(jnp.bfloat16))
    emb_planes = jnp.stack(planes, axis=0)            # (P, H, F*VPAD) bf16

    # Pad rows to a multiple of tile_m (pad indices = 0, sliced off below) and
    # transpose so the index tile is lane-dense.
    n_pad = ((n + tile_m - 1) // tile_m) * tile_m
    x_t = jnp.pad(x, ((0, n_pad - n), (0, 0))).T      # (F, N_pad) int32

    grid = (n_pad // tile_m,)
    cost = pl.CostEstimate(
        flops=2 * n_pad * h * fk * num_planes,        # num_planes bf16 passes
        transcendentals=0,
        bytes_accessed=n_pad * f * 4 + num_planes * h * fk * 2 + n_pad * h * 4)

    out_t = pl.pallas_call(
        atom_encoder_kernel,
        out_shape=jax.ShapeDtypeStruct((h, n_pad), jnp.float32),
        grid_spec=pltpu.PrefetchScalarGridSpec(
            num_scalar_prefetch=0,
            grid=grid,
            in_specs=[
                pl.BlockSpec((f, tile_m), lambda i: (0, i)),          # indices^T
                # Grid-invariant fused/split table (constant index_map).
                pl.BlockSpec((num_planes, h, fk), lambda i: (0, 0, 0)),
            ],
            out_specs=pl.BlockSpec((h, tile_m), lambda i: (0, i)),    # out^T
            scratch_shapes=[pltpu.VMEM((fk, tile_m), jnp.bfloat16)],
        ),
        compiler_params=pltpu.CompilerParams(
            dimension_semantics=("parallel",)),
        cost_estimate=cost,
    )(x_t, emb_planes)

    return out_t[:, :n].T                              # (N, H)


def atom_encoder_ref(x, emb_tables):
    if x.ndim == 1:
        x = x[:, None]
    out = 0
    for i in range(x.shape[1]):
        out = out + jnp.take(emb_tables[i], x[:, i], axis=0)
    return out


if __name__ == "__main__":
    hidden = 32
    n_rows = 300   # exercises a padded tile; a second call below exercises multi-step grids

    key = jax.random.PRNGKey(0)
    k_emb, k_x = jax.random.split(key)

    # Deterministic synthetic parameters: 9 embedding tables of shape (100, hidden).
    emb_tables = jax.random.normal(
        k_emb, (NUM_FEATURES, VOCAB, hidden), dtype=jnp.float32)

    # Integer atom-feature input, all 9 feature columns used.
    x = jax.random.randint(k_x, (n_rows, NUM_FEATURES), 0, VOCAB, dtype=jnp.int32)

    ref = atom_encoder_ref(x, emb_tables)

    # Default tile (tile_m=1024 -> single padded grid step).
    out = jax.block_until_ready(atom_encoder(x, emb_tables))
    assert out.shape == (n_rows, hidden)
    assert jnp.allclose(out, ref, atol=1e-5, rtol=1e-5)

    # Smaller tile -> multiple grid steps + padded final tile.
    out_small = jax.block_until_ready(atom_encoder(x, emb_tables, tile_m=256))
    assert jnp.allclose(out_small, ref, atol=1e-5, rtol=1e-5)

    # 1-D input branch (x.unsqueeze(1) in the PyTorch module).
    out1 = jax.block_until_ready(atom_encoder(x[:, 0], emb_tables))
    ref1 = atom_encoder_ref(x[:, 0], emb_tables)
    assert jnp.allclose(out1, ref1, atol=1e-5, rtol=1e-5)

    print("KERNEL_OK")
</pallas_src>

<mosaic_0001>
module attributes {stable_mosaic.version = 11 : i64} {
  func.func @atom_encoder_kernel(%arg0: i32, %arg1: memref<9x1024xi32, #tpu.memory_space<vmem>>, %arg2: memref<3x32x1152xbf16, #tpu.memory_space<vmem>>, %arg3: memref<32x1024xf32, #tpu.memory_space<vmem>>, %arg4: memref<1152x1024xbf16, #tpu.memory_space<vmem>>) attributes {dimension_semantics = [#tpu.dimension_semantics<parallel>], iteration_bounds = array<i64: 1>, scalar_prefetch = 0 : i64, scratch_operands = 1 : i64, tpu.core_type = #tpu.core_type<tc>, window_params = [{transform_indices = @transform_0, window_bounds = array<i64: 9, 1024>}, {pipeline_mode = #tpu.pipeline_mode<synchronous>, transform_indices = @transform_1, window_bounds = array<i64: 3, 32, 1152>}, {transform_indices = @transform_2, window_bounds = array<i64: 32, 1024>}]} {
    %0 = tpu.iota {dimensions = array<i32: 0>} : vector<128x1024xi32>
    %c0 = arith.constant 0 : index
    %c0_0 = arith.constant 0 : index
    %1 = vector.load %arg1[%c0, %c0_0] : memref<9x1024xi32, #tpu.memory_space<vmem>>, vector<1x1024xi32>
    %2 = vector.broadcast %1 : vector<1x1024xi32> to vector<128x1024xi32>
    %3 = arith.cmpi eq, %0, %2 : vector<128x1024xi32>
    %4 = arith.extui %3 : vector<128x1024xi1> to vector<128x1024xi32>
    %5 = arith.sitofp %4 : vector<128x1024xi32> to vector<128x1024xf32>
    %6 = arith.truncf %5 : vector<128x1024xf32> to vector<128x1024xbf16>
    %c0_1 = arith.constant 0 : index
    %c0_2 = arith.constant 0 : index
    %7 = vector.load %arg4[%c0_1, %c0_2] : memref<1152x1024xbf16, #tpu.memory_space<vmem>>, vector<128x1024xbf16>
    tpu.vector_store %arg4[%c0_1, %c0_2], %6 {strides = array<i32>} : memref<1152x1024xbf16, #tpu.memory_space<vmem>>, vector<128x1024xbf16>,
    %c1 = arith.constant 1 : index
    %c0_3 = arith.constant 0 : index
    %8 = vector.load %arg1[%c1, %c0_3] : memref<9x1024xi32, #tpu.memory_space<vmem>>, vector<1x1024xi32>
    %9 = vector.broadcast %8 : vector<1x1024xi32> to vector<128x1024xi32>
    %10 = arith.cmpi eq, %0, %9 : vector<128x1024xi32>
    %11 = arith.extui %10 : vector<128x1024xi1> to vector<128x1024xi32>
    %12 = arith.sitofp %11 : vector<128x1024xi32> to vector<128x1024xf32>
    %13 = arith.truncf %12 : vector<128x1024xf32> to vector<128x1024xbf16>
    %c128 = arith.constant 128 : index
    %c0_4 = arith.constant 0 : index
    %14 = vector.load %arg4[%c128, %c0_4] : memref<1152x1024xbf16, #tpu.memory_space<vmem>>, vector<128x1024xbf16>
    tpu.vector_store %arg4[%c128, %c0_4], %13 {strides = array<i32>} : memref<1152x1024xbf16, #tpu.memory_space<vmem>>, vector<128x1024xbf16>,
    %c2 = arith.constant 2 : index
    %c0_5 = arith.constant 0 : index
    %15 = vector.load %arg1[%c2, %c0_5] : memref<9x1024xi32, #tpu.memory_space<vmem>>, vector<1x1024xi32>
    %16 = vector.broadcast %15 : vector<1x1024xi32> to vector<128x1024xi32>
    %17 = arith.cmpi eq, %0, %16 : vector<128x1024xi32>
    %18 = arith.extui %17 : vector<128x1024xi1> to vector<128x1024xi32>
    %19 = arith.sitofp %18 : vector<128x1024xi32> to vector<128x1024xf32>
    %20 = arith.truncf %19 : vector<128x1024xf32> to vector<128x1024xbf16>
    %c256 = arith.constant 256 : index
    %c0_6 = arith.constant 0 : index
    %21 = vector.load %arg4[%c256, %c0_6] : memref<1152x1024xbf16, #tpu.memory_space<vmem>>, vector<128x1024xbf16>
    tpu.vector_store %arg4[%c256, %c0_6], %20 {strides = array<i32>} : memref<1152x1024xbf16, #tpu.memory_space<vmem>>, vector<128x1024xbf16>,
    %c3 = arith.constant 3 : index
    %c0_7 = arith.constant 0 : index
    %22 = vector.load %arg1[%c3, %c0_7] : memref<9x1024xi32, #tpu.memory_space<vmem>>, vector<1x1024xi32>
    %23 = vector.broadcast %22 : vector<1x1024xi32> to vector<128x1024xi32>
    %24 = arith.cmpi eq, %0, %23 : vector<128x1024xi32>
    %25 = arith.extui %24 : vector<128x1024xi1> to vector<128x1024xi32>
    %26 = arith.sitofp %25 : vector<128x1024xi32> to vector<128x1024xf32>
    %27 = arith.truncf %26 : vector<128x1024xf32> to vector<128x1024xbf16>
    %c384 = arith.constant 384 : index
    %c0_8 = arith.constant 0 : index
    %28 = vector.load %arg4[%c384, %c0_8] : memref<1152x1024xbf16, #tpu.memory_space<vmem>>, vector<128x1024xbf16>
    tpu.vector_store %arg4[%c384, %c0_8], %27 {strides = array<i32>} : memref<1152x1024xbf16, #tpu.memory_space<vmem>>, vector<128x1024xbf16>,
    %c4 = arith.constant 4 : index
    %c0_9 = arith.constant 0 : index
    %29 = vector.load %arg1[%c4, %c0_9] : memref<9x1024xi32, #tpu.memory_space<vmem>>, vector<1x1024xi32>
    %30 = vector.broadcast %29 : vector<1x1024xi32> to vector<128x1024xi32>
    %31 = arith.cmpi eq, %0, %30 : vector<128x1024xi32>
    %32 = arith.extui %31 : vector<128x1024xi1> to vector<128x1024xi32>
    %33 = arith.sitofp %32 : vector<128x1024xi32> to vector<128x1024xf32>
    %34 = arith.truncf %33 : vector<128x1024xf32> to vector<128x1024xbf16>
    %c512 = arith.constant 512 : index
    %c0_10 = arith.constant 0 : index
    %35 = vector.load %arg4[%c512, %c0_10] : memref<1152x1024xbf16, #tpu.memory_space<vmem>>, vector<128x1024xbf16>
    tpu.vector_store %arg4[%c512, %c0_10], %34 {strides = array<i32>} : memref<1152x1024xbf16, #tpu.memory_space<vmem>>, vector<128x1024xbf16>,
    %c5 = arith.constant 5 : index
    %c0_11 = arith.constant 0 : index
    %36 = vector.load %arg1[%c5, %c0_11] : memref<9x1024xi32, #tpu.memory_space<vmem>>, vector<1x1024xi32>
    %37 = vector.broadcast %36 : vector<1x1024xi32> to vector<128x1024xi32>
    %38 = arith.cmpi eq, %0, %37 : vector<128x1024xi32>
    %39 = arith.extui %38 : vector<128x1024xi1> to vector<128x1024xi32>
    %40 = arith.sitofp %39 : vector<128x1024xi32> to vector<128x1024xf32>
    %41 = arith.truncf %40 : vector<128x1024xf32> to vector<128x1024xbf16>
    %c640 = arith.constant 640 : index
    %c0_12 = arith.constant 0 : index
    %42 = vector.load %arg4[%c640, %c0_12] : memref<1152x1024xbf16, #tpu.memory_space<vmem>>, vector<128x1024xbf16>
    tpu.vector_store %arg4[%c640, %c0_12], %41 {strides = array<i32>} : memref<1152x1024xbf16, #tpu.memory_space<vmem>>, vector<128x1024xbf16>,
    %c6 = arith.constant 6 : index
    %c0_13 = arith.constant 0 : index
    %43 = vector.load %arg1[%c6, %c0_13] : memref<9x1024xi32, #tpu.memory_space<vmem>>, vector<1x1024xi32>
    %44 = vector.broadcast %43 : vector<1x1024xi32> to vector<128x1024xi32>
    %45 = arith.cmpi eq, %0, %44 : vector<128x1024xi32>
    %46 = arith.extui %45 : vector<128x1024xi1> to vector<128x1024xi32>
    %47 = arith.sitofp %46 : vector<128x1024xi32> to vector<128x1024xf32>
    %48 = arith.truncf %47 : vector<128x1024xf32> to vector<128x1024xbf16>
    %c768 = arith.constant 768 : index
    %c0_14 = arith.constant 0 : index
    %49 = vector.load %arg4[%c768, %c0_14] : memref<1152x1024xbf16, #tpu.memory_space<vmem>>, vector<128x1024xbf16>
    tpu.vector_store %arg4[%c768, %c0_14], %48 {strides = array<i32>} : memref<1152x1024xbf16, #tpu.memory_space<vmem>>, vector<128x1024xbf16>,
    %c7 = arith.constant 7 : index
    %c0_15 = arith.constant 0 : index
    %50 = vector.load %arg1[%c7, %c0_15] : memref<9x1024xi32, #tpu.memory_space<vmem>>, vector<1x1024xi32>
    %51 = vector.broadcast %50 : vector<1x1024xi32> to vector<128x1024xi32>
    %52 = arith.cmpi eq, %0, %51 : vector<128x1024xi32>
    %53 = arith.extui %52 : vector<128x1024xi1> to vector<128x1024xi32>
    %54 = arith.sitofp %53 : vector<128x1024xi32> to vector<128x1024xf32>
    %55 = arith.truncf %54 : vector<128x1024xf32> to vector<128x1024xbf16>
    %c896 = arith.constant 896 : index
    %c0_16 = arith.constant 0 : index
    %56 = vector.load %arg4[%c896, %c0_16] : memref<1152x1024xbf16, #tpu.memory_space<vmem>>, vector<128x1024xbf16>
    tpu.vector_store %arg4[%c896, %c0_16], %55 {strides = array<i32>} : memref<1152x1024xbf16, #tpu.memory_space<vmem>>, vector<128x1024xbf16>,
    %c8 = arith.constant 8 : index
    %c0_17 = arith.constant 0 : index
    %57 = vector.load %arg1[%c8, %c0_17] : memref<9x1024xi32, #tpu.memory_space<vmem>>, vector<1x1024xi32>
    %58 = vector.broadcast %57 : vector<1x1024xi32> to vector<128x1024xi32>
    %59 = arith.cmpi eq, %0, %58 : vector<128x1024xi32>
    %60 = arith.extui %59 : vector<128x1024xi1> to vector<128x1024xi32>
    %61 = arith.sitofp %60 : vector<128x1024xi32> to vector<128x1024xf32>
    %62 = arith.truncf %61 : vector<128x1024xf32> to vector<128x1024xbf16>
    %c1024 = arith.constant 1024 : index
    %c0_18 = arith.constant 0 : index
    %63 = vector.load %arg4[%c1024, %c0_18] : memref<1152x1024xbf16, #tpu.memory_space<vmem>>, vector<128x1024xbf16>
    tpu.vector_store %arg4[%c1024, %c0_18], %62 {strides = array<i32>} : memref<1152x1024xbf16, #tpu.memory_space<vmem>>, vector<128x1024xbf16>,
    %c0_19 = arith.constant 0 : index
    %c0_20 = arith.constant 0 : index
    %64 = vector.load %arg4[%c0_19, %c0_20] : memref<1152x1024xbf16, #tpu.memory_space<vmem>>, vector<1152x1024xbf16>
    %c0_21 = arith.constant 0 : index
    %c0_22 = arith.constant 0 : index
    %c0_23 = arith.constant 0 : index
    %65 = vector.load %arg2[%c0_21, %c0_22, %c0_23] : memref<3x32x1152xbf16, #tpu.memory_space<vmem>>, vector<1x32x1152xbf16>
    %66 = vector.shape_cast %65 : vector<1x32x1152xbf16> to vector<32x1152xbf16>
    %cst = arith.constant dense<0.000000e+00> : vector<32x1024xf32>
    %67 = tpu.matmul %66, %64, %cst {dimension_numbers = #tpu.dot_dimension_numbers<[1], [0], [0], [1], [0, 0, 1, 1], [], []>} : vector<32x1152xbf16>, vector<1152x1024xbf16>, vector<32x1024xf32> -> vector<32x1024xf32>
    %c1_24 = arith.constant 1 : index
    %c0_25 = arith.constant 0 : index
    %c0_26 = arith.constant 0 : index
    %68 = vector.load %arg2[%c1_24, %c0_25, %c0_26] : memref<3x32x1152xbf16, #tpu.memory_space<vmem>>, vector<1x32x1152xbf16>
    %69 = vector.shape_cast %68 : vector<1x32x1152xbf16> to vector<32x1152xbf16>
    %cst_27 = arith.constant dense<0.000000e+00> : vector<32x1024xf32>
    %70 = tpu.matmul %69, %64, %cst_27 {dimension_numbers = #tpu.dot_dimension_numbers<[1], [0], [0], [1], [0, 0, 1, 1], [], []>} : vector<32x1152xbf16>, vector<1152x1024xbf16>, vector<32x1024xf32> -> vector<32x1024xf32>
    %71 = arith.addf %67, %70 : vector<32x1024xf32>
    %c2_28 = arith.constant 2 : index
    %c0_29 = arith.constant 0 : index
    %c0_30 = arith.constant 0 : index
    %72 = vector.load %arg2[%c2_28, %c0_29, %c0_30] : memref<3x32x1152xbf16, #tpu.memory_space<vmem>>, vector<1x32x1152xbf16>
    %73 = vector.shape_cast %72 : vector<1x32x1152xbf16> to vector<32x1152xbf16>
    %cst_31 = arith.constant dense<0.000000e+00> : vector<32x1024xf32>
    %74 = tpu.matmul %73, %64, %cst_31 {dimension_numbers = #tpu.dot_dimension_numbers<[1], [0], [0], [1], [0, 0, 1, 1], [], []>} : vector<32x1152xbf16>, vector<1152x1024xbf16>, vector<32x1024xf32> -> vector<32x1024xf32>
    %75 = arith.addf %71, %74 : vector<32x1024xf32>
    %c0_32 = arith.constant 0 : index
    %c0_33 = arith.constant 0 : index
    %76 = vector.load %arg3[%c0_32, %c0_33] : memref<32x1024xf32, #tpu.memory_space<vmem>>, vector<32x1024xf32>
    tpu.vector_store %arg3[%c0_32, %c0_33], %75 {strides = array<i32>} : memref<32x1024xf32, #tpu.memory_space<vmem>>, vector<32x1024xf32>,
    return
  }
  func.func @transform_0(%arg0: i32) -> (i32, i32) {
    %c0_i32 = arith.constant 0 : i32
    %c0_i32_0 = arith.constant 0 : i32
    return %c0_i32, %arg0 : i32, i32
  }
  func.func @transform_1(%arg0: i32) -> (i32, i32, i32) {
    %c0_i32 = arith.constant 0 : i32
    %c0_i32_0 = arith.constant 0 : i32
    %c0_i32_1 = arith.constant 0 : i32
    %c0_i32_2 = arith.constant 0 : i32
    return %c0_i32, %c0_i32_0, %c0_i32_1 : i32, i32, i32
  }
  func.func @transform_2(%arg0: i32) -> (i32, i32) {
    %c0_i32 = arith.constant 0 : i32
    %c0_i32_0 = arith.constant 0 : i32
    return %c0_i32, %arg0 : i32, i32
  }
}

</mosaic_0001>

<llo_original>
// kernel: tpu_custom_call.1
$region0: #{tpu_custom_call.1}
  #allocation0 [shape = 'u32[]', space=smem, size = 0x4, offset = 0x4, fixed_abs, tag = 'smem constant byte address 0x4 - core index']
  #allocation1 [shape = 'u32[144,128]{1,0:T(1,128)}', space=vmem, size = 0x12000, scoped, tag = 'internal scratch']
  #allocation2 [shape = 'bf16[1152,1024]{1,0:T(16,128)(2,1)}', space=vmem, size = 0x240000, scoped, tag = 'scratch operand']
  %s0 = inlined_call_operand.hbm [shape: s32[9,1024], index: 0, kind: input, shape index: {}]
  %s1 = inlined_call_operand.hbm [shape: bf16[3,32,1152], index: 1, kind: input, shape index: {}]
  %s2 = inlined_call_operand.hbm [shape: f32[32,1024], index: 2, kind: output, shape index: {}]
  %s3 = sld [smem:[#allocation0]]
  $region26: #{tpu_custom_call.1} parent=0
    _
  %s5 = ssub.s32 1, %s3
  %s6 = scalar_select 0, %s5, %s3
  $region1: #{tpu_custom_call.1} parent=0
    #allocation3 [shape = 'u8[65536]{0}', space=vmem, size = 0x10000, scoped, tag = 'input window, operand 0, single buffered']
    #allocation4 [shape = 's32[1]{0}', space=sflag, size = 0x4, scoped, tag = 'scoped memory for tpu_custom_call.1']
    #allocation5 [shape = 's32[1]{0}', space=sflag, size = 0x4, scoped, tag = 'scoped memory for tpu_custom_call.1']
    #allocation6 [shape = 'u8[221184]{0}', space=vmem, size = 0x36000, scoped, tag = 'input window, operand 1, single buffered']
    #allocation7 [shape = 's32[1]{0}', space=sflag, size = 0x4, scoped, tag = 'scoped memory for tpu_custom_call.1']
    #allocation8 [shape = 'u8[131072]{0}', space=vmem, size = 0x20000, scoped, tag = 'output window, operand 0, single buffered']
    %7 = vsyncpa [#allocation4], 0
    %8 = vsyncpa [#allocation7], 0
    %9 = vsyncpa [#allocation5], 0
    // Predicated region
    $region2: #{tpu_custom_call.1} parent=1 // pred_check
      _
    $region3: #{tpu_custom_call.1} parent=1 // pred_check_branch
      %11 = sbr.rel (0) target = $region5
    $region4: #{tpu_custom_call.1} parent=1 // pred_region
      %s13 = ssub.s32 2048, 2048
      %14 = vsyncadd [#allocation4], %s13
      %s15 = sshll.u32 [#allocation3], 4
      %s16 = int_to_ptr.vmem [resolvable:$true] %s15
      %21 = dma.hbm_to_vmem [thread:$0]  %s0, 2048, %s16, [#allocation4], 1024, 1024, 64
    $region5: #{tpu_custom_call.1} parent=1 // pred_fallthru
      _
    // Predicated region
    $region6: #{tpu_custom_call.1} parent=1 // pred_check
      _
    $region7: #{tpu_custom_call.1} parent=1 // pred_check_branch
      %23 = sbr.rel (0) target = $region9
    $region8: #{tpu_custom_call.1} parent=1 // pred_region
      %s25 = ssub.s32 6912, 6912
      %26 = vsyncadd [#allocation7], %s25
      %s27 = sshll.u32 [#allocation6], 4
      %s28 = int_to_ptr.vmem [resolvable:$true] %s27
      %33 = dma.hbm_to_vmem [thread:$0]  %s1, 6912, %s28, [#allocation7], 576, 576, 36
    $region9: #{tpu_custom_call.1} parent=1 // pred_fallthru
      _
    // Predicated region
    $region10: #{tpu_custom_call.1} parent=1 // pred_check
      _
    $region11: #{tpu_custom_call.1} parent=1 // pred_check_branch
      %35 = sbr.rel (0) target = $region13
    $region12: #{tpu_custom_call.1} parent=1 // pred_region
      %36 = dma.done [#allocation4], 2048
    $region13: #{tpu_custom_call.1} parent=1 // pred_fallthru
      _
    // Predicated region
    $region14: #{tpu_custom_call.1} parent=1 // pred_check
      _
    $region15: #{tpu_custom_call.1} parent=1 // pred_check_branch
      %38 = sbr.rel (0) target = $region17
    $region16: #{tpu_custom_call.1} parent=1 // pred_region
      %39 = dma.done [#allocation7], 6912
    $region17: #{tpu_custom_call.1} parent=1 // pred_fallthru
      _
    %v41 = vlaneseq
    %v42 = vshrl.u32 %v41, 7
    %v43 = vadd.s32 %v42, 8
    %v44 = vadd.s32 %v42, 16
    %v45 = vadd.s32 %v42, 24
    %v46 = vadd.s32 %v42, 32
    %v47 = vadd.s32 %v42, 40
    %v48 = vadd.s32 %v42, 48
    %v49 = vadd.s32 %v42, 56
    %v50 = vadd.s32 %v42, 64
    %v51 = vadd.s32 %v42, 72
    %v52 = vadd.s32 %v42, 80
    %v53 = vadd.s32 %v42, 88
    %v54 = vadd.s32 %v42, 96
    %v55 = vadd.s32 %v42, 104
    %v56 = vadd.s32 %v42, 112
    %v57 = vadd.s32 %v42, 120
    %v58 = vld [vmem:[#allocation3] ss:$8 sm:$0xf]
    %v59 = vld [vmem:[#allocation3] ss:$8 sm:$0xf0]
    %v60 = vor.u32 %v58, %v59
    %v61 = vlaneseq
    %v62 = vshrl.u32 %v61, 7
    %v63 = vsub.s32 0, %v62
    %v64 = vrot.slane %v60, %v63
    %v65 = vlaneseq
    %v66 = vshrl.u32 %v65, 7
    %v67 = vsub.s32 1, %v66
    %v68 = vrot.slane %v60, %v67
    %v69 = vlaneseq
    %v70 = vshrl.u32 %v69, 7
    %v71 = vsub.s32 2, %v70
    %v72 = vrot.slane %v60, %v71
    %v73 = vlaneseq
    %v74 = vshrl.u32 %v73, 7
    %v75 = vsub.s32 3, %v74
    %v76 = vrot.slane %v60, %v75
    %v77 = vlaneseq
    %v78 = vshrl.u32 %v77, 7
    %v79 = vsub.s32 4, %v78
    %v80 = vrot.slane %v60, %v79
    %v81 = vlaneseq
    %v82 = vshrl.u32 %v81, 7
    %v83 = vsub.s32 5, %v82
    %v84 = vrot.slane %v60, %v83
    %v85 = vlaneseq
    %v86 = vshrl.u32 %v85, 7
    %v87 = vsub.s32 6, %v86
    %v88 = vrot.slane %v60, %v87
    %v89 = vlaneseq
    %v90 = vshrl.u32 %v89, 7
    %v91 = vsub.s32 7, %v90
    %v92 = vrot.slane %v60, %v91
    %vm93 = vcmp.eq.s32.totalorder %v42, %v64
    %vm94 = vcmp.eq.s32.totalorder %v42, %v68
    %vm95 = vcmp.eq.s32.totalorder %v42, %v72
    %vm96 = vcmp.eq.s32.totalorder %v42, %v76
    %vm97 = vcmp.eq.s32.totalorder %v42, %v80
    %vm98 = vcmp.eq.s32.totalorder %v42, %v84
    %vm99 = vcmp.eq.s32.totalorder %v42, %v88
    %vm100 = vcmp.eq.s32.totalorder %v42, %v92
    %vm101 = vcmp.eq.s32.totalorder %v43, %v64
    %vm102 = vcmp.eq.s32.totalorder %v43, %v68
    %vm103 = vcmp.eq.s32.totalorder %v43, %v72
    %vm104 = vcmp.eq.s32.totalorder %v43, %v76
    %vm105 = vcmp.eq.s32.totalorder %v43, %v80
    %vm106 = vcmp.eq.s32.totalorder %v43, %v84
    %vm107 = vcmp.eq.s32.totalorder %v43, %v88
    %vm108 = vcmp.eq.s32.totalorder %v43, %v92
    %vm109 = vcmp.eq.s32.totalorder %v44, %v64
    %vm110 = vcmp.eq.s32.totalorder %v44, %v68
    %vm111 = vcmp.eq.s32.totalorder %v44, %v72
    %vm112 = vcmp.eq.s32.totalorder %v44, %v76
    %vm113 = vcmp.eq.s32.totalorder %v44, %v80
    %vm114 = vcmp.eq.s32.totalorder %v44, %v84
    %vm115 = vcmp.eq.s32.totalorder %v44, %v88
    %vm116 = vcmp.eq.s32.totalorder %v44, %v92
    %vm117 = vcmp.eq.s32.totalorder %v45, %v64
    %vm118 = vcmp.eq.s32.totalorder %v45, %v68
    %vm119 = vcmp.eq.s32.totalorder %v45, %v72
    %vm120 = vcmp.eq.s32.totalorder %v45, %v76
    %vm121 = vcmp.eq.s32.totalorder %v45, %v80
    %vm122 = vcmp.eq.s32.totalorder %v45, %v84
    %vm123 = vcmp.eq.s32.totalorder %v45, %v88
    %vm124 = vcmp.eq.s32.totalorder %v45, %v92
    %vm125 = vcmp.eq.s32.totalorder %v46, %v64
    %vm126 = vcmp.eq.s32.totalorder %v46, %v68
    %vm127 = vcmp.eq.s32.totalorder %v46, %v72
    %vm128 = vcmp.eq.s32.totalorder %v46, %v76
    %vm129 = vcmp.eq.s32.totalorder %v46, %v80
    %vm130 = vcmp.eq.s32.totalorder %v46, %v84
    %vm131 = vcmp.eq.s32.totalorder %v46, %v88
    %vm132 = vcmp.eq.s32.totalorder %v46, %v92
    %vm133 = vcmp.eq.s32.totalorder %v47, %v64
    %vm134 = vcmp.eq.s32.totalorder %v47, %v68
    %vm135 = vcmp.eq.s32.totalorder %v47, %v72
    %vm136 = vcmp.eq.s32.totalorder %v47, %v76
    %vm137 = vcmp.eq.s32.totalorder %v47, %v80
    %vm138 = vcmp.eq.s32.totalorder %v47, %v84
    %vm139 = vcmp.eq.s32.totalorder %v47, %v88
    %vm140 = vcmp.eq.s32.totalorder %v47, %v92
    %vm141 = vcmp.eq.s32.totalorder %v48, %v64
    %vm142 = vcmp.eq.s32.totalorder %v48, %v68
    %vm143 = vcmp.eq.s32.totalorder %v48, %v72
    %vm144 = vcmp.eq.s32.totalorder %v48, %v76
    %vm145 = vcmp.eq.s32.totalorder %v48, %v80
    %vm146 = vcmp.eq.s32.totalorder %v48, %v84
    %vm147 = vcmp.eq.s32.totalorder %v48, %v88
    %vm148 = vcmp.eq.s32.totalorder %v48, %v92
    %vm149 = vcmp.eq.s32.totalorder %v49, %v64
    %vm150 = vcmp.eq.s32.totalorder %v49, %v68
    %vm151 = vcmp.eq.s32.totalorder %v49, %v72
    %vm152 = vcmp.eq.s32.totalorder %v49, %v76
    %vm153 = vcmp.eq.s32.totalorder %v49, %v80
    %vm154 = vcmp.eq.s32.totalorder %v49, %v84
    %vm155 = vcmp.eq.s32.totalorder %v49, %v88
    %vm156 = vcmp.eq.s32.totalorder %v49, %v92
    %vm157 = vcmp.eq.s32.totalorder %v50, %v64
    %vm158 = vcmp.eq.s32.totalorder %v50, %v68
    %vm159 = vcmp.eq.s32.totalorder %v50, %v72
    %vm160 = vcmp.eq.s32.totalorder %v50, %v76
    %vm161 = vcmp.eq.s32.totalorder %v50, %v80
    %vm162 = vcmp.eq.s32.totalorder %v50, %v84
    %vm163 = vcmp.eq.s32.totalorder %v50, %v88
    %vm164 = vcmp.eq.s32.totalorder %v50, %v92
    %vm165 = vcmp.eq.s32.totalorder %v51, %v64
    %vm166 = vcmp.eq.s32.totalorder %v51, %v68
    %vm167 = vcmp.eq.s32.totalorder %v51, %v72
    %vm168 = vcmp.eq.s32.totalorder %v51, %v76
    %vm169 = vcmp.eq.s32.totalorder %v51, %v80
    %vm170 = vcmp.eq.s32.totalorder %v51, %v84
    %vm171 = vcmp.eq.s32.totalorder %v51, %v88
    %vm172 = vcmp.eq.s32.totalorder %v51, %v92
    %vm173 = vcmp.eq.s32.totalorder %v52, %v64
    %vm174 = vcmp.eq.s32.totalorder %v52, %v68
    %vm175 = vcmp.eq.s32.totalorder %v52, %v72
    %vm176 = vcmp.eq.s32.totalorder %v52, %v76
    %vm177 = vcmp.eq.s32.totalorder %v52, %v80
    %vm178 = vcmp.eq.s32.totalorder %v52, %v84
    %vm179 = vcmp.eq.s32.totalorder %v52, %v88
    %vm180 = vcmp.eq.s32.totalorder %v52, %v92
    %vm181 = vcmp.eq.s32.totalorder %v53, %v64
    %vm182 = vcmp.eq.s32.totalorder %v53, %v68
    %vm183 = vcmp.eq.s32.totalorder %v53, %v72
    %vm184 = vcmp.eq.s32.totalorder %v53, %v76
    %vm185 = vcmp.eq.s32.totalorder %v53, %v80
    %vm186 = vcmp.eq.s32.totalorder %v53, %v84
    %vm187 = vcmp.eq.s32.totalorder %v53, %v88
    %vm188 = vcmp.eq.s32.totalorder %v53, %v92
    %vm189 = vcmp.eq.s32.totalorder %v54, %v64
    %vm190 = vcmp.eq.s32.totalorder %v54, %v68
    %vm191 = vcmp.eq.s32.totalorder %v54, %v72
    %vm192 = vcmp.eq.s32.totalorder %v54, %v76
    %vm193 = vcmp.eq.s32.totalorder %v54, %v80
    %vm194 = vcmp.eq.s32.totalorder %v54, %v84
    %vm195 = vcmp.eq.s32.totalorder %v54, %v88
    %vm196 = vcmp.eq.s32.totalorder %v54, %v92
    %vm197 = vcmp.eq.s32.totalorder %v55, %v64
    %vm198 = vcmp.eq.s32.totalorder %v55, %v68
    %vm199 = vcmp.eq.s32.totalorder %v55, %v72
    %vm200 = vcmp.eq.s32.totalorder %v55, %v76
    %vm201 = vcmp.eq.s32.totalorder %v55, %v80
    %vm202 = vcmp.eq.s32.totalorder %v55, %v84
    %vm203 = vcmp.eq.s32.totalorder %v55, %v88
    %vm204 = vcmp.eq.s32.totalorder %v55, %v92
    %vm205 = vcmp.eq.s32.totalorder %v56, %v64
    %vm206 = vcmp.eq.s32.totalorder %v56, %v68
    %vm207 = vcmp.eq.s32.totalorder %v56, %v72
    %vm208 = vcmp.eq.s32.totalorder %v56, %v76
    %vm209 = vcmp.eq.s32.totalorder %v56, %v80
    %vm210 = vcmp.eq.s32.totalorder %v56, %v84
    %vm211 = vcmp.eq.s32.totalorder %v56, %v88
    %vm212 = vcmp.eq.s32.totalorder %v56, %v92
    %vm213 = vcmp.eq.s32.totalorder %v57, %v64
    %vm214 = vcmp.eq.s32.totalorder %v57, %v68
    %vm215 = vcmp.eq.s32.totalorder %v57, %v72
    %vm216 = vcmp.eq.s32.totalorder %v57, %v76
    %vm217 = vcmp.eq.s32.totalorder %v57, %v80
    %vm218 = vcmp.eq.s32.totalorder %v57, %v84
    %vm219 = vcmp.eq.s32.totalorder %v57, %v88
    %vm220 = vcmp.eq.s32.totalorder %v57, %v92
    %v221 = vsel %vm93, 1, 0
    %v222 = vsel %vm94, 1, 0
    %v223 = vsel %vm95, 1, 0
    %v224 = vsel %vm96, 1, 0
    %v225 = vsel %vm97, 1, 0
    %v226 = vsel %vm98, 1, 0
    %v227 = vsel %vm99, 1, 0
    %v228 = vsel %vm100, 1, 0
    %v229 = vsel %vm101, 1, 0
    %v230 = vsel %vm102, 1, 0
    %v231 = vsel %vm103, 1, 0
    %v232 = vsel %vm104, 1, 0
    %v233 = vsel %vm105, 1, 0
    %v234 = vsel %vm106, 1, 0
    %v235 = vsel %vm107, 1, 0
    %v236 = vsel %vm108, 1, 0
    %v237 = vsel %vm109, 1, 0
    %v238 = vsel %vm110, 1, 0
    %v239 = vsel %vm111, 1, 0
    %v240 = vsel %vm112, 1, 0
    %v241 = vsel %vm113, 1, 0
    %v242 = vsel %vm114, 1, 0
    %v243 = vsel %vm115, 1, 0
    %v244 = vsel %vm116, 1, 0
    %v245 = vsel %vm117, 1, 0
    %v246 = vsel %vm118, 1, 0
    %v247 = vsel %vm119, 1, 0
    %v248 = vsel %vm120, 1, 0
    %v249 = vsel %vm121, 1, 0
    %v250 = vsel %vm122, 1, 0
    %v251 = vsel %vm123, 1, 0
    %v252 = vsel %vm124, 1, 0
    %v253 = vsel %vm125, 1, 0
    %v254 = vsel %vm126, 1, 0
    %v255 = vsel %vm127, 1, 0
    %v256 = vsel %vm128, 1, 0
    %v257 = vsel %vm129, 1, 0
    %v258 = vsel %vm130, 1, 0
    %v259 = vsel %vm131, 1, 0
    %v260 = vsel %vm132, 1, 0
    %v261 = vsel %vm133, 1, 0
    %v262 = vsel %vm134, 1, 0
    %v263 = vsel %vm135, 1, 0
    %v264 = vsel %vm136, 1, 0
    %v265 = vsel %vm137, 1, 0
    %v266 = vsel %vm138, 1, 0
    %v267 = vsel %vm139, 1, 0
    %v268 = vsel %vm140, 1, 0
    %v269 = vsel %vm141, 1, 0
    %v270 = vsel %vm142, 1, 0
    %v271 = vsel %vm143, 1, 0
    %v272 = vsel %vm144, 1, 0
    %v273 = vsel %vm145, 1, 0
    %v274 = vsel %vm146, 1, 0
    %v275 = vsel %vm147, 1, 0
    %v276 = vsel %vm148, 1, 0
    %v277 = vsel %vm149, 1, 0
    %v278 = vsel %vm150, 1, 0
    %v279 = vsel %vm151, 1, 0
    %v280 = vsel %vm152, 1, 0
    %v281 = vsel %vm153, 1, 0
    %v282 = vsel %vm154, 1, 0
    %v283 = vsel %vm155, 1, 0
    %v284 = vsel %vm156, 1, 0
    %v285 = vsel %vm157, 1, 0
    %v286 = vsel %vm158, 1, 0
    %v287 = vsel %vm159, 1, 0
    %v288 = vsel %vm160, 1, 0
    %v289 = vsel %vm161, 1, 0
    %v290 = vsel %vm162, 1, 0
    %v291 = vsel %vm163, 1, 0
    %v292 = vsel %vm164, 1, 0
    %v293 = vsel %vm165, 1, 0
    %v294 = vsel %vm166, 1, 0
    %v295 = vsel %vm167, 1, 0
    %v296 = vsel %vm168, 1, 0
    %v297 = vsel %vm169, 1, 0
    %v298 = vsel %vm170, 1, 0
    %v299 = vsel %vm171, 1, 0
    %v300 = vsel %vm172, 1, 0
    %v301 = vsel %vm173, 1, 0
    %v302 = vsel %vm174, 1, 0
    %v303 = vsel %vm175, 1, 0
    %v304 = vsel %vm176, 1, 0
    %v305 = vsel %vm177, 1, 0
    %v306 = vsel %vm178, 1, 0
    %v307 = vsel %vm179, 1, 0
    %v308 = vsel %vm180, 1, 0
    %v309 = vsel %vm181, 1, 0
    %v310 = vsel %vm182, 1, 0
    %v311 = vsel %vm183, 1, 0
    %v312 = vsel %vm184, 1, 0
    %v313 = vsel %vm185, 1, 0
    %v314 = vsel %vm186, 1, 0
    %v315 = vsel %vm187, 1, 0
    %v316 = vsel %vm188, 1, 0
    %v317 = vsel %vm189, 1, 0
    %v318 = vsel %vm190, 1, 0
    %v319 = vsel %vm191, 1, 0
    %v320 = vsel %vm192, 1, 0
    %v321 = vsel %vm193, 1, 0
    %v322 = vsel %vm194, 1, 0
    %v323 = vsel %vm195, 1, 0
    %v324 = vsel %vm196, 1, 0
    %v325 = vsel %vm197, 1, 0
    %v326 = vsel %vm198, 1, 0
    %v327 = vsel %vm199, 1, 0
    %v328 = vsel %vm200, 1, 0
    %v329 = vsel %vm201, 1, 0
    %v330 = vsel %vm202, 1, 0
    %v331 = vsel %vm203, 1, 0
    %v332 = vsel %vm204, 1, 0
    %v333 = vsel %vm205, 1, 0
    %v334 = vsel %vm206, 1, 0
    %v335 = vsel %vm207, 1, 0
    %v336 = vsel %vm208, 1, 0
    %v337 = vsel %vm209, 1, 0
    %v338 = vsel %vm210, 1, 0
    %v339 = vsel %vm211, 1, 0
    %v340 = vsel %vm212, 1, 0
    %v341 = vsel %vm213, 1, 0
    %v342 = vsel %vm214, 1, 0
    %v343 = vsel %vm215, 1, 0
    %v344 = vsel %vm216, 1, 0
    %v345 = vsel %vm217, 1, 0
    %v346 = vsel %vm218, 1, 0
    %v347 = vsel %vm219, 1, 0
    %v348 = vsel %vm220, 1, 0
    %v349 = vcvt.s32.f32 %v221
    %v350 = vcvt.s32.f32 %v222
    %v351 = vcvt.s32.f32 %v223
    %v352 = vcvt.s32.f32 %v224
    %v353 = vcvt.s32.f32 %v225
    %v354 = vcvt.s32.f32 %v226
    %v355 = vcvt.s32.f32 %v227
    %v356 = vcvt.s32.f32 %v228
    %v357 = vcvt.s32.f32 %v229
    %v358 = vcvt.s32.f32 %v230
    %v359 = vcvt.s32.f32 %v231
    %v360 = vcvt.s32.f32 %v232
    %v361 = vcvt.s32.f32 %v233
    %v362 = vcvt.s32.f32 %v234
    %v363 = vcvt.s32.f32 %v235
    %v364 = vcvt.s32.f32 %v236
    %v365 = vcvt.s32.f32 %v237
    %v366 = vcvt.s32.f32 %v238
    %v367 = vcvt.s32.f32 %v239
    %v368 = vcvt.s32.f32 %v240
    %v369 = vcvt.s32.f32 %v241
    %v370 = vcvt.s32.f32 %v242
    %v371 = vcvt.s32.f32 %v243
    %v372 = vcvt.s32.f32 %v244
    %v373 = vcvt.s32.f32 %v245
    %v374 = vcvt.s32.f32 %v246
    %v375 = vcvt.s32.f32 %v247
    %v376 = vcvt.s32.f32 %v248
    %v377 = vcvt.s32.f32 %v249
    %v378 = vcvt.s32.f32 %v250
    %v379 = vcvt.s32.f32 %v251
    %v380 = vcvt.s32.f32 %v252
    %v381 = vcvt.s32.f32 %v253
    %v382 = vcvt.s32.f32 %v254
    %v383 = vcvt.s32.f32 %v255
    %v384 = vcvt.s32.f32 %v256
    %v385 = vcvt.s32.f32 %v257
    %v386 = vcvt.s32.f32 %v258
    %v387 = vcvt.s32.f32 %v259
    %v388 = vcvt.s32.f32 %v260
    %v389 = vcvt.s32.f32 %v261
    %v390 = vcvt.s32.f32 %v262
    %v391 = vcvt.s32.f32 %v263
    %v392 = vcvt.s32.f32 %v264
    %v393 = vcvt.s32.f32 %v265
    %v394 = vcvt.s32.f32 %v266
    %v395 = vcvt.s32.f32 %v267
    %v396 = vcvt.s32.f32 %v268
    %v397 = vcvt.s32.f32 %v269
    %v398 = vcvt.s32.f32 %v270
    %v399 = vcvt.s32.f32 %v271
    %v400 = vcvt.s32.f32 %v272
    %v401 = vcvt.s32.f32 %v273
    %v402 = vcvt.s32.f32 %v274
    %v403 = vcvt.s32.f32 %v275
    %v404 = vcvt.s32.f32 %v276
    %v405 = vcvt.s32.f32 %v277
    %v406 = vcvt.s32.f32 %v278
    %v407 = vcvt.s32.f32 %v279
    %v408 = vcvt.s32.f32 %v280
    %v409 = vcvt.s32.f32 %v281
    %v410 = vcvt.s32.f32 %v282
    %v411 = vcvt.s32.f32 %v283
    %v412 = vcvt.s32.f32 %v284
    %v413 = vcvt.s32.f32 %v285
    %v414 = vcvt.s32.f32 %v286
    %v415 = vcvt.s32.f32 %v287
    %v416 = vcvt.s32.f32 %v288
    %v417 = vcvt.s32.f32 %v289
    %v418 = vcvt.s32.f32 %v290
    %v419 = vcvt.s32.f32 %v291
    %v420 = vcvt.s32.f32 %v292
    %v421 = vcvt.s32.f32 %v293
    %v422 = vcvt.s32.f32 %v294
    %v423 = vcvt.s32.f32 %v295
    %v424 = vcvt.s32.f32 %v296
    %v425 = vcvt.s32.f32 %v297
    %v426 = vcvt.s32.f32 %v298
    %v427 = vcvt.s32.f32 %v299
    %v428 = vcvt.s32.f32 %v300
    %v429 = vcvt.s32.f32 %v301
    %v430 = vcvt.s32.f32 %v302
    %v431 = vcvt.s32.f32 %v303
    %v432 = vcvt.s32.f32 %v304
    %v433 = vcvt.s32.f32 %v305
    %v434 = vcvt.s32.f32 %v306
    %v435 = vcvt.s32.f32 %v307
    %v436 = vcvt.s32.f32 %v308
    %v437 = vcvt.s32.f32 %v309
    %v438 = vcvt.s32.f32 %v310
    %v439 = vcvt.s32.f32 %v311
    %v440 = vcvt.s32.f32 %v312
    %v441 = vcvt.s32.f32 %v313
    %v442 = vcvt.s32.f32 %v314
    %v443 = vcvt.s32.f32 %v315
    %v444 = vcvt.s32.f32 %v316
    %v445 = vcvt.s32.f32 %v317
    %v446 = vcvt.s32.f32 %v318
    %v447 = vcvt.s32.f32 %v319
    %v448 = vcvt.s32.f32 %v320
    %v449 = vcvt.s32.f32 %v321
    %v450 = vcvt.s32.f32 %v322
    %v451 = vcvt.s32.f32 %v323
    %v452 = vcvt.s32.f32 %v324
    %v453 = vcvt.s32.f32 %v325
    %v454 = vcvt.s32.f32 %v326
    %v455 = vcvt.s32.f32 %v327
    %v456 = vcvt.s32.f32 %v328
    %v457 = vcvt.s32.f32 %v329
    %v458 = vcvt.s32.f32 %v330
    %v459 = vcvt.s32.f32 %v331
    %v460 = vcvt.s32.f32 %v332
    %v461 = vcvt.s32.f32 %v333
    %v462 = vcvt.s32.f32 %v334
    %v463 = vcvt.s32.f32 %v335
    %v464 = vcvt.s32.f32 %v336
    %v465 = vcvt.s32.f32 %v337
    %v466 = vcvt.s32.f32 %v338
    %v467 = vcvt.s32.f32 %v339
    %v468 = vcvt.s32.f32 %v340
    %v469 = vcvt.s32.f32 %v341
    %v470 = vcvt.s32.f32 %v342
    %v471 = vcvt.s32.f32 %v343
    %v472 = vcvt.s32.f32 %v344
    %v473 = vcvt.s32.f32 %v345
    %v474 = vcvt.s32.f32 %v346
    %v475 = vcvt.s32.f32 %v347
    %v476 = vcvt.s32.f32 %v348
    %v477 = vpack.c.bf16 %v357, %v349
    %v478 = vpack.c.bf16 %v358, %v350
    %v479 = vpack.c.bf16 %v359, %v351
    %v480 = vpack.c.bf16 %v360, %v352
    %v481 = vpack.c.bf16 %v361, %v353
    %v482 = vpack.c.bf16 %v362, %v354
    %v483 = vpack.c.bf16 %v363, %v355
    %v484 = vpack.c.bf16 %v364, %v356
    %v485 = vpack.c.bf16 %v373, %v365
    %v486 = vpack.c.bf16 %v374, %v366
    %v487 = vpack.c.bf16 %v375, %v367
    %v488 = vpack.c.bf16 %v376, %v368
    %v489 = vpack.c.bf16 %v377, %v369
    %v490 = vpack.c.bf16 %v378, %v370
    %v491 = vpack.c.bf16 %v379, %v371
    %v492 = vpack.c.bf16 %v380, %v372
    %v493 = vpack.c.bf16 %v389, %v381
    %v494 = vpack.c.bf16 %v390, %v382
    %v495 = vpack.c.bf16 %v391, %v383
    %v496 = vpack.c.bf16 %v392, %v384
    %v497 = vpack.c.bf16 %v393, %v385
    %v498 = vpack.c.bf16 %v394, %v386
    %v499 = vpack.c.bf16 %v395, %v387
    %v500 = vpack.c.bf16 %v396, %v388
    %v501 = vpack.c.bf16 %v405, %v397
    %v502 = vpack.c.bf16 %v406, %v398
    %v503 = vpack.c.bf16 %v407, %v399
    %v504 = vpack.c.bf16 %v408, %v400
    %v505 = vpack.c.bf16 %v409, %v401
    %v506 = vpack.c.bf16 %v410, %v402
    %v507 = vpack.c.bf16 %v411, %v403
    %v508 = vpack.c.bf16 %v412, %v404
    %v509 = vpack.c.bf16 %v421, %v413
    %v510 = vpack.c.bf16 %v422, %v414
    %v511 = vpack.c.bf16 %v423, %v415
    %v512 = vpack.c.bf16 %v424, %v416
    %v513 = vpack.c.bf16 %v425, %v417
    %v514 = vpack.c.bf16 %v426, %v418
    %v515 = vpack.c.bf16 %v427, %v419
    %v516 = vpack.c.bf16 %v428, %v420
    %v517 = vpack.c.bf16 %v437, %v429
    %v518 = vpack.c.bf16 %v438, %v430
    %v519 = vpack.c.bf16 %v439, %v431
    %v520 = vpack.c.bf16 %v440, %v432
    %v521 = vpack.c.bf16 %v441, %v433
    %v522 = vpack.c.bf16 %v442, %v434
    %v523 = vpack.c.bf16 %v443, %v435
    %v524 = vpack.c.bf16 %v444, %v436
    %v525 = vpack.c.bf16 %v453, %v445
    %v526 = vpack.c.bf16 %v454, %v446
    %v527 = vpack.c.bf16 %v455, %v447
    %v528 = vpack.c.bf16 %v456, %v448
    %v529 = vpack.c.bf16 %v457, %v449
    %v530 = vpack.c.bf16 %v458, %v450
    %v531 = vpack.c.bf16 %v459, %v451
    %v532 = vpack.c.bf16 %v460, %v452
    %v533 = vpack.c.bf16 %v469, %v461
    %v534 = vpack.c.bf16 %v470, %v462
    %v535 = vpack.c.bf16 %v471, %v463
    %v536 = vpack.c.bf16 %v472, %v464
    %v537 = vpack.c.bf16 %v473, %v465
    %v538 = vpack.c.bf16 %v474, %v466
    %v539 = vpack.c.bf16 %v475, %v467
    %v540 = vpack.c.bf16 %v476, %v468
    %541 = vst [vmem:[#allocation2] sm:$0xff] %v477
    %542 = vst [vmem:[#allocation2 + $0x8] sm:$0xff] %v478
    %543 = vst [vmem:[#allocation2 + $0x10] sm:$0xff] %v479
    %544 = vst [vmem:[#allocation2 + $0x18] sm:$0xff] %v480
    %545 = vst [vmem:[#allocation2 + $0x20] sm:$0xff] %v481
    %546 = vst [vmem:[#allocation2 + $0x28] sm:$0xff] %v482
    %547 = vst [vmem:[#allocation2 + $0x30] sm:$0xff] %v483
    %548 = vst [vmem:[#allocation2 + $0x38] sm:$0xff] %v484
    %549 = vst [vmem:[#allocation2 + $0x40] sm:$0xff] %v485
    %550 = vst [vmem:[#allocation2 + $0x48] sm:$0xff] %v486
    %551 = vst [vmem:[#allocation2 + $0x50] sm:$0xff] %v487
    %552 = vst [vmem:[#allocation2 + $0x58] sm:$0xff] %v488
    %553 = vst [vmem:[#allocation2 + $0x60] sm:$0xff] %v489
    %554 = vst [vmem:[#allocation2 + $0x68] sm:$0xff] %v490
    %555 = vst [vmem:[#allocation2 + $0x70] sm:$0xff] %v491
    %556 = vst [vmem:[#allocation2 + $0x78] sm:$0xff] %v492
    %557 = vst [vmem:[#allocation2 + $0x80] sm:$0xff] %v493
    %558 = vst [vmem:[#allocation2 + $0x88] sm:$0xff] %v494
    %559 = vst [vmem:[#allocation2 + $0x90] sm:$0xff] %v495
    %560 = vst [vmem:[#allocation2 + $0x98] sm:$0xff] %v496
    %561 = vst [vmem:[#allocation2 + $0xa0] sm:$0xff] %v497
    %562 = vst [vmem:[#allocation2 + $0xa8] sm:$0xff] %v498
    %563 = vst [vmem:[#allocation2 + $0xb0] sm:$0xff] %v499
    %564 = vst [vmem:[#allocation2 + $0xb8] sm:$0xff] %v500
    %565 = vst [vmem:[#allocation2 + $0xc0] sm:$0xff] %v501
    %566 = vst [vmem:[#allocation2 + $0xc8] sm:$0xff] %v502
    %567 = vst [vmem:[#allocation2 + $0xd0] sm:$0xff] %v503
    %568 = vst [vmem:[#allocation2 + $0xd8] sm:$0xff] %v504
    %569 = vst [vmem:[#allocation2 + $0xe0] sm:$0xff] %v505
    %570 = vst [vmem:[#allocation2 + $0xe8] sm:$0xff] %v506
    %571 = vst [vmem:[#allocation2 + $0xf0] sm:$0xff] %v507
    %572 = vst [vmem:[#allocation2 + $0xf8] sm:$0xff] %v508
    %573 = vst [vmem:[#allocation2 + $0x100] sm:$0xff] %v509
    %574 = vst [vmem:[#allocation2 + $0x108] sm:$0xff] %v510
    %575 = vst [vmem:[#allocation2 + $0x110] sm:$0xff] %v511
    %576 = vst [vmem:[#allocation2 + $0x118] sm:$0xff] %v512
    %577 = vst [vmem:[#allocation2 + $0x120] sm:$0xff] %v513
    %578 = vst [vmem:[#allocation2 + $0x128] sm:$0xff] %v514
    %579 = vst [vmem:[#allocation2 + $0x130] sm:$0xff] %v515
    %580 = vst [vmem:[#allocation2 + $0x138] sm:$0xff] %v516
    %581 = vst [vmem:[#allocation2 + $0x140] sm:$0xff] %v517
    %582 = vst [vmem:[#allocation2 + $0x148] sm:$0xff] %v518
    %583 = vst [vmem:[#allocation2 + $0x150] sm:$0xff] %v519
    %584 = vst [vmem:[#allocation2 + $0x158] sm:$0xff] %v520
    %585 = vst [vmem:[#allocation2 + $0x160] sm:$0xff] %v521
    %586 = vst [vmem:[#allocation2 + $0x168] sm:$0xff] %v522
    %587 = vst [vmem:[#allocation2 + $0x170] sm:$0xff] %v523
    %588 = vst [vmem:[#allocation2 + $0x178] sm:$0xff] %v524
    %589 = vst [vmem:[#allocation2 + $0x180] sm:$0xff] %v525
    %590 = vst [vmem:[#allocation2 + $0x188] sm:$0xff] %v526
    %591 = vst [vmem:[#allocation2 + $0x190] sm:$0xff] %v527
    %592 = vst [vmem:[#allocation2 + $0x198] sm:$0xff] %v528
    %593 = vst [vmem:[#allocation2 + $0x1a0] sm:$0xff] %v529
    %594 = vst [vmem:[#allocation2 + $0x1a8] sm:$0xff] %v530
    %595 = vst [vmem:[#allocation2 + $0x1b0] sm:$0xff] %v531
    %596 = vst [vmem:[#allocation2 + $0x1b8] sm:$0xff] %v532
    %597 = vst [vmem:[#allocation2 + $0x1c0] sm:$0xff] %v533
    %598 = vst [vmem:[#allocation2 + $0x1c8] sm:$0xff] %v534
    %599 = vst [vmem:[#allocation2 + $0x1d0] sm:$0xff] %v535
    %600 = vst [vmem:[#allocation2 + $0x1d8] sm:$0xff] %v536
    %601 = vst [vmem:[#allocation2 + $0x1e0] sm:$0xff] %v537
    %602 = vst [vmem:[#allocation2 + $0x1e8] sm:$0xff] %v538
    %603 = vst [vmem:[#allocation2 + $0x1f0] sm:$0xff] %v539
    %604 = vst [vmem:[#allocation2 + $0x1f8] sm:$0xff] %v540
    %s605 = scalar_lea.vmem [#allocation3], 1
    %v606 = vld [vmem:[%s605] ss:$8 sm:$0xf]
    %v607 = vld [vmem:[%s605] ss:$8 sm:$0xf0]
    %v608 = vor.u32 %v606, %v607
    %v609 = vlaneseq
    %v610 = vshrl.u32 %v609, 7
    %v611 = vsub.s32 0, %v610
    %v612 = vrot.slane %v608, %v611
    %v613 = vlaneseq
    %v614 = vshrl.u32 %v613, 7
    %v615 = vsub.s32 1, %v614
    %v616 = vrot.slane %v608, %v615
    %v617 = vlaneseq
    %v618 = vshrl.u32 %v617, 7
    %v619 = vsub.s32 2, %v618
    %v620 = vrot.slane %v608, %v619
    %v621 = vlaneseq
    %v622 = vshrl.u32 %v621, 7
    %v623 = vsub.s32 3, %v622
    %v624 = vrot.slane %v608, %v623
    %v625 = vlaneseq
    %v626 = vshrl.u32 %v625, 7
    %v627 = vsub.s32 4, %v626
    %v628 = vrot.slane %v608, %v627
    %v629 = vlaneseq
    %v630 = vshrl.u32 %v629, 7
    %v631 = vsub.s32 5, %v630
    %v632 = vrot.slane %v608, %v631
    %v633 = vlaneseq
    %v634 = vshrl.u32 %v633, 7
    %v635 = vsub.s32 6, %v634
    %v636 = vrot.slane %v608, %v635
    %v637 = vlaneseq
    %v638 = vshrl.u32 %v637, 7
    %v639 = vsub.s32 7, %v638
    %v640 = vrot.slane %v608, %v639
    %vm641 = vcmp.eq.s32.totalorder %v42, %v612
    %vm642 = vcmp.eq.s32.totalorder %v42, %v616
    %vm643 = vcmp.eq.s32.totalorder %v42, %v620
    %vm644 = vcmp.eq.s32.totalorder %v42, %v624
    %vm645 = vcmp.eq.s32.totalorder %v42, %v628
    %vm646 = vcmp.eq.s32.totalorder %v42, %v632
    %vm647 = vcmp.eq.s32.totalorder %v42, %v636
    %vm648 = vcmp.eq.s32.totalorder %v42, %v640
    %vm649 = vcmp.eq.s32.totalorder %v43, %v612
    %vm650 = vcmp.eq.s32.totalorder %v43, %v616
    %vm651 = vcmp.eq.s32.totalorder %v43, %v620
    %vm652 = vcmp.eq.s32.totalorder %v43, %v624
    %vm653 = vcmp.eq.s32.totalorder %v43, %v628
    %vm654 = vcmp.eq.s32.totalorder %v43, %v632
    %vm655 = vcmp.eq.s32.totalorder %v43, %v636
    %vm656 = vcmp.eq.s32.totalorder %v43, %v640
    %vm657 = vcmp.eq.s32.totalorder %v44, %v612
    %vm658 = vcmp.eq.s32.totalorder %v44, %v616
    %vm659 = vcmp.eq.s32.totalorder %v44, %v620
    %vm660 = vcmp.eq.s32.totalorder %v44, %v624
    %vm661 = vcmp.eq.s32.totalorder %v44, %v628
    %vm662 = vcmp.eq.s32.totalorder %v44, %v632
    %vm663 = vcmp.eq.s32.totalorder %v44, %v636
    %vm664 = vcmp.eq.s32.totalorder %v44, %v640
    %vm665 = vcmp.eq.s32.totalorder %v45, %v612
    %vm666 = vcmp.eq.s32.totalorder %v45, %v616
    %vm667 = vcmp.eq.s32.totalorder %v45, %v620
    %vm668 = vcmp.eq.s32.totalorder %v45, %v624
    %vm669 = vcmp.eq.s32.totalorder %v45, %v628
    %vm670 = vcmp.eq.s32.totalorder %v45, %v632
    %vm671 = vcmp.eq.s32.totalorder %v45, %v636
    %vm672 = vcmp.eq.s32.totalorder %v45, %v640
    %vm673 = vcmp.eq.s32.totalorder %v46, %v612
    %vm674 = vcmp.eq.s32.totalorder %v46, %v616
    %vm675 = vcmp.eq.s32.totalorder %v46, %v620
    %vm676 = vcmp.eq.s32.totalorder %v46, %v624
    %vm677 = vcmp.eq.s32.totalorder %v46, %v628
    %vm678 = vcmp.eq.s32.totalorder %v46, %v632
    %vm679 = vcmp.eq.s32.totalorder %v46, %v636
    %vm680 = vcmp.eq.s32.totalorder %v46, %v640
    %vm681 = vcmp.eq.s32.totalorder %v47, %v612
    %vm682 = vcmp.eq.s32.totalorder %v47, %v616
    %vm683 = vcmp.eq.s32.totalorder %v47, %v620
    %vm684 = vcmp.eq.s32.totalorder %v47, %v624
    %vm685 = vcmp.eq.s32.totalorder %v47, %v628
    %vm686 = vcmp.eq.s32.totalorder %v47, %v632
    %vm687 = vcmp.eq.s32.totalorder %v47, %v636
    %vm688 = vcmp.eq.s32.totalorder %v47, %v640
    %vm689 = vcmp.eq.s32.totalorder %v48, %v612
    %vm690 = vcmp.eq.s32.totalorder %v48, %v616
    %vm691 = vcmp.eq.s32.totalorder %v48, %v620
    %vm692 = vcmp.eq.s32.totalorder %v48, %v624
    %vm693 = vcmp.eq.s32.totalorder %v48, %v628
    %vm694 = vcmp.eq.s32.totalorder %v48, %v632
    %vm695 = vcmp.eq.s32.totalorder %v48, %v636
    %vm696 = vcmp.eq.s32.totalorder %v48, %v640
    %vm697 = vcmp.eq.s32.totalorder %v49, %v612
    %vm698 = vcmp.eq.s32.totalorder %v49, %v616
    %vm699 = vcmp.eq.s32.totalorder %v49, %v620
    %vm700 = vcmp.eq.s32.totalorder %v49, %v624
    %vm701 = vcmp.eq.s32.totalorder %v49, %v628
    %vm702 = vcmp.eq.s32.totalorder %v49, %v632
    %vm703 = vcmp.eq.s32.totalorder %v49, %v636
    %vm704 = vcmp.eq.s32.totalorder %v49, %v640
    %vm705 = vcmp.eq.s32.totalorder %v50, %v612
    %vm706 = vcmp.eq.s32.totalorder %v50, %v616
    %vm707 = vcmp.eq.s32.totalorder %v50, %v620
    %vm708 = vcmp.eq.s32.totalorder %v50, %v624
    %vm709 = vcmp.eq.s32.totalorder %v50, %v628
    %vm710 = vcmp.eq.s32.totalorder %v50, %v632
    %vm711 = vcmp.eq.s32.totalorder %v50, %v636
    %vm712 = vcmp.eq.s32.totalorder %v50, %v640
    %vm713 = vcmp.eq.s32.totalorder %v51, %v612
    %vm714 = vcmp.eq.s32.totalorder %v51, %v616
    %vm715 = vcmp.eq.s32.totalorder %v51, %v620
    %vm716 = vcmp.eq.s32.totalorder %v51, %v624
    %vm717 = vcmp.eq.s32.totalorder %v51, %v628
    %vm718 = vcmp.eq.s32.totalorder %v51, %v632
    %vm719 = vcmp.eq.s32.totalorder %v51, %v636
    %vm720 = vcmp.eq.s32.totalorder %v51, %v640
    %vm721 = vcmp.eq.s32.totalorder %v52, %v612
    %vm722 = vcmp.eq.s32.totalorder %v52, %v616
    %vm723 = vcmp.eq.s32.totalorder %v52, %v620
    %vm724 = vcmp.eq.s32.totalorder %v52, %v624
    %vm725 = vcmp.eq.s32.totalorder %v52, %v628
    %vm726 = vcmp.eq.s32.totalorder %v52, %v632
    %vm727 = vcmp.eq.s32.totalorder %v52, %v636
    %vm728 = vcmp.eq.s32.totalorder %v52, %v640
    %vm729 = vcmp.eq.s32.totalorder %v53, %v612
    %vm730 = vcmp.eq.s32.totalorder %v53, %v616
    %vm731 = vcmp.eq.s32.totalorder %v53, %v620
    %vm732 = vcmp.eq.s32.totalorder %v53, %v624
    %vm733 = vcmp.eq.s32.totalorder %v53, %v628
    %vm734 = vcmp.eq.s32.totalorder %v53, %v632
    %vm735 = vcmp.eq.s32.totalorder %v53, %v636
    %vm736 = vcmp.eq.s32.totalorder %v53, %v640
    %vm737 = vcmp.eq.s32.totalorder %v54, %v612
    %vm738 = vcmp.eq.s32.totalorder %v54, %v616
    %vm739 = vcmp.eq.s32.totalorder %v54, %v620
    %vm740 = vcmp.eq.s32.totalorder %v54, %v624
    %vm741 = vcmp.eq.s32.totalorder %v54, %v628
    %vm742 = vcmp.eq.s32.totalorder %v54, %v632
    %vm743 = vcmp.eq.s32.totalorder %v54, %v636
    %vm744 = vcmp.eq.s32.totalorder %v54, %v640
    %vm745 = vcmp.eq.s32.totalorder %v55, %v612
    %vm746 = vcmp.eq.s32.totalorder %v55, %v616
    %vm747 = vcmp.eq.s32.totalorder %v55, %v620
    %vm748 = vcmp.eq.s32.totalorder %v55, %v624
    %vm749 = vcmp.eq.s32.totalorder %v55, %v628
    %vm750 = vcmp.eq.s32.totalorder %v55, %v632
    %vm751 = vcmp.eq.s32.totalorder %v55, %v636
    %vm752 = vcmp.eq.s32.totalorder %v55, %v640
    %vm753 = vcmp.eq.s32.totalorder %v56, %v612
    %vm754 = vcmp.eq.s32.totalorder %v56, %v616
    %vm755 = vcmp.eq.s32.totalorder %v56, %v620
    %vm756 = vcmp.eq.s32.totalorder %v56, %v624
    %vm757 = vcmp.eq.s32.totalorder %v56, %v628
    %vm758 = vcmp.eq.s32.totalorder %v56, %v632
    %vm759 = vcmp.eq.s32.totalorder %v56, %v636
    %vm760 = vcmp.eq.s32.totalorder %v56, %v640
    %vm761 = vcmp.eq.s32.totalorder %v57, %v612
    %vm762 = vcmp.eq.s32.totalorder %v57, %v616
    %vm763 = vcmp.eq.s32.totalorder %v57, %v620
    %vm764 = vcmp.eq.s32.totalorder %v57, %v624
    %vm765 = vcmp.eq.s32.totalorder %v57, %v628
    %vm766 = vcmp.eq.s32.totalorder %v57, %v632
    %vm767 = vcmp.eq.s32.totalorder %v57, %v636
    %vm768 = vcmp.eq.s32.totalorder %v57, %v640
    %v769 = vsel %vm641, 1, 0
    %v770 = vsel %vm642, 1, 0
    %v771 = vsel %vm643, 1, 0
    %v772 = vsel %vm644, 1, 0
    %v773 = vsel %vm645, 1, 0
    %v774 = vsel %vm646, 1, 0
    %v775 = vsel %vm647, 1, 0
    %v776 = vsel %vm648, 1, 0
    %v777 = vsel %vm649, 1, 0
    %v778 = vsel %vm650, 1, 0
    %v779 = vsel %vm651, 1, 0
    %v780 = vsel %vm652, 1, 0
    %v781 = vsel %vm653, 1, 0
    %v782 = vsel %vm654, 1, 0
    %v783 = vsel %vm655, 1, 0
    %v784 = vsel %vm656, 1, 0
    %v785 = vsel %vm657, 1, 0
    %v786 = vsel %vm658, 1, 0
    %v787 = vsel %vm659, 1, 0
    %v788 = vsel %vm660, 1, 0
    %v789 = vsel %vm661, 1, 0
    %v790 = vsel %vm662, 1, 0
    %v791 = vsel %vm663, 1, 0
    %v792 = vsel %vm664, 1, 0
    %v793 = vsel %vm665, 1, 0
    %v794 = vsel %vm666, 1, 0
    %v795 = vsel %vm667, 1, 0
    %v796 = vsel %vm668, 1, 0
    %v797 = vsel %vm669, 1, 0
    %v798 = vsel %vm670, 1, 0
    %v799 = vsel %vm671, 1, 0
    %v800 = vsel %vm672, 1, 0
    %v801 = vsel %vm673, 1, 0
    %v802 = vsel %vm674, 1, 0
    %v803 = vsel %vm675, 1, 0
    %v804 = vsel %vm676, 1, 0
    %v805 = vsel %vm677, 1, 0
    %v806 = vsel %vm678, 1, 0
    %v807 = vsel %vm679, 1, 0
    %v808 = vsel %vm680, 1, 0
    %v809 = vsel %vm681, 1, 0
    %v810 = vsel %vm682, 1, 0
    %v811 = vsel %vm683, 1, 0
    %v812 = vsel %vm684, 1, 0
    %v813 = vsel %vm685, 1, 0
    %v814 = vsel %vm686, 1, 0
    %v815 = vsel %vm687, 1, 0
    %v816 = vsel %vm688, 1, 0
    %v817 = vsel %vm689, 1, 0
    %v818 = vsel %vm690, 1, 0
    %v819 = vsel %vm691, 1, 0
    %v820 = vsel %vm692, 1, 0
    %v821 = vsel %vm693, 1, 0
    %v822 = vsel %vm694, 1, 0
    %v823 = vsel %vm695, 1, 0
    %v824 = vsel %vm696, 1, 0
    %v825 = vsel %vm697, 1, 0
    %v826 = vsel %vm698, 1, 0
    %v827 = vsel %vm699, 1, 0
    %v828 = vsel %vm700, 1, 0
    %v829 = vsel %vm701, 1, 0
    %v830 = vsel %vm702, 1, 0
    %v831 = vsel %vm703, 1, 0
    %v832 = vsel %vm704, 1, 0
    %v833 = vsel %vm705, 1, 0
    %v834 = vsel %vm706, 1, 0
    %v835 = vsel %vm707, 1, 0
    %v836 = vsel %vm708, 1, 0
    %v837 = vsel %vm709, 1, 0
    %v838 = vsel %vm710, 1, 0
    %v839 = vsel %vm711, 1, 0
    %v840 = vsel %vm712, 1, 0
    %v841 = vsel %vm713, 1, 0
    %v842 = vsel %vm714, 1, 0
    %v843 = vsel %vm715, 1, 0
    %v844 = vsel %vm716, 1, 0
    %v845 = vsel %vm717, 1, 0
    %v846 = vsel %vm718, 1, 0
    %v847 = vsel %vm719, 1, 0
    %v848 = vsel %vm720, 1, 0
    %v849 = vsel %vm721, 1, 0
    %v850 = vsel %vm722, 1, 0
    %v851 = vsel %vm723, 1, 0
    %v852 = vsel %vm724, 1, 0
    %v853 = vsel %vm725, 1, 0
    %v854 = vsel %vm726, 1, 0
    %v855 = vsel %vm727, 1, 0
    %v856 = vsel %vm728, 1, 0
    %v857 = vsel %vm729, 1, 0
    %v858 = vsel %vm730, 1, 0
    %v859 = vsel %vm731, 1, 0
    %v860 = vsel %vm732, 1, 0
    %v861 = vsel %vm733, 1, 0
    %v862 = vsel %vm734, 1, 0
    %v863 = vsel %vm735, 1, 0
    %v864 = vsel %vm736, 1, 0
    %v865 = vsel %vm737, 1, 0
    %v866 = vsel %vm738, 1, 0
    %v867 = vsel %vm739, 1, 0
    %v868 = vsel %vm740, 1, 0
    %v869 = vsel %vm741, 1, 0
    %v870 = vsel %vm742, 1, 0
    %v871 = vsel %vm743, 1, 0
    %v872 = vsel %vm744, 1, 0
    %v873 = vsel %vm745, 1, 0
    %v874 = vsel %vm746, 1, 0
    %v875 = vsel %vm747, 1, 0
    %v876 = vsel %vm748, 1, 0
    %v877 = vsel %vm749, 1, 0
    %v878 = vsel %vm750, 1, 0
    %v879 = vsel %vm751, 1, 0
    %v880 = vsel %vm752, 1, 0
    %v881 = vsel %vm753, 1, 0
    %v882 = vsel %vm754, 1, 0
    %v883 = vsel %vm755, 1, 0
    %v884 = vsel %vm756, 1, 0
    %v885 = vsel %vm757, 1, 0
    %v886 = vsel %vm758, 1, 0
    %v887 = vsel %vm759, 1, 0
    %v888 = vsel %vm760, 1, 0
    %v889 = vsel %vm761, 1, 0
    %v890 = vsel %vm762, 1, 0
    %v891 = vsel %vm763, 1, 0
    %v892 = vsel %vm764, 1, 0
    %v893 = vsel %vm765, 1, 0
    %v894 = vsel %vm766, 1, 0
    %v895 = vsel %vm767, 1, 0
    %v896 = vsel %vm768, 1, 0
    %v897 = vcvt.s32.f32 %v769
    %v898 = vcvt.s32.f32 %v770
    %v899 = vcvt.s32.f32 %v771
    %v900 = vcvt.s32.f32 %v772
    %v901 = vcvt.s32.f32 %v773
    %v902 = vcvt.s32.f32 %v774
    %v903 = vcvt.s32.f32 %v775
    %v904 = vcvt.s32.f32 %v776
    %v905 = vcvt.s32.f32 %v777
    %v906 = vcvt.s32.f32 %v778
    %v907 = vcvt.s32.f32 %v779
    %v908 = vcvt.s32.f32 %v780
    %v909 = vcvt.s32.f32 %v781
    %v910 = vcvt.s32.f32 %v782
    %v911 = vcvt.s32.f32 %v783
    %v912 = vcvt.s32.f32 %v784
    %v913 = vcvt.s32.f32 %v785
    %v914 = vcvt.s32.f32 %v786
    %v915 = vcvt.s32.f32 %v787
    %v916 = vcvt.s32.f32 %v788
    %v917 = vcvt.s32.f32 %v789
    %v918 = vcvt.s32.f32 %v790
    %v919 = vcvt.s32.f32 %v791
    %v920 = vcvt.s32.f32 %v792
    %v921 = vcvt.s32.f32 %v793
    %v922 = vcvt.s32.f32 %v794
    %v923 = vcvt.s32.f32 %v795
    %v924 = vcvt.s32.f32 %v796
    %v925 = vcvt.s32.f32 %v797
    %v926 = vcvt.s32.f32 %v798
    %v927 = vcvt.s32.f32 %v799
    %v928 = vcvt.s32.f32 %v800
    %v929 = vcvt.s32.f32 %v801
    %v930 = vcvt.s32.f32 %v802
    %v931 = vcvt.s32.f32 %v803
    %v932 = vcvt.s32.f32 %v804
    %v933 = vcvt.s32.f32 %v805
    %v934 = vcvt.s32.f32 %v806
    %v935 = vcvt.s32.f32 %v807
    %v936 = vcvt.s32.f32 %v808
    %v937 = vcvt.s32.f32 %v809
    %v938 = vcvt.s32.f32 %v810
    %v939 = vcvt.s32.f32 %v811
    %v940 = vcvt.s32.f32 %v812
    %v941 = vcvt.s32.f32 %v813
    %v942 = vcvt.s32.f32 %v814
    %v943 = vcvt.s32.f32 %v815
    %v944 = vcvt.s32.f32 %v816
    %v945 = vcvt.s32.f32 %v817
    %v946 = vcvt.s32.f32 %v818
    %v947 = vcvt.s32.f32 %v819
    %v948 = vcvt.s32.f32 %v820
    %v949 = vcvt.s32.f32 %v821
    %v950 = vcvt.s32.f32 %v822
    %v951 = vcvt.s32.f32 %v823
    %v952 = vcvt.s32.f32 %v824
    %v953 = vcvt.s32.f32 %v825
    %v954 = vcvt.s32.f32 %v826
    %v955 = vcvt.s32.f32 %v827
    %v956 = vcvt.s32.f32 %v828
    %v957 = vcvt.s32.f32 %v829
    %v958 = vcvt.s32.f32 %v830
    %v959 = vcvt.s32.f32 %v831
    %v960 = vcvt.s32.f32 %v832
    %v961 = vcvt.s32.f32 %v833
    %v962 = vcvt.s32.f32 %v834
    %v963 = vcvt.s32.f32 %v835
    %v964 = vcvt.s32.f32 %v836
    %v965 = vcvt.s32.f32 %v837
    %v966 = vcvt.s32.f32 %v838
    %v967 = vcvt.s32.f32 %v839
    %v968 = vcvt.s32.f32 %v840
    %v969 = vcvt.s32.f32 %v841
    %v970 = vcvt.s32.f32 %v842
    %v971 = vcvt.s32.f32 %v843
    %v972 = vcvt.s32.f32 %v844
    %v973 = vcvt.s32.f32 %v845
    %v974 = vcvt.s32.f32 %v846
    %v975 = vcvt.s32.f32 %v847
    %v976 = vcvt.s32.f32 %v848
    %v977 = vcvt.s32.f32 %v849
    %v978 = vcvt.s32.f32 %v850
    %v979 = vcvt.s32.f32 %v851
    %v980 = vcvt.s32.f32 %v852
    %v981 = vcvt.s32.f32 %v853
    %v982 = vcvt.s32.f32 %v854
    %v983 = vcvt.s32.f32 %v855
    %v984 = vcvt.s32.f32 %v856
    %v985 = vcvt.s32.f32 %v857
    %v986 = vcvt.s32.f32 %v858
    %v987 = vcvt.s32.f32 %v859
    %v988 = vcvt.s32.f32 %v860
    %v989 = vcvt.s32.f32 %v861
    %v990 = vcvt.s32.f32 %v862
    %v991 = vcvt.s32.f32 %v863
    %v992 = vcvt.s32.f32 %v864
    %v993 = vcvt.s32.f32 %v865
    %v994 = vcvt.s32.f32 %v866
    %v995 = vcvt.s32.f32 %v867
    %v996 = vcvt.s32.f32 %v868
    %v997 = vcvt.s32.f32 %v869
    %v998 = vcvt.s32.f32 %v870
    %v999 = vcvt.s32.f32 %v871
    %v1000 = vcvt.s32.f32 %v872
    %v1001 = vcvt.s32.f32 %v873
    %v1002 = vcvt.s32.f32 %v874
    %v1003 = vcvt.s32.f32 %v875
    %v1004 = vcvt.s32.f32 %v876
    %v1005 = vcvt.s32.f32 %v877
    %v1006 = vcvt.s32.f32 %v878
    %v1007 = vcvt.s32.f32 %v879
    %v1008 = vcvt.s32.f32 %v880
    %v1009 = vcvt.s32.f32 %v881
    %v1010 = vcvt.s32.f32 %v882
    %v1011 = vcvt.s32.f32 %v883
    %v1012 = vcvt.s32.f32 %v884
    %v1013 = vcvt.s32.f32 %v885
    %v1014 = vcvt.s32.f32 %v886
    %v1015 = vcvt.s32.f32 %v887
    %v1016 = vcvt.s32.f32 %v888
    %v1017 = vcvt.s32.f32 %v889
    %v1018 = vcvt.s32.f32 %v890
    %v1019 = vcvt.s32.f32 %v891
    %v1020 = vcvt.s32.f32 %v892
    %v1021 = vcvt.s32.f32 %v893
    %v1022 = vcvt.s32.f32 %v894
    %v1023 = vcvt.s32.f32 %v895
    %v1024 = vcvt.s32.f32 %v896
    %v1025 = vpack.c.bf16 %v905, %v897
    %v1026 = vpack.c.bf16 %v906, %v898
    %v1027 = vpack.c.bf16 %v907, %v899
    %v1028 = vpack.c.bf16 %v908, %v900
    %v1029 = vpack.c.bf16 %v909, %v901
    %v1030 = vpack.c.bf16 %v910, %v902
    %v1031 = vpack.c.bf16 %v911, %v903
    %v1032 = vpack.c.bf16 %v912, %v904
    %v1033 = vpack.c.bf16 %v921, %v913
    %v1034 = vpack.c.bf16 %v922, %v914
    %v1035 = vpack.c.bf16 %v923, %v915
    %v1036 = vpack.c.bf16 %v924, %v916
    %v1037 = vpack.c.bf16 %v925, %v917
    %v1038 = vpack.c.bf16 %v926, %v918
    %v1039 = vpack.c.bf16 %v927, %v919
    %v1040 = vpack.c.bf16 %v928, %v920
    %v1041 = vpack.c.bf16 %v937, %v929
    %v1042 = vpack.c.bf16 %v938, %v930
    %v1043 = vpack.c.bf16 %v939, %v931
    %v1044 = vpack.c.bf16 %v940, %v932
    %v1045 = vpack.c.bf16 %v941, %v933
    %v1046 = vpack.c.bf16 %v942, %v934
    %v1047 = vpack.c.bf16 %v943, %v935
    %v1048 = vpack.c.bf16 %v944, %v936
    %v1049 = vpack.c.bf16 %v953, %v945
    %v1050 = vpack.c.bf16 %v954, %v946
    %v1051 = vpack.c.bf16 %v955, %v947
    %v1052 = vpack.c.bf16 %v956, %v948
    %v1053 = vpack.c.bf16 %v957, %v949
    %v1054 = vpack.c.bf16 %v958, %v950
    %v1055 = vpack.c.bf16 %v959, %v951
    %v1056 = vpack.c.bf16 %v960, %v952
    %v1057 = vpack.c.bf16 %v969, %v961
    %v1058 = vpack.c.bf16 %v970, %v962
    %v1059 = vpack.c.bf16 %v971, %v963
    %v1060 = vpack.c.bf16 %v972, %v964
    %v1061 = vpack.c.bf16 %v973, %v965
    %v1062 = vpack.c.bf16 %v974, %v966
    %v1063 = vpack.c.bf16 %v975, %v967
    %v1064 = vpack.c.bf16 %v976, %v968
    %v1065 = vpack.c.bf16 %v985, %v977
    %v1066 = vpack.c.bf16 %v986, %v978
    %v1067 = vpack.c.bf16 %v987, %v979
    %v1068 = vpack.c.bf16 %v988, %v980
    %v1069 = vpack.c.bf16 %v989, %v981
    %v1070 = vpack.c.bf16 %v990, %v982
    %v1071 = vpack.c.bf16 %v991, %v983
    %v1072 = vpack.c.bf16 %v992, %v984
    %v1073 = vpack.c.bf16 %v1001, %v993
    %v1074 = vpack.c.bf16 %v1002, %v994
    %v1075 = vpack.c.bf16 %v1003, %v995
    %v1076 = vpack.c.bf16 %v1004, %v996
    %v1077 = vpack.c.bf16 %v1005, %v997
    %v1078 = vpack.c.bf16 %v1006, %v998
    %v1079 = vpack.c.bf16 %v1007, %v999
    %v1080 = vpack.c.bf16 %v1008, %v1000
    %v1081 = vpack.c.bf16 %v1017, %v1009
    %v1082 = vpack.c.bf16 %v1018, %v1010
    %v1083 = vpack.c.bf16 %v1019, %v1011
    %v1084 = vpack.c.bf16 %v1020, %v1012
    %v1085 = vpack.c.bf16 %v1021, %v1013
    %v1086 = vpack.c.bf16 %v1022, %v1014
    %v1087 = vpack.c.bf16 %v1023, %v1015
    %v1088 = vpack.c.bf16 %v1024, %v1016
    %1089 = vst [vmem:[#allocation2 + $0x200] sm:$0xff] %v1025
    %1090 = vst [vmem:[#allocation2 + $0x208] sm:$0xff] %v1026
    %1091 = vst [vmem:[#allocation2 + $0x210] sm:$0xff] %v1027
    %1092 = vst [vmem:[#allocation2 + $0x218] sm:$0xff] %v1028
    %1093 = vst [vmem:[#allocation2 + $0x220] sm:$0xff] %v1029
    %1094 = vst [vmem:[#allocation2 + $0x228] sm:$0xff] %v1030
    %1095 = vst [vmem:[#allocation2 + $0x230] sm:$0xff] %v1031
    %1096 = vst [vmem:[#allocation2 + $0x238] sm:$0xff] %v1032
    %1097 = vst [vmem:[#allocation2 + $0x240] sm:$0xff] %v1033
    %1098 = vst [vmem:[#allocation2 + $0x248] sm:$0xff] %v1034
    %1099 = vst [vmem:[#allocation2 + $0x250] sm:$0xff] %v1035
    %1100 = vst [vmem:[#allocation2 + $0x258] sm:$0xff] %v1036
    %1101 = vst [vmem:[#allocation2 + $0x260] sm:$0xff] %v1037
    %1102 = vst [vmem:[#allocation2 + $0x268] sm:$0xff] %v1038
    %1103 = vst [vmem:[#allocation2 + $0x270] sm:$0xff] %v1039
    %1104 = vst [vmem:[#allocation2 + $0x278] sm:$0xff] %v1040
    %1105 = vst [vmem:[#allocation2 + $0x280] sm:$0xff] %v1041
    %1106 = vst [vmem:[#allocation2 + $0x288] sm:$0xff] %v1042
    %1107 = vst [vmem:[#allocation2 + $0x290] sm:$0xff] %v1043
    %1108 = vst [vmem:[#allocation2 + $0x298] sm:$0xff] %v1044
    %1109 = vst [vmem:[#allocation2 + $0x2a0] sm:$0xff] %v1045
    %1110 = vst [vmem:[#allocation2 + $0x2a8] sm:$0xff] %v1046
    %1111 = vst [vmem:[#allocation2 + $0x2b0] sm:$0xff] %v1047
    %1112 = vst [vmem:[#allocation2 + $0x2b8] sm:$0xff] %v1048
    %1113 = vst [vmem:[#allocation2 + $0x2c0] sm:$0xff] %v1049
    %1114 = vst [vmem:[#allocation2 + $0x2c8] sm:$0xff] %v1050
    %1115 = vst [vmem:[#allocation2 + $0x2d0] sm:$0xff] %v1051
    %1116 = vst [vmem:[#allocation2 + $0x2d8] sm:$0xff] %v1052
    %1117 = vst [vmem:[#allocation2 + $0x2e0] sm:$0xff] %v1053
    %1118 = vst [vmem:[#allocation2 + $0x2e8] sm:$0xff] %v1054
    %1119 = vst [vmem:[#allocation2 + $0x2f0] sm:$0xff] %v1055
    %1120 = vst [vmem:[#allocation2 + $0x2f8] sm:$0xff] %v1056
    %1121 = vst [vmem:[#allocation2 + $0x300] sm:$0xff] %v1057
    %1122 = vst [vmem:[#allocation2 + $0x308] sm:$0xff] %v1058
    %1123 = vst [vmem:[#allocation2 + $0x310] sm:$0xff] %v1059
    %1124 = vst [vmem:[#allocation2 + $0x318] sm:$0xff] %v1060
    %1125 = vst [vmem:[#allocation2 + $0x320] sm:$0xff] %v1061
    %1126 = vst [vmem:[#allocation2 + $0x328] sm:$0xff] %v1062
    %1127 = vst [vmem:[#allocation2 + $0x330] sm:$0xff] %v1063
    %1128 = vst [vmem:[#allocation2 + $0x338] sm:$0xff] %v1064
    %1129 = vst [vmem:[#allocation2 + $0x340] sm:$0xff] %v1065
    %1130 = vst [vmem:[#allocation2 + $0x348] sm:$0xff] %v1066
    %1131 = vst [vmem:[#allocation2 + $0x350] sm:$0xff] %v1067
    %1132 = vst [vmem:[#allocation2 + $0x358] sm:$0xff] %v1068
    %1133 = vst [vmem:[#allocation2 + $0x360] sm:$0xff] %v1069
    %1134 = vst [vmem:[#allocation2 + $0x368] sm:$0xff] %v1070
    %1135 = vst [vmem:[#allocation2 + $0x370] sm:$0xff] %v1071
    %1136 = vst [vmem:[#allocation2 + $0x378] sm:$0xff] %v1072
    %1137 = vst [vmem:[#allocation2 + $0x380] sm:$0xff] %v1073
    %1138 = vst [vmem:[#allocation2 + $0x388] sm:$0xff] %v1074
    %1139 = vst [vmem:[#allocation2 + $0x390] sm:$0xff] %v1075
    %1140 = vst [vmem:[#allocation2 + $0x398] sm:$0xff] %v1076
    %1141 = vst [vmem:[#allocation2 + $0x3a0] sm:$0xff] %v1077
    %1142 = vst [vmem:[#allocation2 + $0x3a8] sm:$0xff] %v1078
    %1143 = vst [vmem:[#allocation2 + $0x3b0] sm:$0xff] %v1079
    %1144 = vst [vmem:[#allocation2 + $0x3b8] sm:$0xff] %v1080
    %1145 = vst [vmem:[#allocation2 + $0x3c0] sm:$0xff] %v1081
    %1146 = vst [vmem:[#allocation2 + $0x3c8] sm:$0xff] %v1082
    %1147 = vst [vmem:[#allocation2 + $0x3d0] sm:$0xff] %v1083
    %1148 = vst [vmem:[#allocation2 + $0x3d8] sm:$0xff] %v1084
    %1149 = vst [vmem:[#allocation2 + $0x3e0] sm:$0xff] %v1085
    %1150 = vst [vmem:[#allocation2 + $0x3e8] sm:$0xff] %v1086
    %1151 = vst [vmem:[#allocation2 + $0x3f0] sm:$0xff] %v1087
    %1152 = vst [vmem:[#allocation2 + $0x3f8] sm:$0xff] %v1088
    %s1153 = scalar_lea.vmem [#allocation3], 2
    %v1154 = vld [vmem:[%s1153] ss:$8 sm:$0xf]
    %v1155 = vld [vmem:[%s1153] ss:$8 sm:$0xf0]
    %v1156 = vor.u32 %v1154, %v1155
    %v1157 = vlaneseq
    %v1158 = vshrl.u32 %v1157, 7
    %v1159 = vsub.s32 0, %v1158
    %v1160 = vrot.slane %v1156, %v1159
    %v1161 = vlaneseq
    %v1162 = vshrl.u32 %v1161, 7
    %v1163 = vsub.s32 1, %v1162
    %v1164 = vrot.slane %v1156, %v1163
    %v1165 = vlaneseq
    %v1166 = vshrl.u32 %v1165, 7
    %v1167 = vsub.s32 2, %v1166
    %v1168 = vrot.slane %v1156, %v1167
    %v1169 = vlaneseq
    %v1170 = vshrl.u32 %v1169, 7
    %v1171 = vsub.s32 3, %v1170
    %v1172 = vrot.slane %v1156, %v1171
    %v1173 = vlaneseq
    %v1174 = vshrl.u32 %v1173, 7
    %v1175 = vsub.s32 4, %v1174
    %v1176 = vrot.slane %v1156, %v1175
    %v1177 = vlaneseq
    %v1178 = vshrl.u32 %v1177, 7
    %v1179 = vsub.s32 5, %v1178
    %v1180 = vrot.slane %v1156, %v1179
    %v1181 = vlaneseq
    %v1182 = vshrl.u32 %v1181, 7
    %v1183 = vsub.s32 6, %v1182
    %v1184 = vrot.slane %v1156, %v1183
    %v1185 = vlaneseq
    %v1186 = vshrl.u32 %v1185, 7
    %v1187 = vsub.s32 7, %v1186
    %v1188 = vrot.slane %v1156, %v1187
    %vm1189 = vcmp.eq.s32.totalorder %v42, %v1160
    %vm1190 = vcmp.eq.s32.totalorder %v42, %v1164
    %vm1191 = vcmp.eq.s32.totalorder %v42, %v1168
    %vm1192 = vcmp.eq.s32.totalorder %v42, %v1172
    %vm1193 = vcmp.eq.s32.totalorder %v42, %v1176
    %vm1194 = vcmp.eq.s32.totalorder %v42, %v1180
    %vm1195 = vcmp.eq.s32.totalorder %v42, %v1184
    %vm1196 = vcmp.eq.s32.totalorder %v42, %v1188
    %vm1197 = vcmp.eq.s32.totalorder %v43, %v1160
    %vm1198 = vcmp.eq.s32.totalorder %v43, %v1164
    %vm1199 = vcmp.eq.s32.totalorder %v43, %v1168
    %vm1200 = vcmp.eq.s32.totalorder %v43, %v1172
    %vm1201 = vcmp.eq.s32.totalorder %v43, %v1176
    %vm1202 = vcmp.eq.s32.totalorder %v43, %v1180
    %vm1203 = vcmp.eq.s32.totalorder %v43, %v1184
    %vm1204 = vcmp.eq.s32.totalorder %v43, %v1188
    %vm1205 = vcmp.eq.s32.totalorder %v44, %v1160
    %vm1206 = vcmp.eq.s32.totalorder %v44, %v1164
    %vm1207 = vcmp.eq.s32.totalorder %v44, %v1168
    %vm1208 = vcmp.eq.s32.totalorder %v44, %v1172
    %vm1209 = vcmp.eq.s32.totalorder %v44, %v1176
    %vm1210 = vcmp.eq.s32.totalorder %v44, %v1180
    %vm1211 = vcmp.eq.s32.totalorder %v44, %v1184
    %vm1212 = vcmp.eq.s32.totalorder %v44, %v1188
    %vm1213 = vcmp.eq.s32.totalorder %v45, %v1160
    %vm1214 = vcmp.eq.s32.totalorder %v45, %v1164
    %vm1215 = vcmp.eq.s32.totalorder %v45, %v1168
    %vm1216 = vcmp.eq.s32.totalorder %v45, %v1172
    %vm1217 = vcmp.eq.s32.totalorder %v45, %v1176
    %vm1218 = vcmp.eq.s32.totalorder %v45, %v1180
    %vm1219 = vcmp.eq.s32.totalorder %v45, %v1184
    %vm1220 = vcmp.eq.s32.totalorder %v45, %v1188
    %vm1221 = vcmp.eq.s32.totalorder %v46, %v1160
    %vm1222 = vcmp.eq.s32.totalorder %v46, %v1164
    %vm1223 = vcmp.eq.s32.totalorder %v46, %v1168
    %vm1224 = vcmp.eq.s32.totalorder %v46, %v1172
    %vm1225 = vcmp.eq.s32.totalorder %v46, %v1176
    %vm1226 = vcmp.eq.s32.totalorder %v46, %v1180
    %vm1227 = vcmp.eq.s32.totalorder %v46, %v1184
    %vm1228 = vcmp.eq.s32.totalorder %v46, %v1188
    %vm1229 = vcmp.eq.s32.totalorder %v47, %v1160
    %vm1230 = vcmp.eq.s32.totalorder %v47, %v1164
    %vm1231 = vcmp.eq.s32.totalorder %v47, %v1168
    %vm1232 = vcmp.eq.s32.totalorder %v47, %v1172
    %vm1233 = vcmp.eq.s32.totalorder %v47, %v1176
    %vm1234 = vcmp.eq.s32.totalorder %v47, %v1180
    %vm1235 = vcmp.eq.s32.totalorder %v47, %v1184
    %vm1236 = vcmp.eq.s32.totalorder %v47, %v1188
    %vm1237 = vcmp.eq.s32.totalorder %v48, %v1160
    %vm1238 = vcmp.eq.s32.totalorder %v48, %v1164
    %vm1239 = vcmp.eq.s32.totalorder %v48, %v1168
    %vm1240 = vcmp.eq.s32.totalorder %v48, %v1172
    %vm1241 = vcmp.eq.s32.totalorder %v48, %v1176
    %vm1242 = vcmp.eq.s32.totalorder %v48, %v1180
    %vm1243 = vcmp.eq.s32.totalorder %v48, %v1184
    %vm1244 = vcmp.eq.s32.totalorder %v48, %v1188
    %vm1245 = vcmp.eq.s32.totalorder %v49, %v1160
    %vm1246 = vcmp.eq.s32.totalorder %v49, %v1164
    %vm1247 = vcmp.eq.s32.totalorder %v49, %v1168
    %vm1248 = vcmp.eq.s32.totalorder %v49, %v1172
    %vm1249 = vcmp.eq.s32.totalorder %v49, %v1176
    %vm1250 = vcmp.eq.s32.totalorder %v49, %v1180
    %vm1251 = vcmp.eq.s32.totalorder %v49, %v1184
    %vm1252 = vcmp.eq.s32.totalorder %v49, %v1188
    %vm1253 = vcmp.eq.s32.totalorder %v50, %v1160
    %vm1254 = vcmp.eq.s32.totalorder %v50, %v1164
    %vm1255 = vcmp.eq.s32.totalorder %v50, %v1168
    %vm1256 = vcmp.eq.s32.totalorder %v50, %v1172
    %vm1257 = vcmp.eq.s32.totalorder %v50, %v1176
    %vm1258 = vcmp.eq.s32.totalorder %v50, %v1180
    %vm1259 = vcmp.eq.s32.totalorder %v50, %v1184
    %vm1260 = vcmp.eq.s32.totalorder %v50, %v1188
    %vm1261 = vcmp.eq.s32.totalorder %v51, %v1160
    %vm1262 = vcmp.eq.s32.totalorder %v51, %v1164
    %vm1263 = vcmp.eq.s32.totalorder %v51, %v1168
    %vm1264 = vcmp.eq.s32.totalorder %v51, %v1172
    %vm1265 = vcmp.eq.s32.totalorder %v51, %v1176
    %vm1266 = vcmp.eq.s32.totalorder %v51, %v1180
    %vm1267 = vcmp.eq.s32.totalorder %v51, %v1184
    %vm1268 = vcmp.eq.s32.totalorder %v51, %v1188
    %vm1269 = vcmp.eq.s32.totalorder %v52, %v1160
    %vm1270 = vcmp.eq.s32.totalorder %v52, %v1164
    %vm1271 = vcmp.eq.s32.totalorder %v52, %v1168
    %vm1272 = vcmp.eq.s32.totalorder %v52, %v1172
    %vm1273 = vcmp.eq.s32.totalorder %v52, %v1176
    %vm1274 = vcmp.eq.s32.totalorder %v52, %v1180
    %vm1275 = vcmp.eq.s32.totalorder %v52, %v1184
    %vm1276 = vcmp.eq.s32.totalorder %v52, %v1188
    %vm1277 = vcmp.eq.s32.totalorder %v53, %v1160
    %vm1278 = vcmp.eq.s32.totalorder %v53, %v1164
    %vm1279 = vcmp.eq.s32.totalorder %v53, %v1168
    %vm1280 = vcmp.eq.s32.totalorder %v53, %v1172
    %vm1281 = vcmp.eq.s32.totalorder %v53, %v1176
    %vm1282 = vcmp.eq.s32.totalorder %v53, %v1180
    %vm1283 = vcmp.eq.s32.totalorder %v53, %v1184
    %vm1284 = vcmp.eq.s32.totalorder %v53, %v1188
    %vm1285 = vcmp.eq.s32.totalorder %v54, %v1160
    %vm1286 = vcmp.eq.s32.totalorder %v54, %v1164
    %vm1287 = vcmp.eq.s32.totalorder %v54, %v1168
    %vm1288 = vcmp.eq.s32.totalorder %v54, %v1172
    %vm1289 = vcmp.eq.s32.totalorder %v54, %v1176
    %vm1290 = vcmp.eq.s32.totalorder %v54, %v1180
    %vm1291 = vcmp.eq.s32.totalorder %v54, %v1184
    %vm1292 = vcmp.eq.s32.totalorder %v54, %v1188
    %vm1293 = vcmp.eq.s32.totalorder %v55, %v1160
    %vm1294 = vcmp.eq.s32.totalorder %v55, %v1164
    %vm1295 = vcmp.eq.s32.totalorder %v55, %v1168
    %vm1296 = vcmp.eq.s32.totalorder %v55, %v1172
    %vm1297 = vcmp.eq.s32.totalorder %v55, %v1176
    %vm1298 = vcmp.eq.s32.totalorder %v55, %v1180
    %vm1299 = vcmp.eq.s32.totalorder %v55, %v1184
    %vm1300 = vcmp.eq.s32.totalorder %v55, %v1188
    %vm1301 = vcmp.eq.s32.totalorder %v56, %v1160
    %vm1302 = vcmp.eq.s32.totalorder %v56, %v1164
    %vm1303 = vcmp.eq.s32.totalorder %v56, %v1168
    %vm1304 = vcmp.eq.s32.totalorder %v56, %v1172
    %vm1305 = vcmp.eq.s32.totalorder %v56, %v1176
    %vm1306 = vcmp.eq.s32.totalorder %v56, %v1180
    %vm1307 = vcmp.eq.s32.totalorder %v56, %v1184
    %vm1308 = vcmp.eq.s32.totalorder %v56, %v1188
    %vm1309 = vcmp.eq.s32.totalorder %v57, %v1160
    %vm1310 = vcmp.eq.s32.totalorder %v57, %v1164
    %vm1311 = vcmp.eq.s32.totalorder %v57, %v1168
    %vm1312 = vcmp.eq.s32.totalorder %v57, %v1172
    %vm1313 = vcmp.eq.s32.totalorder %v57, %v1176
    %vm1314 = vcmp.eq.s32.totalorder %v57, %v1180
    %vm1315 = vcmp.eq.s32.totalorder %v57, %v1184
    %vm1316 = vcmp.eq.s32.totalorder %v57, %v1188
    %v1317 = vsel %vm1189, 1, 0
    %v1318 = vsel %vm1190, 1, 0
    %v1319 = vsel %vm1191, 1, 0
    %v1320 = vsel %vm1192, 1, 0
    %v1321 = vsel %vm1193, 1, 0
    %v1322 = vsel %vm1194, 1, 0
    %v1323 = vsel %vm1195, 1, 0
    %v1324 = vsel %vm1196, 1, 0
    %v1325 = vsel %vm1197, 1, 0
    %v1326 = vsel %vm1198, 1, 0
    %v1327 = vsel %vm1199, 1, 0
    %v1328 = vsel %vm1200, 1, 0
    %v1329 = vsel %vm1201, 1, 0
    %v1330 = vsel %vm1202, 1, 0
    %v1331 = vsel %vm1203, 1, 0
    %v1332 = vsel %vm1204, 1, 0
    %v1333 = vsel %vm1205, 1, 0
    %v1334 = vsel %vm1206, 1, 0
    %v1335 = vsel %vm1207, 1, 0
    %v1336 = vsel %vm1208, 1, 0
    %v1337 = vsel %vm1209, 1, 0
    %v1338 = vsel %vm1210, 1, 0
    %v1339 = vsel %vm1211, 1, 0
    %v1340 = vsel %vm1212, 1, 0
    %v1341 = vsel %vm1213, 1, 0
    %v1342 = vsel %vm1214, 1, 0
    %v1343 = vsel %vm1215, 1, 0
    %v1344 = vsel %vm1216, 1, 0
    %v1345 = vsel %vm1217, 1, 0
    %v1346 = vsel %vm1218, 1, 0
    %v1347 = vsel %vm1219, 1, 0
    %v1348 = vsel %vm1220, 1, 0
    %v1349 = vsel %vm1221, 1, 0
    %v1350 = vsel %vm1222, 1, 0
    %v1351 = vsel %vm1223, 1, 0
    %v1352 = vsel %vm1224, 1, 0
    %v1353 = vsel %vm1225, 1, 0
    %v1354 = vsel %vm1226, 1, 0
    %v1355 = vsel %vm1227, 1, 0
    %v1356 = vsel %vm1228, 1, 0
    %v1357 = vsel %vm1229, 1, 0
    %v1358 = vsel %vm1230, 1, 0
    %v1359 = vsel %vm1231, 1, 0
    %v1360 = vsel %vm1232, 1, 0
    %v1361 = vsel %vm1233, 1, 0
    %v1362 = vsel %vm1234, 1, 0
    %v1363 = vsel %vm1235, 1, 0
    %v1364 = vsel %vm1236, 1, 0
    %v1365 = vsel %vm1237, 1, 0
    %v1366 = vsel %vm1238, 1, 0
    %v1367 = vsel %vm1239, 1, 0
    %v1368 = vsel %vm1240, 1, 0
    %v1369 = vsel %vm1241, 1, 0
    %v1370 = vsel %vm1242, 1, 0
    %v1371 = vsel %vm1243, 1, 0
    %v1372 = vsel %vm1244, 1, 0
    %v1373 = vsel %vm1245, 1, 0
    %v1374 = vsel %vm1246, 1, 0
    %v1375 = vsel %vm1247, 1, 0
    %v1376 = vsel %vm1248, 1, 0
    %v1377 = vsel %vm1249, 1, 0
    %v1378 = vsel %vm1250, 1, 0
    %v1379 = vsel %vm1251, 1, 0
    %v1380 = vsel %vm1252, 1, 0
    %v1381 = vsel %vm1253, 1, 0
    %v1382 = vsel %vm1254, 1, 0
    %v1383 = vsel %vm1255, 1, 0
    %v1384 = vsel %vm1256, 1, 0
    %v1385 = vsel %vm1257, 1, 0
    %v1386 = vsel %vm1258, 1, 0
    %v1387 = vsel %vm1259, 1, 0
    %v1388 = vsel %vm1260, 1, 0
    %v1389 = vsel %vm1261, 1, 0
    %v1390 = vsel %vm1262, 1, 0
    %v1391 = vsel %vm1263, 1, 0
    %v1392 = vsel %vm1264, 1, 0
    %v1393 = vsel %vm1265, 1, 0
    %v1394 = vsel %vm1266, 1, 0
    %v1395 = vsel %vm1267, 1, 0
    %v1396 = vsel %vm1268, 1, 0
    %v1397 = vsel %vm1269, 1, 0
    %v1398 = vsel %vm1270, 1, 0
    %v1399 = vsel %vm1271, 1, 0
    %v1400 = vsel %vm1272, 1, 0
    %v1401 = vsel %vm1273, 1, 0
    %v1402 = vsel %vm1274, 1, 0
    %v1403 = vsel %vm1275, 1, 0
    %v1404 = vsel %vm1276, 1, 0
    %v1405 = vsel %vm1277, 1, 0
    %v1406 = vsel %vm1278, 1, 0
    %v1407 = vsel %vm1279, 1, 0
    %v1408 = vsel %vm1280, 1, 0
    %v1409 = vsel %vm1281, 1, 0
    %v1410 = vsel %vm1282, 1, 0
    %v1411 = vsel %vm1283, 1, 0
    %v1412 = vsel %vm1284, 1, 0
    %v1413 = vsel %vm1285, 1, 0
    %v1414 = vsel %vm1286, 1, 0
    %v1415 = vsel %vm1287, 1, 0
    %v1416 = vsel %vm1288, 1, 0
    %v1417 = vsel %vm1289, 1, 0
    %v1418 = vsel %vm1290, 1, 0
    %v1419 = vsel %vm1291, 1, 0
    %v1420 = vsel %vm1292, 1, 0
    %v1421 = vsel %vm1293, 1, 0
    %v1422 = vsel %vm1294, 1, 0
    %v1423 = vsel %vm1295, 1, 0
    %v1424 = vsel %vm1296, 1, 0
    %v1425 = vsel %vm1297, 1, 0
    %v1426 = vsel %vm1298, 1, 0
    %v1427 = vsel %vm1299, 1, 0
    %v1428 = vsel %vm1300, 1, 0
    %v1429 = vsel %vm1301, 1, 0
    %v1430 = vsel %vm1302, 1, 0
    %v1431 = vsel %vm1303, 1, 0
    %v1432 = vsel %vm1304, 1, 0
    %v1433 = vsel %vm1305, 1, 0
    %v1434 = vsel %vm1306, 1, 0
    %v1435 = vsel %vm1307, 1, 0
    %v1436 = vsel %vm1308, 1, 0
    %v1437 = vsel %vm1309, 1, 0
    %v1438 = vsel %vm1310, 1, 0
    %v1439 = vsel %vm1311, 1, 0
    %v1440 = vsel %vm1312, 1, 0
    %v1441 = vsel %vm1313, 1, 0
    %v1442 = vsel %vm1314, 1, 0
    %v1443 = vsel %vm1315, 1, 0
    %v1444 = vsel %vm1316, 1, 0
    %v1445 = vcvt.s32.f32 %v1317
    %v1446 = vcvt.s32.f32 %v1318
    %v1447 = vcvt.s32.f32 %v1319
    %v1448 = vcvt.s32.f32 %v1320
    %v1449 = vcvt.s32.f32 %v1321
    %v1450 = vcvt.s32.f32 %v1322
    %v1451 = vcvt.s32.f32 %v1323
    %v1452 = vcvt.s32.f32 %v1324
    %v1453 = vcvt.s32.f32 %v1325
    %v1454 = vcvt.s32.f32 %v1326
    %v1455 = vcvt.s32.f32 %v1327
    %v1456 = vcvt.s32.f32 %v1328
    %v1457 = vcvt.s32.f32 %v1329
    %v1458 = vcvt.s32.f32 %v1330
    %v1459 = vcvt.s32.f32 %v1331
    %v1460 = vcvt.s32.f32 %v1332
    %v1461 = vcvt.s32.f32 %v1333
    %v1462 = vcvt.s32.f32 %v1334
    %v1463 = vcvt.s32.f32 %v1335
    %v1464 = vcvt.s32.f32 %v1336
    %v1465 = vcvt.s32.f32 %v1337
    %v1466 = vcvt.s32.f32 %v1338
    %v1467 = vcvt.s32.f32 %v1339
    %v1468 = vcvt.s32.f32 %v1340
    %v1469 = vcvt.s32.f32 %v1341
    %v1470 = vcvt.s32.f32 %v1342
    %v1471 = vcvt.s32.f32 %v1343
    %v1472 = vcvt.s32.f32 %v1344
    %v1473 = vcvt.s32.f32 %v1345
    %v1474 = vcvt.s32.f32 %v1346
    %v1475 = vcvt.s32.f32 %v1347
    %v1476 = vcvt.s32.f32 %v1348
    %v1477 = vcvt.s32.f32 %v1349
    %v1478 = vcvt.s32.f32 %v1350
    %v1479 = vcvt.s32.f32 %v1351
    %v1480 = vcvt.s32.f32 %v1352
    %v1481 = vcvt.s32.f32 %v1353
    %v1482 = vcvt.s32.f32 %v1354
    %v1483 = vcvt.s32.f32 %v1355
    %v1484 = vcvt.s32.f32 %v1356
    %v1485 = vcvt.s32.f32 %v1357
    %v1486 = vcvt.s32.f32 %v1358
    %v1487 = vcvt.s32.f32 %v1359
    %v1488 = vcvt.s32.f32 %v1360
    %v1489 = vcvt.s32.f32 %v1361
    %v1490 = vcvt.s32.f32 %v1362
    %v1491 = vcvt.s32.f32 %v1363
    %v1492 = vcvt.s32.f32 %v1364
    %v1493 = vcvt.s32.f32 %v1365
    %v1494 = vcvt.s32.f32 %v1366
    %v1495 = vcvt.s32.f32 %v1367
    %v1496 = vcvt.s32.f32 %v1368
    %v1497 = vcvt.s32.f32 %v1369
    %v1498 = vcvt.s32.f32 %v1370
    %v1499 = vcvt.s32.f32 %v1371
    %v1500 = vcvt.s32.f32 %v1372
    %v1501 = vcvt.s32.f32 %v1373
    %v1502 = vcvt.s32.f32 %v1374
    %v1503 = vcvt.s32.f32 %v1375
    %v1504 = vcvt.s32.f32 %v1376
    %v1505 = vcvt.s32.f32 %v1377
    %v1506 = vcvt.s32.f32 %v1378
    %v1507 = vcvt.s32.f32 %v1379
    %v1508 = vcvt.s32.f32 %v1380
    %v1509 = vcvt.s32.f32 %v1381
    %v1510 = vcvt.s32.f32 %v1382
    %v1511 = vcvt.s32.f32 %v1383
    %v1512 = vcvt.s32.f32 %v1384
    %v1513 = vcvt.s32.f32 %v1385
    %v1514 = vcvt.s32.f32 %v1386
    %v1515 = vcvt.s32.f32 %v1387
    %v1516 = vcvt.s32.f32 %v1388
    %v1517 = vcvt.s32.f32 %v1389
    %v1518 = vcvt.s32.f32 %v1390
    %v1519 = vcvt.s32.f32 %v1391
    %v1520 = vcvt.s32.f32 %v1392
    %v1521 = vcvt.s32.f32 %v1393
    %v1522 = vcvt.s32.f32 %v1394
    %v1523 = vcvt.s32.f32 %v1395
    %v1524 = vcvt.s32.f32 %v1396
    %v1525 = vcvt.s32.f32 %v1397
    %v1526 = vcvt.s32.f32 %v1398
    %v1527 = vcvt.s32.f32 %v1399
    %v1528 = vcvt.s32.f32 %v1400
    %v1529 = vcvt.s32.f32 %v1401
    %v1530 = vcvt.s32.f32 %v1402
    %v1531 = vcvt.s32.f32 %v1403
    %v1532 = vcvt.s32.f32 %v1404
    %v1533 = vcvt.s32.f32 %v1405
    %v1534 = vcvt.s32.f32 %v1406
    %v1535 = vcvt.s32.f32 %v1407
    %v1536 = vcvt.s32.f32 %v1408
    %v1537 = vcvt.s32.f32 %v1409
    %v1538 = vcvt.s32.f32 %v1410
    %v1539 = vcvt.s32.f32 %v1411
    %v1540 = vcvt.s32.f32 %v1412
    %v1541 = vcvt.s32.f32 %v1413
    %v1542 = vcvt.s32.f32 %v1414
    %v1543 = vcvt.s32.f32 %v1415
    %v1544 = vcvt.s32.f32 %v1416
    %v1545 = vcvt.s32.f32 %v1417
    %v1546 = vcvt.s32.f32 %v1418
    %v1547 = vcvt.s32.f32 %v1419
    %v1548 = vcvt.s32.f32 %v1420
    %v1549 = vcvt.s32.f32 %v1421
    %v1550 = vcvt.s32.f32 %v1422
    %v1551 = vcvt.s32.f32 %v1423
    %v1552 = vcvt.s32.f32 %v1424
    %v1553 = vcvt.s32.f32 %v1425
    %v1554 = vcvt.s32.f32 %v1426
    %v1555 = vcvt.s32.f32 %v1427
    %v1556 = vcvt.s32.f32 %v1428
    %v1557 = vcvt.s32.f32 %v1429
    %v1558 = vcvt.s32.f32 %v1430
    %v1559 = vcvt.s32.f32 %v1431
    %v1560 = vcvt.s32.f32 %v1432
    %v1561 = vcvt.s32.f32 %v1433
    %v1562 = vcvt.s32.f32 %v1434
    %v1563 = vcvt.s32.f32 %v1435
    %v1564 = vcvt.s32.f32 %v1436
    %v1565 = vcvt.s32.f32 %v1437
    %v1566 = vcvt.s32.f32 %v1438
    %v1567 = vcvt.s32.f32 %v1439
    %v1568 = vcvt.s32.f32 %v1440
    %v1569 = vcvt.s32.f32 %v1441
    %v1570 = vcvt.s32.f32 %v1442
    %v1571 = vcvt.s32.f32 %v1443
    %v1572 = vcvt.s32.f32 %v1444
    %v1573 = vpack.c.bf16 %v1453, %v1445
    %v1574 = vpack.c.bf16 %v1454, %v1446
    %v1575 = vpack.c.bf16 %v1455, %v1447
    %v1576 = vpack.c.bf16 %v1456, %v1448
    %v1577 = vpack.c.bf16 %v1457, %v1449
    %v1578 = vpack.c.bf16 %v1458, %v1450
    %v1579 = vpack.c.bf16 %v1459, %v1451
    %v1580 = vpack.c.bf16 %v1460, %v1452
    %v1581 = vpack.c.bf16 %v1469, %v1461
    %v1582 = vpack.c.bf16 %v1470, %v1462
    %v1583 = vpack.c.bf16 %v1471, %v1463
    %v1584 = vpack.c.bf16 %v1472, %v1464
    %v1585 = vpack.c.bf16 %v1473, %v1465
    %v1586 = vpack.c.bf16 %v1474, %v1466
    %v1587 = vpack.c.bf16 %v1475, %v1467
    %v1588 = vpack.c.bf16 %v1476, %v1468
    %v1589 = vpack.c.bf16 %v1485, %v1477
    %v1590 = vpack.c.bf16 %v1486, %v1478
    %v1591 = vpack.c.bf16 %v1487, %v1479
    %v1592 = vpack.c.bf16 %v1488, %v1480
    %v1593 = vpack.c.bf16 %v1489, %v1481
    %v1594 = vpack.c.bf16 %v1490, %v1482
    %v1595 = vpack.c.bf16 %v1491, %v1483
    %v1596 = vpack.c.bf16 %v1492, %v1484
    %v1597 = vpack.c.bf16 %v1501, %v1493
    %v1598 = vpack.c.bf16 %v1502, %v1494
    %v1599 = vpack.c.bf16 %v1503, %v1495
    %v1600 = vpack.c.bf16 %v1504, %v1496
    %v1601 = vpack.c.bf16 %v1505, %v1497
    %v1602 = vpack.c.bf16 %v1506, %v1498
    %v1603 = vpack.c.bf16 %v1507, %v1499
    %v1604 = vpack.c.bf16 %v1508, %v1500
    %v1605 = vpack.c.bf16 %v1517, %v1509
    %v1606 = vpack.c.bf16 %v1518, %v1510
    %v1607 = vpack.c.bf16 %v1519, %v1511
    %v1608 = vpack.c.bf16 %v1520, %v1512
    %v1609 = vpack.c.bf16 %v1521, %v1513
    %v1610 = vpack.c.bf16 %v1522, %v1514
    %v1611 = vpack.c.bf16 %v1523, %v1515
    %v1612 = vpack.c.bf16 %v1524, %v1516
    %v1613 = vpack.c.bf16 %v1533, %v1525
    %v1614 = vpack.c.bf16 %v1534, %v1526
    %v1615 = vpack.c.bf16 %v1535, %v1527
    %v1616 = vpack.c.bf16 %v1536, %v1528
    %v1617 = vpack.c.bf16 %v1537, %v1529
    %v1618 = vpack.c.bf16 %v1538, %v1530
    %v1619 = vpack.c.bf16 %v1539, %v1531
    %v1620 = vpack.c.bf16 %v1540, %v1532
    %v1621 = vpack.c.bf16 %v1549, %v1541
    %v1622 = vpack.c.bf16 %v1550, %v1542
    %v1623 = vpack.c.bf16 %v1551, %v1543
    %v1624 = vpack.c.bf16 %v1552, %v1544
    %v1625 = vpack.c.bf16 %v1553, %v1545
    %v1626 = vpack.c.bf16 %v1554, %v1546
    %v1627 = vpack.c.bf16 %v1555, %v1547
    %v1628 = vpack.c.bf16 %v1556, %v1548
    %v1629 = vpack.c.bf16 %v1565, %v1557
    %v1630 = vpack.c.bf16 %v1566, %v1558
    %v1631 = vpack.c.bf16 %v1567, %v1559
    %v1632 = vpack.c.bf16 %v1568, %v1560
    %v1633 = vpack.c.bf16 %v1569, %v1561
    %v1634 = vpack.c.bf16 %v1570, %v1562
    %v1635 = vpack.c.bf16 %v1571, %v1563
    %v1636 = vpack.c.bf16 %v1572, %v1564
    %1637 = vst [vmem:[#allocation2 + $0x400] sm:$0xff] %v1573
    %1638 = vst [vmem:[#allocation2 + $0x408] sm:$0xff] %v1574
    %1639 = vst [vmem:[#allocation2 + $0x410] sm:$0xff] %v1575
    %1640 = vst [vmem:[#allocation2 + $0x418] sm:$0xff] %v1576
    %1641 = vst [vmem:[#allocation2 + $0x420] sm:$0xff] %v1577
    %1642 = vst [vmem:[#allocation2 + $0x428] sm:$0xff] %v1578
    %1643 = vst [vmem:[#allocation2 + $0x430] sm:$0xff] %v1579
    %1644 = vst [vmem:[#allocation2 + $0x438] sm:$0xff] %v1580
    %1645 = vst [vmem:[#allocation2 + $0x440] sm:$0xff] %v1581
    %1646 = vst [vmem:[#allocation2 + $0x448] sm:$0xff] %v1582
    %1647 = vst [vmem:[#allocation2 + $0x450] sm:$0xff] %v1583
    %1648 = vst [vmem:[#allocation2 + $0x458] sm:$0xff] %v1584
    %1649 = vst [vmem:[#allocation2 + $0x460] sm:$0xff] %v1585
    %1650 = vst [vmem:[#allocation2 + $0x468] sm:$0xff] %v1586
    %1651 = vst [vmem:[#allocation2 + $0x470] sm:$0xff] %v1587
    %1652 = vst [vmem:[#allocation2 + $0x478] sm:$0xff] %v1588
    %1653 = vst [vmem:[#allocation2 + $0x480] sm:$0xff] %v1589
    %1654 = vst [vmem:[#allocation2 + $0x488] sm:$0xff] %v1590
    %1655 = vst [vmem:[#allocation2 + $0x490] sm:$0xff] %v1591
    %1656 = vst [vmem:[#allocation2 + $0x498] sm:$0xff] %v1592
    %1657 = vst [vmem:[#allocation2 + $0x4a0] sm:$0xff] %v1593
    %1658 = vst [vmem:[#allocation2 + $0x4a8] sm:$0xff] %v1594
    %1659 = vst [vmem:[#allocation2 + $0x4b0] sm:$0xff] %v1595
    %1660 = vst [vmem:[#allocation2 + $0x4b8] sm:$0xff] %v1596
    %1661 = vst [vmem:[#allocation2 + $0x4c0] sm:$0xff] %v1597
    %1662 = vst [vmem:[#allocation2 + $0x4c8] sm:$0xff] %v1598
    %1663 = vst [vmem:[#allocation2 + $0x4d0] sm:$0xff] %v1599
    %1664 = vst [vmem:[#allocation2 + $0x4d8] sm:$0xff] %v1600
    %1665 = vst [vmem:[#allocation2 + $0x4e0] sm:$0xff] %v1601
    %1666 = vst [vmem:[#allocation2 + $0x4e8] sm:$0xff] %v1602
    %1667 = vst [vmem:[#allocation2 + $0x4f0] sm:$0xff] %v1603
    %1668 = vst [vmem:[#allocation2 + $0x4f8] sm:$0xff] %v1604
    %1669 = vst [vmem:[#allocation2 + $0x500] sm:$0xff] %v1605
    %1670 = vst [vmem:[#allocation2 + $0x508] sm:$0xff] %v1606
    %1671 = vst [vmem:[#allocation2 + $0x510] sm:$0xff] %v1607
    %1672 = vst [vmem:[#allocation2 + $0x518] sm:$0xff] %v1608
    %1673 = vst [vmem:[#allocation2 + $0x520] sm:$0xff] %v1609
    %1674 = vst [vmem:[#allocation2 + $0x528] sm:$0xff] %v1610
    %1675 = vst [vmem:[#allocation2 + $0x530] sm:$0xff] %v1611
    %1676 = vst [vmem:[#allocation2 + $0x538] sm:$0xff] %v1612
    %1677 = vst [vmem:[#allocation2 + $0x540] sm:$0xff] %v1613
    %1678 = vst [vmem:[#allocation2 + $0x548] sm:$0xff] %v1614
    %1679 = vst [vmem:[#allocation2 + $0x550] sm:$0xff] %v1615
    %1680 = vst [vmem:[#allocation2 + $0x558] sm:$0xff] %v1616
    %1681 = vst [vmem:[#allocation2 + $0x560] sm:$0xff] %v1617
    %1682 = vst [vmem:[#allocation2 + $0x568] sm:$0xff] %v1618
    %1683 = vst [vmem:[#allocation2 + $0x570] sm:$0xff] %v1619
    %1684 = vst [vmem:[#allocation2 + $0x578] sm:$0xff] %v1620
    %1685 = vst [vmem:[#allocation2 + $0x580] sm:$0xff] %v1621
    %1686 = vst [vmem:[#allocation2 + $0x588] sm:$0xff] %v1622
    %1687 = vst [vmem:[#allocation2 + $0x590] sm:$0xff] %v1623
    %1688 = vst [vmem:[#allocation2 + $0x598] sm:$0xff] %v1624
    %1689 = vst [vmem:[#allocation2 + $0x5a0] sm:$0xff] %v1625
    %1690 = vst [vmem:[#allocation2 + $0x5a8] sm:$0xff] %v1626
    %1691 = vst [vmem:[#allocation2 + $0x5b0] sm:$0xff] %v1627
    %1692 = vst [vmem:[#allocation2 + $0x5b8] sm:$0xff] %v1628
    %1693 = vst [vmem:[#allocation2 + $0x5c0] sm:$0xff] %v1629
    %1694 = vst [vmem:[#allocation2 + $0x5c8] sm:$0xff] %v1630
    %1695 = vst [vmem:[#allocation2 + $0x5d0] sm:$0xff] %v1631
    %1696 = vst [vmem:[#allocation2 + $0x5d8] sm:$0xff] %v1632
    %1697 = vst [vmem:[#allocation2 + $0x5e0] sm:$0xff] %v1633
    %1698 = vst [vmem:[#allocation2 + $0x5e8] sm:$0xff] %v1634
    %1699 = vst [vmem:[#allocation2 + $0x5f0] sm:$0xff] %v1635
    %1700 = vst [vmem:[#allocation2 + $0x5f8] sm:$0xff] %v1636
    %s1701 = scalar_lea.vmem [#allocation3], 3
    %v1702 = vld [vmem:[%s1701] ss:$8 sm:$0xf]
    %v1703 = vld [vmem:[%s1701] ss:$8 sm:$0xf0]
    %v1704 = vor.u32 %v1702, %v1703
    %v1705 = vlaneseq
    %v1706 = vshrl.u32 %v1705, 7
    %v1707 = vsub.s32 0, %v1706
    %v1708 = vrot.slane %v1704, %v1707
    %v1709 = vlaneseq
    %v1710 = vshrl.u32 %v1709, 7
    %v1711 = vsub.s32 1, %v1710
    %v1712 = vrot.slane %v1704, %v1711
    %v1713 = vlaneseq
    %v1714 = vshrl.u32 %v1713, 7
    %v1715 = vsub.s32 2, %v1714
    %v1716 = vrot.slane %v1704, %v1715
    %v1717 = vlaneseq
    %v1718 = vshrl.u32 %v1717, 7
    %v1719 = vsub.s32 3, %v1718
    %v1720 = vrot.slane %v1704, %v1719
    %v1721 = vlaneseq
    %v1722 = vshrl.u32 %v1721, 7
    %v1723 = vsub.s32 4, %v1722
    %v1724 = vrot.slane %v1704, %v1723
    %v1725 = vlaneseq
    %v1726 = vshrl.u32 %v1725, 7
    %v1727 = vsub.s32 5, %v1726
    %v1728 = vrot.slane %v1704, %v1727
    %v1729 = vlaneseq
    %v1730 = vshrl.u32 %v1729, 7
    %v1731 = vsub.s32 6, %v1730
    %v1732 = vrot.slane %v1704, %v1731
    %v1733 = vlaneseq
    %v1734 = vshrl.u32 %v1733, 7
    %v1735 = vsub.s32 7, %v1734
    %v1736 = vrot.slane %v1704, %v1735
    %vm1737 = vcmp.eq.s32.totalorder %v42, %v1708
    %vm1738 = vcmp.eq.s32.totalorder %v42, %v1712
    %vm1739 = vcmp.eq.s32.totalorder %v42, %v1716
    %vm1740 = vcmp.eq.s32.totalorder %v42, %v1720
    %vm1741 = vcmp.eq.s32.totalorder %v42, %v1724
    %vm1742 = vcmp.eq.s32.totalorder %v42, %v1728
    %vm1743 = vcmp.eq.s32.totalorder %v42, %v1732
    %vm1744 = vcmp.eq.s32.totalorder %v42, %v1736
    %vm1745 = vcmp.eq.s32.totalorder %v43, %v1708
    %vm1746 = vcmp.eq.s32.totalorder %v43, %v1712
    %vm1747 = vcmp.eq.s32.totalorder %v43, %v1716
    %vm1748 = vcmp.eq.s32.totalorder %v43, %v1720
    %vm1749 = vcmp.eq.s32.totalorder %v43, %v1724
    %vm1750 = vcmp.eq.s32.totalorder %v43, %v1728
    %vm1751 = vcmp.eq.s32.totalorder %v43, %v1732
    %vm1752 = vcmp.eq.s32.totalorder %v43, %v1736
    %vm1753 = vcmp.eq.s32.totalorder %v44, %v1708
    %vm1754 = vcmp.eq.s32.totalorder %v44, %v1712
    %vm1755 = vcmp.eq.s32.totalorder %v44, %v1716
    %vm1756 = vcmp.eq.s32.totalorder %v44, %v1720
    %vm1757 = vcmp.eq.s32.totalorder %v44, %v1724
    %vm1758 = vcmp.eq.s32.totalorder %v44, %v1728
    %vm1759 = vcmp.eq.s32.totalorder %v44, %v1732
    %vm1760 = vcmp.eq.s32.totalorder %v44, %v1736
    %vm1761 = vcmp.eq.s32.totalorder %v45, %v1708
    %vm1762 = vcmp.eq.s32.totalorder %v45, %v1712
    %vm1763 = vcmp.eq.s32.totalorder %v45, %v1716
    %vm1764 = vcmp.eq.s32.totalorder %v45, %v1720
    %vm1765 = vcmp.eq.s32.totalorder %v45, %v1724
    %vm1766 = vcmp.eq.s32.totalorder %v45, %v1728
    %vm1767 = vcmp.eq.s32.totalorder %v45, %v1732
    %vm1768 = vcmp.eq.s32.totalorder %v45, %v1736
    %vm1769 = vcmp.eq.s32.totalorder %v46, %v1708
    %vm1770 = vcmp.eq.s32.totalorder %v46, %v1712
    %vm1771 = vcmp.eq.s32.totalorder %v46, %v1716
    %vm1772 = vcmp.eq.s32.totalorder %v46, %v1720
    %vm1773 = vcmp.eq.s32.totalorder %v46, %v1724
    %vm1774 = vcmp.eq.s32.totalorder %v46, %v1728
    %vm1775 = vcmp.eq.s32.totalorder %v46, %v1732
    %vm1776 = vcmp.eq.s32.totalorder %v46, %v1736
    %vm1777 = vcmp.eq.s32.totalorder %v47, %v1708
    %vm1778 = vcmp.eq.s32.totalorder %v47, %v1712
    %vm1779 = vcmp.eq.s32.totalorder %v47, %v1716
    %vm1780 = vcmp.eq.s32.totalorder %v47, %v1720
    %vm1781 = vcmp.eq.s32.totalorder %v47, %v1724
    %vm1782 = vcmp.eq.s32.totalorder %v47, %v1728
    %vm1783 = vcmp.eq.s32.totalorder %v47, %v1732
    %vm1784 = vcmp.eq.s32.totalorder %v47, %v1736
    %vm1785 = vcmp.eq.s32.totalorder %v48, %v1708
    %vm1786 = vcmp.eq.s32.totalorder %v48, %v1712
    %vm1787 = vcmp.eq.s32.totalorder %v48, %v1716
    %vm1788 = vcmp.eq.s32.totalorder %v48, %v1720
    %vm1789 = vcmp.eq.s32.totalorder %v48, %v1724
    %vm1790 = vcmp.eq.s32.totalorder %v48, %v1728
    %vm1791 = vcmp.eq.s32.totalorder %v48, %v1732
    %vm1792 = vcmp.eq.s32.totalorder %v48, %v1736
    %vm1793 = vcmp.eq.s32.totalorder %v49, %v1708
    %vm1794 = vcmp.eq.s32.totalorder %v49, %v1712
    %vm1795 = vcmp.eq.s32.totalorder %v49, %v1716
    %vm1796 = vcmp.eq.s32.totalorder %v49, %v1720
    %vm1797 = vcmp.eq.s32.totalorder %v49, %v1724
    %vm1798 = vcmp.eq.s32.totalorder %v49, %v1728
    %vm1799 = vcmp.eq.s32.totalorder %v49, %v1732
    %vm1800 = vcmp.eq.s32.totalorder %v49, %v1736
    %vm1801 = vcmp.eq.s32.totalorder %v50, %v1708
    %vm1802 = vcmp.eq.s32.totalorder %v50, %v1712
    %vm1803 = vcmp.eq.s32.totalorder %v50, %v1716
    %vm1804 = vcmp.eq.s32.totalorder %v50, %v1720
    %vm1805 = vcmp.eq.s32.totalorder %v50, %v1724
    %vm1806 = vcmp.eq.s32.totalorder %v50, %v1728
    %vm1807 = vcmp.eq.s32.totalorder %v50, %v1732
    %vm1808 = vcmp.eq.s32.totalorder %v50, %v1736
    %vm1809 = vcmp.eq.s32.totalorder %v51, %v1708
    %vm1810 = vcmp.eq.s32.totalorder %v51, %v1712
    %vm1811 = vcmp.eq.s32.totalorder %v51, %v1716
    %vm1812 = vcmp.eq.s32.totalorder %v51, %v1720
    %vm1813 = vcmp.eq.s32.totalorder %v51, %v1724
    %vm1814 = vcmp.eq.s32.totalorder %v51, %v1728
    %vm1815 = vcmp.eq.s32.totalorder %v51, %v1732
    %vm1816 = vcmp.eq.s32.totalorder %v51, %v1736
    %vm1817 = vcmp.eq.s32.totalorder %v52, %v1708
    %vm1818 = vcmp.eq.s32.totalorder %v52, %v1712
    %vm1819 = vcmp.eq.s32.totalorder %v52, %v1716
    %vm1820 = vcmp.eq.s32.totalorder %v52, %v1720
    %vm1821 = vcmp.eq.s32.totalorder %v52, %v1724
    %vm1822 = vcmp.eq.s32.totalorder %v52, %v1728
    %vm1823 = vcmp.eq.s32.totalorder %v52, %v1732
    %vm1824 = vcmp.eq.s32.totalorder %v52, %v1736
    %vm1825 = vcmp.eq.s32.totalorder %v53, %v1708
    %vm1826 = vcmp.eq.s32.totalorder %v53, %v1712
    %vm1827 = vcmp.eq.s32.totalorder %v53, %v1716
    %vm1828 = vcmp.eq.s32.totalorder %v53, %v1720
    %vm1829 = vcmp.eq.s32.totalorder %v53, %v1724
    %vm1830 = vcmp.eq.s32.totalorder %v53, %v1728
    %vm1831 = vcmp.eq.s32.totalorder %v53, %v1732
    %vm1832 = vcmp.eq.s32.totalorder %v53, %v1736
    %vm1833 = vcmp.eq.s32.totalorder %v54, %v1708
    %vm1834 = vcmp.eq.s32.totalorder %v54, %v1712
    %vm1835 = vcmp.eq.s32.totalorder %v54, %v1716
    %vm1836 = vcmp.eq.s32.totalorder %v54, %v1720
    %vm1837 = vcmp.eq.s32.totalorder %v54, %v1724
    %vm1838 = vcmp.eq.s32.totalorder %v54, %v1728
    %vm1839 = vcmp.eq.s32.totalorder %v54, %v1732
    %vm1840 = vcmp.eq.s32.totalorder %v54, %v1736
    %vm1841 = vcmp.eq.s32.totalorder %v55, %v1708
    %vm1842 = vcmp.eq.s32.totalorder %v55, %v1712
    %vm1843 = vcmp.eq.s32.totalorder %v55, %v1716
    %vm1844 = vcmp.eq.s32.totalorder %v55, %v1720
    %vm1845 = vcmp.eq.s32.totalorder %v55, %v1724
    %vm1846 = vcmp.eq.s32.totalorder %v55, %v1728
    %vm1847 = vcmp.eq.s32.totalorder %v55, %v1732
    %vm1848 = vcmp.eq.s32.totalorder %v55, %v1736
    %vm1849 = vcmp.eq.s32.totalorder %v56, %v1708
    %vm1850 = vcmp.eq.s32.totalorder %v56, %v1712
    %vm1851 = vcmp.eq.s32.totalorder %v56, %v1716
    %vm1852 = vcmp.eq.s32.totalorder %v56, %v1720
    %vm1853 = vcmp.eq.s32.totalorder %v56, %v1724
    %vm1854 = vcmp.eq.s32.totalorder %v56, %v1728
    %vm1855 = vcmp.eq.s32.totalorder %v56, %v1732
    %vm1856 = vcmp.eq.s32.totalorder %v56, %v1736
    %vm1857 = vcmp.eq.s32.totalorder %v57, %v1708
    %vm1858 = vcmp.eq.s32.totalorder %v57, %v1712
    %vm1859 = vcmp.eq.s32.totalorder %v57, %v1716
    %vm1860 = vcmp.eq.s32.totalorder %v57, %v1720
    %vm1861 = vcmp.eq.s32.totalorder %v57, %v1724
    %vm1862 = vcmp.eq.s32.totalorder %v57, %v1728
    %vm1863 = vcmp.eq.s32.totalorder %v57, %v1732
    %vm1864 = vcmp.eq.s32.totalorder %v57, %v1736
    %v1865 = vsel %vm1737, 1, 0
    %v1866 = vsel %vm1738, 1, 0
    %v1867 = vsel %vm1739, 1, 0
    %v1868 = vsel %vm1740, 1, 0
    %v1869 = vsel %vm1741, 1, 0
    %v1870 = vsel %vm1742, 1, 0
    %v1871 = vsel %vm1743, 1, 0
    %v1872 = vsel %vm1744, 1, 0
    %v1873 = vsel %vm1745, 1, 0
    %v1874 = vsel %vm1746, 1, 0
    %v1875 = vsel %vm1747, 1, 0
    %v1876 = vsel %vm1748, 1, 0
    %v1877 = vsel %vm1749, 1, 0
    %v1878 = vsel %vm1750, 1, 0
    %v1879 = vsel %vm1751, 1, 0
    %v1880 = vsel %vm1752, 1, 0
    %v1881 = vsel %vm1753, 1, 0
    %v1882 = vsel %vm1754, 1, 0
    %v1883 = vsel %vm1755, 1, 0
    %v1884 = vsel %vm1756, 1, 0
    %v1885 = vsel %vm1757, 1, 0
    %v1886 = vsel %vm1758, 1, 0
    %v1887 = vsel %vm1759, 1, 0
    %v1888 = vsel %vm1760, 1, 0
    %v1889 = vsel %vm1761, 1, 0
    %v1890 = vsel %vm1762, 1, 0
    %v1891 = vsel %vm1763, 1, 0
    %v1892 = vsel %vm1764, 1, 0
    %v1893 = vsel %vm1765, 1, 0
    %v1894 = vsel %vm1766, 1, 0
    %v1895 = vsel %vm1767, 1, 0
    %v1896 = vsel %vm1768, 1, 0
    %v1897 = vsel %vm1769, 1, 0
    %v1898 = vsel %vm1770, 1, 0
    %v1899 = vsel %vm1771, 1, 0
    %v1900 = vsel %vm1772, 1, 0
    %v1901 = vsel %vm1773, 1, 0
    %v1902 = vsel %vm1774, 1, 0
    %v1903 = vsel %vm1775, 1, 0
    %v1904 = vsel %vm1776, 1, 0
    %v1905 = vsel %vm1777, 1, 0
    %v1906 = vsel %vm1778, 1, 0
    %v1907 = vsel %vm1779, 1, 0
    %v1908 = vsel %vm1780, 1, 0
    %v1909 = vsel %vm1781, 1, 0
    %v1910 = vsel %vm1782, 1, 0
    %v1911 = vsel %vm1783, 1, 0
    %v1912 = vsel %vm1784, 1, 0
    %v1913 = vsel %vm1785, 1, 0
    %v1914 = vsel %vm1786, 1, 0
    %v1915 = vsel %vm1787, 1, 0
    %v1916 = vsel %vm1788, 1, 0
    %v1917 = vsel %vm1789, 1, 0
    %v1918 = vsel %vm1790, 1, 0
    %v1919 = vsel %vm1791, 1, 0
    %v1920 = vsel %vm1792, 1, 0
    %v1921 = vsel %vm1793, 1, 0
    %v1922 = vsel %vm1794, 1, 0
    %v1923 = vsel %vm1795, 1, 0
    %v1924 = vsel %vm1796, 1, 0
    %v1925 = vsel %vm1797, 1, 0
    %v1926 = vsel %vm1798, 1, 0
    %v1927 = vsel %vm1799, 1, 0
    %v1928 = vsel %vm1800, 1, 0
    %v1929 = vsel %vm1801, 1, 0
    %v1930 = vsel %vm1802, 1, 0
    %v1931 = vsel %vm1803, 1, 0
    %v1932 = vsel %vm1804, 1, 0
    %v1933 = vsel %vm1805, 1, 0
    %v1934 = vsel %vm1806, 1, 0
    %v1935 = vsel %vm1807, 1, 0
    %v1936 = vsel %vm1808, 1, 0
    %v1937 = vsel %vm1809, 1, 0
    %v1938 = vsel %vm1810, 1, 0
    %v1939 = vsel %vm1811, 1, 0
    %v1940 = vsel %vm1812, 1, 0
    %v1941 = vsel %vm1813, 1, 0
    %v1942 = vsel %vm1814, 1, 0
    %v1943 = vsel %vm1815, 1, 0
    %v1944 = vsel %vm1816, 1, 0
    %v1945 = vsel %vm1817, 1, 0
    %v1946 = vsel %vm1818, 1, 0
    %v1947 = vsel %vm1819, 1, 0
    %v1948 = vsel %vm1820, 1, 0
    %v1949 = vsel %vm1821, 1, 0
    %v1950 = vsel %vm1822, 1, 0
    %v1951 = vsel %vm1823, 1, 0
    %v1952 = vsel %vm1824, 1, 0
    %v1953 = vsel %vm1825, 1, 0
    %v1954 = vsel %vm1826, 1, 0
    %v1955 = vsel %vm1827, 1, 0
    %v1956 = vsel %vm1828, 1, 0
    %v1957 = vsel %vm1829, 1, 0
    %v1958 = vsel %vm1830, 1, 0
    %v1959 = vsel %vm1831, 1, 0
    %v1960 = vsel %vm1832, 1, 0
    %v1961 = vsel %vm1833, 1, 0
    %v1962 = vsel %vm1834, 1, 0
    %v1963 = vsel %vm1835, 1, 0
    %v1964 = vsel %vm1836, 1, 0
    %v1965 = vsel %vm1837, 1, 0
    %v1966 = vsel %vm1838, 1, 0
    %v1967 = vsel %vm1839, 1, 0
    %v1968 = vsel %vm1840, 1, 0
    %v1969 = vsel %vm1841, 1, 0
    %v1970 = vsel %vm1842, 1, 0
    %v1971 = vsel %vm1843, 1, 0
    %v1972 = vsel %vm1844, 1, 0
    %v1973 = vsel %vm1845, 1, 0
    %v1974 = vsel %vm1846, 1, 0
    %v1975 = vsel %vm1847, 1, 0
    %v1976 = vsel %vm1848, 1, 0
    %v1977 = vsel %vm1849, 1, 0
    %v1978 = vsel %vm1850, 1, 0
    %v1979 = vsel %vm1851, 1, 0
    %v1980 = vsel %vm1852, 1, 0
    %v1981 = vsel %vm1853, 1, 0
    %v1982 = vsel %vm1854, 1, 0
    %v1983 = vsel %vm1855, 1, 0
    %v1984 = vsel %vm1856, 1, 0
    %v1985 = vsel %vm1857, 1, 0
    %v1986 = vsel %vm1858, 1, 0
    %v1987 = vsel %vm1859, 1, 0
    %v1988 = vsel %vm1860, 1, 0
    %v1989 = vsel %vm1861, 1, 0
    %v1990 = vsel %vm1862, 1, 0
    %v1991 = vsel %vm1863, 1, 0
    %v1992 = vsel %vm1864, 1, 0
    %v1993 = vcvt.s32.f32 %v1865
    %v1994 = vcvt.s32.f32 %v1866
    %v1995 = vcvt.s32.f32 %v1867
    %v1996 = vcvt.s32.f32 %v1868
    %v1997 = vcvt.s32.f32 %v1869
    %v1998 = vcvt.s32.f32 %v1870
    %v1999 = vcvt.s32.f32 %v1871
    %v2000 = vcvt.s32.f32 %v1872
    %v2001 = vcvt.s32.f32 %v1873
    %v2002 = vcvt.s32.f32 %v1874
    %v2003 = vcvt.s32.f32 %v1875
    %v2004 = vcvt.s32.f32 %v1876
    %v2005 = vcvt.s32.f32 %v1877
    %v2006 = vcvt.s32.f32 %v1878
    %v2007 = vcvt.s32.f32 %v1879
    %v2008 = vcvt.s32.f32 %v1880
    %v2009 = vcvt.s32.f32 %v1881
    %v2010 = vcvt.s32.f32 %v1882
    %v2011 = vcvt.s32.f32 %v1883
    %v2012 = vcvt.s32.f32 %v1884
    %v2013 = vcvt.s32.f32 %v1885
    %v2014 = vcvt.s32.f32 %v1886
    %v2015 = vcvt.s32.f32 %v1887
    %v2016 = vcvt.s32.f32 %v1888
    %v2017 = vcvt.s32.f32 %v1889
    %v2018 = vcvt.s32.f32 %v1890
    %v2019 = vcvt.s32.f32 %v1891
    %v2020 = vcvt.s32.f32 %v1892
    %v2021 = vcvt.s32.f32 %v1893
    %v2022 = vcvt.s32.f32 %v1894
    %v2023 = vcvt.s32.f32 %v1895
    %v2024 = vcvt.s32.f32 %v1896
    %v2025 = vcvt.s32.f32 %v1897
    %v2026 = vcvt.s32.f32 %v1898
    %v2027 = vcvt.s32.f32 %v1899
    %v2028 = vcvt.s32.f32 %v1900
    %v2029 = vcvt.s32.f32 %v1901
    %v2030 = vcvt.s32.f32 %v1902
    %v2031 = vcvt.s32.f32 %v1903
    %v2032 = vcvt.s32.f32 %v1904
    %v2033 = vcvt.s32.f32 %v1905
    %v2034 = vcvt.s32.f32 %v1906
    %v2035 = vcvt.s32.f32 %v1907
    %v2036 = vcvt.s32.f32 %v1908
    %v2037 = vcvt.s32.f32 %v1909
    %v2038 = vcvt.s32.f32 %v1910
    %v2039 = vcvt.s32.f32 %v1911
    %v2040 = vcvt.s32.f32 %v1912
    %v2041 = vcvt.s32.f32 %v1913
    %v2042 = vcvt.s32.f32 %v1914
    %v2043 = vcvt.s32.f32 %v1915
    %v2044 = vcvt.s32.f32 %v1916
    %v2045 = vcvt.s32.f32 %v1917
    %v2046 = vcvt.s32.f32 %v1918
    %v2047 = vcvt.s32.f32 %v1919
    %v2048 = vcvt.s32.f32 %v1920
    %v2049 = vcvt.s32.f32 %v1921
    %v2050 = vcvt.s32.f32 %v1922
    %v2051 = vcvt.s32.f32 %v1923
    %v2052 = vcvt.s32.f32 %v1924
    %v2053 = vcvt.s32.f32 %v1925
    %v2054 = vcvt.s32.f32 %v1926
    %v2055 = vcvt.s32.f32 %v1927
    %v2056 = vcvt.s32.f32 %v1928
    %v2057 = vcvt.s32.f32 %v1929
    %v2058 = vcvt.s32.f32 %v1930
    %v2059 = vcvt.s32.f32 %v1931
    %v2060 = vcvt.s32.f32 %v1932
    %v2061 = vcvt.s32.f32 %v1933
    %v2062 = vcvt.s32.f32 %v1934
    %v2063 = vcvt.s32.f32 %v1935
    %v2064 = vcvt.s32.f32 %v1936
    %v2065 = vcvt.s32.f32 %v1937
    %v2066 = vcvt.s32.f32 %v1938
    %v2067 = vcvt.s32.f32 %v1939
    %v2068 = vcvt.s32.f32 %v1940
    %v2069 = vcvt.s32.f32 %v1941
    %v2070 = vcvt.s32.f32 %v1942
    %v2071 = vcvt.s32.f32 %v1943
    %v2072 = vcvt.s32.f32 %v1944
    %v2073 = vcvt.s32.f32 %v1945
    %v2074 = vcvt.s32.f32 %v1946
    %v2075 = vcvt.s32.f32 %v1947
    %v2076 = vcvt.s32.f32 %v1948
    %v2077 = vcvt.s32.f32 %v1949
    %v2078 = vcvt.s32.f32 %v1950
    %v2079 = vcvt.s32.f32 %v1951
    %v2080 = vcvt.s32.f32 %v1952
    %v2081 = vcvt.s32.f32 %v1953
    %v2082 = vcvt.s32.f32 %v1954
    %v2083 = vcvt.s32.f32 %v1955
    %v2084 = vcvt.s32.f32 %v1956
    %v2085 = vcvt.s32.f32 %v1957
    %v2086 = vcvt.s32.f32 %v1958
    %v2087 = vcvt.s32.f32 %v1959
    %v2088 = vcvt.s32.f32 %v1960
    %v2089 = vcvt.s32.f32 %v1961
    %v2090 = vcvt.s32.f32 %v1962
    %v2091 = vcvt.s32.f32 %v1963
    %v2092 = vcvt.s32.f32 %v1964
    %v2093 = vcvt.s32.f32 %v1965
    %v2094 = vcvt.s32.f32 %v1966
    %v2095 = vcvt.s32.f32 %v1967
    %v2096 = vcvt.s32.f32 %v1968
    %v2097 = vcvt.s32.f32 %v1969
    %v2098 = vcvt.s32.f32 %v1970
    %v2099 = vcvt.s32.f32 %v1971
    %v2100 = vcvt.s32.f32 %v1972
    %v2101 = vcvt.s32.f32 %v1973
    %v2102 = vcvt.s32.f32 %v1974
    %v2103 = vcvt.s32.f32 %v1975
    %v2104 = vcvt.s32.f32 %v1976
    %v2105 = vcvt.s32.f32 %v1977
    %v2106 = vcvt.s32.f32 %v1978
    %v2107 = vcvt.s32.f32 %v1979
    %v2108 = vcvt.s32.f32 %v1980
    %v2109 = vcvt.s32.f32 %v1981
    %v2110 = vcvt.s32.f32 %v1982
    %v2111 = vcvt.s32.f32 %v1983
    %v2112 = vcvt.s32.f32 %v1984
    %v2113 = vcvt.s32.f32 %v1985
    %v2114 = vcvt.s32.f32 %v1986
    %v2115 = vcvt.s32.f32 %v1987
    %v2116 = vcvt.s32.f32 %v1988
    %v2117 = vcvt.s32.f32 %v1989
    %v2118 = vcvt.s32.f32 %v1990
    %v2119 = vcvt.s32.f32 %v1991
    %v2120 = vcvt.s32.f32 %v1992
    %v2121 = vpack.c.bf16 %v2001, %v1993
    %v2122 = vpack.c.bf16 %v2002, %v1994
    %v2123 = vpack.c.bf16 %v2003, %v1995
    %v2124 = vpack.c.bf16 %v2004, %v1996
    %v2125 = vpack.c.bf16 %v2005, %v1997
    %v2126 = vpack.c.bf16 %v2006, %v1998
    %v2127 = vpack.c.bf16 %v2007, %v1999
    %v2128 = vpack.c.bf16 %v2008, %v2000
    %v2129 = vpack.c.bf16 %v2017, %v2009
    %v2130 = vpack.c.bf16 %v2018, %v2010
    %v2131 = vpack.c.bf16 %v2019, %v2011
    %v2132 = vpack.c.bf16 %v2020, %v2012
    %v2133 = vpack.c.bf16 %v2021, %v2013
    %v2134 = vpack.c.bf16 %v2022, %v2014
    %v2135 = vpack.c.bf16 %v2023, %v2015
    %v2136 = vpack.c.bf16 %v2024, %v2016
    %v2137 = vpack.c.bf16 %v2033, %v2025
    %v2138 = vpack.c.bf16 %v2034, %v2026
    %v2139 = vpack.c.bf16 %v2035, %v2027
    %v2140 = vpack.c.bf16 %v2036, %v2028
    %v2141 = vpack.c.bf16 %v2037, %v2029
    %v2142 = vpack.c.bf16 %v2038, %v2030
    %v2143 = vpack.c.bf16 %v2039, %v2031
    %v2144 = vpack.c.bf16 %v2040, %v2032
    %v2145 = vpack.c.bf16 %v2049, %v2041
    %v2146 = vpack.c.bf16 %v2050, %v2042
    %v2147 = vpack.c.bf16 %v2051, %v2043
    %v2148 = vpack.c.bf16 %v2052, %v2044
    %v2149 = vpack.c.bf16 %v2053, %v2045
    %v2150 = vpack.c.bf16 %v2054, %v2046
    %v2151 = vpack.c.bf16 %v2055, %v2047
    %v2152 = vpack.c.bf16 %v2056, %v2048
    %v2153 = vpack.c.bf16 %v2065, %v2057
    %v2154 = vpack.c.bf16 %v2066, %v2058
    %v2155 = vpack.c.bf16 %v2067, %v2059
    %v2156 = vpack.c.bf16 %v2068, %v2060
    %v2157 = vpack.c.bf16 %v2069, %v2061
    %v2158 = vpack.c.bf16 %v2070, %v2062
    %v2159 = vpack.c.bf16 %v2071, %v2063
    %v2160 = vpack.c.bf16 %v2072, %v2064
    %v2161 = vpack.c.bf16 %v2081, %v2073
    %v2162 = vpack.c.bf16 %v2082, %v2074
    %v2163 = vpack.c.bf16 %v2083, %v2075
    %v2164 = vpack.c.bf16 %v2084, %v2076
    %v2165 = vpack.c.bf16 %v2085, %v2077
    %v2166 = vpack.c.bf16 %v2086, %v2078
    %v2167 = vpack.c.bf16 %v2087, %v2079
    %v2168 = vpack.c.bf16 %v2088, %v2080
    %v2169 = vpack.c.bf16 %v2097, %v2089
    %v2170 = vpack.c.bf16 %v2098, %v2090
    %v2171 = vpack.c.bf16 %v2099, %v2091
    %v2172 = vpack.c.bf16 %v2100, %v2092
    %v2173 = vpack.c.bf16 %v2101, %v2093
    %v2174 = vpack.c.bf16 %v2102, %v2094
    %v2175 = vpack.c.bf16 %v2103, %v2095
    %v2176 = vpack.c.bf16 %v2104, %v2096
    %v2177 = vpack.c.bf16 %v2113, %v2105
    %v2178 = vpack.c.bf16 %v2114, %v2106
    %v2179 = vpack.c.bf16 %v2115, %v2107
    %v2180 = vpack.c.bf16 %v2116, %v2108
    %v2181 = vpack.c.bf16 %v2117, %v2109
    %v2182 = vpack.c.bf16 %v2118, %v2110
    %v2183 = vpack.c.bf16 %v2119, %v2111
    %v2184 = vpack.c.bf16 %v2120, %v2112
    %2185 = vst [vmem:[#allocation2 + $0x600] sm:$0xff] %v2121
    %2186 = vst [vmem:[#allocation2 + $0x608] sm:$0xff] %v2122
    %2187 = vst [vmem:[#allocation2 + $0x610] sm:$0xff] %v2123
    %2188 = vst [vmem:[#allocation2 + $0x618] sm:$0xff] %v2124
    %2189 = vst [vmem:[#allocation2 + $0x620] sm:$0xff] %v2125
    %2190 = vst [vmem:[#allocation2 + $0x628] sm:$0xff] %v2126
    %2191 = vst [vmem:[#allocation2 + $0x630] sm:$0xff] %v2127
    %2192 = vst [vmem:[#allocation2 + $0x638] sm:$0xff] %v2128
    %2193 = vst [vmem:[#allocation2 + $0x640] sm:$0xff] %v2129
    %2194 = vst [vmem:[#allocation2 + $0x648] sm:$0xff] %v2130
    %2195 = vst [vmem:[#allocation2 + $0x650] sm:$0xff] %v2131
    %2196 = vst [vmem:[#allocation2 + $0x658] sm:$0xff] %v2132
    %2197 = vst [vmem:[#allocation2 + $0x660] sm:$0xff] %v2133
    %2198 = vst [vmem:[#allocation2 + $0x668] sm:$0xff] %v2134
    %2199 = vst [vmem:[#allocation2 + $0x670] sm:$0xff] %v2135
    %2200 = vst [vmem:[#allocation2 + $0x678] sm:$0xff] %v2136
    %2201 = vst [vmem:[#allocation2 + $0x680] sm:$0xff] %v2137
    %2202 = vst [vmem:[#allocation2 + $0x688] sm:$0xff] %v2138
    %2203 = vst [vmem:[#allocation2 + $0x690] sm:$0xff] %v2139
    %2204 = vst [vmem:[#allocation2 + $0x698] sm:$0xff] %v2140
    %2205 = vst [vmem:[#allocation2 + $0x6a0] sm:$0xff] %v2141
    %2206 = vst [vmem:[#allocation2 + $0x6a8] sm:$0xff] %v2142
    %2207 = vst [vmem:[#allocation2 + $0x6b0] sm:$0xff] %v2143
    %2208 = vst [vmem:[#allocation2 + $0x6b8] sm:$0xff] %v2144
    %2209 = vst [vmem:[#allocation2 + $0x6c0] sm:$0xff] %v2145
    %2210 = vst [vmem:[#allocation2 + $0x6c8] sm:$0xff] %v2146
    %2211 = vst [vmem:[#allocation2 + $0x6d0] sm:$0xff] %v2147
    %2212 = vst [vmem:[#allocation2 + $0x6d8] sm:$0xff] %v2148
    %2213 = vst [vmem:[#allocation2 + $0x6e0] sm:$0xff] %v2149
    %2214 = vst [vmem:[#allocation2 + $0x6e8] sm:$0xff] %v2150
    %2215 = vst [vmem:[#allocation2 + $0x6f0] sm:$0xff] %v2151
    %2216 = vst [vmem:[#allocation2 + $0x6f8] sm:$0xff] %v2152
    %2217 = vst [vmem:[#allocation2 + $0x700] sm:$0xff] %v2153
    %2218 = vst [vmem:[#allocation2 + $0x708] sm:$0xff] %v2154
    %2219 = vst [vmem:[#allocation2 + $0x710] sm:$0xff] %v2155
    %2220 = vst [vmem:[#allocation2 + $0x718] sm:$0xff] %v2156
    %2221 = vst [vmem:[#allocation2 + $0x720] sm:$0xff] %v2157
    %2222 = vst [vmem:[#allocation2 + $0x728] sm:$0xff] %v2158
    %2223 = vst [vmem:[#allocation2 + $0x730] sm:$0xff] %v2159
    %2224 = vst [vmem:[#allocation2 + $0x738] sm:$0xff] %v2160
    %2225 = vst [vmem:[#allocation2 + $0x740] sm:$0xff] %v2161
    %2226 = vst [vmem:[#allocation2 + $0x748] sm:$0xff] %v2162
    %2227 = vst [vmem:[#allocation2 + $0x750] sm:$0xff] %v2163
    %2228 = vst [vmem:[#allocation2 + $0x758] sm:$0xff] %v2164
    %2229 = vst [vmem:[#allocation2 + $0x760] sm:$0xff] %v2165
    %2230 = vst [vmem:[#allocation2 + $0x768] sm:$0xff] %v2166
    %2231 = vst [vmem:[#allocation2 + $0x770] sm:$0xff] %v2167
    %2232 = vst [vmem:[#allocation2 + $0x778] sm:$0xff] %v2168
    %2233 = vst [vmem:[#allocation2 + $0x780] sm:$0xff] %v2169
    %2234 = vst [vmem:[#allocation2 + $0x788] sm:$0xff] %v2170
    %2235 = vst [vmem:[#allocation2 + $0x790] sm:$0xff] %v2171
    %2236 = vst [vmem:[#allocation2 + $0x798] sm:$0xff] %v2172
    %2237 = vst [vmem:[#allocation2 + $0x7a0] sm:$0xff] %v2173
    %2238 = vst [vmem:[#allocation2 + $0x7a8] sm:$0xff] %v2174
    %2239 = vst [vmem:[#allocation2 + $0x7b0] sm:$0xff] %v2175
    %2240 = vst [vmem:[#allocation2 + $0x7b8] sm:$0xff] %v2176
    %2241 = vst [vmem:[#allocation2 + $0x7c0] sm:$0xff] %v2177
    %2242 = vst [vmem:[#allocation2 + $0x7c8] sm:$0xff] %v2178
    %2243 = vst [vmem:[#allocation2 + $0x7d0] sm:$0xff] %v2179
    %2244 = vst [vmem:[#allocation2 + $0x7d8] sm:$0xff] %v2180
    %2245 = vst [vmem:[#allocation2 + $0x7e0] sm:$0xff] %v2181
    %2246 = vst [vmem:[#allocation2 + $0x7e8] sm:$0xff] %v2182
    %2247 = vst [vmem:[#allocation2 + $0x7f0] sm:$0xff] %v2183
    %2248 = vst [vmem:[#allocation2 + $0x7f8] sm:$0xff] %v2184
    %s2249 = scalar_lea.vmem [#allocation3], 4
    %v2250 = vld [vmem:[%s2249] ss:$8 sm:$0xf]
    %v2251 = vld [vmem:[%s2249] ss:$8 sm:$0xf0]
    %v2252 = vor.u32 %v2250, %v2251
    %v2253 = vlaneseq
    %v2254 = vshrl.u32 %v2253, 7
    %v2255 = vsub.s32 0, %v2254
    %v2256 = vrot.slane %v2252, %v2255
    %v2257 = vlaneseq
    %v2258 = vshrl.u32 %v2257, 7
    %v2259 = vsub.s32 1, %v2258
    %v2260 = vrot.slane %v2252, %v2259
    %v2261 = vlaneseq
    %v2262 = vshrl.u32 %v2261, 7
    %v2263 = vsub.s32 2, %v2262
    %v2264 = vrot.slane %v2252, %v2263
    %v2265 = vlaneseq
    %v2266 = vshrl.u32 %v2265, 7
    %v2267 = vsub.s32 3, %v2266
    %v2268 = vrot.slane %v2252, %v2267
    %v2269 = vlaneseq
    %v2270 = vshrl.u32 %v2269, 7
    %v2271 = vsub.s32 4, %v2270
    %v2272 = vrot.slane %v2252, %v2271
    %v2273 = vlaneseq
    %v2274 = vshrl.u32 %v2273, 7
    %v2275 = vsub.s32 5, %v2274
    %v2276 = vrot.slane %v2252, %v2275
    %v2277 = vlaneseq
    %v2278 = vshrl.u32 %v2277, 7
    %v2279 = vsub.s32 6, %v2278
    %v2280 = vrot.slane %v2252, %v2279
    %v2281 = vlaneseq
    %v2282 = vshrl.u32 %v2281, 7
    %v2283 = vsub.s32 7, %v2282
    %v2284 = vrot.slane %v2252, %v2283
    %vm2285 = vcmp.eq.s32.totalorder %v42, %v2256
    %vm2286 = vcmp.eq.s32.totalorder %v42, %v2260
    %vm2287 = vcmp.eq.s32.totalorder %v42, %v2264
    %vm2288 = vcmp.eq.s32.totalorder %v42, %v2268
    %vm2289 = vcmp.eq.s32.totalorder %v42, %v2272
    %vm2290 = vcmp.eq.s32.totalorder %v42, %v2276
    %vm2291 = vcmp.eq.s32.totalorder %v42, %v2280
    %vm2292 = vcmp.eq.s32.totalorder %v42, %v2284
    %vm2293 = vcmp.eq.s32.totalorder %v43, %v2256
    %vm2294 = vcmp.eq.s32.totalorder %v43, %v2260
    %vm2295 = vcmp.eq.s32.totalorder %v43, %v2264
    %vm2296 = vcmp.eq.s32.totalorder %v43, %v2268
    %vm2297 = vcmp.eq.s32.totalorder %v43, %v2272
    %vm2298 = vcmp.eq.s32.totalorder %v43, %v2276
    %vm2299 = vcmp.eq.s32.totalorder %v43, %v2280
    %vm2300 = vcmp.eq.s32.totalorder %v43, %v2284
    %vm2301 = vcmp.eq.s32.totalorder %v44, %v2256
    %vm2302 = vcmp.eq.s32.totalorder %v44, %v2260
    %vm2303 = vcmp.eq.s32.totalorder %v44, %v2264
    %vm2304 = vcmp.eq.s32.totalorder %v44, %v2268
    %vm2305 = vcmp.eq.s32.totalorder %v44, %v2272
    %vm2306 = vcmp.eq.s32.totalorder %v44, %v2276
    %vm2307 = vcmp.eq.s32.totalorder %v44, %v2280
    %vm2308 = vcmp.eq.s32.totalorder %v44, %v2284
    %vm2309 = vcmp.eq.s32.totalorder %v45, %v2256
    %vm2310 = vcmp.eq.s32.totalorder %v45, %v2260
    %vm2311 = vcmp.eq.s32.totalorder %v45, %v2264
    %vm2312 = vcmp.eq.s32.totalorder %v45, %v2268
    %vm2313 = vcmp.eq.s32.totalorder %v45, %v2272
    %vm2314 = vcmp.eq.s32.totalorder %v45, %v2276
    %vm2315 = vcmp.eq.s32.totalorder %v45, %v2280
    %vm2316 = vcmp.eq.s32.totalorder %v45, %v2284
    %vm2317 = vcmp.eq.s32.totalorder %v46, %v2256
    %vm2318 = vcmp.eq.s32.totalorder %v46, %v2260
    %vm2319 = vcmp.eq.s32.totalorder %v46, %v2264
    %vm2320 = vcmp.eq.s32.totalorder %v46, %v2268
    %vm2321 = vcmp.eq.s32.totalorder %v46, %v2272
    %vm2322 = vcmp.eq.s32.totalorder %v46, %v2276
    %vm2323 = vcmp.eq.s32.totalorder %v46, %v2280
    %vm2324 = vcmp.eq.s32.totalorder %v46, %v2284
    %vm2325 = vcmp.eq.s32.totalorder %v47, %v2256
    %vm2326 = vcmp.eq.s32.totalorder %v47, %v2260
    %vm2327 = vcmp.eq.s32.totalorder %v47, %v2264
    %vm2328 = vcmp.eq.s32.totalorder %v47, %v2268
    %vm2329 = vcmp.eq.s32.totalorder %v47, %v2272
    %vm2330 = vcmp.eq.s32.totalorder %v47, %v2276
    %vm2331 = vcmp.eq.s32.totalorder %v47, %v2280
    %vm2332 = vcmp.eq.s32.totalorder %v47, %v2284
    %vm2333 = vcmp.eq.s32.totalorder %v48, %v2256
    %vm2334 = vcmp.eq.s32.totalorder %v48, %v2260
    %vm2335 = vcmp.eq.s32.totalorder %v48, %v2264
    %vm2336 = vcmp.eq.s32.totalorder %v48, %v2268
    %vm2337 = vcmp.eq.s32.totalorder %v48, %v2272
    %vm2338 = vcmp.eq.s32.totalorder %v48, %v2276
    %vm2339 = vcmp.eq.s32.totalorder %v48, %v2280
    %vm2340 = vcmp.eq.s32.totalorder %v48, %v2284
    %vm2341 = vcmp.eq.s32.totalorder %v49, %v2256
    %vm2342 = vcmp.eq.s32.totalorder %v49, %v2260
    %vm2343 = vcmp.eq.s32.totalorder %v49, %v2264
    %vm2344 = vcmp.eq.s32.totalorder %v49, %v2268
    %vm2345 = vcmp.eq.s32.totalorder %v49, %v2272
    %vm2346 = vcmp.eq.s32.totalorder %v49, %v2276
    %vm2347 = vcmp.eq.s32.totalorder %v49, %v2280
    %vm2348 = vcmp.eq.s32.totalorder %v49, %v2284
    %vm2349 = vcmp.eq.s32.totalorder %v50, %v2256
    %vm2350 = vcmp.eq.s32.totalorder %v50, %v2260
    %vm2351 = vcmp.eq.s32.totalorder %v50, %v2264
    %vm2352 = vcmp.eq.s32.totalorder %v50, %v2268
    %vm2353 = vcmp.eq.s32.totalorder %v50, %v2272
    %vm2354 = vcmp.eq.s32.totalorder %v50, %v2276
    %vm2355 = vcmp.eq.s32.totalorder %v50, %v2280
    %vm2356 = vcmp.eq.s32.totalorder %v50, %v2284
    %vm2357 = vcmp.eq.s32.totalorder %v51, %v2256
    %vm2358 = vcmp.eq.s32.totalorder %v51, %v2260
    %vm2359 = vcmp.eq.s32.totalorder %v51, %v2264
    %vm2360 = vcmp.eq.s32.totalorder %v51, %v2268
    %vm2361 = vcmp.eq.s32.totalorder %v51, %v2272
    %vm2362 = vcmp.eq.s32.totalorder %v51, %v2276
    %vm2363 = vcmp.eq.s32.totalorder %v51, %v2280
    %vm2364 = vcmp.eq.s32.totalorder %v51, %v2284
    %vm2365 = vcmp.eq.s32.totalorder %v52, %v2256
    %vm2366 = vcmp.eq.s32.totalorder %v52, %v2260
    %vm2367 = vcmp.eq.s32.totalorder %v52, %v2264
    %vm2368 = vcmp.eq.s32.totalorder %v52, %v2268
    %vm2369 = vcmp.eq.s32.totalorder %v52, %v2272
    %vm2370 = vcmp.eq.s32.totalorder %v52, %v2276
    %vm2371 = vcmp.eq.s32.totalorder %v52, %v2280
    %vm2372 = vcmp.eq.s32.totalorder %v52, %v2284
    %vm2373 = vcmp.eq.s32.totalorder %v53, %v2256
    %vm2374 = vcmp.eq.s32.totalorder %v53, %v2260
    %vm2375 = vcmp.eq.s32.totalorder %v53, %v2264
    %vm2376 = vcmp.eq.s32.totalorder %v53, %v2268
    %vm2377 = vcmp.eq.s32.totalorder %v53, %v2272
    %vm2378 = vcmp.eq.s32.totalorder %v53, %v2276
    %vm2379 = vcmp.eq.s32.totalorder %v53, %v2280
    %vm2380 = vcmp.eq.s32.totalorder %v53, %v2284
    %vm2381 = vcmp.eq.s32.totalorder %v54, %v2256
    %vm2382 = vcmp.eq.s32.totalorder %v54, %v2260
    %vm2383 = vcmp.eq.s32.totalorder %v54, %v2264
    %vm2384 = vcmp.eq.s32.totalorder %v54, %v2268
    %vm2385 = vcmp.eq.s32.totalorder %v54, %v2272
    %vm2386 = vcmp.eq.s32.totalorder %v54, %v2276
    %vm2387 = vcmp.eq.s32.totalorder %v54, %v2280
    %vm2388 = vcmp.eq.s32.totalorder %v54, %v2284
    %vm2389 = vcmp.eq.s32.totalorder %v55, %v2256
    %vm2390 = vcmp.eq.s32.totalorder %v55, %v2260
    %vm2391 = vcmp.eq.s32.totalorder %v55, %v2264
    %vm2392 = vcmp.eq.s32.totalorder %v55, %v2268
    %vm2393 = vcmp.eq.s32.totalorder %v55, %v2272
    %vm2394 = vcmp.eq.s32.totalorder %v55, %v2276
    %vm2395 = vcmp.eq.s32.totalorder %v55, %v2280
    %vm2396 = vcmp.eq.s32.totalorder %v55, %v2284
    %vm2397 = vcmp.eq.s32.totalorder %v56, %v2256
    %vm2398 = vcmp.eq.s32.totalorder %v56, %v2260
    %vm2399 = vcmp.eq.s32.totalorder %v56, %v2264
    %vm2400 = vcmp.eq.s32.totalorder %v56, %v2268
    %vm2401 = vcmp.eq.s32.totalorder %v56, %v2272
    %vm2402 = vcmp.eq.s32.totalorder %v56, %v2276
    %vm2403 = vcmp.eq.s32.totalorder %v56, %v2280
    %vm2404 = vcmp.eq.s32.totalorder %v56, %v2284
    %vm2405 = vcmp.eq.s32.totalorder %v57, %v2256
    %vm2406 = vcmp.eq.s32.totalorder %v57, %v2260
    %vm2407 = vcmp.eq.s32.totalorder %v57, %v2264
    %vm2408 = vcmp.eq.s32.totalorder %v57, %v2268
    %vm2409 = vcmp.eq.s32.totalorder %v57, %v2272
    %vm2410 = vcmp.eq.s32.totalorder %v57, %v2276
    %vm2411 = vcmp.eq.s32.totalorder %v57, %v2280
    %vm2412 = vcmp.eq.s32.totalorder %v57, %v2284
    %v2413 = vsel %vm2285, 1, 0
    %v2414 = vsel %vm2286, 1, 0
    %v2415 = vsel %vm2287, 1, 0
    %v2416 = vsel %vm2288, 1, 0
    %v2417 = vsel %vm2289, 1, 0
    %v2418 = vsel %vm2290, 1, 0
    %v2419 = vsel %vm2291, 1, 0
    %v2420 = vsel %vm2292, 1, 0
    %v2421 = vsel %vm2293, 1, 0
    %v2422 = vsel %vm2294, 1, 0
    %v2423 = vsel %vm2295, 1, 0
    %v2424 = vsel %vm2296, 1, 0
    %v2425 = vsel %vm2297, 1, 0
    %v2426 = vsel %vm2298, 1, 0
    %v2427 = vsel %vm2299, 1, 0
    %v2428 = vsel %vm2300, 1, 0
    %v2429 = vsel %vm2301, 1, 0
    %v2430 = vsel %vm2302, 1, 0
    %v2431 = vsel %vm2303, 1, 0
    %v2432 = vsel %vm2304, 1, 0
    %v2433 = vsel %vm2305, 1, 0
    %v2434 = vsel %vm2306, 1, 0
    %v2435 = vsel %vm2307, 1, 0
    %v2436 = vsel %vm2308, 1, 0
    %v2437 = vsel %vm2309, 1, 0
    %v2438 = vsel %vm2310, 1, 0
    %v2439 = vsel %vm2311, 1, 0
    %v2440 = vsel %vm2312, 1, 0
    %v2441 = vsel %vm2313, 1, 0
    %v2442 = vsel %vm2314, 1, 0
    %v2443 = vsel %vm2315, 1, 0
    %v2444 = vsel %vm2316, 1, 0
    %v2445 = vsel %vm2317, 1, 0
    %v2446 = vsel %vm2318, 1, 0
    %v2447 = vsel %vm2319, 1, 0
    %v2448 = vsel %vm2320, 1, 0
    %v2449 = vsel %vm2321, 1, 0
    %v2450 = vsel %vm2322, 1, 0
    %v2451 = vsel %vm2323, 1, 0
    %v2452 = vsel %vm2324, 1, 0
    %v2453 = vsel %vm2325, 1, 0
    %v2454 = vsel %vm2326, 1, 0
    %v2455 = vsel %vm2327, 1, 0
    %v2456 = vsel %vm2328, 1, 0
    %v2457 = vsel %vm2329, 1, 0
    %v2458 = vsel %vm2330, 1, 0
    %v2459 = vsel %vm2331, 1, 0
    %v2460 = vsel %vm2332, 1, 0
    %v2461 = vsel %vm2333, 1, 0
    %v2462 = vsel %vm2334, 1, 0
    %v2463 = vsel %vm2335, 1, 0
    %v2464 = vsel %vm2336, 1, 0
    %v2465 = vsel %vm2337, 1, 0
    %v2466 = vsel %vm2338, 1, 0
    %v2467 = vsel %vm2339, 1, 0
    %v2468 = vsel %vm2340, 1, 0
    %v2469 = vsel %vm2341, 1, 0
    %v2470 = vsel %vm2342, 1, 0
    %v2471 = vsel %vm2343, 1, 0
    %v2472 = vsel %vm2344, 1, 0
    %v2473 = vsel %vm2345, 1, 0
    %v2474 = vsel %vm2346, 1, 0
    %v2475 = vsel %vm2347, 1, 0
    %v2476 = vsel %vm2348, 1, 0
    %v2477 = vsel %vm2349, 1, 0
    %v2478 = vsel %vm2350, 1, 0
    %v2479 = vsel %vm2351, 1, 0
    %v2480 = vsel %vm2352, 1, 0
    %v2481 = vsel %vm2353, 1, 0
    %v2482 = vsel %vm2354, 1, 0
    %v2483 = vsel %vm2355, 1, 0
    %v2484 = vsel %vm2356, 1, 0
    %v2485 = vsel %vm2357, 1, 0
    %v2486 = vsel %vm2358, 1, 0
    %v2487 = vsel %vm2359, 1, 0
    %v2488 = vsel %vm2360, 1, 0
    %v2489 = vsel %vm2361, 1, 0
    %v2490 = vsel %vm2362, 1, 0
    %v2491 = vsel %vm2363, 1, 0
    %v2492 = vsel %vm2364, 1, 0
    %v2493 = vsel %vm2365, 1, 0
    %v2494 = vsel %vm2366, 1, 0
    %v2495 = vsel %vm2367, 1, 0
    %v2496 = vsel %vm2368, 1, 0
    %v2497 = vsel %vm2369, 1, 0
    %v2498 = vsel %vm2370, 1, 0
    %v2499 = vsel %vm2371, 1, 0
    %v2500 = vsel %vm2372, 1, 0
    %v2501 = vsel %vm2373, 1, 0
    %v2502 = vsel %vm2374, 1, 0
    %v2503 = vsel %vm2375, 1, 0
    %v2504 = vsel %vm2376, 1, 0
    %v2505 = vsel %vm2377, 1, 0
    %v2506 = vsel %vm2378, 1, 0
    %v2507 = vsel %vm2379, 1, 0
    %v2508 = vsel %vm2380, 1, 0
    %v2509 = vsel %vm2381, 1, 0
    %v2510 = vsel %vm2382, 1, 0
    %v2511 = vsel %vm2383, 1, 0
    %v2512 = vsel %vm2384, 1, 0
    %v2513 = vsel %vm2385, 1, 0
    %v2514 = vsel %vm2386, 1, 0
    %v2515 = vsel %vm2387, 1, 0
    %v2516 = vsel %vm2388, 1, 0
    %v2517 = vsel %vm2389, 1, 0
    %v2518 = vsel %vm2390, 1, 0
    %v2519 = vsel %vm2391, 1, 0
    %v2520 = vsel %vm2392, 1, 0
    %v2521 = vsel %vm2393, 1, 0
    %v2522 = vsel %vm2394, 1, 0
    %v2523 = vsel %vm2395, 1, 0
    %v2524 = vsel %vm2396, 1, 0
    %v2525 = vsel %vm2397, 1, 0
    %v2526 = vsel %vm2398, 1, 0
    %v2527 = vsel %vm2399, 1, 0
    %v2528 = vsel %vm2400, 1, 0
    %v2529 = vsel %vm2401, 1, 0
    %v2530 = vsel %vm2402, 1, 0
    %v2531 = vsel %vm2403, 1, 0
    %v2532 = vsel %vm2404, 1, 0
    %v2533 = vsel %vm2405, 1, 0
    %v2534 = vsel %vm2406, 1, 0
    %v2535 = vsel %vm2407, 1, 0
    %v2536 = vsel %vm2408, 1, 0
    %v2537 = vsel %vm2409, 1, 0
    %v2538 = vsel %vm2410, 1, 0
    %v2539 = vsel %vm2411, 1, 0
    %v2540 = vsel %vm2412, 1, 0
    %v2541 = vcvt.s32.f32 %v2413
    %v2542 = vcvt.s32.f32 %v2414
    %v2543 = vcvt.s32.f32 %v2415
    %v2544 = vcvt.s32.f32 %v2416
    %v2545 = vcvt.s32.f32 %v2417
    %v2546 = vcvt.s32.f32 %v2418
    %v2547 = vcvt.s32.f32 %v2419
    %v2548 = vcvt.s32.f32 %v2420
    %v2549 = vcvt.s32.f32 %v2421
    %v2550 = vcvt.s32.f32 %v2422
    %v2551 = vcvt.s32.f32 %v2423
    %v2552 = vcvt.s32.f32 %v2424
    %v2553 = vcvt.s32.f32 %v2425
    %v2554 = vcvt.s32.f32 %v2426
    %v2555 = vcvt.s32.f32 %v2427
    %v2556 = vcvt.s32.f32 %v2428
    %v2557 = vcvt.s32.f32 %v2429
    %v2558 = vcvt.s32.f32 %v2430
    %v2559 = vcvt.s32.f32 %v2431
    %v2560 = vcvt.s32.f32 %v2432
    %v2561 = vcvt.s32.f32 %v2433
    %v2562 = vcvt.s32.f32 %v2434
    %v2563 = vcvt.s32.f32 %v2435
    %v2564 = vcvt.s32.f32 %v2436
    %v2565 = vcvt.s32.f32 %v2437
    %v2566 = vcvt.s32.f32 %v2438
    %v2567 = vcvt.s32.f32 %v2439
    %v2568 = vcvt.s32.f32 %v2440
    %v2569 = vcvt.s32.f32 %v2441
    %v2570 = vcvt.s32.f32 %v2442
    %v2571 = vcvt.s32.f32 %v2443
    %v2572 = vcvt.s32.f32 %v2444
    %v2573 = vcvt.s32.f32 %v2445
    %v2574 = vcvt.s32.f32 %v2446
    %v2575 = vcvt.s32.f32 %v2447
    %v2576 = vcvt.s32.f32 %v2448
    %v2577 = vcvt.s32.f32 %v2449
    %v2578 = vcvt.s32.f32 %v2450
    %v2579 = vcvt.s32.f32 %v2451
    %v2580 = vcvt.s32.f32 %v2452
    %v2581 = vcvt.s32.f32 %v2453
    %v2582 = vcvt.s32.f32 %v2454
    %v2583 = vcvt.s32.f32 %v2455
    %v2584 = vcvt.s32.f32 %v2456
    %v2585 = vcvt.s32.f32 %v2457
    %v2586 = vcvt.s32.f32 %v2458
    %v2587 = vcvt.s32.f32 %v2459
    %v2588 = vcvt.s32.f32 %v2460
    %v2589 = vcvt.s32.f32 %v2461
    %v2590 = vcvt.s32.f32 %v2462
    %v2591 = vcvt.s32.f32 %v2463
    %v2592 = vcvt.s32.f32 %v2464
    %v2593 = vcvt.s32.f32 %v2465
    %v2594 = vcvt.s32.f32 %v2466
    %v2595 = vcvt.s32.f32 %v2467
    %v2596 = vcvt.s32.f32 %v2468
    %v2597 = vcvt.s32.f32 %v2469
    %v2598 = vcvt.s32.f32 %v2470
    %v2599 = vcvt.s32.f32 %v2471
    %v2600 = vcvt.s32.f32 %v2472
    %v2601 = vcvt.s32.f32 %v2473
    %v2602 = vcvt.s32.f32 %v2474
    %v2603 = vcvt.s32.f32 %v2475
    %v2604 = vcvt.s32.f32 %v2476
    %v2605 = vcvt.s32.f32 %v2477
    %v2606 = vcvt.s32.f32 %v2478
    %v2607 = vcvt.s32.f32 %v2479
    %v2608 = vcvt.s32.f32 %v2480
    %v2609 = vcvt.s32.f32 %v2481
    %v2610 = vcvt.s32.f32 %v2482
    %v2611 = vcvt.s32.f32 %v2483
    %v2612 = vcvt.s32.f32 %v2484
    %v2613 = vcvt.s32.f32 %v2485
    %v2614 = vcvt.s32.f32 %v2486
    %v2615 = vcvt.s32.f32 %v2487
    %v2616 = vcvt.s32.f32 %v2488
    %v2617 = vcvt.s32.f32 %v2489
    %v2618 = vcvt.s32.f32 %v2490
    %v2619 = vcvt.s32.f32 %v2491
    %v2620 = vcvt.s32.f32 %v2492
    %v2621 = vcvt.s32.f32 %v2493
    %v2622 = vcvt.s32.f32 %v2494
    %v2623 = vcvt.s32.f32 %v2495
    %v2624 = vcvt.s32.f32 %v2496
    %v2625 = vcvt.s32.f32 %v2497
    %v2626 = vcvt.s32.f32 %v2498
    %v2627 = vcvt.s32.f32 %v2499
    %v2628 = vcvt.s32.f32 %v2500
    %v2629 = vcvt.s32.f32 %v2501
    %v2630 = vcvt.s32.f32 %v2502
    %v2631 = vcvt.s32.f32 %v2503
    %v2632 = vcvt.s32.f32 %v2504
    %v2633 = vcvt.s32.f32 %v2505
    %v2634 = vcvt.s32.f32 %v2506
    %v2635 = vcvt.s32.f32 %v2507
    %v2636 = vcvt.s32.f32 %v2508
    %v2637 = vcvt.s32.f32 %v2509
    %v2638 = vcvt.s32.f32 %v2510
    %v2639 = vcvt.s32.f32 %v2511
    %v2640 = vcvt.s32.f32 %v2512
    %v2641 = vcvt.s32.f32 %v2513
    %v2642 = vcvt.s32.f32 %v2514
    %v2643 = vcvt.s32.f32 %v2515
    %v2644 = vcvt.s32.f32 %v2516
    %v2645 = vcvt.s32.f32 %v2517
    %v2646 = vcvt.s32.f32 %v2518
    %v2647 = vcvt.s32.f32 %v2519
    %v2648 = vcvt.s32.f32 %v2520
    %v2649 = vcvt.s32.f32 %v2521
    %v2650 = vcvt.s32.f32 %v2522
    %v2651 = vcvt.s32.f32 %v2523
    %v2652 = vcvt.s32.f32 %v2524
    %v2653 = vcvt.s32.f32 %v2525
    %v2654 = vcvt.s32.f32 %v2526
    %v2655 = vcvt.s32.f32 %v2527
    %v2656 = vcvt.s32.f32 %v2528
    %v2657 = vcvt.s32.f32 %v2529
    %v2658 = vcvt.s32.f32 %v2530
    %v2659 = vcvt.s32.f32 %v2531
    %v2660 = vcvt.s32.f32 %v2532
    %v2661 = vcvt.s32.f32 %v2533
    %v2662 = vcvt.s32.f32 %v2534
    %v2663 = vcvt.s32.f32 %v2535
    %v2664 = vcvt.s32.f32 %v2536
    %v2665 = vcvt.s32.f32 %v2537
    %v2666 = vcvt.s32.f32 %v2538
    %v2667 = vcvt.s32.f32 %v2539
    %v2668 = vcvt.s32.f32 %v2540
    %v2669 = vpack.c.bf16 %v2549, %v2541
    %v2670 = vpack.c.bf16 %v2550, %v2542
    %v2671 = vpack.c.bf16 %v2551, %v2543
    %v2672 = vpack.c.bf16 %v2552, %v2544
    %v2673 = vpack.c.bf16 %v2553, %v2545
    %v2674 = vpack.c.bf16 %v2554, %v2546
    %v2675 = vpack.c.bf16 %v2555, %v2547
    %v2676 = vpack.c.bf16 %v2556, %v2548
    %v2677 = vpack.c.bf16 %v2565, %v2557
    %v2678 = vpack.c.bf16 %v2566, %v2558
    %v2679 = vpack.c.bf16 %v2567, %v2559
    %v2680 = vpack.c.bf16 %v2568, %v2560
    %v2681 = vpack.c.bf16 %v2569, %v2561
    %v2682 = vpack.c.bf16 %v2570, %v2562
    %v2683 = vpack.c.bf16 %v2571, %v2563
    %v2684 = vpack.c.bf16 %v2572, %v2564
    %v2685 = vpack.c.bf16 %v2581, %v2573
    %v2686 = vpack.c.bf16 %v2582, %v2574
    %v2687 = vpack.c.bf16 %v2583, %v2575
    %v2688 = vpack.c.bf16 %v2584, %v2576
    %v2689 = vpack.c.bf16 %v2585, %v2577
    %v2690 = vpack.c.bf16 %v2586, %v2578
    %v2691 = vpack.c.bf16 %v2587, %v2579
    %v2692 = vpack.c.bf16 %v2588, %v2580
    %v2693 = vpack.c.bf16 %v2597, %v2589
    %v2694 = vpack.c.bf16 %v2598, %v2590
    %v2695 = vpack.c.bf16 %v2599, %v2591
    %v2696 = vpack.c.bf16 %v2600, %v2592
    %v2697 = vpack.c.bf16 %v2601, %v2593
    %v2698 = vpack.c.bf16 %v2602, %v2594
    %v2699 = vpack.c.bf16 %v2603, %v2595
    %v2700 = vpack.c.bf16 %v2604, %v2596
    %v2701 = vpack.c.bf16 %v2613, %v2605
    %v2702 = vpack.c.bf16 %v2614, %v2606
    %v2703 = vpack.c.bf16 %v2615, %v2607
    %v2704 = vpack.c.bf16 %v2616, %v2608
    %v2705 = vpack.c.bf16 %v2617, %v2609
    %v2706 = vpack.c.bf16 %v2618, %v2610
    %v2707 = vpack.c.bf16 %v2619, %v2611
    %v2708 = vpack.c.bf16 %v2620, %v2612
    %v2709 = vpack.c.bf16 %v2629, %v2621
    %v2710 = vpack.c.bf16 %v2630, %v2622
    %v2711 = vpack.c.bf16 %v2631, %v2623
    %v2712 = vpack.c.bf16 %v2632, %v2624
    %v2713 = vpack.c.bf16 %v2633, %v2625
    %v2714 = vpack.c.bf16 %v2634, %v2626
    %v2715 = vpack.c.bf16 %v2635, %v2627
    %v2716 = vpack.c.bf16 %v2636, %v2628
    %v2717 = vpack.c.bf16 %v2645, %v2637
    %v2718 = vpack.c.bf16 %v2646, %v2638
    %v2719 = vpack.c.bf16 %v2647, %v2639
    %v2720 = vpack.c.bf16 %v2648, %v2640
    %v2721 = vpack.c.bf16 %v2649, %v2641
    %v2722 = vpack.c.bf16 %v2650, %v2642
    %v2723 = vpack.c.bf16 %v2651, %v2643
    %v2724 = vpack.c.bf16 %v2652, %v2644
    %v2725 = vpack.c.bf16 %v2661, %v2653
    %v2726 = vpack.c.bf16 %v2662, %v2654
    %v2727 = vpack.c.bf16 %v2663, %v2655
    %v2728 = vpack.c.bf16 %v2664, %v2656
    %v2729 = vpack.c.bf16 %v2665, %v2657
    %v2730 = vpack.c.bf16 %v2666, %v2658
    %v2731 = vpack.c.bf16 %v2667, %v2659
    %v2732 = vpack.c.bf16 %v2668, %v2660
    %2733 = vst [vmem:[#allocation2 + $0x800] sm:$0xff] %v2669
    %2734 = vst [vmem:[#allocation2 + $0x808] sm:$0xff] %v2670
    %2735 = vst [vmem:[#allocation2 + $0x810] sm:$0xff] %v2671
    %2736 = vst [vmem:[#allocation2 + $0x818] sm:$0xff] %v2672
    %2737 = vst [vmem:[#allocation2 + $0x820] sm:$0xff] %v2673
    %2738 = vst [vmem:[#allocation2 + $0x828] sm:$0xff] %v2674
    %2739 = vst [vmem:[#allocation2 + $0x830] sm:$0xff] %v2675
    %2740 = vst [vmem:[#allocation2 + $0x838] sm:$0xff] %v2676
    %2741 = vst [vmem:[#allocation2 + $0x840] sm:$0xff] %v2677
    %2742 = vst [vmem:[#allocation2 + $0x848] sm:$0xff] %v2678
    %2743 = vst [vmem:[#allocation2 + $0x850] sm:$0xff] %v2679
    %2744 = vst [vmem:[#allocation2 + $0x858] sm:$0xff] %v2680
    %2745 = vst [vmem:[#allocation2 + $0x860] sm:$0xff] %v2681
    %2746 = vst [vmem:[#allocation2 + $0x868] sm:$0xff] %v2682
    %2747 = vst [vmem:[#allocation2 + $0x870] sm:$0xff] %v2683
    %2748 = vst [vmem:[#allocation2 + $0x878] sm:$0xff] %v2684
    %2749 = vst [vmem:[#allocation2 + $0x880] sm:$0xff] %v2685
    %2750 = vst [vmem:[#allocation2 + $0x888] sm:$0xff] %v2686
    %2751 = vst [vmem:[#allocation2 + $0x890] sm:$0xff] %v2687
    %2752 = vst [vmem:[#allocation2 + $0x898] sm:$0xff] %v2688
    %2753 = vst [vmem:[#allocation2 + $0x8a0] sm:$0xff] %v2689
    %2754 = vst [vmem:[#allocation2 + $0x8a8] sm:$0xff] %v2690
    %2755 = vst [vmem:[#allocation2 + $0x8b0] sm:$0xff] %v2691
    %2756 = vst [vmem:[#allocation2 + $0x8b8] sm:$0xff] %v2692
    %2757 = vst [vmem:[#allocation2 + $0x8c0] sm:$0xff] %v2693
    %2758 = vst [vmem:[#allocation2 + $0x8c8] sm:$0xff] %v2694
    %2759 = vst [vmem:[#allocation2 + $0x8d0] sm:$0xff] %v2695
    %2760 = vst [vmem:[#allocation2 + $0x8d8] sm:$0xff] %v2696
    %2761 = vst [vmem:[#allocation2 + $0x8e0] sm:$0xff] %v2697
    %2762 = vst [vmem:[#allocation2 + $0x8e8] sm:$0xff] %v2698
    %2763 = vst [vmem:[#allocation2 + $0x8f0] sm:$0xff] %v2699
    %2764 = vst [vmem:[#allocation2 + $0x8f8] sm:$0xff] %v2700
    %2765 = vst [vmem:[#allocation2 + $0x900] sm:$0xff] %v2701
    %2766 = vst [vmem:[#allocation2 + $0x908] sm:$0xff] %v2702
    %2767 = vst [vmem:[#allocation2 + $0x910] sm:$0xff] %v2703
    %2768 = vst [vmem:[#allocation2 + $0x918] sm:$0xff] %v2704
    %2769 = vst [vmem:[#allocation2 + $0x920] sm:$0xff] %v2705
    %2770 = vst [vmem:[#allocation2 + $0x928] sm:$0xff] %v2706
    %2771 = vst [vmem:[#allocation2 + $0x930] sm:$0xff] %v2707
    %2772 = vst [vmem:[#allocation2 + $0x938] sm:$0xff] %v2708
    %2773 = vst [vmem:[#allocation2 + $0x940] sm:$0xff] %v2709
    %2774 = vst [vmem:[#allocation2 + $0x948] sm:$0xff] %v2710
    %2775 = vst [vmem:[#allocation2 + $0x950] sm:$0xff] %v2711
    %2776 = vst [vmem:[#allocation2 + $0x958] sm:$0xff] %v2712
    %2777 = vst [vmem:[#allocation2 + $0x960] sm:$0xff] %v2713
    %2778 = vst [vmem:[#allocation2 + $0x968] sm:$0xff] %v2714
    %2779 = vst [vmem:[#allocation2 + $0x970] sm:$0xff] %v2715
    %2780 = vst [vmem:[#allocation2 + $0x978] sm:$0xff] %v2716
    %2781 = vst [vmem:[#allocation2 + $0x980] sm:$0xff] %v2717
    %2782 = vst [vmem:[#allocation2 + $0x988] sm:$0xff] %v2718
    %2783 = vst [vmem:[#allocation2 + $0x990] sm:$0xff] %v2719
    %2784 = vst [vmem:[#allocation2 + $0x998] sm:$0xff] %v2720
    %2785 = vst [vmem:[#allocation2 + $0x9a0] sm:$0xff] %v2721
    %2786 = vst [vmem:[#allocation2 + $0x9a8] sm:$0xff] %v2722
    %2787 = vst [vmem:[#allocation2 + $0x9b0] sm:$0xff] %v2723
    %2788 = vst [vmem:[#allocation2 + $0x9b8] sm:$0xff] %v2724
    %2789 = vst [vmem:[#allocation2 + $0x9c0] sm:$0xff] %v2725
    %2790 = vst [vmem:[#allocation2 + $0x9c8] sm:$0xff] %v2726
    %2791 = vst [vmem:[#allocation2 + $0x9d0] sm:$0xff] %v2727
    %2792 = vst [vmem:[#allocation2 + $0x9d8] sm:$0xff] %v2728
    %2793 = vst [vmem:[#allocation2 + $0x9e0] sm:$0xff] %v2729
    %2794 = vst [vmem:[#allocation2 + $0x9e8] sm:$0xff] %v2730
    %2795 = vst [vmem:[#allocation2 + $0x9f0] sm:$0xff] %v2731
    %2796 = vst [vmem:[#allocation2 + $0x9f8] sm:$0xff] %v2732
    %s2797 = scalar_lea.vmem [#allocation3], 5
    %v2798 = vld [vmem:[%s2797] ss:$8 sm:$0xf]
    %v2799 = vld [vmem:[%s2797] ss:$8 sm:$0xf0]
    %v2800 = vor.u32 %v2798, %v2799
    %v2801 = vlaneseq
    %v2802 = vshrl.u32 %v2801, 7
    %v2803 = vsub.s32 0, %v2802
    %v2804 = vrot.slane %v2800, %v2803
    %v2805 = vlaneseq
    %v2806 = vshrl.u32 %v2805, 7
    %v2807 = vsub.s32 1, %v2806
    %v2808 = vrot.slane %v2800, %v2807
    %v2809 = vlaneseq
    %v2810 = vshrl.u32 %v2809, 7
    %v2811 = vsub.s32 2, %v2810
    %v2812 = vrot.slane %v2800, %v2811
    %v2813 = vlaneseq
    %v2814 = vshrl.u32 %v2813, 7
    %v2815 = vsub.s32 3, %v2814
    %v2816 = vrot.slane %v2800, %v2815
    %v2817 = vlaneseq
    %v2818 = vshrl.u32 %v2817, 7
    %v2819 = vsub.s32 4, %v2818
    %v2820 = vrot.slane %v2800, %v2819
    %v2821 = vlaneseq
    %v2822 = vshrl.u32 %v2821, 7
    %v2823 = vsub.s32 5, %v2822
    %v2824 = vrot.slane %v2800, %v2823
    %v2825 = vlaneseq
    %v2826 = vshrl.u32 %v2825, 7
    %v2827 = vsub.s32 6, %v2826
    %v2828 = vrot.slane %v2800, %v2827
    %v2829 = vlaneseq
    %v2830 = vshrl.u32 %v2829, 7
    %v2831 = vsub.s32 7, %v2830
    %v2832 = vrot.slane %v2800, %v2831
    %vm2833 = vcmp.eq.s32.totalorder %v42, %v2804
    %vm2834 = vcmp.eq.s32.totalorder %v42, %v2808
    %vm2835 = vcmp.eq.s32.totalorder %v42, %v2812
    %vm2836 = vcmp.eq.s32.totalorder %v42, %v2816
    %vm2837 = vcmp.eq.s32.totalorder %v42, %v2820
    %vm2838 = vcmp.eq.s32.totalorder %v42, %v2824
    %vm2839 = vcmp.eq.s32.totalorder %v42, %v2828
    %vm2840 = vcmp.eq.s32.totalorder %v42, %v2832
    %vm2841 = vcmp.eq.s32.totalorder %v43, %v2804
    %vm2842 = vcmp.eq.s32.totalorder %v43, %v2808
    %vm2843 = vcmp.eq.s32.totalorder %v43, %v2812
    %vm2844 = vcmp.eq.s32.totalorder %v43, %v2816
    %vm2845 = vcmp.eq.s32.totalorder %v43, %v2820
    %vm2846 = vcmp.eq.s32.totalorder %v43, %v2824
    %vm2847 = vcmp.eq.s32.totalorder %v43, %v2828
    %vm2848 = vcmp.eq.s32.totalorder %v43, %v2832
    %vm2849 = vcmp.eq.s32.totalorder %v44, %v2804
    %vm2850 = vcmp.eq.s32.totalorder %v44, %v2808
    %vm2851 = vcmp.eq.s32.totalorder %v44, %v2812
    %vm2852 = vcmp.eq.s32.totalorder %v44, %v2816
    %vm2853 = vcmp.eq.s32.totalorder %v44, %v2820
    %vm2854 = vcmp.eq.s32.totalorder %v44, %v2824
    %vm2855 = vcmp.eq.s32.totalorder %v44, %v2828
    %vm2856 = vcmp.eq.s32.totalorder %v44, %v2832
    %vm2857 = vcmp.eq.s32.totalorder %v45, %v2804
    %vm2858 = vcmp.eq.s32.totalorder %v45, %v2808
    %vm2859 = vcmp.eq.s32.totalorder %v45, %v2812
    %vm2860 = vcmp.eq.s32.totalorder %v45, %v2816
    %vm2861 = vcmp.eq.s32.totalorder %v45, %v2820
    %vm2862 = vcmp.eq.s32.totalorder %v45, %v2824
    %vm2863 = vcmp.eq.s32.totalorder %v45, %v2828
    %vm2864 = vcmp.eq.s32.totalorder %v45, %v2832
    %vm2865 = vcmp.eq.s32.totalorder %v46, %v2804
    %vm2866 = vcmp.eq.s32.totalorder %v46, %v2808
    %vm2867 = vcmp.eq.s32.totalorder %v46, %v2812
    %vm2868 = vcmp.eq.s32.totalorder %v46, %v2816
    %vm2869 = vcmp.eq.s32.totalorder %v46, %v2820
    %vm2870 = vcmp.eq.s32.totalorder %v46, %v2824
    %vm2871 = vcmp.eq.s32.totalorder %v46, %v2828
    %vm2872 = vcmp.eq.s32.totalorder %v46, %v2832
    %vm2873 = vcmp.eq.s32.totalorder %v47, %v2804
    %vm2874 = vcmp.eq.s32.totalorder %v47, %v2808
    %vm2875 = vcmp.eq.s32.totalorder %v47, %v2812
    %vm2876 = vcmp.eq.s32.totalorder %v47, %v2816
    %vm2877 = vcmp.eq.s32.totalorder %v47, %v2820
    %vm2878 = vcmp.eq.s32.totalorder %v47, %v2824
    %vm2879 = vcmp.eq.s32.totalorder %v47, %v2828
    %vm2880 = vcmp.eq.s32.totalorder %v47, %v2832
    %vm2881 = vcmp.eq.s32.totalorder %v48, %v2804
    %vm2882 = vcmp.eq.s32.totalorder %v48, %v2808
    %vm2883 = vcmp.eq.s32.totalorder %v48, %v2812
    %vm2884 = vcmp.eq.s32.totalorder %v48, %v2816
    %vm2885 = vcmp.eq.s32.totalorder %v48, %v2820
    %vm2886 = vcmp.eq.s32.totalorder %v48, %v2824
    %vm2887 = vcmp.eq.s32.totalorder %v48, %v2828
    %vm2888 = vcmp.eq.s32.totalorder %v48, %v2832
    %vm2889 = vcmp.eq.s32.totalorder %v49, %v2804
    %vm2890 = vcmp.eq.s32.totalorder %v49, %v2808
    %vm2891 = vcmp.eq.s32.totalorder %v49, %v2812
    %vm2892 = vcmp.eq.s32.totalorder %v49, %v2816
    %vm2893 = vcmp.eq.s32.totalorder %v49, %v2820
    %vm2894 = vcmp.eq.s32.totalorder %v49, %v2824
    %vm2895 = vcmp.eq.s32.totalorder %v49, %v2828
    %vm2896 = vcmp.eq.s32.totalorder %v49, %v2832
    %vm2897 = vcmp.eq.s32.totalorder %v50, %v2804
    %vm2898 = vcmp.eq.s32.totalorder %v50, %v2808
    %vm2899 = vcmp.eq.s32.totalorder %v50, %v2812
    %vm2900 = vcmp.eq.s32.totalorder %v50, %v2816
    %vm2901 = vcmp.eq.s32.totalorder %v50, %v2820
    %vm2902 = vcmp.eq.s32.totalorder %v50, %v2824
    %vm2903 = vcmp.eq.s32.totalorder %v50, %v2828
    %vm2904 = vcmp.eq.s32.totalorder %v50, %v2832
    %vm2905 = vcmp.eq.s32.totalorder %v51, %v2804
    %vm2906 = vcmp.eq.s32.totalorder %v51, %v2808
    %vm2907 = vcmp.eq.s32.totalorder %v51, %v2812
    %vm2908 = vcmp.eq.s32.totalorder %v51, %v2816
    %vm2909 = vcmp.eq.s32.totalorder %v51, %v2820
    %vm2910 = vcmp.eq.s32.totalorder %v51, %v2824
    %vm2911 = vcmp.eq.s32.totalorder %v51, %v2828
    %vm2912 = vcmp.eq.s32.totalorder %v51, %v2832
    %vm2913 = vcmp.eq.s32.totalorder %v52, %v2804
    %vm2914 = vcmp.eq.s32.totalorder %v52, %v2808
    %vm2915 = vcmp.eq.s32.totalorder %v52, %v2812
    %vm2916 = vcmp.eq.s32.totalorder %v52, %v2816
    %vm2917 = vcmp.eq.s32.totalorder %v52, %v2820
    %vm2918 = vcmp.eq.s32.totalorder %v52, %v2824
    %vm2919 = vcmp.eq.s32.totalorder %v52, %v2828
    %vm2920 = vcmp.eq.s32.totalorder %v52, %v2832
    %vm2921 = vcmp.eq.s32.totalorder %v53, %v2804
    %vm2922 = vcmp.eq.s32.totalorder %v53, %v2808
    %vm2923 = vcmp.eq.s32.totalorder %v53, %v2812
    %vm2924 = vcmp.eq.s32.totalorder %v53, %v2816
    %vm2925 = vcmp.eq.s32.totalorder %v53, %v2820
    %vm2926 = vcmp.eq.s32.totalorder %v53, %v2824
    %vm2927 = vcmp.eq.s32.totalorder %v53, %v2828
    %vm2928 = vcmp.eq.s32.totalorder %v53, %v2832
    %vm2929 = vcmp.eq.s32.totalorder %v54, %v2804
    %vm2930 = vcmp.eq.s32.totalorder %v54, %v2808
    %vm2931 = vcmp.eq.s32.totalorder %v54, %v2812
    %vm2932 = vcmp.eq.s32.totalorder %v54, %v2816
    %vm2933 = vcmp.eq.s32.totalorder %v54, %v2820
    %vm2934 = vcmp.eq.s32.totalorder %v54, %v2824
    %vm2935 = vcmp.eq.s32.totalorder %v54, %v2828
    %vm2936 = vcmp.eq.s32.totalorder %v54, %v2832
    %vm2937 = vcmp.eq.s32.totalorder %v55, %v2804
    %vm2938 = vcmp.eq.s32.totalorder %v55, %v2808
    %vm2939 = vcmp.eq.s32.totalorder %v55, %v2812
    %vm2940 = vcmp.eq.s32.totalorder %v55, %v2816
    %vm2941 = vcmp.eq.s32.totalorder %v55, %v2820
    %vm2942 = vcmp.eq.s32.totalorder %v55, %v2824
    %vm2943 = vcmp.eq.s32.totalorder %v55, %v2828
    %vm2944 = vcmp.eq.s32.totalorder %v55, %v2832
    %vm2945 = vcmp.eq.s32.totalorder %v56, %v2804
    %vm2946 = vcmp.eq.s32.totalorder %v56, %v2808
    %vm2947 = vcmp.eq.s32.totalorder %v56, %v2812
    %vm2948 = vcmp.eq.s32.totalorder %v56, %v2816
    %vm2949 = vcmp.eq.s32.totalorder %v56, %v2820
    %vm2950 = vcmp.eq.s32.totalorder %v56, %v2824
    %vm2951 = vcmp.eq.s32.totalorder %v56, %v2828
    %vm2952 = vcmp.eq.s32.totalorder %v56, %v2832
    %vm2953 = vcmp.eq.s32.totalorder %v57, %v2804
    %vm2954 = vcmp.eq.s32.totalorder %v57, %v2808
    %vm2955 = vcmp.eq.s32.totalorder %v57, %v2812
    %vm2956 = vcmp.eq.s32.totalorder %v57, %v2816
    %vm2957 = vcmp.eq.s32.totalorder %v57, %v2820
    %vm2958 = vcmp.eq.s32.totalorder %v57, %v2824
    %vm2959 = vcmp.eq.s32.totalorder %v57, %v2828
    %vm2960 = vcmp.eq.s32.totalorder %v57, %v2832
    %v2961 = vsel %vm2833, 1, 0
    %v2962 = vsel %vm2834, 1, 0
    %v2963 = vsel %vm2835, 1, 0
    %v2964 = vsel %vm2836, 1, 0
    %v2965 = vsel %vm2837, 1, 0
    %v2966 = vsel %vm2838, 1, 0
    %v2967 = vsel %vm2839, 1, 0
    %v2968 = vsel %vm2840, 1, 0
    %v2969 = vsel %vm2841, 1, 0
    %v2970 = vsel %vm2842, 1, 0
    %v2971 = vsel %vm2843, 1, 0
    %v2972 = vsel %vm2844, 1, 0
    %v2973 = vsel %vm2845, 1, 0
    %v2974 = vsel %vm2846, 1, 0
    %v2975 = vsel %vm2847, 1, 0
    %v2976 = vsel %vm2848, 1, 0
    %v2977 = vsel %vm2849, 1, 0
    %v2978 = vsel %vm2850, 1, 0
    %v2979 = vsel %vm2851, 1, 0
    %v2980 = vsel %vm2852, 1, 0
    %v2981 = vsel %vm2853, 1, 0
    %v2982 = vsel %vm2854, 1, 0
    %v2983 = vsel %vm2855, 1, 0
    %v2984 = vsel %vm2856, 1, 0
    %v2985 = vsel %vm2857, 1, 0
    %v2986 = vsel %vm2858, 1, 0
    %v2987 = vsel %vm2859, 1, 0
    %v2988 = vsel %vm2860, 1, 0
    %v2989 = vsel %vm2861, 1, 0
    %v2990 = vsel %vm2862, 1, 0
    %v2991 = vsel %vm2863, 1, 0
    %v2992 = vsel %vm2864, 1, 0
    %v2993 = vsel %vm2865, 1, 0
    %v2994 = vsel %vm2866, 1, 0
    %v2995 = vsel %vm2867, 1, 0
    %v2996 = vsel %vm2868, 1, 0
    %v2997 = vsel %vm2869, 1, 0
    %v2998 = vsel %vm2870, 1, 0
    %v2999 = vsel %vm2871, 1, 0
    %v3000 = vsel %vm2872, 1, 0
    %v3001 = vsel %vm2873, 1, 0
    %v3002 = vsel %vm2874, 1, 0
    %v3003 = vsel %vm2875, 1, 0
    %v3004 = vsel %vm2876, 1, 0
    %v3005 = vsel %vm2877, 1, 0
    %v3006 = vsel %vm2878, 1, 0
    %v3007 = vsel %vm2879, 1, 0
    %v3008 = vsel %vm2880, 1, 0
    %v3009 = vsel %vm2881, 1, 0
    %v3010 = vsel %vm2882, 1, 0
    %v3011 = vsel %vm2883, 1, 0
    %v3012 = vsel %vm2884, 1, 0
    %v3013 = vsel %vm2885, 1, 0
    %v3014 = vsel %vm2886, 1, 0
    %v3015 = vsel %vm2887, 1, 0
    %v3016 = vsel %vm2888, 1, 0
    %v3017 = vsel %vm2889, 1, 0
    %v3018 = vsel %vm2890, 1, 0
    %v3019 = vsel %vm2891, 1, 0
    %v3020 = vsel %vm2892, 1, 0
    %v3021 = vsel %vm2893, 1, 0
    %v3022 = vsel %vm2894, 1, 0
    %v3023 = vsel %vm2895, 1, 0
    %v3024 = vsel %vm2896, 1, 0
    %v3025 = vsel %vm2897, 1, 0
    %v3026 = vsel %vm2898, 1, 0
    %v3027 = vsel %vm2899, 1, 0
    %v3028 = vsel %vm2900, 1, 0
    %v3029 = vsel %vm2901, 1, 0
    %v3030 = vsel %vm2902, 1, 0
    %v3031 = vsel %vm2903, 1, 0
    %v3032 = vsel %vm2904, 1, 0
    %v3033 = vsel %vm2905, 1, 0
    %v3034 = vsel %vm2906, 1, 0
    %v3035 = vsel %vm2907, 1, 0
    %v3036 = vsel %vm2908, 1, 0
    %v3037 = vsel %vm2909, 1, 0
    %v3038 = vsel %vm2910, 1, 0
    %v3039 = vsel %vm2911, 1, 0
    %v3040 = vsel %vm2912, 1, 0
    %v3041 = vsel %vm2913, 1, 0
    %v3042 = vsel %vm2914, 1, 0
    %v3043 = vsel %vm2915, 1, 0
    %v3044 = vsel %vm2916, 1, 0
    %v3045 = vsel %vm2917, 1, 0
    %v3046 = vsel %vm2918, 1, 0
    %v3047 = vsel %vm2919, 1, 0
    %v3048 = vsel %vm2920, 1, 0
    %v3049 = vsel %vm2921, 1, 0
    %v3050 = vsel %vm2922, 1, 0
    %v3051 = vsel %vm2923, 1, 0
    %v3052 = vsel %vm2924, 1, 0
    %v3053 = vsel %vm2925, 1, 0
    %v3054 = vsel %vm2926, 1, 0
    %v3055 = vsel %vm2927, 1, 0
    %v3056 = vsel %vm2928, 1, 0
    %v3057 = vsel %vm2929, 1, 0
    %v3058 = vsel %vm2930, 1, 0
    %v3059 = vsel %vm2931, 1, 0
    %v3060 = vsel %vm2932, 1, 0
    %v3061 = vsel %vm2933, 1, 0
    %v3062 = vsel %vm2934, 1, 0
    %v3063 = vsel %vm2935, 1, 0
    %v3064 = vsel %vm2936, 1, 0
    %v3065 = vsel %vm2937, 1, 0
    %v3066 = vsel %vm2938, 1, 0
    %v3067 = vsel %vm2939, 1, 0
    %v3068 = vsel %vm2940, 1, 0
    %v3069 = vsel %vm2941, 1, 0
    %v3070 = vsel %vm2942, 1, 0
    %v3071 = vsel %vm2943, 1, 0
    %v3072 = vsel %vm2944, 1, 0
    %v3073 = vsel %vm2945, 1, 0
    %v3074 = vsel %vm2946, 1, 0
    %v3075 = vsel %vm2947, 1, 0
    %v3076 = vsel %vm2948, 1, 0
    %v3077 = vsel %vm2949, 1, 0
    %v3078 = vsel %vm2950, 1, 0
    %v3079 = vsel %vm2951, 1, 0
    %v3080 = vsel %vm2952, 1, 0
    %v3081 = vsel %vm2953, 1, 0
    %v3082 = vsel %vm2954, 1, 0
    %v3083 = vsel %vm2955, 1, 0
    %v3084 = vsel %vm2956, 1, 0
    %v3085 = vsel %vm2957, 1, 0
    %v3086 = vsel %vm2958, 1, 0
    %v3087 = vsel %vm2959, 1, 0
    %v3088 = vsel %vm2960, 1, 0
    %v3089 = vcvt.s32.f32 %v2961
    %v3090 = vcvt.s32.f32 %v2962
    %v3091 = vcvt.s32.f32 %v2963
    %v3092 = vcvt.s32.f32 %v2964
    %v3093 = vcvt.s32.f32 %v2965
    %v3094 = vcvt.s32.f32 %v2966
    %v3095 = vcvt.s32.f32 %v2967
    %v3096 = vcvt.s32.f32 %v2968
    %v3097 = vcvt.s32.f32 %v2969
    %v3098 = vcvt.s32.f32 %v2970
    %v3099 = vcvt.s32.f32 %v2971
    %v3100 = vcvt.s32.f32 %v2972
    %v3101 = vcvt.s32.f32 %v2973
    %v3102 = vcvt.s32.f32 %v2974
    %v3103 = vcvt.s32.f32 %v2975
    %v3104 = vcvt.s32.f32 %v2976
    %v3105 = vcvt.s32.f32 %v2977
    %v3106 = vcvt.s32.f32 %v2978
    %v3107 = vcvt.s32.f32 %v2979
    %v3108 = vcvt.s32.f32 %v2980
    %v3109 = vcvt.s32.f32 %v2981
    %v3110 = vcvt.s32.f32 %v2982
    %v3111 = vcvt.s32.f32 %v2983
    %v3112 = vcvt.s32.f32 %v2984
    %v3113 = vcvt.s32.f32 %v2985
    %v3114 = vcvt.s32.f32 %v2986
    %v3115 = vcvt.s32.f32 %v2987
    %v3116 = vcvt.s32.f32 %v2988
    %v3117 = vcvt.s32.f32 %v2989
    %v3118 = vcvt.s32.f32 %v2990
    %v3119 = vcvt.s32.f32 %v2991
    %v3120 = vcvt.s32.f32 %v2992
    %v3121 = vcvt.s32.f32 %v2993
    %v3122 = vcvt.s32.f32 %v2994
    %v3123 = vcvt.s32.f32 %v2995
    %v3124 = vcvt.s32.f32 %v2996
    %v3125 = vcvt.s32.f32 %v2997
    %v3126 = vcvt.s32.f32 %v2998
    %v3127 = vcvt.s32.f32 %v2999
    %v3128 = vcvt.s32.f32 %v3000
    %v3129 = vcvt.s32.f32 %v3001
    %v3130 = vcvt.s32.f32 %v3002
    %v3131 = vcvt.s32.f32 %v3003
    %v3132 = vcvt.s32.f32 %v3004
    %v3133 = vcvt.s32.f32 %v3005
    %v3134 = vcvt.s32.f32 %v3006
    %v3135 = vcvt.s32.f32 %v3007
    %v3136 = vcvt.s32.f32 %v3008
    %v3137 = vcvt.s32.f32 %v3009
    %v3138 = vcvt.s32.f32 %v3010
    %v3139 = vcvt.s32.f32 %v3011
    %v3140 = vcvt.s32.f32 %v3012
    %v3141 = vcvt.s32.f32 %v3013
    %v3142 = vcvt.s32.f32 %v3014
    %v3143 = vcvt.s32.f32 %v3015
    %v3144 = vcvt.s32.f32 %v3016
    %v3145 = vcvt.s32.f32 %v3017
    %v3146 = vcvt.s32.f32 %v3018
    %v3147 = vcvt.s32.f32 %v3019
    %v3148 = vcvt.s32.f32 %v3020
    %v3149 = vcvt.s32.f32 %v3021
    %v3150 = vcvt.s32.f32 %v3022
    %v3151 = vcvt.s32.f32 %v3023
    %v3152 = vcvt.s32.f32 %v3024
    %v3153 = vcvt.s32.f32 %v3025
    %v3154 = vcvt.s32.f32 %v3026
    %v3155 = vcvt.s32.f32 %v3027
    %v3156 = vcvt.s32.f32 %v3028
    %v3157 = vcvt.s32.f32 %v3029
    %v3158 = vcvt.s32.f32 %v3030
    %v3159 = vcvt.s32.f32 %v3031
    %v3160 = vcvt.s32.f32 %v3032
    %v3161 = vcvt.s32.f32 %v3033
    %v3162 = vcvt.s32.f32 %v3034
    %v3163 = vcvt.s32.f32 %v3035
    %v3164 = vcvt.s32.f32 %v3036
    %v3165 = vcvt.s32.f32 %v3037
    %v3166 = vcvt.s32.f32 %v3038
    %v3167 = vcvt.s32.f32 %v3039
    %v3168 = vcvt.s32.f32 %v3040
    %v3169 = vcvt.s32.f32 %v3041
    %v3170 = vcvt.s32.f32 %v3042
    %v3171 = vcvt.s32.f32 %v3043
    %v3172 = vcvt.s32.f32 %v3044
    %v3173 = vcvt.s32.f32 %v3045
    %v3174 = vcvt.s32.f32 %v3046
    %v3175 = vcvt.s32.f32 %v3047
    %v3176 = vcvt.s32.f32 %v3048
    %v3177 = vcvt.s32.f32 %v3049
    %v3178 = vcvt.s32.f32 %v3050
    %v3179 = vcvt.s32.f32 %v3051
    %v3180 = vcvt.s32.f32 %v3052
    %v3181 = vcvt.s32.f32 %v3053
    %v3182 = vcvt.s32.f32 %v3054
    %v3183 = vcvt.s32.f32 %v3055
    %v3184 = vcvt.s32.f32 %v3056
    %v3185 = vcvt.s32.f32 %v3057
    %v3186 = vcvt.s32.f32 %v3058
    %v3187 = vcvt.s32.f32 %v3059
    %v3188 = vcvt.s32.f32 %v3060
    %v3189 = vcvt.s32.f32 %v3061
    %v3190 = vcvt.s32.f32 %v3062
    %v3191 = vcvt.s32.f32 %v3063
    %v3192 = vcvt.s32.f32 %v3064
    %v3193 = vcvt.s32.f32 %v3065
    %v3194 = vcvt.s32.f32 %v3066
    %v3195 = vcvt.s32.f32 %v3067
    %v3196 = vcvt.s32.f32 %v3068
    %v3197 = vcvt.s32.f32 %v3069
    %v3198 = vcvt.s32.f32 %v3070
    %v3199 = vcvt.s32.f32 %v3071
    %v3200 = vcvt.s32.f32 %v3072
    %v3201 = vcvt.s32.f32 %v3073
    %v3202 = vcvt.s32.f32 %v3074
    %v3203 = vcvt.s32.f32 %v3075
    %v3204 = vcvt.s32.f32 %v3076
    %v3205 = vcvt.s32.f32 %v3077
    %v3206 = vcvt.s32.f32 %v3078
    %v3207 = vcvt.s32.f32 %v3079
    %v3208 = vcvt.s32.f32 %v3080
    %v3209 = vcvt.s32.f32 %v3081
    %v3210 = vcvt.s32.f32 %v3082
    %v3211 = vcvt.s32.f32 %v3083
    %v3212 = vcvt.s32.f32 %v3084
    %v3213 = vcvt.s32.f32 %v3085
    %v3214 = vcvt.s32.f32 %v3086
    %v3215 = vcvt.s32.f32 %v3087
    %v3216 = vcvt.s32.f32 %v3088
    %v3217 = vpack.c.bf16 %v3097, %v3089
    %v3218 = vpack.c.bf16 %v3098, %v3090
    %v3219 = vpack.c.bf16 %v3099, %v3091
    %v3220 = vpack.c.bf16 %v3100, %v3092
    %v3221 = vpack.c.bf16 %v3101, %v3093
    %v3222 = vpack.c.bf16 %v3102, %v3094
    %v3223 = vpack.c.bf16 %v3103, %v3095
    %v3224 = vpack.c.bf16 %v3104, %v3096
    %v3225 = vpack.c.bf16 %v3113, %v3105
    %v3226 = vpack.c.bf16 %v3114, %v3106
    %v3227 = vpack.c.bf16 %v3115, %v3107
    %v3228 = vpack.c.bf16 %v3116, %v3108
    %v3229 = vpack.c.bf16 %v3117, %v3109
    %v3230 = vpack.c.bf16 %v3118, %v3110
    %v3231 = vpack.c.bf16 %v3119, %v3111
    %v3232 = vpack.c.bf16 %v3120, %v3112
    %v3233 = vpack.c.bf16 %v3129, %v3121
    %v3234 = vpack.c.bf16 %v3130, %v3122
    %v3235 = vpack.c.bf16 %v3131, %v3123
    %v3236 = vpack.c.bf16 %v3132, %v3124
    %v3237 = vpack.c.bf16 %v3133, %v3125
    %v3238 = vpack.c.bf16 %v3134, %v3126
    %v3239 = vpack.c.bf16 %v3135, %v3127
    %v3240 = vpack.c.bf16 %v3136, %v3128
    %v3241 = vpack.c.bf16 %v3145, %v3137
    %v3242 = vpack.c.bf16 %v3146, %v3138
    %v3243 = vpack.c.bf16 %v3147, %v3139
    %v3244 = vpack.c.bf16 %v3148, %v3140
    %v3245 = vpack.c.bf16 %v3149, %v3141
    %v3246 = vpack.c.bf16 %v3150, %v3142
    %v3247 = vpack.c.bf16 %v3151, %v3143
    %v3248 = vpack.c.bf16 %v3152, %v3144
    %v3249 = vpack.c.bf16 %v3161, %v3153
    %v3250 = vpack.c.bf16 %v3162, %v3154
    %v3251 = vpack.c.bf16 %v3163, %v3155
    %v3252 = vpack.c.bf16 %v3164, %v3156
    %v3253 = vpack.c.bf16 %v3165, %v3157
    %v3254 = vpack.c.bf16 %v3166, %v3158
    %v3255 = vpack.c.bf16 %v3167, %v3159
    %v3256 = vpack.c.bf16 %v3168, %v3160
    %v3257 = vpack.c.bf16 %v3177, %v3169
    %v3258 = vpack.c.bf16 %v3178, %v3170
    %v3259 = vpack.c.bf16 %v3179, %v3171
    %v3260 = vpack.c.bf16 %v3180, %v3172
    %v3261 = vpack.c.bf16 %v3181, %v3173
    %v3262 = vpack.c.bf16 %v3182, %v3174
    %v3263 = vpack.c.bf16 %v3183, %v3175
    %v3264 = vpack.c.bf16 %v3184, %v3176
    %v3265 = vpack.c.bf16 %v3193, %v3185
    %v3266 = vpack.c.bf16 %v3194, %v3186
    %v3267 = vpack.c.bf16 %v3195, %v3187
    %v3268 = vpack.c.bf16 %v3196, %v3188
    %v3269 = vpack.c.bf16 %v3197, %v3189
    %v3270 = vpack.c.bf16 %v3198, %v3190
    %v3271 = vpack.c.bf16 %v3199, %v3191
    %v3272 = vpack.c.bf16 %v3200, %v3192
    %v3273 = vpack.c.bf16 %v3209, %v3201
    %v3274 = vpack.c.bf16 %v3210, %v3202
    %v3275 = vpack.c.bf16 %v3211, %v3203
    %v3276 = vpack.c.bf16 %v3212, %v3204
    %v3277 = vpack.c.bf16 %v3213, %v3205
    %v3278 = vpack.c.bf16 %v3214, %v3206
    %v3279 = vpack.c.bf16 %v3215, %v3207
    %v3280 = vpack.c.bf16 %v3216, %v3208
    %3281 = vst [vmem:[#allocation2 + $0xa00] sm:$0xff] %v3217
    %3282 = vst [vmem:[#allocation2 + $0xa08] sm:$0xff] %v3218
    %3283 = vst [vmem:[#allocation2 + $0xa10] sm:$0xff] %v3219
    %3284 = vst [vmem:[#allocation2 + $0xa18] sm:$0xff] %v3220
    %3285 = vst [vmem:[#allocation2 + $0xa20] sm:$0xff] %v3221
    %3286 = vst [vmem:[#allocation2 + $0xa28] sm:$0xff] %v3222
    %3287 = vst [vmem:[#allocation2 + $0xa30] sm:$0xff] %v3223
    %3288 = vst [vmem:[#allocation2 + $0xa38] sm:$0xff] %v3224
    %3289 = vst [vmem:[#allocation2 + $0xa40] sm:$0xff] %v3225
    %3290 = vst [vmem:[#allocation2 + $0xa48] sm:$0xff] %v3226
    %3291 = vst [vmem:[#allocation2 + $0xa50] sm:$0xff] %v3227
    %3292 = vst [vmem:[#allocation2 + $0xa58] sm:$0xff] %v3228
    %3293 = vst [vmem:[#allocation2 + $0xa60] sm:$0xff] %v3229
    %3294 = vst [vmem:[#allocation2 + $0xa68] sm:$0xff] %v3230
    %3295 = vst [vmem:[#allocation2 + $0xa70] sm:$0xff] %v3231
    %3296 = vst [vmem:[#allocation2 + $0xa78] sm:$0xff] %v3232
    %3297 = vst [vmem:[#allocation2 + $0xa80] sm:$0xff] %v3233
    %3298 = vst [vmem:[#allocation2 + $0xa88] sm:$0xff] %v3234
    %3299 = vst [vmem:[#allocation2 + $0xa90] sm:$0xff] %v3235
    %3300 = vst [vmem:[#allocation2 + $0xa98] sm:$0xff] %v3236
    %3301 = vst [vmem:[#allocation2 + $0xaa0] sm:$0xff] %v3237
    %3302 = vst [vmem:[#allocation2 + $0xaa8] sm:$0xff] %v3238
    %3303 = vst [vmem:[#allocation2 + $0xab0] sm:$0xff] %v3239
    %3304 = vst [vmem:[#allocation2 + $0xab8] sm:$0xff] %v3240
    %3305 = vst [vmem:[#allocation2 + $0xac0] sm:$0xff] %v3241
    %3306 = vst [vmem:[#allocation2 + $0xac8] sm:$0xff] %v3242
    %3307 = vst [vmem:[#allocation2 + $0xad0] sm:$0xff] %v3243
    %3308 = vst [vmem:[#allocation2 + $0xad8] sm:$0xff] %v3244
    %3309 = vst [vmem:[#allocation2 + $0xae0] sm:$0xff] %v3245
    %3310 = vst [vmem:[#allocation2 + $0xae8] sm:$0xff] %v3246
    %3311 = vst [vmem:[#allocation2 + $0xaf0] sm:$0xff] %v3247
    %3312 = vst [vmem:[#allocation2 + $0xaf8] sm:$0xff] %v3248
    %3313 = vst [vmem:[#allocation2 + $0xb00] sm:$0xff] %v3249
    %3314 = vst [vmem:[#allocation2 + $0xb08] sm:$0xff] %v3250
    %3315 = vst [vmem:[#allocation2 + $0xb10] sm:$0xff] %v3251
    %3316 = vst [vmem:[#allocation2 + $0xb18] sm:$0xff] %v3252
    %3317 = vst [vmem:[#allocation2 + $0xb20] sm:$0xff] %v3253
    %3318 = vst [vmem:[#allocation2 + $0xb28] sm:$0xff] %v3254
    %3319 = vst [vmem:[#allocation2 + $0xb30] sm:$0xff] %v3255
    %3320 = vst [vmem:[#allocation2 + $0xb38] sm:$0xff] %v3256
    %3321 = vst [vmem:[#allocation2 + $0xb40] sm:$0xff] %v3257
    %3322 = vst [vmem:[#allocation2 + $0xb48] sm:$0xff] %v3258
    %3323 = vst [vmem:[#allocation2 + $0xb50] sm:$0xff] %v3259
    %3324 = vst [vmem:[#allocation2 + $0xb58] sm:$0xff] %v3260
    %3325 = vst [vmem:[#allocation2 + $0xb60] sm:$0xff] %v3261
    %3326 = vst [vmem:[#allocation2 + $0xb68] sm:$0xff] %v3262
    %3327 = vst [vmem:[#allocation2 + $0xb70] sm:$0xff] %v3263
    %3328 = vst [vmem:[#allocation2 + $0xb78] sm:$0xff] %v3264
    %3329 = vst [vmem:[#allocation2 + $0xb80] sm:$0xff] %v3265
    %3330 = vst [vmem:[#allocation2 + $0xb88] sm:$0xff] %v3266
    %3331 = vst [vmem:[#allocation2 + $0xb90] sm:$0xff] %v3267
    %3332 = vst [vmem:[#allocation2 + $0xb98] sm:$0xff] %v3268
    %3333 = vst [vmem:[#allocation2 + $0xba0] sm:$0xff] %v3269
    %3334 = vst [vmem:[#allocation2 + $0xba8] sm:$0xff] %v3270
    %3335 = vst [vmem:[#allocation2 + $0xbb0] sm:$0xff] %v3271
    %3336 = vst [vmem:[#allocation2 + $0xbb8] sm:$0xff] %v3272
    %3337 = vst [vmem:[#allocation2 + $0xbc0] sm:$0xff] %v3273
    %3338 = vst [vmem:[#allocation2 + $0xbc8] sm:$0xff] %v3274
    %3339 = vst [vmem:[#allocation2 + $0xbd0] sm:$0xff] %v3275
    %3340 = vst [vmem:[#allocation2 + $0xbd8] sm:$0xff] %v3276
    %3341 = vst [vmem:[#allocation2 + $0xbe0] sm:$0xff] %v3277
    %3342 = vst [vmem:[#allocation2 + $0xbe8] sm:$0xff] %v3278
    %3343 = vst [vmem:[#allocation2 + $0xbf0] sm:$0xff] %v3279
    %3344 = vst [vmem:[#allocation2 + $0xbf8] sm:$0xff] %v3280
    %s3345 = scalar_lea.vmem [#allocation3], 6
    %v3346 = vld [vmem:[%s3345] ss:$8 sm:$0xf]
    %v3347 = vld [vmem:[%s3345] ss:$8 sm:$0xf0]
    %v3348 = vor.u32 %v3346, %v3347
    %v3349 = vlaneseq
    %v3350 = vshrl.u32 %v3349, 7
    %v3351 = vsub.s32 0, %v3350
    %v3352 = vrot.slane %v3348, %v3351
    %v3353 = vlaneseq
    %v3354 = vshrl.u32 %v3353, 7
    %v3355 = vsub.s32 1, %v3354
    %v3356 = vrot.slane %v3348, %v3355
    %v3357 = vlaneseq
    %v3358 = vshrl.u32 %v3357, 7
    %v3359 = vsub.s32 2, %v3358
    %v3360 = vrot.slane %v3348, %v3359
    %v3361 = vlaneseq
    %v3362 = vshrl.u32 %v3361, 7
    %v3363 = vsub.s32 3, %v3362
    %v3364 = vrot.slane %v3348, %v3363
    %v3365 = vlaneseq
    %v3366 = vshrl.u32 %v3365, 7
    %v3367 = vsub.s32 4, %v3366
    %v3368 = vrot.slane %v3348, %v3367
    %v3369 = vlaneseq
    %v3370 = vshrl.u32 %v3369, 7
    %v3371 = vsub.s32 5, %v3370
    %v3372 = vrot.slane %v3348, %v3371
    %v3373 = vlaneseq
    %v3374 = vshrl.u32 %v3373, 7
    %v3375 = vsub.s32 6, %v3374
    %v3376 = vrot.slane %v3348, %v3375
    %v3377 = vlaneseq
    %v3378 = vshrl.u32 %v3377, 7
    %v3379 = vsub.s32 7, %v3378
    %v3380 = vrot.slane %v3348, %v3379
    %vm3381 = vcmp.eq.s32.totalorder %v42, %v3352
    %vm3382 = vcmp.eq.s32.totalorder %v42, %v3356
    %vm3383 = vcmp.eq.s32.totalorder %v42, %v3360
    %vm3384 = vcmp.eq.s32.totalorder %v42, %v3364
    %vm3385 = vcmp.eq.s32.totalorder %v42, %v3368
    %vm3386 = vcmp.eq.s32.totalorder %v42, %v3372
    %vm3387 = vcmp.eq.s32.totalorder %v42, %v3376
    %vm3388 = vcmp.eq.s32.totalorder %v42, %v3380
    %vm3389 = vcmp.eq.s32.totalorder %v43, %v3352
    %vm3390 = vcmp.eq.s32.totalorder %v43, %v3356
    %vm3391 = vcmp.eq.s32.totalorder %v43, %v3360
    %vm3392 = vcmp.eq.s32.totalorder %v43, %v3364
    %vm3393 = vcmp.eq.s32.totalorder %v43, %v3368
    %vm3394 = vcmp.eq.s32.totalorder %v43, %v3372
    %vm3395 = vcmp.eq.s32.totalorder %v43, %v3376
    %vm3396 = vcmp.eq.s32.totalorder %v43, %v3380
    %vm3397 = vcmp.eq.s32.totalorder %v44, %v3352
    %vm3398 = vcmp.eq.s32.totalorder %v44, %v3356
    %vm3399 = vcmp.eq.s32.totalorder %v44, %v3360
    %vm3400 = vcmp.eq.s32.totalorder %v44, %v3364
    %vm3401 = vcmp.eq.s32.totalorder %v44, %v3368
    %vm3402 = vcmp.eq.s32.totalorder %v44, %v3372
    %vm3403 = vcmp.eq.s32.totalorder %v44, %v3376
    %vm3404 = vcmp.eq.s32.totalorder %v44, %v3380
    %vm3405 = vcmp.eq.s32.totalorder %v45, %v3352
    %vm3406 = vcmp.eq.s32.totalorder %v45, %v3356
    %vm3407 = vcmp.eq.s32.totalorder %v45, %v3360
    %vm3408 = vcmp.eq.s32.totalorder %v45, %v3364
    %vm3409 = vcmp.eq.s32.totalorder %v45, %v3368
    %vm3410 = vcmp.eq.s32.totalorder %v45, %v3372
    %vm3411 = vcmp.eq.s32.totalorder %v45, %v3376
    %vm3412 = vcmp.eq.s32.totalorder %v45, %v3380
    %vm3413 = vcmp.eq.s32.totalorder %v46, %v3352
    %vm3414 = vcmp.eq.s32.totalorder %v46, %v3356
    %vm3415 = vcmp.eq.s32.totalorder %v46, %v3360
    %vm3416 = vcmp.eq.s32.totalorder %v46, %v3364
    %vm3417 = vcmp.eq.s32.totalorder %v46, %v3368
    %vm3418 = vcmp.eq.s32.totalorder %v46, %v3372
    %vm3419 = vcmp.eq.s32.totalorder %v46, %v3376
    %vm3420 = vcmp.eq.s32.totalorder %v46, %v3380
    %vm3421 = vcmp.eq.s32.totalorder %v47, %v3352
    %vm3422 = vcmp.eq.s32.totalorder %v47, %v3356
    %vm3423 = vcmp.eq.s32.totalorder %v47, %v3360
    %vm3424 = vcmp.eq.s32.totalorder %v47, %v3364
    %vm3425 = vcmp.eq.s32.totalorder %v47, %v3368
    %vm3426 = vcmp.eq.s32.totalorder %v47, %v3372
    %vm3427 = vcmp.eq.s32.totalorder %v47, %v3376
    %vm3428 = vcmp.eq.s32.totalorder %v47, %v3380
    %vm3429 = vcmp.eq.s32.totalorder %v48, %v3352
    %vm3430 = vcmp.eq.s32.totalorder %v48, %v3356
    %vm3431 = vcmp.eq.s32.totalorder %v48, %v3360
    %vm3432 = vcmp.eq.s32.totalorder %v48, %v3364
    %vm3433 = vcmp.eq.s32.totalorder %v48, %v3368
    %vm3434 = vcmp.eq.s32.totalorder %v48, %v3372
    %vm3435 = vcmp.eq.s32.totalorder %v48, %v3376
    %vm3436 = vcmp.eq.s32.totalorder %v48, %v3380
    %vm3437 = vcmp.eq.s32.totalorder %v49, %v3352
    %vm3438 = vcmp.eq.s32.totalorder %v49, %v3356
    %vm3439 = vcmp.eq.s32.totalorder %v49, %v3360
    %vm3440 = vcmp.eq.s32.totalorder %v49, %v3364
    %vm3441 = vcmp.eq.s32.totalorder %v49, %v3368
    %vm3442 = vcmp.eq.s32.totalorder %v49, %v3372
    %vm3443 = vcmp.eq.s32.totalorder %v49, %v3376
    %vm3444 = vcmp.eq.s32.totalorder %v49, %v3380
    %vm3445 = vcmp.eq.s32.totalorder %v50, %v3352
    %vm3446 = vcmp.eq.s32.totalorder %v50, %v3356
    %vm3447 = vcmp.eq.s32.totalorder %v50, %v3360
    %vm3448 = vcmp.eq.s32.totalorder %v50, %v3364
    %vm3449 = vcmp.eq.s32.totalorder %v50, %v3368
    %vm3450 = vcmp.eq.s32.totalorder %v50, %v3372
    %vm3451 = vcmp.eq.s32.totalorder %v50, %v3376
    %vm3452 = vcmp.eq.s32.totalorder %v50, %v3380
    %vm3453 = vcmp.eq.s32.totalorder %v51, %v3352
    %vm3454 = vcmp.eq.s32.totalorder %v51, %v3356
    %vm3455 = vcmp.eq.s32.totalorder %v51, %v3360
    %vm3456 = vcmp.eq.s32.totalorder %v51, %v3364
    %vm3457 = vcmp.eq.s32.totalorder %v51, %v3368
    %vm3458 = vcmp.eq.s32.totalorder %v51, %v3372
    %vm3459 = vcmp.eq.s32.totalorder %v51, %v3376
    %vm3460 = vcmp.eq.s32.totalorder %v51, %v3380
    %vm3461 = vcmp.eq.s32.totalorder %v52, %v3352
    %vm3462 = vcmp.eq.s32.totalorder %v52, %v3356
    %vm3463 = vcmp.eq.s32.totalorder %v52, %v3360
    %vm3464 = vcmp.eq.s32.totalorder %v52, %v3364
    %vm3465 = vcmp.eq.s32.totalorder %v52, %v3368
    %vm3466 = vcmp.eq.s32.totalorder %v52, %v3372
    %vm3467 = vcmp.eq.s32.totalorder %v52, %v3376
    %vm3468 = vcmp.eq.s32.totalorder %v52, %v3380
    %vm3469 = vcmp.eq.s32.totalorder %v53, %v3352
    %vm3470 = vcmp.eq.s32.totalorder %v53, %v3356
    %vm3471 = vcmp.eq.s32.totalorder %v53, %v3360
    %vm3472 = vcmp.eq.s32.totalorder %v53, %v3364
    %vm3473 = vcmp.eq.s32.totalorder %v53, %v3368
    %vm3474 = vcmp.eq.s32.totalorder %v53, %v3372
    %vm3475 = vcmp.eq.s32.totalorder %v53, %v3376
    %vm3476 = vcmp.eq.s32.totalorder %v53, %v3380
    %vm3477 = vcmp.eq.s32.totalorder %v54, %v3352
    %vm3478 = vcmp.eq.s32.totalorder %v54, %v3356
    %vm3479 = vcmp.eq.s32.totalorder %v54, %v3360
    %vm3480 = vcmp.eq.s32.totalorder %v54, %v3364
    %vm3481 = vcmp.eq.s32.totalorder %v54, %v3368
    %vm3482 = vcmp.eq.s32.totalorder %v54, %v3372
    %vm3483 = vcmp.eq.s32.totalorder %v54, %v3376
    %vm3484 = vcmp.eq.s32.totalorder %v54, %v3380
    %vm3485 = vcmp.eq.s32.totalorder %v55, %v3352
    %vm3486 = vcmp.eq.s32.totalorder %v55, %v3356
    %vm3487 = vcmp.eq.s32.totalorder %v55, %v3360
    %vm3488 = vcmp.eq.s32.totalorder %v55, %v3364
    %vm3489 = vcmp.eq.s32.totalorder %v55, %v3368
    %vm3490 = vcmp.eq.s32.totalorder %v55, %v3372
    %vm3491 = vcmp.eq.s32.totalorder %v55, %v3376
    %vm3492 = vcmp.eq.s32.totalorder %v55, %v3380
    %vm3493 = vcmp.eq.s32.totalorder %v56, %v3352
    %vm3494 = vcmp.eq.s32.totalorder %v56, %v3356
    %vm3495 = vcmp.eq.s32.totalorder %v56, %v3360
    %vm3496 = vcmp.eq.s32.totalorder %v56, %v3364
    %vm3497 = vcmp.eq.s32.totalorder %v56, %v3368
    %vm3498 = vcmp.eq.s32.totalorder %v56, %v3372
    %vm3499 = vcmp.eq.s32.totalorder %v56, %v3376
    %vm3500 = vcmp.eq.s32.totalorder %v56, %v3380
    %vm3501 = vcmp.eq.s32.totalorder %v57, %v3352
    %vm3502 = vcmp.eq.s32.totalorder %v57, %v3356
    %vm3503 = vcmp.eq.s32.totalorder %v57, %v3360
    %vm3504 = vcmp.eq.s32.totalorder %v57, %v3364
    %vm3505 = vcmp.eq.s32.totalorder %v57, %v3368
    %vm3506 = vcmp.eq.s32.totalorder %v57, %v3372
    %vm3507 = vcmp.eq.s32.totalorder %v57, %v3376
    %vm3508 = vcmp.eq.s32.totalorder %v57, %v3380
    %v3509 = vsel %vm3381, 1, 0
    %v3510 = vsel %vm3382, 1, 0
    %v3511 = vsel %vm3383, 1, 0
    %v3512 = vsel %vm3384, 1, 0
    %v3513 = vsel %vm3385, 1, 0
    %v3514 = vsel %vm3386, 1, 0
    %v3515 = vsel %vm3387, 1, 0
    %v3516 = vsel %vm3388, 1, 0
    %v3517 = vsel %vm3389, 1, 0
    %v3518 = vsel %vm3390, 1, 0
    %v3519 = vsel %vm3391, 1, 0
    %v3520 = vsel %vm3392, 1, 0
    %v3521 = vsel %vm3393, 1, 0
    %v3522 = vsel %vm3394, 1, 0
    %v3523 = vsel %vm3395, 1, 0
    %v3524 = vsel %vm3396, 1, 0
    %v3525 = vsel %vm3397, 1, 0
    %v3526 = vsel %vm3398, 1, 0
    %v3527 = vsel %vm3399, 1, 0
    %v3528 = vsel %vm3400, 1, 0
    %v3529 = vsel %vm3401, 1, 0
    %v3530 = vsel %vm3402, 1, 0
    %v3531 = vsel %vm3403, 1, 0
    %v3532 = vsel %vm3404, 1, 0
    %v3533 = vsel %vm3405, 1, 0
    %v3534 = vsel %vm3406, 1, 0
    %v3535 = vsel %vm3407, 1, 0
    %v3536 = vsel %vm3408, 1, 0
    %v3537 = vsel %vm3409, 1, 0
    %v3538 = vsel %vm3410, 1, 0
    %v3539 = vsel %vm3411, 1, 0
    %v3540 = vsel %vm3412, 1, 0
    %v3541 = vsel %vm3413, 1, 0
    %v3542 = vsel %vm3414, 1, 0
    %v3543 = vsel %vm3415, 1, 0
    %v3544 = vsel %vm3416, 1, 0
    %v3545 = vsel %vm3417, 1, 0
    %v3546 = vsel %vm3418, 1, 0
    %v3547 = vsel %vm3419, 1, 0
    %v3548 = vsel %vm3420, 1, 0
    %v3549 = vsel %vm3421, 1, 0
    %v3550 = vsel %vm3422, 1, 0
    %v3551 = vsel %vm3423, 1, 0
    %v3552 = vsel %vm3424, 1, 0
    %v3553 = vsel %vm3425, 1, 0
    %v3554 = vsel %vm3426, 1, 0
    %v3555 = vsel %vm3427, 1, 0
    %v3556 = vsel %vm3428, 1, 0
    %v3557 = vsel %vm3429, 1, 0
    %v3558 = vsel %vm3430, 1, 0
    %v3559 = vsel %vm3431, 1, 0
    %v3560 = vsel %vm3432, 1, 0
    %v3561 = vsel %vm3433, 1, 0
    %v3562 = vsel %vm3434, 1, 0
    %v3563 = vsel %vm3435, 1, 0
    %v3564 = vsel %vm3436, 1, 0
    %v3565 = vsel %vm3437, 1, 0
    %v3566 = vsel %vm3438, 1, 0
    %v3567 = vsel %vm3439, 1, 0
    %v3568 = vsel %vm3440, 1, 0
    %v3569 = vsel %vm3441, 1, 0
    %v3570 = vsel %vm3442, 1, 0
    %v3571 = vsel %vm3443, 1, 0
    %v3572 = vsel %vm3444, 1, 0
    %v3573 = vsel %vm3445, 1, 0
    %v3574 = vsel %vm3446, 1, 0
    %v3575 = vsel %vm3447, 1, 0
    %v3576 = vsel %vm3448, 1, 0
    %v3577 = vsel %vm3449, 1, 0
    %v3578 = vsel %vm3450, 1, 0
    %v3579 = vsel %vm3451, 1, 0
    %v3580 = vsel %vm3452, 1, 0
    %v3581 = vsel %vm3453, 1, 0
    %v3582 = vsel %vm3454, 1, 0
    %v3583 = vsel %vm3455, 1, 0
    %v3584 = vsel %vm3456, 1, 0
    %v3585 = vsel %vm3457, 1, 0
    %v3586 = vsel %vm3458, 1, 0
    %v3587 = vsel %vm3459, 1, 0
    %v3588 = vsel %vm3460, 1, 0
    %v3589 = vsel %vm3461, 1, 0
    %v3590 = vsel %vm3462, 1, 0
    %v3591 = vsel %vm3463, 1, 0
    %v3592 = vsel %vm3464, 1, 0
    %v3593 = vsel %vm3465, 1, 0
    %v3594 = vsel %vm3466, 1, 0
    %v3595 = vsel %vm3467, 1, 0
    %v3596 = vsel %vm3468, 1, 0
    %v3597 = vsel %vm3469, 1, 0
    %v3598 = vsel %vm3470, 1, 0
    %v3599 = vsel %vm3471, 1, 0
    %v3600 = vsel %vm3472, 1, 0
    %v3601 = vsel %vm3473, 1, 0
    %v3602 = vsel %vm3474, 1, 0
    %v3603 = vsel %vm3475, 1, 0
    %v3604 = vsel %vm3476, 1, 0
    %v3605 = vsel %vm3477, 1, 0
    %v3606 = vsel %vm3478, 1, 0
    %v3607 = vsel %vm3479, 1, 0
    %v3608 = vsel %vm3480, 1, 0
    %v3609 = vsel %vm3481, 1, 0
    %v3610 = vsel %vm3482, 1, 0
    %v3611 = vsel %vm3483, 1, 0
    %v3612 = vsel %vm3484, 1, 0
    %v3613 = vsel %vm3485, 1, 0
    %v3614 = vsel %vm3486, 1, 0
    %v3615 = vsel %vm3487, 1, 0
    %v3616 = vsel %vm3488, 1, 0
    %v3617 = vsel %vm3489, 1, 0
    %v3618 = vsel %vm3490, 1, 0
    %v3619 = vsel %vm3491, 1, 0
    %v3620 = vsel %vm3492, 1, 0
    %v3621 = vsel %vm3493, 1, 0
    %v3622 = vsel %vm3494, 1, 0
    %v3623 = vsel %vm3495, 1, 0
    %v3624 = vsel %vm3496, 1, 0
    %v3625 = vsel %vm3497, 1, 0
    %v3626 = vsel %vm3498, 1, 0
    %v3627 = vsel %vm3499, 1, 0
    %v3628 = vsel %vm3500, 1, 0
    %v3629 = vsel %vm3501, 1, 0
    %v3630 = vsel %vm3502, 1, 0
    %v3631 = vsel %vm3503, 1, 0
    %v3632 = vsel %vm3504, 1, 0
    %v3633 = vsel %vm3505, 1, 0
    %v3634 = vsel %vm3506, 1, 0
    %v3635 = vsel %vm3507, 1, 0
    %v3636 = vsel %vm3508, 1, 0
    %v3637 = vcvt.s32.f32 %v3509
    %v3638 = vcvt.s32.f32 %v3510
    %v3639 = vcvt.s32.f32 %v3511
    %v3640 = vcvt.s32.f32 %v3512
    %v3641 = vcvt.s32.f32 %v3513
    %v3642 = vcvt.s32.f32 %v3514
    %v3643 = vcvt.s32.f32 %v3515
    %v3644 = vcvt.s32.f32 %v3516
    %v3645 = vcvt.s32.f32 %v3517
    %v3646 = vcvt.s32.f32 %v3518
    %v3647 = vcvt.s32.f32 %v3519
    %v3648 = vcvt.s32.f32 %v3520
    %v3649 = vcvt.s32.f32 %v3521
    %v3650 = vcvt.s32.f32 %v3522
    %v3651 = vcvt.s32.f32 %v3523
    %v3652 = vcvt.s32.f32 %v3524
    %v3653 = vcvt.s32.f32 %v3525
    %v3654 = vcvt.s32.f32 %v3526
    %v3655 = vcvt.s32.f32 %v3527
    %v3656 = vcvt.s32.f32 %v3528
    %v3657 = vcvt.s32.f32 %v3529
    %v3658 = vcvt.s32.f32 %v3530
    %v3659 = vcvt.s32.f32 %v3531
    %v3660 = vcvt.s32.f32 %v3532
    %v3661 = vcvt.s32.f32 %v3533
    %v3662 = vcvt.s32.f32 %v3534
    %v3663 = vcvt.s32.f32 %v3535
    %v3664 = vcvt.s32.f32 %v3536
    %v3665 = vcvt.s32.f32 %v3537
    %v3666 = vcvt.s32.f32 %v3538
    %v3667 = vcvt.s32.f32 %v3539
    %v3668 = vcvt.s32.f32 %v3540
    %v3669 = vcvt.s32.f32 %v3541
    %v3670 = vcvt.s32.f32 %v3542
    %v3671 = vcvt.s32.f32 %v3543
    %v3672 = vcvt.s32.f32 %v3544
    %v3673 = vcvt.s32.f32 %v3545
    %v3674 = vcvt.s32.f32 %v3546
    %v3675 = vcvt.s32.f32 %v3547
    %v3676 = vcvt.s32.f32 %v3548
    %v3677 = vcvt.s32.f32 %v3549
    %v3678 = vcvt.s32.f32 %v3550
    %v3679 = vcvt.s32.f32 %v3551
    %v3680 = vcvt.s32.f32 %v3552
    %v3681 = vcvt.s32.f32 %v3553
    %v3682 = vcvt.s32.f32 %v3554
    %v3683 = vcvt.s32.f32 %v3555
    %v3684 = vcvt.s32.f32 %v3556
    %v3685 = vcvt.s32.f32 %v3557
    %v3686 = vcvt.s32.f32 %v3558
    %v3687 = vcvt.s32.f32 %v3559
    %v3688 = vcvt.s32.f32 %v3560
    %v3689 = vcvt.s32.f32 %v3561
    %v3690 = vcvt.s32.f32 %v3562
    %v3691 = vcvt.s32.f32 %v3563
    %v3692 = vcvt.s32.f32 %v3564
    %v3693 = vcvt.s32.f32 %v3565
    %v3694 = vcvt.s32.f32 %v3566
    %v3695 = vcvt.s32.f32 %v3567
    %v3696 = vcvt.s32.f32 %v3568
    %v3697 = vcvt.s32.f32 %v3569
    %v3698 = vcvt.s32.f32 %v3570
    %v3699 = vcvt.s32.f32 %v3571
    %v3700 = vcvt.s32.f32 %v3572
    %v3701 = vcvt.s32.f32 %v3573
    %v3702 = vcvt.s32.f32 %v3574
    %v3703 = vcvt.s32.f32 %v3575
    %v3704 = vcvt.s32.f32 %v3576
    %v3705 = vcvt.s32.f32 %v3577
    %v3706 = vcvt.s32.f32 %v3578
    %v3707 = vcvt.s32.f32 %v3579
    %v3708 = vcvt.s32.f32 %v3580
    %v3709 = vcvt.s32.f32 %v3581
    %v3710 = vcvt.s32.f32 %v3582
    %v3711 = vcvt.s32.f32 %v3583
    %v3712 = vcvt.s32.f32 %v3584
    %v3713 = vcvt.s32.f32 %v3585
    %v3714 = vcvt.s32.f32 %v3586
    %v3715 = vcvt.s32.f32 %v3587
    %v3716 = vcvt.s32.f32 %v3588
    %v3717 = vcvt.s32.f32 %v3589
    %v3718 = vcvt.s32.f32 %v3590
    %v3719 = vcvt.s32.f32 %v3591
    %v3720 = vcvt.s32.f32 %v3592
    %v3721 = vcvt.s32.f32 %v3593
    %v3722 = vcvt.s32.f32 %v3594
    %v3723 = vcvt.s32.f32 %v3595
    %v3724 = vcvt.s32.f32 %v3596
    %v3725 = vcvt.s32.f32 %v3597
    %v3726 = vcvt.s32.f32 %v3598
    %v3727 = vcvt.s32.f32 %v3599
    %v3728 = vcvt.s32.f32 %v3600
    %v3729 = vcvt.s32.f32 %v3601
    %v3730 = vcvt.s32.f32 %v3602
    %v3731 = vcvt.s32.f32 %v3603
    %v3732 = vcvt.s32.f32 %v3604
    %v3733 = vcvt.s32.f32 %v3605
    %v3734 = vcvt.s32.f32 %v3606
    %v3735 = vcvt.s32.f32 %v3607
    %v3736 = vcvt.s32.f32 %v3608
    %v3737 = vcvt.s32.f32 %v3609
    %v3738 = vcvt.s32.f32 %v3610
    %v3739 = vcvt.s32.f32 %v3611
    %v3740 = vcvt.s32.f32 %v3612
    %v3741 = vcvt.s32.f32 %v3613
    %v3742 = vcvt.s32.f32 %v3614
    %v3743 = vcvt.s32.f32 %v3615
    %v3744 = vcvt.s32.f32 %v3616
    %v3745 = vcvt.s32.f32 %v3617
    %v3746 = vcvt.s32.f32 %v3618
    %v3747 = vcvt.s32.f32 %v3619
    %v3748 = vcvt.s32.f32 %v3620
    %v3749 = vcvt.s32.f32 %v3621
    %v3750 = vcvt.s32.f32 %v3622
    %v3751 = vcvt.s32.f32 %v3623
    %v3752 = vcvt.s32.f32 %v3624
    %v3753 = vcvt.s32.f32 %v3625
    %v3754 = vcvt.s32.f32 %v3626
    %v3755 = vcvt.s32.f32 %v3627
    %v3756 = vcvt.s32.f32 %v3628
    %v3757 = vcvt.s32.f32 %v3629
    %v3758 = vcvt.s32.f32 %v3630
    %v3759 = vcvt.s32.f32 %v3631
    %v3760 = vcvt.s32.f32 %v3632
    %v3761 = vcvt.s32.f32 %v3633
    %v3762 = vcvt.s32.f32 %v3634
    %v3763 = vcvt.s32.f32 %v3635
    %v3764 = vcvt.s32.f32 %v3636
    %v3765 = vpack.c.bf16 %v3645, %v3637
    %v3766 = vpack.c.bf16 %v3646, %v3638
    %v3767 = vpack.c.bf16 %v3647, %v3639
    %v3768 = vpack.c.bf16 %v3648, %v3640
    %v3769 = vpack.c.bf16 %v3649, %v3641
    %v3770 = vpack.c.bf16 %v3650, %v3642
    %v3771 = vpack.c.bf16 %v3651, %v3643
    %v3772 = vpack.c.bf16 %v3652, %v3644
    %v3773 = vpack.c.bf16 %v3661, %v3653
    %v3774 = vpack.c.bf16 %v3662, %v3654
    %v3775 = vpack.c.bf16 %v3663, %v3655
    %v3776 = vpack.c.bf16 %v3664, %v3656
    %v3777 = vpack.c.bf16 %v3665, %v3657
    %v3778 = vpack.c.bf16 %v3666, %v3658
    %v3779 = vpack.c.bf16 %v3667, %v3659
    %v3780 = vpack.c.bf16 %v3668, %v3660
    %v3781 = vpack.c.bf16 %v3677, %v3669
    %v3782 = vpack.c.bf16 %v3678, %v3670
    %v3783 = vpack.c.bf16 %v3679, %v3671
    %v3784 = vpack.c.bf16 %v3680, %v3672
    %v3785 = vpack.c.bf16 %v3681, %v3673
    %v3786 = vpack.c.bf16 %v3682, %v3674
    %v3787 = vpack.c.bf16 %v3683, %v3675
    %v3788 = vpack.c.bf16 %v3684, %v3676
    %v3789 = vpack.c.bf16 %v3693, %v3685
    %v3790 = vpack.c.bf16 %v3694, %v3686
    %v3791 = vpack.c.bf16 %v3695, %v3687
    %v3792 = vpack.c.bf16 %v3696, %v3688
    %v3793 = vpack.c.bf16 %v3697, %v3689
    %v3794 = vpack.c.bf16 %v3698, %v3690
    %v3795 = vpack.c.bf16 %v3699, %v3691
    %v3796 = vpack.c.bf16 %v3700, %v3692
    %v3797 = vpack.c.bf16 %v3709, %v3701
    %v3798 = vpack.c.bf16 %v3710, %v3702
    %v3799 = vpack.c.bf16 %v3711, %v3703
    %v3800 = vpack.c.bf16 %v3712, %v3704
    %v3801 = vpack.c.bf16 %v3713, %v3705
    %v3802 = vpack.c.bf16 %v3714, %v3706
    %v3803 = vpack.c.bf16 %v3715, %v3707
    %v3804 = vpack.c.bf16 %v3716, %v3708
    %v3805 = vpack.c.bf16 %v3725, %v3717
    %v3806 = vpack.c.bf16 %v3726, %v3718
    %v3807 = vpack.c.bf16 %v3727, %v3719
    %v3808 = vpack.c.bf16 %v3728, %v3720
    %v3809 = vpack.c.bf16 %v3729, %v3721
    %v3810 = vpack.c.bf16 %v3730, %v3722
    %v3811 = vpack.c.bf16 %v3731, %v3723
    %v3812 = vpack.c.bf16 %v3732, %v3724
    %v3813 = vpack.c.bf16 %v3741, %v3733
    %v3814 = vpack.c.bf16 %v3742, %v3734
    %v3815 = vpack.c.bf16 %v3743, %v3735
    %v3816 = vpack.c.bf16 %v3744, %v3736
    %v3817 = vpack.c.bf16 %v3745, %v3737
    %v3818 = vpack.c.bf16 %v3746, %v3738
    %v3819 = vpack.c.bf16 %v3747, %v3739
    %v3820 = vpack.c.bf16 %v3748, %v3740
    %v3821 = vpack.c.bf16 %v3757, %v3749
    %v3822 = vpack.c.bf16 %v3758, %v3750
    %v3823 = vpack.c.bf16 %v3759, %v3751
    %v3824 = vpack.c.bf16 %v3760, %v3752
    %v3825 = vpack.c.bf16 %v3761, %v3753
    %v3826 = vpack.c.bf16 %v3762, %v3754
    %v3827 = vpack.c.bf16 %v3763, %v3755
    %v3828 = vpack.c.bf16 %v3764, %v3756
    %3829 = vst [vmem:[#allocation2 + $0xc00] sm:$0xff] %v3765
    %3830 = vst [vmem:[#allocation2 + $0xc08] sm:$0xff] %v3766
    %3831 = vst [vmem:[#allocation2 + $0xc10] sm:$0xff] %v3767
    %3832 = vst [vmem:[#allocation2 + $0xc18] sm:$0xff] %v3768
    %3833 = vst [vmem:[#allocation2 + $0xc20] sm:$0xff] %v3769
    %3834 = vst [vmem:[#allocation2 + $0xc28] sm:$0xff] %v3770
    %3835 = vst [vmem:[#allocation2 + $0xc30] sm:$0xff] %v3771
    %3836 = vst [vmem:[#allocation2 + $0xc38] sm:$0xff] %v3772
    %3837 = vst [vmem:[#allocation2 + $0xc40] sm:$0xff] %v3773
    %3838 = vst [vmem:[#allocation2 + $0xc48] sm:$0xff] %v3774
    %3839 = vst [vmem:[#allocation2 + $0xc50] sm:$0xff] %v3775
    %3840 = vst [vmem:[#allocation2 + $0xc58] sm:$0xff] %v3776
    %3841 = vst [vmem:[#allocation2 + $0xc60] sm:$0xff] %v3777
    %3842 = vst [vmem:[#allocation2 + $0xc68] sm:$0xff] %v3778
    %3843 = vst [vmem:[#allocation2 + $0xc70] sm:$0xff] %v3779
    %3844 = vst [vmem:[#allocation2 + $0xc78] sm:$0xff] %v3780
    %3845 = vst [vmem:[#allocation2 + $0xc80] sm:$0xff] %v3781
    %3846 = vst [vmem:[#allocation2 + $0xc88] sm:$0xff] %v3782
    %3847 = vst [vmem:[#allocation2 + $0xc90] sm:$0xff] %v3783
    %3848 = vst [vmem:[#allocation2 + $0xc98] sm:$0xff] %v3784
    %3849 = vst [vmem:[#allocation2 + $0xca0] sm:$0xff] %v3785
    %3850 = vst [vmem:[#allocation2 + $0xca8] sm:$0xff] %v3786
    %3851 = vst [vmem:[#allocation2 + $0xcb0] sm:$0xff] %v3787
    %3852 = vst [vmem:[#allocation2 + $0xcb8] sm:$0xff] %v3788
    %3853 = vst [vmem:[#allocation2 + $0xcc0] sm:$0xff] %v3789
    %3854 = vst [vmem:[#allocation2 + $0xcc8] sm:$0xff] %v3790
    %3855 = vst [vmem:[#allocation2 + $0xcd0] sm:$0xff] %v3791
    %3856 = vst [vmem:[#allocation2 + $0xcd8] sm:$0xff] %v3792
    %3857 = vst [vmem:[#allocation2 + $0xce0] sm:$0xff] %v3793
    %3858 = vst [vmem:[#allocation2 + $0xce8] sm:$0xff] %v3794
    %3859 = vst [vmem:[#allocation2 + $0xcf0] sm:$0xff] %v3795
    %3860 = vst [vmem:[#allocation2 + $0xcf8] sm:$0xff] %v3796
    %3861 = vst [vmem:[#allocation2 + $0xd00] sm:$0xff] %v3797
    %3862 = vst [vmem:[#allocation2 + $0xd08] sm:$0xff] %v3798
    %3863 = vst [vmem:[#allocation2 + $0xd10] sm:$0xff] %v3799
    %3864 = vst [vmem:[#allocation2 + $0xd18] sm:$0xff] %v3800
    %3865 = vst [vmem:[#allocation2 + $0xd20] sm:$0xff] %v3801
    %3866 = vst [vmem:[#allocation2 + $0xd28] sm:$0xff] %v3802
    %3867 = vst [vmem:[#allocation2 + $0xd30] sm:$0xff] %v3803
    %3868 = vst [vmem:[#allocation2 + $0xd38] sm:$0xff] %v3804
    %3869 = vst [vmem:[#allocation2 + $0xd40] sm:$0xff] %v3805
    %3870 = vst [vmem:[#allocation2 + $0xd48] sm:$0xff] %v3806
    %3871 = vst [vmem:[#allocation2 + $0xd50] sm:$0xff] %v3807
    %3872 = vst [vmem:[#allocation2 + $0xd58] sm:$0xff] %v3808
    %3873 = vst [vmem:[#allocation2 + $0xd60] sm:$0xff] %v3809
    %3874 = vst [vmem:[#allocation2 + $0xd68] sm:$0xff] %v3810
    %3875 = vst [vmem:[#allocation2 + $0xd70] sm:$0xff] %v3811
    %3876 = vst [vmem:[#allocation2 + $0xd78] sm:$0xff] %v3812
    %3877 = vst [vmem:[#allocation2 + $0xd80] sm:$0xff] %v3813
    %3878 = vst [vmem:[#allocation2 + $0xd88] sm:$0xff] %v3814
    %3879 = vst [vmem:[#allocation2 + $0xd90] sm:$0xff] %v3815
    %3880 = vst [vmem:[#allocation2 + $0xd98] sm:$0xff] %v3816
    %3881 = vst [vmem:[#allocation2 + $0xda0] sm:$0xff] %v3817
    %3882 = vst [vmem:[#allocation2 + $0xda8] sm:$0xff] %v3818
    %3883 = vst [vmem:[#allocation2 + $0xdb0] sm:$0xff] %v3819
    %3884 = vst [vmem:[#allocation2 + $0xdb8] sm:$0xff] %v3820
    %3885 = vst [vmem:[#allocation2 + $0xdc0] sm:$0xff] %v3821
    %3886 = vst [vmem:[#allocation2 + $0xdc8] sm:$0xff] %v3822
    %3887 = vst [vmem:[#allocation2 + $0xdd0] sm:$0xff] %v3823
    %3888 = vst [vmem:[#allocation2 + $0xdd8] sm:$0xff] %v3824
    %3889 = vst [vmem:[#allocation2 + $0xde0] sm:$0xff] %v3825
    %3890 = vst [vmem:[#allocation2 + $0xde8] sm:$0xff] %v3826
    %3891 = vst [vmem:[#allocation2 + $0xdf0] sm:$0xff] %v3827
    %3892 = vst [vmem:[#allocation2 + $0xdf8] sm:$0xff] %v3828
    %s3893 = scalar_lea.vmem [#allocation3], 7
    %v3894 = vld [vmem:[%s3893] ss:$8 sm:$0xf]
    %v3895 = vld [vmem:[%s3893] ss:$8 sm:$0xf0]
    %v3896 = vor.u32 %v3894, %v3895
    %v3897 = vlaneseq
    %v3898 = vshrl.u32 %v3897, 7
    %v3899 = vsub.s32 0, %v3898
    %v3900 = vrot.slane %v3896, %v3899
    %v3901 = vlaneseq
    %v3902 = vshrl.u32 %v3901, 7
    %v3903 = vsub.s32 1, %v3902
    %v3904 = vrot.slane %v3896, %v3903
    %v3905 = vlaneseq
    %v3906 = vshrl.u32 %v3905, 7
    %v3907 = vsub.s32 2, %v3906
    %v3908 = vrot.slane %v3896, %v3907
    %v3909 = vlaneseq
    %v3910 = vshrl.u32 %v3909, 7
    %v3911 = vsub.s32 3, %v3910
    %v3912 = vrot.slane %v3896, %v3911
    %v3913 = vlaneseq
    %v3914 = vshrl.u32 %v3913, 7
    %v3915 = vsub.s32 4, %v3914
    %v3916 = vrot.slane %v3896, %v3915
    %v3917 = vlaneseq
    %v3918 = vshrl.u32 %v3917, 7
    %v3919 = vsub.s32 5, %v3918
    %v3920 = vrot.slane %v3896, %v3919
    %v3921 = vlaneseq
    %v3922 = vshrl.u32 %v3921, 7
    %v3923 = vsub.s32 6, %v3922
    %v3924 = vrot.slane %v3896, %v3923
    %v3925 = vlaneseq
    %v3926 = vshrl.u32 %v3925, 7
    %v3927 = vsub.s32 7, %v3926
    %v3928 = vrot.slane %v3896, %v3927
    %vm3929 = vcmp.eq.s32.totalorder %v42, %v3900
    %vm3930 = vcmp.eq.s32.totalorder %v42, %v3904
    %vm3931 = vcmp.eq.s32.totalorder %v42, %v3908
    %vm3932 = vcmp.eq.s32.totalorder %v42, %v3912
    %vm3933 = vcmp.eq.s32.totalorder %v42, %v3916
    %vm3934 = vcmp.eq.s32.totalorder %v42, %v3920
    %vm3935 = vcmp.eq.s32.totalorder %v42, %v3924
    %vm3936 = vcmp.eq.s32.totalorder %v42, %v3928
    %vm3937 = vcmp.eq.s32.totalorder %v43, %v3900
    %vm3938 = vcmp.eq.s32.totalorder %v43, %v3904
    %vm3939 = vcmp.eq.s32.totalorder %v43, %v3908
    %vm3940 = vcmp.eq.s32.totalorder %v43, %v3912
    %vm3941 = vcmp.eq.s32.totalorder %v43, %v3916
    %vm3942 = vcmp.eq.s32.totalorder %v43, %v3920
    %vm3943 = vcmp.eq.s32.totalorder %v43, %v3924
    %vm3944 = vcmp.eq.s32.totalorder %v43, %v3928
    %vm3945 = vcmp.eq.s32.totalorder %v44, %v3900
    %vm3946 = vcmp.eq.s32.totalorder %v44, %v3904
    %vm3947 = vcmp.eq.s32.totalorder %v44, %v3908
    %vm3948 = vcmp.eq.s32.totalorder %v44, %v3912
    %vm3949 = vcmp.eq.s32.totalorder %v44, %v3916
    %vm3950 = vcmp.eq.s32.totalorder %v44, %v3920
    %vm3951 = vcmp.eq.s32.totalorder %v44, %v3924
    %vm3952 = vcmp.eq.s32.totalorder %v44, %v3928
    %vm3953 = vcmp.eq.s32.totalorder %v45, %v3900
    %vm3954 = vcmp.eq.s32.totalorder %v45, %v3904
    %vm3955 = vcmp.eq.s32.totalorder %v45, %v3908
    %vm3956 = vcmp.eq.s32.totalorder %v45, %v3912
    %vm3957 = vcmp.eq.s32.totalorder %v45, %v3916
    %vm3958 = vcmp.eq.s32.totalorder %v45, %v3920
    %vm3959 = vcmp.eq.s32.totalorder %v45, %v3924
    %vm3960 = vcmp.eq.s32.totalorder %v45, %v3928
    %vm3961 = vcmp.eq.s32.totalorder %v46, %v3900
    %vm3962 = vcmp.eq.s32.totalorder %v46, %v3904
    %vm3963 = vcmp.eq.s32.totalorder %v46, %v3908
    %vm3964 = vcmp.eq.s32.totalorder %v46, %v3912
    %vm3965 = vcmp.eq.s32.totalorder %v46, %v3916
    %vm3966 = vcmp.eq.s32.totalorder %v46, %v3920
    %vm3967 = vcmp.eq.s32.totalorder %v46, %v3924
    %vm3968 = vcmp.eq.s32.totalorder %v46, %v3928
    %vm3969 = vcmp.eq.s32.totalorder %v47, %v3900
    %vm3970 = vcmp.eq.s32.totalorder %v47, %v3904
    %vm3971 = vcmp.eq.s32.totalorder %v47, %v3908
    %vm3972 = vcmp.eq.s32.totalorder %v47, %v3912
    %vm3973 = vcmp.eq.s32.totalorder %v47, %v3916
    %vm3974 = vcmp.eq.s32.totalorder %v47, %v3920
    %vm3975 = vcmp.eq.s32.totalorder %v47, %v3924
    %vm3976 = vcmp.eq.s32.totalorder %v47, %v3928
    %vm3977 = vcmp.eq.s32.totalorder %v48, %v3900
    %vm3978 = vcmp.eq.s32.totalorder %v48, %v3904
    %vm3979 = vcmp.eq.s32.totalorder %v48, %v3908
    %vm3980 = vcmp.eq.s32.totalorder %v48, %v3912
    %vm3981 = vcmp.eq.s32.totalorder %v48, %v3916
    %vm3982 = vcmp.eq.s32.totalorder %v48, %v3920
    %vm3983 = vcmp.eq.s32.totalorder %v48, %v3924
    %vm3984 = vcmp.eq.s32.totalorder %v48, %v3928
    %vm3985 = vcmp.eq.s32.totalorder %v49, %v3900
    %vm3986 = vcmp.eq.s32.totalorder %v49, %v3904
    %vm3987 = vcmp.eq.s32.totalorder %v49, %v3908
    %vm3988 = vcmp.eq.s32.totalorder %v49, %v3912
    %vm3989 = vcmp.eq.s32.totalorder %v49, %v3916
    %vm3990 = vcmp.eq.s32.totalorder %v49, %v3920
    %vm3991 = vcmp.eq.s32.totalorder %v49, %v3924
    %vm3992 = vcmp.eq.s32.totalorder %v49, %v3928
    %vm3993 = vcmp.eq.s32.totalorder %v50, %v3900
    %vm3994 = vcmp.eq.s32.totalorder %v50, %v3904
    %vm3995 = vcmp.eq.s32.totalorder %v50, %v3908
    %vm3996 = vcmp.eq.s32.totalorder %v50, %v3912
    %vm3997 = vcmp.eq.s32.totalorder %v50, %v3916
    %vm3998 = vcmp.eq.s32.totalorder %v50, %v3920
    %vm3999 = vcmp.eq.s32.totalorder %v50, %v3924
    %vm4000 = vcmp.eq.s32.totalorder %v50, %v3928
    %vm4001 = vcmp.eq.s32.totalorder %v51, %v3900
    %vm4002 = vcmp.eq.s32.totalorder %v51, %v3904
    %vm4003 = vcmp.eq.s32.totalorder %v51, %v3908
    %vm4004 = vcmp.eq.s32.totalorder %v51, %v3912
    %vm4005 = vcmp.eq.s32.totalorder %v51, %v3916
    %vm4006 = vcmp.eq.s32.totalorder %v51, %v3920
    %vm4007 = vcmp.eq.s32.totalorder %v51, %v3924
    %vm4008 = vcmp.eq.s32.totalorder %v51, %v3928
    %vm4009 = vcmp.eq.s32.totalorder %v52, %v3900
    %vm4010 = vcmp.eq.s32.totalorder %v52, %v3904
    %vm4011 = vcmp.eq.s32.totalorder %v52, %v3908
    %vm4012 = vcmp.eq.s32.totalorder %v52, %v3912
    %vm4013 = vcmp.eq.s32.totalorder %v52, %v3916
    %vm4014 = vcmp.eq.s32.totalorder %v52, %v3920
    %vm4015 = vcmp.eq.s32.totalorder %v52, %v3924
    %vm4016 = vcmp.eq.s32.totalorder %v52, %v3928
    %vm4017 = vcmp.eq.s32.totalorder %v53, %v3900
    %vm4018 = vcmp.eq.s32.totalorder %v53, %v3904
    %vm4019 = vcmp.eq.s32.totalorder %v53, %v3908
    %vm4020 = vcmp.eq.s32.totalorder %v53, %v3912
    %vm4021 = vcmp.eq.s32.totalorder %v53, %v3916
    %vm4022 = vcmp.eq.s32.totalorder %v53, %v3920
    %vm4023 = vcmp.eq.s32.totalorder %v53, %v3924
    %vm4024 = vcmp.eq.s32.totalorder %v53, %v3928
    %vm4025 = vcmp.eq.s32.totalorder %v54, %v3900
    %vm4026 = vcmp.eq.s32.totalorder %v54, %v3904
    %vm4027 = vcmp.eq.s32.totalorder %v54, %v3908
    %vm4028 = vcmp.eq.s32.totalorder %v54, %v3912
    %vm4029 = vcmp.eq.s32.totalorder %v54, %v3916
    %vm4030 = vcmp.eq.s32.totalorder %v54, %v3920
    %vm4031 = vcmp.eq.s32.totalorder %v54, %v3924
    %vm4032 = vcmp.eq.s32.totalorder %v54, %v3928
    %vm4033 = vcmp.eq.s32.totalorder %v55, %v3900
    %vm4034 = vcmp.eq.s32.totalorder %v55, %v3904
    %vm4035 = vcmp.eq.s32.totalorder %v55, %v3908
    %vm4036 = vcmp.eq.s32.totalorder %v55, %v3912
    %vm4037 = vcmp.eq.s32.totalorder %v55, %v3916
    %vm4038 = vcmp.eq.s32.totalorder %v55, %v3920
    %vm4039 = vcmp.eq.s32.totalorder %v55, %v3924
    %vm4040 = vcmp.eq.s32.totalorder %v55, %v3928
    %vm4041 = vcmp.eq.s32.totalorder %v56, %v3900
    %vm4042 = vcmp.eq.s32.totalorder %v56, %v3904
    %vm4043 = vcmp.eq.s32.totalorder %v56, %v3908
    %vm4044 = vcmp.eq.s32.totalorder %v56, %v3912
    %vm4045 = vcmp.eq.s32.totalorder %v56, %v3916
    %vm4046 = vcmp.eq.s32.totalorder %v56, %v3920
    %vm4047 = vcmp.eq.s32.totalorder %v56, %v3924
    %vm4048 = vcmp.eq.s32.totalorder %v56, %v3928
    %vm4049 = vcmp.eq.s32.totalorder %v57, %v3900
    %vm4050 = vcmp.eq.s32.totalorder %v57, %v3904
    %vm4051 = vcmp.eq.s32.totalorder %v57, %v3908
    %vm4052 = vcmp.eq.s32.totalorder %v57, %v3912
    %vm4053 = vcmp.eq.s32.totalorder %v57, %v3916
    %vm4054 = vcmp.eq.s32.totalorder %v57, %v3920
    %vm4055 = vcmp.eq.s32.totalorder %v57, %v3924
    %vm4056 = vcmp.eq.s32.totalorder %v57, %v3928
    %v4057 = vsel %vm3929, 1, 0
    %v4058 = vsel %vm3930, 1, 0
    %v4059 = vsel %vm3931, 1, 0
    %v4060 = vsel %vm3932, 1, 0
    %v4061 = vsel %vm3933, 1, 0
    %v4062 = vsel %vm3934, 1, 0
    %v4063 = vsel %vm3935, 1, 0
    %v4064 = vsel %vm3936, 1, 0
    %v4065 = vsel %vm3937, 1, 0
    %v4066 = vsel %vm3938, 1, 0
    %v4067 = vsel %vm3939, 1, 0
    %v4068 = vsel %vm3940, 1, 0
    %v4069 = vsel %vm3941, 1, 0
    %v4070 = vsel %vm3942, 1, 0
    %v4071 = vsel %vm3943, 1, 0
    %v4072 = vsel %vm3944, 1, 0
    %v4073 = vsel %vm3945, 1, 0
    %v4074 = vsel %vm3946, 1, 0
    %v4075 = vsel %vm3947, 1, 0
    %v4076 = vsel %vm3948, 1, 0
    %v4077 = vsel %vm3949, 1, 0
    %v4078 = vsel %vm3950, 1, 0
    %v4079 = vsel %vm3951, 1, 0
    %v4080 = vsel %vm3952, 1, 0
    %v4081 = vsel %vm3953, 1, 0
    %v4082 = vsel %vm3954, 1, 0
    %v4083 = vsel %vm3955, 1, 0
    %v4084 = vsel %vm3956, 1, 0
    %v4085 = vsel %vm3957, 1, 0
    %v4086 = vsel %vm3958, 1, 0
    %v4087 = vsel %vm3959, 1, 0
    %v4088 = vsel %vm3960, 1, 0
    %v4089 = vsel %vm3961, 1, 0
    %v4090 = vsel %vm3962, 1, 0
    %v4091 = vsel %vm3963, 1, 0
    %v4092 = vsel %vm3964, 1, 0
    %v4093 = vsel %vm3965, 1, 0
    %v4094 = vsel %vm3966, 1, 0
    %v4095 = vsel %vm3967, 1, 0
    %v4096 = vsel %vm3968, 1, 0
    %v4097 = vsel %vm3969, 1, 0
    %v4098 = vsel %vm3970, 1, 0
    %v4099 = vsel %vm3971, 1, 0
    %v4100 = vsel %vm3972, 1, 0
    %v4101 = vsel %vm3973, 1, 0
    %v4102 = vsel %vm3974, 1, 0
    %v4103 = vsel %vm3975, 1, 0
    %v4104 = vsel %vm3976, 1, 0
    %v4105 = vsel %vm3977, 1, 0
    %v4106 = vsel %vm3978, 1, 0
    %v4107 = vsel %vm3979, 1, 0
    %v4108 = vsel %vm3980, 1, 0
    %v4109 = vsel %vm3981, 1, 0
    %v4110 = vsel %vm3982, 1, 0
    %v4111 = vsel %vm3983, 1, 0
    %v4112 = vsel %vm3984, 1, 0
    %v4113 = vsel %vm3985, 1, 0
    %v4114 = vsel %vm3986, 1, 0
    %v4115 = vsel %vm3987, 1, 0
    %v4116 = vsel %vm3988, 1, 0
    %v4117 = vsel %vm3989, 1, 0
    %v4118 = vsel %vm3990, 1, 0
    %v4119 = vsel %vm3991, 1, 0
    %v4120 = vsel %vm3992, 1, 0
    %v4121 = vsel %vm3993, 1, 0
    %v4122 = vsel %vm3994, 1, 0
    %v4123 = vsel %vm3995, 1, 0
    %v4124 = vsel %vm3996, 1, 0
    %v4125 = vsel %vm3997, 1, 0
    %v4126 = vsel %vm3998, 1, 0
    %v4127 = vsel %vm3999, 1, 0
    %v4128 = vsel %vm4000, 1, 0
    %v4129 = vsel %vm4001, 1, 0
    %v4130 = vsel %vm4002, 1, 0
    %v4131 = vsel %vm4003, 1, 0
    %v4132 = vsel %vm4004, 1, 0
    %v4133 = vsel %vm4005, 1, 0
    %v4134 = vsel %vm4006, 1, 0
    %v4135 = vsel %vm4007, 1, 0
    %v4136 = vsel %vm4008, 1, 0
    %v4137 = vsel %vm4009, 1, 0
    %v4138 = vsel %vm4010, 1, 0
    %v4139 = vsel %vm4011, 1, 0
    %v4140 = vsel %vm4012, 1, 0
    %v4141 = vsel %vm4013, 1, 0
    %v4142 = vsel %vm4014, 1, 0
    %v4143 = vsel %vm4015, 1, 0
    %v4144 = vsel %vm4016, 1, 0
    %v4145 = vsel %vm4017, 1, 0
    %v4146 = vsel %vm4018, 1, 0
    %v4147 = vsel %vm4019, 1, 0
    %v4148 = vsel %vm4020, 1, 0
    %v4149 = vsel %vm4021, 1, 0
    %v4150 = vsel %vm4022, 1, 0
    %v4151 = vsel %vm4023, 1, 0
    %v4152 = vsel %vm4024, 1, 0
    %v4153 = vsel %vm4025, 1, 0
    %v4154 = vsel %vm4026, 1, 0
    %v4155 = vsel %vm4027, 1, 0
    %v4156 = vsel %vm4028, 1, 0
    %v4157 = vsel %vm4029, 1, 0
    %v4158 = vsel %vm4030, 1, 0
    %v4159 = vsel %vm4031, 1, 0
    %v4160 = vsel %vm4032, 1, 0
    %v4161 = vsel %vm4033, 1, 0
    %v4162 = vsel %vm4034, 1, 0
    %v4163 = vsel %vm4035, 1, 0
    %v4164 = vsel %vm4036, 1, 0
    %v4165 = vsel %vm4037, 1, 0
    %v4166 = vsel %vm4038, 1, 0
    %v4167 = vsel %vm4039, 1, 0
    %v4168 = vsel %vm4040, 1, 0
    %v4169 = vsel %vm4041, 1, 0
    %v4170 = vsel %vm4042, 1, 0
    %v4171 = vsel %vm4043, 1, 0
    %v4172 = vsel %vm4044, 1, 0
    %v4173 = vsel %vm4045, 1, 0
    %v4174 = vsel %vm4046, 1, 0
    %v4175 = vsel %vm4047, 1, 0
    %v4176 = vsel %vm4048, 1, 0
    %v4177 = vsel %vm4049, 1, 0
    %v4178 = vsel %vm4050, 1, 0
    %v4179 = vsel %vm4051, 1, 0
    %v4180 = vsel %vm4052, 1, 0
    %v4181 = vsel %vm4053, 1, 0
    %v4182 = vsel %vm4054, 1, 0
    %v4183 = vsel %vm4055, 1, 0
    %v4184 = vsel %vm4056, 1, 0
    %v4185 = vcvt.s32.f32 %v4057
    %v4186 = vcvt.s32.f32 %v4058
    %v4187 = vcvt.s32.f32 %v4059
    %v4188 = vcvt.s32.f32 %v4060
    %v4189 = vcvt.s32.f32 %v4061
    %v4190 = vcvt.s32.f32 %v4062
    %v4191 = vcvt.s32.f32 %v4063
    %v4192 = vcvt.s32.f32 %v4064
    %v4193 = vcvt.s32.f32 %v4065
    %v4194 = vcvt.s32.f32 %v4066
    %v4195 = vcvt.s32.f32 %v4067
    %v4196 = vcvt.s32.f32 %v4068
    %v4197 = vcvt.s32.f32 %v4069
    %v4198 = vcvt.s32.f32 %v4070
    %v4199 = vcvt.s32.f32 %v4071
    %v4200 = vcvt.s32.f32 %v4072
    %v4201 = vcvt.s32.f32 %v4073
    %v4202 = vcvt.s32.f32 %v4074
    %v4203 = vcvt.s32.f32 %v4075
    %v4204 = vcvt.s32.f32 %v4076
    %v4205 = vcvt.s32.f32 %v4077
    %v4206 = vcvt.s32.f32 %v4078
    %v4207 = vcvt.s32.f32 %v4079
    %v4208 = vcvt.s32.f32 %v4080
    %v4209 = vcvt.s32.f32 %v4081
    %v4210 = vcvt.s32.f32 %v4082
    %v4211 = vcvt.s32.f32 %v4083
    %v4212 = vcvt.s32.f32 %v4084
    %v4213 = vcvt.s32.f32 %v4085
    %v4214 = vcvt.s32.f32 %v4086
    %v4215 = vcvt.s32.f32 %v4087
    %v4216 = vcvt.s32.f32 %v4088
    %v4217 = vcvt.s32.f32 %v4089
    %v4218 = vcvt.s32.f32 %v4090
    %v4219 = vcvt.s32.f32 %v4091
    %v4220 = vcvt.s32.f32 %v4092
    %v4221 = vcvt.s32.f32 %v4093
    %v4222 = vcvt.s32.f32 %v4094
    %v4223 = vcvt.s32.f32 %v4095
    %v4224 = vcvt.s32.f32 %v4096
    %v4225 = vcvt.s32.f32 %v4097
    %v4226 = vcvt.s32.f32 %v4098
    %v4227 = vcvt.s32.f32 %v4099
    %v4228 = vcvt.s32.f32 %v4100
    %v4229 = vcvt.s32.f32 %v4101
    %v4230 = vcvt.s32.f32 %v4102
    %v4231 = vcvt.s32.f32 %v4103
    %v4232 = vcvt.s32.f32 %v4104
    %v4233 = vcvt.s32.f32 %v4105
    %v4234 = vcvt.s32.f32 %v4106
    %v4235 = vcvt.s32.f32 %v4107
    %v4236 = vcvt.s32.f32 %v4108
    %v4237 = vcvt.s32.f32 %v4109
    %v4238 = vcvt.s32.f32 %v4110
    %v4239 = vcvt.s32.f32 %v4111
    %v4240 = vcvt.s32.f32 %v4112
    %v4241 = vcvt.s32.f32 %v4113
    %v4242 = vcvt.s32.f32 %v4114
    %v4243 = vcvt.s32.f32 %v4115
    %v4244 = vcvt.s32.f32 %v4116
    %v4245 = vcvt.s32.f32 %v4117
    %v4246 = vcvt.s32.f32 %v4118
    %v4247 = vcvt.s32.f32 %v4119
    %v4248 = vcvt.s32.f32 %v4120
    %v4249 = vcvt.s32.f32 %v4121
    %v4250 = vcvt.s32.f32 %v4122
    %v4251 = vcvt.s32.f32 %v4123
    %v4252 = vcvt.s32.f32 %v4124
    %v4253 = vcvt.s32.f32 %v4125
    %v4254 = vcvt.s32.f32 %v4126
    %v4255 = vcvt.s32.f32 %v4127
    %v4256 = vcvt.s32.f32 %v4128
    %v4257 = vcvt.s32.f32 %v4129
    %v4258 = vcvt.s32.f32 %v4130
    %v4259 = vcvt.s32.f32 %v4131
    %v4260 = vcvt.s32.f32 %v4132
    %v4261 = vcvt.s32.f32 %v4133
    %v4262 = vcvt.s32.f32 %v4134
    %v4263 = vcvt.s32.f32 %v4135
    %v4264 = vcvt.s32.f32 %v4136
    %v4265 = vcvt.s32.f32 %v4137
    %v4266 = vcvt.s32.f32 %v4138
    %v4267 = vcvt.s32.f32 %v4139
    %v4268 = vcvt.s32.f32 %v4140
    %v4269 = vcvt.s32.f32 %v4141
    %v4270 = vcvt.s32.f32 %v4142
    %v4271 = vcvt.s32.f32 %v4143
    %v4272 = vcvt.s32.f32 %v4144
    %v4273 = vcvt.s32.f32 %v4145
    %v4274 = vcvt.s32.f32 %v4146
    %v4275 = vcvt.s32.f32 %v4147
    %v4276 = vcvt.s32.f32 %v4148
    %v4277 = vcvt.s32.f32 %v4149
    %v4278 = vcvt.s32.f32 %v4150
    %v4279 = vcvt.s32.f32 %v4151
    %v4280 = vcvt.s32.f32 %v4152
    %v4281 = vcvt.s32.f32 %v4153
    %v4282 = vcvt.s32.f32 %v4154
    %v4283 = vcvt.s32.f32 %v4155
    %v4284 = vcvt.s32.f32 %v4156
    %v4285 = vcvt.s32.f32 %v4157
    %v4286 = vcvt.s32.f32 %v4158
    %v4287 = vcvt.s32.f32 %v4159
    %v4288 = vcvt.s32.f32 %v4160
    %v4289 = vcvt.s32.f32 %v4161
    %v4290 = vcvt.s32.f32 %v4162
    %v4291 = vcvt.s32.f32 %v4163
    %v4292 = vcvt.s32.f32 %v4164
    %v4293 = vcvt.s32.f32 %v4165
    %v4294 = vcvt.s32.f32 %v4166
    %v4295 = vcvt.s32.f32 %v4167
    %v4296 = vcvt.s32.f32 %v4168
    %v4297 = vcvt.s32.f32 %v4169
    %v4298 = vcvt.s32.f32 %v4170
    %v4299 = vcvt.s32.f32 %v4171
    %v4300 = vcvt.s32.f32 %v4172
    %v4301 = vcvt.s32.f32 %v4173
    %v4302 = vcvt.s32.f32 %v4174
    %v4303 = vcvt.s32.f32 %v4175
    %v4304 = vcvt.s32.f32 %v4176
    %v4305 = vcvt.s32.f32 %v4177
    %v4306 = vcvt.s32.f32 %v4178
    %v4307 = vcvt.s32.f32 %v4179
    %v4308 = vcvt.s32.f32 %v4180
    %v4309 = vcvt.s32.f32 %v4181
    %v4310 = vcvt.s32.f32 %v4182
    %v4311 = vcvt.s32.f32 %v4183
    %v4312 = vcvt.s32.f32 %v4184
    %v4313 = vpack.c.bf16 %v4193, %v4185
    %v4314 = vpack.c.bf16 %v4194, %v4186
    %v4315 = vpack.c.bf16 %v4195, %v4187
    %v4316 = vpack.c.bf16 %v4196, %v4188
    %v4317 = vpack.c.bf16 %v4197, %v4189
    %v4318 = vpack.c.bf16 %v4198, %v4190
    %v4319 = vpack.c.bf16 %v4199, %v4191
    %v4320 = vpack.c.bf16 %v4200, %v4192
    %v4321 = vpack.c.bf16 %v4209, %v4201
    %v4322 = vpack.c.bf16 %v4210, %v4202
    %v4323 = vpack.c.bf16 %v4211, %v4203
    %v4324 = vpack.c.bf16 %v4212, %v4204
    %v4325 = vpack.c.bf16 %v4213, %v4205
    %v4326 = vpack.c.bf16 %v4214, %v4206
    %v4327 = vpack.c.bf16 %v4215, %v4207
    %v4328 = vpack.c.bf16 %v4216, %v4208
    %v4329 = vpack.c.bf16 %v4225, %v4217
    %v4330 = vpack.c.bf16 %v4226, %v4218
    %v4331 = vpack.c.bf16 %v4227, %v4219
    %v4332 = vpack.c.bf16 %v4228, %v4220
    %v4333 = vpack.c.bf16 %v4229, %v4221
    %v4334 = vpack.c.bf16 %v4230, %v4222
    %v4335 = vpack.c.bf16 %v4231, %v4223
    %v4336 = vpack.c.bf16 %v4232, %v4224
    %v4337 = vpack.c.bf16 %v4241, %v4233
    %v4338 = vpack.c.bf16 %v4242, %v4234
    %v4339 = vpack.c.bf16 %v4243, %v4235
    %v4340 = vpack.c.bf16 %v4244, %v4236
    %v4341 = vpack.c.bf16 %v4245, %v4237
    %v4342 = vpack.c.bf16 %v4246, %v4238
    %v4343 = vpack.c.bf16 %v4247, %v4239
    %v4344 = vpack.c.bf16 %v4248, %v4240
    %v4345 = vpack.c.bf16 %v4257, %v4249
    %v4346 = vpack.c.bf16 %v4258, %v4250
    %v4347 = vpack.c.bf16 %v4259, %v4251
    %v4348 = vpack.c.bf16 %v4260, %v4252
    %v4349 = vpack.c.bf16 %v4261, %v4253
    %v4350 = vpack.c.bf16 %v4262, %v4254
    %v4351 = vpack.c.bf16 %v4263, %v4255
    %v4352 = vpack.c.bf16 %v4264, %v4256
    %v4353 = vpack.c.bf16 %v4273, %v4265
    %v4354 = vpack.c.bf16 %v4274, %v4266
    %v4355 = vpack.c.bf16 %v4275, %v4267
    %v4356 = vpack.c.bf16 %v4276, %v4268
    %v4357 = vpack.c.bf16 %v4277, %v4269
    %v4358 = vpack.c.bf16 %v4278, %v4270
    %v4359 = vpack.c.bf16 %v4279, %v4271
    %v4360 = vpack.c.bf16 %v4280, %v4272
    %v4361 = vpack.c.bf16 %v4289, %v4281
    %v4362 = vpack.c.bf16 %v4290, %v4282
    %v4363 = vpack.c.bf16 %v4291, %v4283
    %v4364 = vpack.c.bf16 %v4292, %v4284
    %v4365 = vpack.c.bf16 %v4293, %v4285
    %v4366 = vpack.c.bf16 %v4294, %v4286
    %v4367 = vpack.c.bf16 %v4295, %v4287
    %v4368 = vpack.c.bf16 %v4296, %v4288
    %v4369 = vpack.c.bf16 %v4305, %v4297
    %v4370 = vpack.c.bf16 %v4306, %v4298
    %v4371 = vpack.c.bf16 %v4307, %v4299
    %v4372 = vpack.c.bf16 %v4308, %v4300
    %v4373 = vpack.c.bf16 %v4309, %v4301
    %v4374 = vpack.c.bf16 %v4310, %v4302
    %v4375 = vpack.c.bf16 %v4311, %v4303
    %v4376 = vpack.c.bf16 %v4312, %v4304
    %4377 = vst [vmem:[#allocation2 + $0xe00] sm:$0xff] %v4313
    %4378 = vst [vmem:[#allocation2 + $0xe08] sm:$0xff] %v4314
    %4379 = vst [vmem:[#allocation2 + $0xe10] sm:$0xff] %v4315
    %4380 = vst [vmem:[#allocation2 + $0xe18] sm:$0xff] %v4316
    %4381 = vst [vmem:[#allocation2 + $0xe20] sm:$0xff] %v4317
    %4382 = vst [vmem:[#allocation2 + $0xe28] sm:$0xff] %v4318
    %4383 = vst [vmem:[#allocation2 + $0xe30] sm:$0xff] %v4319
    %4384 = vst [vmem:[#allocation2 + $0xe38] sm:$0xff] %v4320
    %4385 = vst [vmem:[#allocation2 + $0xe40] sm:$0xff] %v4321
    %4386 = vst [vmem:[#allocation2 + $0xe48] sm:$0xff] %v4322
    %4387 = vst [vmem:[#allocation2 + $0xe50] sm:$0xff] %v4323
    %4388 = vst [vmem:[#allocation2 + $0xe58] sm:$0xff] %v4324
    %4389 = vst [vmem:[#allocation2 + $0xe60] sm:$0xff] %v4325
    %4390 = vst [vmem:[#allocation2 + $0xe68] sm:$0xff] %v4326
    %4391 = vst [vmem:[#allocation2 + $0xe70] sm:$0xff] %v4327
    %4392 = vst [vmem:[#allocation2 + $0xe78] sm:$0xff] %v4328
    %4393 = vst [vmem:[#allocation2 + $0xe80] sm:$0xff] %v4329
    %4394 = vst [vmem:[#allocation2 + $0xe88] sm:$0xff] %v4330
    %4395 = vst [vmem:[#allocation2 + $0xe90] sm:$0xff] %v4331
    %4396 = vst [vmem:[#allocation2 + $0xe98] sm:$0xff] %v4332
    %4397 = vst [vmem:[#allocation2 + $0xea0] sm:$0xff] %v4333
    %4398 = vst [vmem:[#allocation2 + $0xea8] sm:$0xff] %v4334
    %4399 = vst [vmem:[#allocation2 + $0xeb0] sm:$0xff] %v4335
    %4400 = vst [vmem:[#allocation2 + $0xeb8] sm:$0xff] %v4336
    %4401 = vst [vmem:[#allocation2 + $0xec0] sm:$0xff] %v4337
    %4402 = vst [vmem:[#allocation2 + $0xec8] sm:$0xff] %v4338
    %4403 = vst [vmem:[#allocation2 + $0xed0] sm:$0xff] %v4339
    %4404 = vst [vmem:[#allocation2 + $0xed8] sm:$0xff] %v4340
    %4405 = vst [vmem:[#allocation2 + $0xee0] sm:$0xff] %v4341
    %4406 = vst [vmem:[#allocation2 + $0xee8] sm:$0xff] %v4342
    %4407 = vst [vmem:[#allocation2 + $0xef0] sm:$0xff] %v4343
    %4408 = vst [vmem:[#allocation2 + $0xef8] sm:$0xff] %v4344
    %4409 = vst [vmem:[#allocation2 + $0xf00] sm:$0xff] %v4345
    %4410 = vst [vmem:[#allocation2 + $0xf08] sm:$0xff] %v4346
    %4411 = vst [vmem:[#allocation2 + $0xf10] sm:$0xff] %v4347
    %4412 = vst [vmem:[#allocation2 + $0xf18] sm:$0xff] %v4348
    %4413 = vst [vmem:[#allocation2 + $0xf20] sm:$0xff] %v4349
    %4414 = vst [vmem:[#allocation2 + $0xf28] sm:$0xff] %v4350
    %4415 = vst [vmem:[#allocation2 + $0xf30] sm:$0xff] %v4351
    %4416 = vst [vmem:[#allocation2 + $0xf38] sm:$0xff] %v4352
    %4417 = vst [vmem:[#allocation2 + $0xf40] sm:$0xff] %v4353
    %4418 = vst [vmem:[#allocation2 + $0xf48] sm:$0xff] %v4354
    %4419 = vst [vmem:[#allocation2 + $0xf50] sm:$0xff] %v4355
    %4420 = vst [vmem:[#allocation2 + $0xf58] sm:$0xff] %v4356
    %4421 = vst [vmem:[#allocation2 + $0xf60] sm:$0xff] %v4357
    %4422 = vst [vmem:[#allocation2 + $0xf68] sm:$0xff] %v4358
    %4423 = vst [vmem:[#allocation2 + $0xf70] sm:$0xff] %v4359
    %4424 = vst [vmem:[#allocation2 + $0xf78] sm:$0xff] %v4360
    %4425 = vst [vmem:[#allocation2 + $0xf80] sm:$0xff] %v4361
    %4426 = vst [vmem:[#allocation2 + $0xf88] sm:$0xff] %v4362
    %4427 = vst [vmem:[#allocation2 + $0xf90] sm:$0xff] %v4363
    %4428 = vst [vmem:[#allocation2 + $0xf98] sm:$0xff] %v4364
    %4429 = vst [vmem:[#allocation2 + $0xfa0] sm:$0xff] %v4365
    %4430 = vst [vmem:[#allocation2 + $0xfa8] sm:$0xff] %v4366
    %4431 = vst [vmem:[#allocation2 + $0xfb0] sm:$0xff] %v4367
    %4432 = vst [vmem:[#allocation2 + $0xfb8] sm:$0xff] %v4368
    %4433 = vst [vmem:[#allocation2 + $0xfc0] sm:$0xff] %v4369
    %4434 = vst [vmem:[#allocation2 + $0xfc8] sm:$0xff] %v4370
    %4435 = vst [vmem:[#allocation2 + $0xfd0] sm:$0xff] %v4371
    %4436 = vst [vmem:[#allocation2 + $0xfd8] sm:$0xff] %v4372
    %4437 = vst [vmem:[#allocation2 + $0xfe0] sm:$0xff] %v4373
    %4438 = vst [vmem:[#allocation2 + $0xfe8] sm:$0xff] %v4374
    %4439 = vst [vmem:[#allocation2 + $0xff0] sm:$0xff] %v4375
    %4440 = vst [vmem:[#allocation2 + $0xff8] sm:$0xff] %v4376
    %s4441 = scalar_lea.vmem [#allocation3], 64
    %v4442 = vld [vmem:[%s4441] ss:$8 sm:$0xf]
    %v4443 = vld [vmem:[%s4441] ss:$8 sm:$0xf0]
    %v4444 = vor.u32 %v4442, %v4443
    %v4445 = vlaneseq
    %v4446 = vshrl.u32 %v4445, 7
    %v4447 = vsub.s32 0, %v4446
    %v4448 = vrot.slane %v4444, %v4447
    %v4449 = vlaneseq
    %v4450 = vshrl.u32 %v4449, 7
    %v4451 = vsub.s32 1, %v4450
    %v4452 = vrot.slane %v4444, %v4451
    %v4453 = vlaneseq
    %v4454 = vshrl.u32 %v4453, 7
    %v4455 = vsub.s32 2, %v4454
    %v4456 = vrot.slane %v4444, %v4455
    %v4457 = vlaneseq
    %v4458 = vshrl.u32 %v4457, 7
    %v4459 = vsub.s32 3, %v4458
    %v4460 = vrot.slane %v4444, %v4459
    %v4461 = vlaneseq
    %v4462 = vshrl.u32 %v4461, 7
    %v4463 = vsub.s32 4, %v4462
    %v4464 = vrot.slane %v4444, %v4463
    %v4465 = vlaneseq
    %v4466 = vshrl.u32 %v4465, 7
    %v4467 = vsub.s32 5, %v4466
    %v4468 = vrot.slane %v4444, %v4467
    %v4469 = vlaneseq
    %v4470 = vshrl.u32 %v4469, 7
    %v4471 = vsub.s32 6, %v4470
    %v4472 = vrot.slane %v4444, %v4471
    %v4473 = vlaneseq
    %v4474 = vshrl.u32 %v4473, 7
    %v4475 = vsub.s32 7, %v4474
    %v4476 = vrot.slane %v4444, %v4475
    %vm4477 = vcmp.eq.s32.totalorder %v42, %v4448
    %vm4478 = vcmp.eq.s32.totalorder %v42, %v4452
    %vm4479 = vcmp.eq.s32.totalorder %v42, %v4456
    %vm4480 = vcmp.eq.s32.totalorder %v42, %v4460
    %vm4481 = vcmp.eq.s32.totalorder %v42, %v4464
    %vm4482 = vcmp.eq.s32.totalorder %v42, %v4468
    %vm4483 = vcmp.eq.s32.totalorder %v42, %v4472
    %vm4484 = vcmp.eq.s32.totalorder %v42, %v4476
    %vm4485 = vcmp.eq.s32.totalorder %v43, %v4448
    %vm4486 = vcmp.eq.s32.totalorder %v43, %v4452
    %vm4487 = vcmp.eq.s32.totalorder %v43, %v4456
    %vm4488 = vcmp.eq.s32.totalorder %v43, %v4460
    %vm4489 = vcmp.eq.s32.totalorder %v43, %v4464
    %vm4490 = vcmp.eq.s32.totalorder %v43, %v4468
    %vm4491 = vcmp.eq.s32.totalorder %v43, %v4472
    %vm4492 = vcmp.eq.s32.totalorder %v43, %v4476
    %vm4493 = vcmp.eq.s32.totalorder %v44, %v4448
    %vm4494 = vcmp.eq.s32.totalorder %v44, %v4452
    %vm4495 = vcmp.eq.s32.totalorder %v44, %v4456
    %vm4496 = vcmp.eq.s32.totalorder %v44, %v4460
    %vm4497 = vcmp.eq.s32.totalorder %v44, %v4464
    %vm4498 = vcmp.eq.s32.totalorder %v44, %v4468
    %vm4499 = vcmp.eq.s32.totalorder %v44, %v4472
    %vm4500 = vcmp.eq.s32.totalorder %v44, %v4476
    %vm4501 = vcmp.eq.s32.totalorder %v45, %v4448
    %vm4502 = vcmp.eq.s32.totalorder %v45, %v4452
    %vm4503 = vcmp.eq.s32.totalorder %v45, %v4456
    %vm4504 = vcmp.eq.s32.totalorder %v45, %v4460
    %vm4505 = vcmp.eq.s32.totalorder %v45, %v4464
    %vm4506 = vcmp.eq.s32.totalorder %v45, %v4468
    %vm4507 = vcmp.eq.s32.totalorder %v45, %v4472
    %vm4508 = vcmp.eq.s32.totalorder %v45, %v4476
    %vm4509 = vcmp.eq.s32.totalorder %v46, %v4448
    %vm4510 = vcmp.eq.s32.totalorder %v46, %v4452
    %vm4511 = vcmp.eq.s32.totalorder %v46, %v4456
    %vm4512 = vcmp.eq.s32.totalorder %v46, %v4460
    %vm4513 = vcmp.eq.s32.totalorder %v46, %v4464
    %vm4514 = vcmp.eq.s32.totalorder %v46, %v4468
    %vm4515 = vcmp.eq.s32.totalorder %v46, %v4472
    %vm4516 = vcmp.eq.s32.totalorder %v46, %v4476
    %vm4517 = vcmp.eq.s32.totalorder %v47, %v4448
    %vm4518 = vcmp.eq.s32.totalorder %v47, %v4452
    %vm4519 = vcmp.eq.s32.totalorder %v47, %v4456
    %vm4520 = vcmp.eq.s32.totalorder %v47, %v4460
    %vm4521 = vcmp.eq.s32.totalorder %v47, %v4464
    %vm4522 = vcmp.eq.s32.totalorder %v47, %v4468
    %vm4523 = vcmp.eq.s32.totalorder %v47, %v4472
    %vm4524 = vcmp.eq.s32.totalorder %v47, %v4476
    %vm4525 = vcmp.eq.s32.totalorder %v48, %v4448
    %vm4526 = vcmp.eq.s32.totalorder %v48, %v4452
    %vm4527 = vcmp.eq.s32.totalorder %v48, %v4456
    %vm4528 = vcmp.eq.s32.totalorder %v48, %v4460
    %vm4529 = vcmp.eq.s32.totalorder %v48, %v4464
    %vm4530 = vcmp.eq.s32.totalorder %v48, %v4468
    %vm4531 = vcmp.eq.s32.totalorder %v48, %v4472
    %vm4532 = vcmp.eq.s32.totalorder %v48, %v4476
    %vm4533 = vcmp.eq.s32.totalorder %v49, %v4448
    %vm4534 = vcmp.eq.s32.totalorder %v49, %v4452
    %vm4535 = vcmp.eq.s32.totalorder %v49, %v4456
    %vm4536 = vcmp.eq.s32.totalorder %v49, %v4460
    %vm4537 = vcmp.eq.s32.totalorder %v49, %v4464
    %vm4538 = vcmp.eq.s32.totalorder %v49, %v4468
    %vm4539 = vcmp.eq.s32.totalorder %v49, %v4472
    %vm4540 = vcmp.eq.s32.totalorder %v49, %v4476
    %vm4541 = vcmp.eq.s32.totalorder %v50, %v4448
    %vm4542 = vcmp.eq.s32.totalorder %v50, %v4452
    %vm4543 = vcmp.eq.s32.totalorder %v50, %v4456
    %vm4544 = vcmp.eq.s32.totalorder %v50, %v4460
    %vm4545 = vcmp.eq.s32.totalorder %v50, %v4464
    %vm4546 = vcmp.eq.s32.totalorder %v50, %v4468
    %vm4547 = vcmp.eq.s32.totalorder %v50, %v4472
    %vm4548 = vcmp.eq.s32.totalorder %v50, %v4476
    %vm4549 = vcmp.eq.s32.totalorder %v51, %v4448
    %vm4550 = vcmp.eq.s32.totalorder %v51, %v4452
    %vm4551 = vcmp.eq.s32.totalorder %v51, %v4456
    %vm4552 = vcmp.eq.s32.totalorder %v51, %v4460
    %vm4553 = vcmp.eq.s32.totalorder %v51, %v4464
    %vm4554 = vcmp.eq.s32.totalorder %v51, %v4468
    %vm4555 = vcmp.eq.s32.totalorder %v51, %v4472
    %vm4556 = vcmp.eq.s32.totalorder %v51, %v4476
    %vm4557 = vcmp.eq.s32.totalorder %v52, %v4448
    %vm4558 = vcmp.eq.s32.totalorder %v52, %v4452
    %vm4559 = vcmp.eq.s32.totalorder %v52, %v4456
    %vm4560 = vcmp.eq.s32.totalorder %v52, %v4460
    %vm4561 = vcmp.eq.s32.totalorder %v52, %v4464
    %vm4562 = vcmp.eq.s32.totalorder %v52, %v4468
    %vm4563 = vcmp.eq.s32.totalorder %v52, %v4472
    %vm4564 = vcmp.eq.s32.totalorder %v52, %v4476
    %vm4565 = vcmp.eq.s32.totalorder %v53, %v4448
    %vm4566 = vcmp.eq.s32.totalorder %v53, %v4452
    %vm4567 = vcmp.eq.s32.totalorder %v53, %v4456
    %vm4568 = vcmp.eq.s32.totalorder %v53, %v4460
    %vm4569 = vcmp.eq.s32.totalorder %v53, %v4464
    %vm4570 = vcmp.eq.s32.totalorder %v53, %v4468
    %vm4571 = vcmp.eq.s32.totalorder %v53, %v4472
    %vm4572 = vcmp.eq.s32.totalorder %v53, %v4476
    %vm4573 = vcmp.eq.s32.totalorder %v54, %v4448
    %vm4574 = vcmp.eq.s32.totalorder %v54, %v4452
    %vm4575 = vcmp.eq.s32.totalorder %v54, %v4456
    %vm4576 = vcmp.eq.s32.totalorder %v54, %v4460
    %vm4577 = vcmp.eq.s32.totalorder %v54, %v4464
    %vm4578 = vcmp.eq.s32.totalorder %v54, %v4468
    %vm4579 = vcmp.eq.s32.totalorder %v54, %v4472
    %vm4580 = vcmp.eq.s32.totalorder %v54, %v4476
    %vm4581 = vcmp.eq.s32.totalorder %v55, %v4448
    %vm4582 = vcmp.eq.s32.totalorder %v55, %v4452
    %vm4583 = vcmp.eq.s32.totalorder %v55, %v4456
    %vm4584 = vcmp.eq.s32.totalorder %v55, %v4460
    %vm4585 = vcmp.eq.s32.totalorder %v55, %v4464
    %vm4586 = vcmp.eq.s32.totalorder %v55, %v4468
    %vm4587 = vcmp.eq.s32.totalorder %v55, %v4472
    %vm4588 = vcmp.eq.s32.totalorder %v55, %v4476
    %vm4589 = vcmp.eq.s32.totalorder %v56, %v4448
    %vm4590 = vcmp.eq.s32.totalorder %v56, %v4452
    %vm4591 = vcmp.eq.s32.totalorder %v56, %v4456
    %vm4592 = vcmp.eq.s32.totalorder %v56, %v4460
    %vm4593 = vcmp.eq.s32.totalorder %v56, %v4464
    %vm4594 = vcmp.eq.s32.totalorder %v56, %v4468
    %vm4595 = vcmp.eq.s32.totalorder %v56, %v4472
    %vm4596 = vcmp.eq.s32.totalorder %v56, %v4476
    %vm4597 = vcmp.eq.s32.totalorder %v57, %v4448
    %vm4598 = vcmp.eq.s32.totalorder %v57, %v4452
    %vm4599 = vcmp.eq.s32.totalorder %v57, %v4456
    %vm4600 = vcmp.eq.s32.totalorder %v57, %v4460
    %vm4601 = vcmp.eq.s32.totalorder %v57, %v4464
    %vm4602 = vcmp.eq.s32.totalorder %v57, %v4468
    %vm4603 = vcmp.eq.s32.totalorder %v57, %v4472
    %vm4604 = vcmp.eq.s32.totalorder %v57, %v4476
    %v4605 = vsel %vm4477, 1, 0
    %v4606 = vsel %vm4478, 1, 0
    %v4607 = vsel %vm4479, 1, 0
    %v4608 = vsel %vm4480, 1, 0
    %v4609 = vsel %vm4481, 1, 0
    %v4610 = vsel %vm4482, 1, 0
    %v4611 = vsel %vm4483, 1, 0
    %v4612 = vsel %vm4484, 1, 0
    %v4613 = vsel %vm4485, 1, 0
    %v4614 = vsel %vm4486, 1, 0
    %v4615 = vsel %vm4487, 1, 0
    %v4616 = vsel %vm4488, 1, 0
    %v4617 = vsel %vm4489, 1, 0
    %v4618 = vsel %vm4490, 1, 0
    %v4619 = vsel %vm4491, 1, 0
    %v4620 = vsel %vm4492, 1, 0
    %v4621 = vsel %vm4493, 1, 0
    %v4622 = vsel %vm4494, 1, 0
    %v4623 = vsel %vm4495, 1, 0
    %v4624 = vsel %vm4496, 1, 0
    %v4625 = vsel %vm4497, 1, 0
    %v4626 = vsel %vm4498, 1, 0
    %v4627 = vsel %vm4499, 1, 0
    %v4628 = vsel %vm4500, 1, 0
    %v4629 = vsel %vm4501, 1, 0
    %v4630 = vsel %vm4502, 1, 0
    %v4631 = vsel %vm4503, 1, 0
    %v4632 = vsel %vm4504, 1, 0
    %v4633 = vsel %vm4505, 1, 0
    %v4634 = vsel %vm4506, 1, 0
    %v4635 = vsel %vm4507, 1, 0
    %v4636 = vsel %vm4508, 1, 0
    %v4637 = vsel %vm4509, 1, 0
    %v4638 = vsel %vm4510, 1, 0
    %v4639 = vsel %vm4511, 1, 0
    %v4640 = vsel %vm4512, 1, 0
    %v4641 = vsel %vm4513, 1, 0
    %v4642 = vsel %vm4514, 1, 0
    %v4643 = vsel %vm4515, 1, 0
    %v4644 = vsel %vm4516, 1, 0
    %v4645 = vsel %vm4517, 1, 0
    %v4646 = vsel %vm4518, 1, 0
    %v4647 = vsel %vm4519, 1, 0
    %v4648 = vsel %vm4520, 1, 0
    %v4649 = vsel %vm4521, 1, 0
    %v4650 = vsel %vm4522, 1, 0
    %v4651 = vsel %vm4523, 1, 0
    %v4652 = vsel %vm4524, 1, 0
    %v4653 = vsel %vm4525, 1, 0
    %v4654 = vsel %vm4526, 1, 0
    %v4655 = vsel %vm4527, 1, 0
    %v4656 = vsel %vm4528, 1, 0
    %v4657 = vsel %vm4529, 1, 0
    %v4658 = vsel %vm4530, 1, 0
    %v4659 = vsel %vm4531, 1, 0
    %v4660 = vsel %vm4532, 1, 0
    %v4661 = vsel %vm4533, 1, 0
    %v4662 = vsel %vm4534, 1, 0
    %v4663 = vsel %vm4535, 1, 0
    %v4664 = vsel %vm4536, 1, 0
    %v4665 = vsel %vm4537, 1, 0
    %v4666 = vsel %vm4538, 1, 0
    %v4667 = vsel %vm4539, 1, 0
    %v4668 = vsel %vm4540, 1, 0
    %v4669 = vsel %vm4541, 1, 0
    %v4670 = vsel %vm4542, 1, 0
    %v4671 = vsel %vm4543, 1, 0
    %v4672 = vsel %vm4544, 1, 0
    %v4673 = vsel %vm4545, 1, 0
    %v4674 = vsel %vm4546, 1, 0
    %v4675 = vsel %vm4547, 1, 0
    %v4676 = vsel %vm4548, 1, 0
    %v4677 = vsel %vm4549, 1, 0
    %v4678 = vsel %vm4550, 1, 0
    %v4679 = vsel %vm4551, 1, 0
    %v4680 = vsel %vm4552, 1, 0
    %v4681 = vsel %vm4553, 1, 0
    %v4682 = vsel %vm4554, 1, 0
    %v4683 = vsel %vm4555, 1, 0
    %v4684 = vsel %vm4556, 1, 0
    %v4685 = vsel %vm4557, 1, 0
    %v4686 = vsel %vm4558, 1, 0
    %v4687 = vsel %vm4559, 1, 0
    %v4688 = vsel %vm4560, 1, 0
    %v4689 = vsel %vm4561, 1, 0
    %v4690 = vsel %vm4562, 1, 0
    %v4691 = vsel %vm4563, 1, 0
    %v4692 = vsel %vm4564, 1, 0
    %v4693 = vsel %vm4565, 1, 0
    %v4694 = vsel %vm4566, 1, 0
    %v4695 = vsel %vm4567, 1, 0
    %v4696 = vsel %vm4568, 1, 0
    %v4697 = vsel %vm4569, 1, 0
    %v4698 = vsel %vm4570, 1, 0
    %v4699 = vsel %vm4571, 1, 0
    %v4700 = vsel %vm4572, 1, 0
    %v4701 = vsel %vm4573, 1, 0
    %v4702 = vsel %vm4574, 1, 0
    %v4703 = vsel %vm4575, 1, 0
    %v4704 = vsel %vm4576, 1, 0
    %v4705 = vsel %vm4577, 1, 0
    %v4706 = vsel %vm4578, 1, 0
    %v4707 = vsel %vm4579, 1, 0
    %v4708 = vsel %vm4580, 1, 0
    %v4709 = vsel %vm4581, 1, 0
    %v4710 = vsel %vm4582, 1, 0
    %v4711 = vsel %vm4583, 1, 0
    %v4712 = vsel %vm4584, 1, 0
    %v4713 = vsel %vm4585, 1, 0
    %v4714 = vsel %vm4586, 1, 0
    %v4715 = vsel %vm4587, 1, 0
    %v4716 = vsel %vm4588, 1, 0
    %v4717 = vsel %vm4589, 1, 0
    %v4718 = vsel %vm4590, 1, 0
    %v4719 = vsel %vm4591, 1, 0
    %v4720 = vsel %vm4592, 1, 0
    %v4721 = vsel %vm4593, 1, 0
    %v4722 = vsel %vm4594, 1, 0
    %v4723 = vsel %vm4595, 1, 0
    %v4724 = vsel %vm4596, 1, 0
    %v4725 = vsel %vm4597, 1, 0
    %v4726 = vsel %vm4598, 1, 0
    %v4727 = vsel %vm4599, 1, 0
    %v4728 = vsel %vm4600, 1, 0
    %v4729 = vsel %vm4601, 1, 0
    %v4730 = vsel %vm4602, 1, 0
    %v4731 = vsel %vm4603, 1, 0
    %v4732 = vsel %vm4604, 1, 0
    %v4733 = vcvt.s32.f32 %v4605
    %v4734 = vcvt.s32.f32 %v4606
    %v4735 = vcvt.s32.f32 %v4607
    %v4736 = vcvt.s32.f32 %v4608
    %v4737 = vcvt.s32.f32 %v4609
    %v4738 = vcvt.s32.f32 %v4610
    %v4739 = vcvt.s32.f32 %v4611
    %v4740 = vcvt.s32.f32 %v4612
    %v4741 = vcvt.s32.f32 %v4613
    %v4742 = vcvt.s32.f32 %v4614
    %v4743 = vcvt.s32.f32 %v4615
    %v4744 = vcvt.s32.f32 %v4616
    %v4745 = vcvt.s32.f32 %v4617
    %v4746 = vcvt.s32.f32 %v4618
    %v4747 = vcvt.s32.f32 %v4619
    %v4748 = vcvt.s32.f32 %v4620
    %v4749 = vcvt.s32.f32 %v4621
    %v4750 = vcvt.s32.f32 %v4622
    %v4751 = vcvt.s32.f32 %v4623
    %v4752 = vcvt.s32.f32 %v4624
    %v4753 = vcvt.s32.f32 %v4625
    %v4754 = vcvt.s32.f32 %v4626
    %v4755 = vcvt.s32.f32 %v4627
    %v4756 = vcvt.s32.f32 %v4628
    %v4757 = vcvt.s32.f32 %v4629
    %v4758 = vcvt.s32.f32 %v4630
    %v4759 = vcvt.s32.f32 %v4631
    %v4760 = vcvt.s32.f32 %v4632
    %v4761 = vcvt.s32.f32 %v4633
    %v4762 = vcvt.s32.f32 %v4634
    %v4763 = vcvt.s32.f32 %v4635
    %v4764 = vcvt.s32.f32 %v4636
    %v4765 = vcvt.s32.f32 %v4637
    %v4766 = vcvt.s32.f32 %v4638
    %v4767 = vcvt.s32.f32 %v4639
    %v4768 = vcvt.s32.f32 %v4640
    %v4769 = vcvt.s32.f32 %v4641
    %v4770 = vcvt.s32.f32 %v4642
    %v4771 = vcvt.s32.f32 %v4643
    %v4772 = vcvt.s32.f32 %v4644
    %v4773 = vcvt.s32.f32 %v4645
    %v4774 = vcvt.s32.f32 %v4646
    %v4775 = vcvt.s32.f32 %v4647
    %v4776 = vcvt.s32.f32 %v4648
    %v4777 = vcvt.s32.f32 %v4649
    %v4778 = vcvt.s32.f32 %v4650
    %v4779 = vcvt.s32.f32 %v4651
    %v4780 = vcvt.s32.f32 %v4652
    %v4781 = vcvt.s32.f32 %v4653
    %v4782 = vcvt.s32.f32 %v4654
    %v4783 = vcvt.s32.f32 %v4655
    %v4784 = vcvt.s32.f32 %v4656
    %v4785 = vcvt.s32.f32 %v4657
    %v4786 = vcvt.s32.f32 %v4658
    %v4787 = vcvt.s32.f32 %v4659
    %v4788 = vcvt.s32.f32 %v4660
    %v4789 = vcvt.s32.f32 %v4661
    %v4790 = vcvt.s32.f32 %v4662
    %v4791 = vcvt.s32.f32 %v4663
    %v4792 = vcvt.s32.f32 %v4664
    %v4793 = vcvt.s32.f32 %v4665
    %v4794 = vcvt.s32.f32 %v4666
    %v4795 = vcvt.s32.f32 %v4667
    %v4796 = vcvt.s32.f32 %v4668
    %v4797 = vcvt.s32.f32 %v4669
    %v4798 = vcvt.s32.f32 %v4670
    %v4799 = vcvt.s32.f32 %v4671
    %v4800 = vcvt.s32.f32 %v4672
    %v4801 = vcvt.s32.f32 %v4673
    %v4802 = vcvt.s32.f32 %v4674
    %v4803 = vcvt.s32.f32 %v4675
    %v4804 = vcvt.s32.f32 %v4676
    %v4805 = vcvt.s32.f32 %v4677
    %v4806 = vcvt.s32.f32 %v4678
    %v4807 = vcvt.s32.f32 %v4679
    %v4808 = vcvt.s32.f32 %v4680
    %v4809 = vcvt.s32.f32 %v4681
    %v4810 = vcvt.s32.f32 %v4682
    %v4811 = vcvt.s32.f32 %v4683
    %v4812 = vcvt.s32.f32 %v4684
    %v4813 = vcvt.s32.f32 %v4685
    %v4814 = vcvt.s32.f32 %v4686
    %v4815 = vcvt.s32.f32 %v4687
    %v4816 = vcvt.s32.f32 %v4688
    %v4817 = vcvt.s32.f32 %v4689
    %v4818 = vcvt.s32.f32 %v4690
    %v4819 = vcvt.s32.f32 %v4691
    %v4820 = vcvt.s32.f32 %v4692
    %v4821 = vcvt.s32.f32 %v4693
    %v4822 = vcvt.s32.f32 %v4694
    %v4823 = vcvt.s32.f32 %v4695
    %v4824 = vcvt.s32.f32 %v4696
    %v4825 = vcvt.s32.f32 %v4697
    %v4826 = vcvt.s32.f32 %v4698
    %v4827 = vcvt.s32.f32 %v4699
    %v4828 = vcvt.s32.f32 %v4700
    %v4829 = vcvt.s32.f32 %v4701
    %v4830 = vcvt.s32.f32 %v4702
    %v4831 = vcvt.s32.f32 %v4703
    %v4832 = vcvt.s32.f32 %v4704
    %v4833 = vcvt.s32.f32 %v4705
    %v4834 = vcvt.s32.f32 %v4706
    %v4835 = vcvt.s32.f32 %v4707
    %v4836 = vcvt.s32.f32 %v4708
    %v4837 = vcvt.s32.f32 %v4709
    %v4838 = vcvt.s32.f32 %v4710
    %v4839 = vcvt.s32.f32 %v4711
    %v4840 = vcvt.s32.f32 %v4712
    %v4841 = vcvt.s32.f32 %v4713
    %v4842 = vcvt.s32.f32 %v4714
    %v4843 = vcvt.s32.f32 %v4715
    %v4844 = vcvt.s32.f32 %v4716
    %v4845 = vcvt.s32.f32 %v4717
    %v4846 = vcvt.s32.f32 %v4718
    %v4847 = vcvt.s32.f32 %v4719
    %v4848 = vcvt.s32.f32 %v4720
    %v4849 = vcvt.s32.f32 %v4721
    %v4850 = vcvt.s32.f32 %v4722
    %v4851 = vcvt.s32.f32 %v4723
    %v4852 = vcvt.s32.f32 %v4724
    %v4853 = vcvt.s32.f32 %v4725
    %v4854 = vcvt.s32.f32 %v4726
    %v4855 = vcvt.s32.f32 %v4727
    %v4856 = vcvt.s32.f32 %v4728
    %v4857 = vcvt.s32.f32 %v4729
    %v4858 = vcvt.s32.f32 %v4730
    %v4859 = vcvt.s32.f32 %v4731
    %v4860 = vcvt.s32.f32 %v4732
    %v4861 = vpack.c.bf16 %v4741, %v4733
    %v4862 = vpack.c.bf16 %v4742, %v4734
    %v4863 = vpack.c.bf16 %v4743, %v4735
    %v4864 = vpack.c.bf16 %v4744, %v4736
    %v4865 = vpack.c.bf16 %v4745, %v4737
    %v4866 = vpack.c.bf16 %v4746, %v4738
    %v4867 = vpack.c.bf16 %v4747, %v4739
    %v4868 = vpack.c.bf16 %v4748, %v4740
    %v4869 = vpack.c.bf16 %v4757, %v4749
    %v4870 = vpack.c.bf16 %v4758, %v4750
    %v4871 = vpack.c.bf16 %v4759, %v4751
    %v4872 = vpack.c.bf16 %v4760, %v4752
    %v4873 = vpack.c.bf16 %v4761, %v4753
    %v4874 = vpack.c.bf16 %v4762, %v4754
    %v4875 = vpack.c.bf16 %v4763, %v4755
    %v4876 = vpack.c.bf16 %v4764, %v4756
    %v4877 = vpack.c.bf16 %v4773, %v4765
    %v4878 = vpack.c.bf16 %v4774, %v4766
    %v4879 = vpack.c.bf16 %v4775, %v4767
    %v4880 = vpack.c.bf16 %v4776, %v4768
    %v4881 = vpack.c.bf16 %v4777, %v4769
    %v4882 = vpack.c.bf16 %v4778, %v4770
    %v4883 = vpack.c.bf16 %v4779, %v4771
    %v4884 = vpack.c.bf16 %v4780, %v4772
    %v4885 = vpack.c.bf16 %v4789, %v4781
    %v4886 = vpack.c.bf16 %v4790, %v4782
    %v4887 = vpack.c.bf16 %v4791, %v4783
    %v4888 = vpack.c.bf16 %v4792, %v4784
    %v4889 = vpack.c.bf16 %v4793, %v4785
    %v4890 = vpack.c.bf16 %v4794, %v4786
    %v4891 = vpack.c.bf16 %v4795, %v4787
    %v4892 = vpack.c.bf16 %v4796, %v4788
    %v4893 = vpack.c.bf16 %v4805, %v4797
    %v4894 = vpack.c.bf16 %v4806, %v4798
    %v4895 = vpack.c.bf16 %v4807, %v4799
    %v4896 = vpack.c.bf16 %v4808, %v4800
    %v4897 = vpack.c.bf16 %v4809, %v4801
    %v4898 = vpack.c.bf16 %v4810, %v4802
    %v4899 = vpack.c.bf16 %v4811, %v4803
    %v4900 = vpack.c.bf16 %v4812, %v4804
    %v4901 = vpack.c.bf16 %v4821, %v4813
    %v4902 = vpack.c.bf16 %v4822, %v4814
    %v4903 = vpack.c.bf16 %v4823, %v4815
    %v4904 = vpack.c.bf16 %v4824, %v4816
    %v4905 = vpack.c.bf16 %v4825, %v4817
    %v4906 = vpack.c.bf16 %v4826, %v4818
    %v4907 = vpack.c.bf16 %v4827, %v4819
    %v4908 = vpack.c.bf16 %v4828, %v4820
    %v4909 = vpack.c.bf16 %v4837, %v4829
    %v4910 = vpack.c.bf16 %v4838, %v4830
    %v4911 = vpack.c.bf16 %v4839, %v4831
    %v4912 = vpack.c.bf16 %v4840, %v4832
    %v4913 = vpack.c.bf16 %v4841, %v4833
    %v4914 = vpack.c.bf16 %v4842, %v4834
    %v4915 = vpack.c.bf16 %v4843, %v4835
    %v4916 = vpack.c.bf16 %v4844, %v4836
    %v4917 = vpack.c.bf16 %v4853, %v4845
    %v4918 = vpack.c.bf16 %v4854, %v4846
    %v4919 = vpack.c.bf16 %v4855, %v4847
    %v4920 = vpack.c.bf16 %v4856, %v4848
    %v4921 = vpack.c.bf16 %v4857, %v4849
    %v4922 = vpack.c.bf16 %v4858, %v4850
    %v4923 = vpack.c.bf16 %v4859, %v4851
    %v4924 = vpack.c.bf16 %v4860, %v4852
    %4925 = vst [vmem:[#allocation2 + $0x1000] sm:$0xff] %v4861
    %4926 = vst [vmem:[#allocation2 + $0x1008] sm:$0xff] %v4862
    %4927 = vst [vmem:[#allocation2 + $0x1010] sm:$0xff] %v4863
    %4928 = vst [vmem:[#allocation2 + $0x1018] sm:$0xff] %v4864
    %4929 = vst [vmem:[#allocation2 + $0x1020] sm:$0xff] %v4865
    %4930 = vst [vmem:[#allocation2 + $0x1028] sm:$0xff] %v4866
    %4931 = vst [vmem:[#allocation2 + $0x1030] sm:$0xff] %v4867
    %4932 = vst [vmem:[#allocation2 + $0x1038] sm:$0xff] %v4868
    %4933 = vst [vmem:[#allocation2 + $0x1040] sm:$0xff] %v4869
    %4934 = vst [vmem:[#allocation2 + $0x1048] sm:$0xff] %v4870
    %4935 = vst [vmem:[#allocation2 + $0x1050] sm:$0xff] %v4871
    %4936 = vst [vmem:[#allocation2 + $0x1058] sm:$0xff] %v4872
    %4937 = vst [vmem:[#allocation2 + $0x1060] sm:$0xff] %v4873
    %4938 = vst [vmem:[#allocation2 + $0x1068] sm:$0xff] %v4874
    %4939 = vst [vmem:[#allocation2 + $0x1070] sm:$0xff] %v4875
    %4940 = vst [vmem:[#allocation2 + $0x1078] sm:$0xff] %v4876
    %4941 = vst [vmem:[#allocation2 + $0x1080] sm:$0xff] %v4877
    %4942 = vst [vmem:[#allocation2 + $0x1088] sm:$0xff] %v4878
    %4943 = vst [vmem:[#allocation2 + $0x1090] sm:$0xff] %v4879
    %4944 = vst [vmem:[#allocation2 + $0x1098] sm:$0xff] %v4880
    %4945 = vst [vmem:[#allocation2 + $0x10a0] sm:$0xff] %v4881
    %4946 = vst [vmem:[#allocation2 + $0x10a8] sm:$0xff] %v4882
    %4947 = vst [vmem:[#allocation2 + $0x10b0] sm:$0xff] %v4883
    %4948 = vst [vmem:[#allocation2 + $0x10b8] sm:$0xff] %v4884
    %4949 = vst [vmem:[#allocation2 + $0x10c0] sm:$0xff] %v4885
    %4950 = vst [vmem:[#allocation2 + $0x10c8] sm:$0xff] %v4886
    %4951 = vst [vmem:[#allocation2 + $0x10d0] sm:$0xff] %v4887
    %4952 = vst [vmem:[#allocation2 + $0x10d8] sm:$0xff] %v4888
    %4953 = vst [vmem:[#allocation2 + $0x10e0] sm:$0xff] %v4889
    %4954 = vst [vmem:[#allocation2 + $0x10e8] sm:$0xff] %v4890
    %4955 = vst [vmem:[#allocation2 + $0x10f0] sm:$0xff] %v4891
    %4956 = vst [vmem:[#allocation2 + $0x10f8] sm:$0xff] %v4892
    %4957 = vst [vmem:[#allocation2 + $0x1100] sm:$0xff] %v4893
    %4958 = vst [vmem:[#allocation2 + $0x1108] sm:$0xff] %v4894
    %4959 = vst [vmem:[#allocation2 + $0x1110] sm:$0xff] %v4895
    %4960 = vst [vmem:[#allocation2 + $0x1118] sm:$0xff] %v4896
    %4961 = vst [vmem:[#allocation2 + $0x1120] sm:$0xff] %v4897
    %4962 = vst [vmem:[#allocation2 + $0x1128] sm:$0xff] %v4898
    %4963 = vst [vmem:[#allocation2 + $0x1130] sm:$0xff] %v4899
    %4964 = vst [vmem:[#allocation2 + $0x1138] sm:$0xff] %v4900
    %4965 = vst [vmem:[#allocation2 + $0x1140] sm:$0xff] %v4901
    %4966 = vst [vmem:[#allocation2 + $0x1148] sm:$0xff] %v4902
    %4967 = vst [vmem:[#allocation2 + $0x1150] sm:$0xff] %v4903
    %4968 = vst [vmem:[#allocation2 + $0x1158] sm:$0xff] %v4904
    %4969 = vst [vmem:[#allocation2 + $0x1160] sm:$0xff] %v4905
    %4970 = vst [vmem:[#allocation2 + $0x1168] sm:$0xff] %v4906
    %4971 = vst [vmem:[#allocation2 + $0x1170] sm:$0xff] %v4907
    %4972 = vst [vmem:[#allocation2 + $0x1178] sm:$0xff] %v4908
    %4973 = vst [vmem:[#allocation2 + $0x1180] sm:$0xff] %v4909
    %4974 = vst [vmem:[#allocation2 + $0x1188] sm:$0xff] %v4910
    %4975 = vst [vmem:[#allocation2 + $0x1190] sm:$0xff] %v4911
    %4976 = vst [vmem:[#allocation2 + $0x1198] sm:$0xff] %v4912
    %4977 = vst [vmem:[#allocation2 + $0x11a0] sm:$0xff] %v4913
    %4978 = vst [vmem:[#allocation2 + $0x11a8] sm:$0xff] %v4914
    %4979 = vst [vmem:[#allocation2 + $0x11b0] sm:$0xff] %v4915
    %4980 = vst [vmem:[#allocation2 + $0x11b8] sm:$0xff] %v4916
    %4981 = vst [vmem:[#allocation2 + $0x11c0] sm:$0xff] %v4917
    %4982 = vst [vmem:[#allocation2 + $0x11c8] sm:$0xff] %v4918
    %4983 = vst [vmem:[#allocation2 + $0x11d0] sm:$0xff] %v4919
    %4984 = vst [vmem:[#allocation2 + $0x11d8] sm:$0xff] %v4920
    %4985 = vst [vmem:[#allocation2 + $0x11e0] sm:$0xff] %v4921
    %4986 = vst [vmem:[#allocation2 + $0x11e8] sm:$0xff] %v4922
    %4987 = vst [vmem:[#allocation2 + $0x11f0] sm:$0xff] %v4923
    %4988 = vst [vmem:[#allocation2 + $0x11f8] sm:$0xff] %v4924
    %v4989 = vld [vmem:[#allocation2] sm:$0xff]
    %v4990 = vld [vmem:[#allocation2 + $0x8] sm:$0xff]
    %v4991 = vld [vmem:[#allocation2 + $0x10] sm:$0xff]
    %v4992 = vld [vmem:[#allocation2 + $0x18] sm:$0xff]
    %v4993 = vld [vmem:[#allocation2 + $0x20] sm:$0xff]
    %v4994 = vld [vmem:[#allocation2 + $0x28] sm:$0xff]
    %v4995 = vld [vmem:[#allocation2 + $0x30] sm:$0xff]
    %v4996 = vld [vmem:[#allocation2 + $0x38] sm:$0xff]
    %v4997 = vld [vmem:[#allocation2 + $0x40] sm:$0xff]
    %v4998 = vld [vmem:[#allocation2 + $0x48] sm:$0xff]
    %v4999 = vld [vmem:[#allocation2 + $0x50] sm:$0xff]
    %v5000 = vld [vmem:[#allocation2 + $0x58] sm:$0xff]
    %v5001 = vld [vmem:[#allocation2 + $0x60] sm:$0xff]
    %v5002 = vld [vmem:[#allocation2 + $0x68] sm:$0xff]
    %v5003 = vld [vmem:[#allocation2 + $0x70] sm:$0xff]
    %v5004 = vld [vmem:[#allocation2 + $0x78] sm:$0xff]
    %v5005 = vld [vmem:[#allocation2 + $0x80] sm:$0xff]
    %v5006 = vld [vmem:[#allocation2 + $0x88] sm:$0xff]
    %v5007 = vld [vmem:[#allocation2 + $0x90] sm:$0xff]
    %v5008 = vld [vmem:[#allocation2 + $0x98] sm:$0xff]
    %v5009 = vld [vmem:[#allocation2 + $0xa0] sm:$0xff]
    %v5010 = vld [vmem:[#allocation2 + $0xa8] sm:$0xff]
    %v5011 = vld [vmem:[#allocation2 + $0xb0] sm:$0xff]
    %v5012 = vld [vmem:[#allocation2 + $0xb8] sm:$0xff]
    %v5013 = vld [vmem:[#allocation2 + $0xc0] sm:$0xff]
    %v5014 = vld [vmem:[#allocation2 + $0xc8] sm:$0xff]
    %v5015 = vld [vmem:[#allocation2 + $0xd0] sm:$0xff]
    %v5016 = vld [vmem:[#allocation2 + $0xd8] sm:$0xff]
    %v5017 = vld [vmem:[#allocation2 + $0xe0] sm:$0xff]
    %v5018 = vld [vmem:[#allocation2 + $0xe8] sm:$0xff]
    %v5019 = vld [vmem:[#allocation2 + $0xf0] sm:$0xff]
    %v5020 = vld [vmem:[#allocation2 + $0xf8] sm:$0xff]
    %v5021 = vld [vmem:[#allocation2 + $0x100] sm:$0xff]
    %v5022 = vld [vmem:[#allocation2 + $0x108] sm:$0xff]
    %v5023 = vld [vmem:[#allocation2 + $0x110] sm:$0xff]
    %v5024 = vld [vmem:[#allocation2 + $0x118] sm:$0xff]
    %v5025 = vld [vmem:[#allocation2 + $0x120] sm:$0xff]
    %v5026 = vld [vmem:[#allocation2 + $0x128] sm:$0xff]
    %v5027 = vld [vmem:[#allocation2 + $0x130] sm:$0xff]
    %v5028 = vld [vmem:[#allocation2 + $0x138] sm:$0xff]
    %v5029 = vld [vmem:[#allocation2 + $0x140] sm:$0xff]
    %v5030 = vld [vmem:[#allocation2 + $0x148] sm:$0xff]
    %v5031 = vld [vmem:[#allocation2 + $0x150] sm:$0xff]
    %v5032 = vld [vmem:[#allocation2 + $0x158] sm:$0xff]
    %v5033 = vld [vmem:[#allocation2 + $0x160] sm:$0xff]
    %v5034 = vld [vmem:[#allocation2 + $0x168] sm:$0xff]
    %v5035 = vld [vmem:[#allocation2 + $0x170] sm:$0xff]
    %v5036 = vld [vmem:[#allocation2 + $0x178] sm:$0xff]
    %v5037 = vld [vmem:[#allocation2 + $0x180] sm:$0xff]
    %v5038 = vld [vmem:[#allocation2 + $0x188] sm:$0xff]
    %v5039 = vld [vmem:[#allocation2 + $0x190] sm:$0xff]
    %v5040 = vld [vmem:[#allocation2 + $0x198] sm:$0xff]
    %v5041 = vld [vmem:[#allocation2 + $0x1a0] sm:$0xff]
    %v5042 = vld [vmem:[#allocation2 + $0x1a8] sm:$0xff]
    %v5043 = vld [vmem:[#allocation2 + $0x1b0] sm:$0xff]
    %v5044 = vld [vmem:[#allocation2 + $0x1b8] sm:$0xff]
    %v5045 = vld [vmem:[#allocation2 + $0x1c0] sm:$0xff]
    %v5046 = vld [vmem:[#allocation2 + $0x1c8] sm:$0xff]
    %v5047 = vld [vmem:[#allocation2 + $0x1d0] sm:$0xff]
    %v5048 = vld [vmem:[#allocation2 + $0x1d8] sm:$0xff]
    %v5049 = vld [vmem:[#allocation2 + $0x1e0] sm:$0xff]
    %v5050 = vld [vmem:[#allocation2 + $0x1e8] sm:$0xff]
    %v5051 = vld [vmem:[#allocation2 + $0x1f0] sm:$0xff]
    %v5052 = vld [vmem:[#allocation2 + $0x1f8] sm:$0xff]
    %v5053 = vld [vmem:[#allocation2 + $0x200] sm:$0xff]
    %v5054 = vld [vmem:[#allocation2 + $0x208] sm:$0xff]
    %v5055 = vld [vmem:[#allocation2 + $0x210] sm:$0xff]
    %v5056 = vld [vmem:[#allocation2 + $0x218] sm:$0xff]
    %v5057 = vld [vmem:[#allocation2 + $0x220] sm:$0xff]
    %v5058 = vld [vmem:[#allocation2 + $0x228] sm:$0xff]
    %v5059 = vld [vmem:[#allocation2 + $0x230] sm:$0xff]
    %v5060 = vld [vmem:[#allocation2 + $0x238] sm:$0xff]
    %v5061 = vld [vmem:[#allocation2 + $0x240] sm:$0xff]
    %v5062 = vld [vmem:[#allocation2 + $0x248] sm:$0xff]
    %v5063 = vld [vmem:[#allocation2 + $0x250] sm:$0xff]
    %v5064 = vld [vmem:[#allocation2 + $0x258] sm:$0xff]
    %v5065 = vld [vmem:[#allocation2 + $0x260] sm:$0xff]
    %v5066 = vld [vmem:[#allocation2 + $0x268] sm:$0xff]
    %v5067 = vld [vmem:[#allocation2 + $0x270] sm:$0xff]
    %v5068 = vld [vmem:[#allocation2 + $0x278] sm:$0xff]
    %v5069 = vld [vmem:[#allocation2 + $0x280] sm:$0xff]
    %v5070 = vld [vmem:[#allocation2 + $0x288] sm:$0xff]
    %v5071 = vld [vmem:[#allocation2 + $0x290] sm:$0xff]
    %v5072 = vld [vmem:[#allocation2 + $0x298] sm:$0xff]
    %v5073 = vld [vmem:[#allocation2 + $0x2a0] sm:$0xff]
    %v5074 = vld [vmem:[#allocation2 + $0x2a8] sm:$0xff]
    %v5075 = vld [vmem:[#allocation2 + $0x2b0] sm:$0xff]
    %v5076 = vld [vmem:[#allocation2 + $0x2b8] sm:$0xff]
    %v5077 = vld [vmem:[#allocation2 + $0x2c0] sm:$0xff]
    %v5078 = vld [vmem:[#allocation2 + $0x2c8] sm:$0xff]
    %v5079 = vld [vmem:[#allocation2 + $0x2d0] sm:$0xff]
    %v5080 = vld [vmem:[#allocation2 + $0x2d8] sm:$0xff]
    %v5081 = vld [vmem:[#allocation2 + $0x2e0] sm:$0xff]
    %v5082 = vld [vmem:[#allocation2 + $0x2e8] sm:$0xff]
    %v5083 = vld [vmem:[#allocation2 + $0x2f0] sm:$0xff]
    %v5084 = vld [vmem:[#allocation2 + $0x2f8] sm:$0xff]
    %v5085 = vld [vmem:[#allocation2 + $0x300] sm:$0xff]
    %v5086 = vld [vmem:[#allocation2 + $0x308] sm:$0xff]
    %v5087 = vld [vmem:[#allocation2 + $0x310] sm:$0xff]
    %v5088 = vld [vmem:[#allocation2 + $0x318] sm:$0xff]
    %v5089 = vld [vmem:[#allocation2 + $0x320] sm:$0xff]
    %v5090 = vld [vmem:[#allocation2 + $0x328] sm:$0xff]
    %v5091 = vld [vmem:[#allocation2 + $0x330] sm:$0xff]
    %v5092 = vld [vmem:[#allocation2 + $0x338] sm:$0xff]
    %v5093 = vld [vmem:[#allocation2 + $0x340] sm:$0xff]
    %v5094 = vld [vmem:[#allocation2 + $0x348] sm:$0xff]
    %v5095 = vld [vmem:[#allocation2 + $0x350] sm:$0xff]
    %v5096 = vld [vmem:[#allocation2 + $0x358] sm:$0xff]
    %v5097 = vld [vmem:[#allocation2 + $0x360] sm:$0xff]
    %v5098 = vld [vmem:[#allocation2 + $0x368] sm:$0xff]
    %v5099 = vld [vmem:[#allocation2 + $0x370] sm:$0xff]
    %v5100 = vld [vmem:[#allocation2 + $0x378] sm:$0xff]
    %v5101 = vld [vmem:[#allocation2 + $0x380] sm:$0xff]
    %v5102 = vld [vmem:[#allocation2 + $0x388] sm:$0xff]
    %v5103 = vld [vmem:[#allocation2 + $0x390] sm:$0xff]
    %v5104 = vld [vmem:[#allocation2 + $0x398] sm:$0xff]
    %v5105 = vld [vmem:[#allocation2 + $0x3a0] sm:$0xff]
    %v5106 = vld [vmem:[#allocation2 + $0x3a8] sm:$0xff]
    %v5107 = vld [vmem:[#allocation2 + $0x3b0] sm:$0xff]
    %v5108 = vld [vmem:[#allocation2 + $0x3b8] sm:$0xff]
    %v5109 = vld [vmem:[#allocation2 + $0x3c0] sm:$0xff]
    %v5110 = vld [vmem:[#allocation2 + $0x3c8] sm:$0xff]
    %v5111 = vld [vmem:[#allocation2 + $0x3d0] sm:$0xff]
    %v5112 = vld [vmem:[#allocation2 + $0x3d8] sm:$0xff]
    %v5113 = vld [vmem:[#allocation2 + $0x3e0] sm:$0xff]
    %v5114 = vld [vmem:[#allocation2 + $0x3e8] sm:$0xff]
    %v5115 = vld [vmem:[#allocation2 + $0x3f0] sm:$0xff]
    %v5116 = vld [vmem:[#allocation2 + $0x3f8] sm:$0xff]
    %v5117 = vld [vmem:[#allocation2 + $0x400] sm:$0xff]
    %v5118 = vld [vmem:[#allocation2 + $0x408] sm:$0xff]
    %v5119 = vld [vmem:[#allocation2 + $0x410] sm:$0xff]
    %v5120 = vld [vmem:[#allocation2 + $0x418] sm:$0xff]
    %v5121 = vld [vmem:[#allocation2 + $0x420] sm:$0xff]
    %v5122 = vld [vmem:[#allocation2 + $0x428] sm:$0xff]
    %v5123 = vld [vmem:[#allocation2 + $0x430] sm:$0xff]
    %v5124 = vld [vmem:[#allocation2 + $0x438] sm:$0xff]
    %v5125 = vld [vmem:[#allocation2 + $0x440] sm:$0xff]
    %v5126 = vld [vmem:[#allocation2 + $0x448] sm:$0xff]
    %v5127 = vld [vmem:[#allocation2 + $0x450] sm:$0xff]
    %v5128 = vld [vmem:[#allocation2 + $0x458] sm:$0xff]
    %v5129 = vld [vmem:[#allocation2 + $0x460] sm:$0xff]
    %v5130 = vld [vmem:[#allocation2 + $0x468] sm:$0xff]
    %v5131 = vld [vmem:[#allocation2 + $0x470] sm:$0xff]
    %v5132 = vld [vmem:[#allocation2 + $0x478] sm:$0xff]
    %v5133 = vld [vmem:[#allocation2 + $0x480] sm:$0xff]
    %v5134 = vld [vmem:[#allocation2 + $0x488] sm:$0xff]
    %v5135 = vld [vmem:[#allocation2 + $0x490] sm:$0xff]
    %v5136 = vld [vmem:[#allocation2 + $0x498] sm:$0xff]
    %v5137 = vld [vmem:[#allocation2 + $0x4a0] sm:$0xff]
    %v5138 = vld [vmem:[#allocation2 + $0x4a8] sm:$0xff]
    %v5139 = vld [vmem:[#allocation2 + $0x4b0] sm:$0xff]
    %v5140 = vld [vmem:[#allocation2 + $0x4b8] sm:$0xff]
    %v5141 = vld [vmem:[#allocation2 + $0x4c0] sm:$0xff]
    %v5142 = vld [vmem:[#allocation2 + $0x4c8] sm:$0xff]
    %v5143 = vld [vmem:[#allocation2 + $0x4d0] sm:$0xff]
    %v5144 = vld [vmem:[#allocation2 + $0x4d8] sm:$0xff]
    %v5145 = vld [vmem:[#allocation2 + $0x4e0] sm:$0xff]
    %v5146 = vld [vmem:[#allocation2 + $0x4e8] sm:$0xff]
    %v5147 = vld [vmem:[#allocation2 + $0x4f0] sm:$0xff]
    %v5148 = vld [vmem:[#allocation2 + $0x4f8] sm:$0xff]
    %v5149 = vld [vmem:[#allocation2 + $0x500] sm:$0xff]
    %v5150 = vld [vmem:[#allocation2 + $0x508] sm:$0xff]
    %v5151 = vld [vmem:[#allocation2 + $0x510] sm:$0xff]
    %v5152 = vld [vmem:[#allocation2 + $0x518] sm:$0xff]
    %v5153 = vld [vmem:[#allocation2 + $0x520] sm:$0xff]
    %v5154 = vld [vmem:[#allocation2 + $0x528] sm:$0xff]
    %v5155 = vld [vmem:[#allocation2 + $0x530] sm:$0xff]
    %v5156 = vld [vmem:[#allocation2 + $0x538] sm:$0xff]
    %v5157 = vld [vmem:[#allocation2 + $0x540] sm:$0xff]
    %v5158 = vld [vmem:[#allocation2 + $0x548] sm:$0xff]
    %v5159 = vld [vmem:[#allocation2 + $0x550] sm:$0xff]
    %v5160 = vld [vmem:[#allocation2 + $0x558] sm:$0xff]
    %v5161 = vld [vmem:[#allocation2 + $0x560] sm:$0xff]
    %v5162 = vld [vmem:[#allocation2 + $0x568] sm:$0xff]
    %v5163 = vld [vmem:[#allocation2 + $0x570] sm:$0xff]
    %v5164 = vld [vmem:[#allocation2 + $0x578] sm:$0xff]
    %v5165 = vld [vmem:[#allocation2 + $0x580] sm:$0xff]
    %v5166 = vld [vmem:[#allocation2 + $0x588] sm:$0xff]
    %v5167 = vld [vmem:[#allocation2 + $0x590] sm:$0xff]
    %v5168 = vld [vmem:[#allocation2 + $0x598] sm:$0xff]
    %v5169 = vld [vmem:[#allocation2 + $0x5a0] sm:$0xff]
    %v5170 = vld [vmem:[#allocation2 + $0x5a8] sm:$0xff]
    %v5171 = vld [vmem:[#allocation2 + $0x5b0] sm:$0xff]
    %v5172 = vld [vmem:[#allocation2 + $0x5b8] sm:$0xff]
    %v5173 = vld [vmem:[#allocation2 + $0x5c0] sm:$0xff]
    %v5174 = vld [vmem:[#allocation2 + $0x5c8] sm:$0xff]
    %v5175 = vld [vmem:[#allocation2 + $0x5d0] sm:$0xff]
    %v5176 = vld [vmem:[#allocation2 + $0x5d8] sm:$0xff]
    %v5177 = vld [vmem:[#allocation2 + $0x5e0] sm:$0xff]
    %v5178 = vld [vmem:[#allocation2 + $0x5e8] sm:$0xff]
    %v5179 = vld [vmem:[#allocation2 + $0x5f0] sm:$0xff]
    %v5180 = vld [vmem:[#allocation2 + $0x5f8] sm:$0xff]
    %v5181 = vld [vmem:[#allocation2 + $0x600] sm:$0xff]
    %v5182 = vld [vmem:[#allocation2 + $0x608] sm:$0xff]
    %v5183 = vld [vmem:[#allocation2 + $0x610] sm:$0xff]
    %v5184 = vld [vmem:[#allocation2 + $0x618] sm:$0xff]
    %v5185 = vld [vmem:[#allocation2 + $0x620] sm:$0xff]
    %v5186 = vld [vmem:[#allocation2 + $0x628] sm:$0xff]
    %v5187 = vld [vmem:[#allocation2 + $0x630] sm:$0xff]
    %v5188 = vld [vmem:[#allocation2 + $0x638] sm:$0xff]
    %v5189 = vld [vmem:[#allocation2 + $0x640] sm:$0xff]
    %v5190 = vld [vmem:[#allocation2 + $0x648] sm:$0xff]
    %v5191 = vld [vmem:[#allocation2 + $0x650] sm:$0xff]
    %v5192 = vld [vmem:[#allocation2 + $0x658] sm:$0xff]
    %v5193 = vld [vmem:[#allocation2 + $0x660] sm:$0xff]
    %v5194 = vld [vmem:[#allocation2 + $0x668] sm:$0xff]
    %v5195 = vld [vmem:[#allocation2 + $0x670] sm:$0xff]
    %v5196 = vld [vmem:[#allocation2 + $0x678] sm:$0xff]
    %v5197 = vld [vmem:[#allocation2 + $0x680] sm:$0xff]
    %v5198 = vld [vmem:[#allocation2 + $0x688] sm:$0xff]
    %v5199 = vld [vmem:[#allocation2 + $0x690] sm:$0xff]
    %v5200 = vld [vmem:[#allocation2 + $0x698] sm:$0xff]
    %v5201 = vld [vmem:[#allocation2 + $0x6a0] sm:$0xff]
    %v5202 = vld [vmem:[#allocation2 + $0x6a8] sm:$0xff]
    %v5203 = vld [vmem:[#allocation2 + $0x6b0] sm:$0xff]
    %v5204 = vld [vmem:[#allocation2 + $0x6b8] sm:$0xff]
    %v5205 = vld [vmem:[#allocation2 + $0x6c0] sm:$0xff]
    %v5206 = vld [vmem:[#allocation2 + $0x6c8] sm:$0xff]
    %v5207 = vld [vmem:[#allocation2 + $0x6d0] sm:$0xff]
    %v5208 = vld [vmem:[#allocation2 + $0x6d8] sm:$0xff]
    %v5209 = vld [vmem:[#allocation2 + $0x6e0] sm:$0xff]
    %v5210 = vld [vmem:[#allocation2 + $0x6e8] sm:$0xff]
    %v5211 = vld [vmem:[#allocation2 + $0x6f0] sm:$0xff]
    %v5212 = vld [vmem:[#allocation2 + $0x6f8] sm:$0xff]
    %v5213 = vld [vmem:[#allocation2 + $0x700] sm:$0xff]
    %v5214 = vld [vmem:[#allocation2 + $0x708] sm:$0xff]
    %v5215 = vld [vmem:[#allocation2 + $0x710] sm:$0xff]
    %v5216 = vld [vmem:[#allocation2 + $0x718] sm:$0xff]
    %v5217 = vld [vmem:[#allocation2 + $0x720] sm:$0xff]
    %v5218 = vld [vmem:[#allocation2 + $0x728] sm:$0xff]
    %v5219 = vld [vmem:[#allocation2 + $0x730] sm:$0xff]
    %v5220 = vld [vmem:[#allocation2 + $0x738] sm:$0xff]
    %v5221 = vld [vmem:[#allocation2 + $0x740] sm:$0xff]
    %v5222 = vld [vmem:[#allocation2 + $0x748] sm:$0xff]
    %v5223 = vld [vmem:[#allocation2 + $0x750] sm:$0xff]
    %v5224 = vld [vmem:[#allocation2 + $0x758] sm:$0xff]
    %v5225 = vld [vmem:[#allocation2 + $0x760] sm:$0xff]
    %v5226 = vld [vmem:[#allocation2 + $0x768] sm:$0xff]
    %v5227 = vld [vmem:[#allocation2 + $0x770] sm:$0xff]
    %v5228 = vld [vmem:[#allocation2 + $0x778] sm:$0xff]
    %v5229 = vld [vmem:[#allocation2 + $0x780] sm:$0xff]
    %v5230 = vld [vmem:[#allocation2 + $0x788] sm:$0xff]
    %v5231 = vld [vmem:[#allocation2 + $0x790] sm:$0xff]
    %v5232 = vld [vmem:[#allocation2 + $0x798] sm:$0xff]
    %v5233 = vld [vmem:[#allocation2 + $0x7a0] sm:$0xff]
    %v5234 = vld [vmem:[#allocation2 + $0x7a8] sm:$0xff]
    %v5235 = vld [vmem:[#allocation2 + $0x7b0] sm:$0xff]
    %v5236 = vld [vmem:[#allocation2 + $0x7b8] sm:$0xff]
    %v5237 = vld [vmem:[#allocation2 + $0x7c0] sm:$0xff]
    %v5238 = vld [vmem:[#allocation2 + $0x7c8] sm:$0xff]
    %v5239 = vld [vmem:[#allocation2 + $0x7d0] sm:$0xff]
    %v5240 = vld [vmem:[#allocation2 + $0x7d8] sm:$0xff]
    %v5241 = vld [vmem:[#allocation2 + $0x7e0] sm:$0xff]
    %v5242 = vld [vmem:[#allocation2 + $0x7e8] sm:$0xff]
    %v5243 = vld [vmem:[#allocation2 + $0x7f0] sm:$0xff]
    %v5244 = vld [vmem:[#allocation2 + $0x7f8] sm:$0xff]
    %v5245 = vld [vmem:[#allocation2 + $0x800] sm:$0xff]
    %v5246 = vld [vmem:[#allocation2 + $0x808] sm:$0xff]
    %v5247 = vld [vmem:[#allocation2 + $0x810] sm:$0xff]
    %v5248 = vld [vmem:[#allocation2 + $0x818] sm:$0xff]
    %v5249 = vld [vmem:[#allocation2 + $0x820] sm:$0xff]
    %v5250 = vld [vmem:[#allocation2 + $0x828] sm:$0xff]
    %v5251 = vld [vmem:[#allocation2 + $0x830] sm:$0xff]
    %v5252 = vld [vmem:[#allocation2 + $0x838] sm:$0xff]
    %v5253 = vld [vmem:[#allocation2 + $0x840] sm:$0xff]
    %v5254 = vld [vmem:[#allocation2 + $0x848] sm:$0xff]
    %v5255 = vld [vmem:[#allocation2 + $0x850] sm:$0xff]
    %v5256 = vld [vmem:[#allocation2 + $0x858] sm:$0xff]
    %v5257 = vld [vmem:[#allocation2 + $0x860] sm:$0xff]
    %v5258 = vld [vmem:[#allocation2 + $0x868] sm:$0xff]
    %v5259 = vld [vmem:[#allocation2 + $0x870] sm:$0xff]
    %v5260 = vld [vmem:[#allocation2 + $0x878] sm:$0xff]
    %v5261 = vld [vmem:[#allocation2 + $0x880] sm:$0xff]
    %v5262 = vld [vmem:[#allocation2 + $0x888] sm:$0xff]
    %v5263 = vld [vmem:[#allocation2 + $0x890] sm:$0xff]
    %v5264 = vld [vmem:[#allocation2 + $0x898] sm:$0xff]
    %v5265 = vld [vmem:[#allocation2 + $0x8a0] sm:$0xff]
    %v5266 = vld [vmem:[#allocation2 + $0x8a8] sm:$0xff]
    %v5267 = vld [vmem:[#allocation2 + $0x8b0] sm:$0xff]
    %v5268 = vld [vmem:[#allocation2 + $0x8b8] sm:$0xff]
    %v5269 = vld [vmem:[#allocation2 + $0x8c0] sm:$0xff]
    %v5270 = vld [vmem:[#allocation2 + $0x8c8] sm:$0xff]
    %v5271 = vld [vmem:[#allocation2 + $0x8d0] sm:$0xff]
    %v5272 = vld [vmem:[#allocation2 + $0x8d8] sm:$0xff]
    %v5273 = vld [vmem:[#allocation2 + $0x8e0] sm:$0xff]
    %v5274 = vld [vmem:[#allocation2 + $0x8e8] sm:$0xff]
    %v5275 = vld [vmem:[#allocation2 + $0x8f0] sm:$0xff]
    %v5276 = vld [vmem:[#allocation2 + $0x8f8] sm:$0xff]
    %v5277 = vld [vmem:[#allocation2 + $0x900] sm:$0xff]
    %v5278 = vld [vmem:[#allocation2 + $0x908] sm:$0xff]
    %v5279 = vld [vmem:[#allocation2 + $0x910] sm:$0xff]
    %v5280 = vld [vmem:[#allocation2 + $0x918] sm:$0xff]
    %v5281 = vld [vmem:[#allocation2 + $0x920] sm:$0xff]
    %v5282 = vld [vmem:[#allocation2 + $0x928] sm:$0xff]
    %v5283 = vld [vmem:[#allocation2 + $0x930] sm:$0xff]
    %v5284 = vld [vmem:[#allocation2 + $0x938] sm:$0xff]
    %v5285 = vld [vmem:[#allocation2 + $0x940] sm:$0xff]
    %v5286 = vld [vmem:[#allocation2 + $0x948] sm:$0xff]
    %v5287 = vld [vmem:[#allocation2 + $0x950] sm:$0xff]
    %v5288 = vld [vmem:[#allocation2 + $0x958] sm:$0xff]
    %v5289 = vld [vmem:[#allocation2 + $0x960] sm:$0xff]
    %v5290 = vld [vmem:[#allocation2 + $0x968] sm:$0xff]
    %v5291 = vld [vmem:[#allocation2 + $0x970] sm:$0xff]
    %v5292 = vld [vmem:[#allocation2 + $0x978] sm:$0xff]
    %v5293 = vld [vmem:[#allocation2 + $0x980] sm:$0xff]
    %v5294 = vld [vmem:[#allocation2 + $0x988] sm:$0xff]
    %v5295 = vld [vmem:[#allocation2 + $0x990] sm:$0xff]
    %v5296 = vld [vmem:[#allocation2 + $0x998] sm:$0xff]
    %v5297 = vld [vmem:[#allocation2 + $0x9a0] sm:$0xff]
    %v5298 = vld [vmem:[#allocation2 + $0x9a8] sm:$0xff]
    %v5299 = vld [vmem:[#allocation2 + $0x9b0] sm:$0xff]
    %v5300 = vld [vmem:[#allocation2 + $0x9b8] sm:$0xff]
    %v5301 = vld [vmem:[#allocation2 + $0x9c0] sm:$0xff]
    %v5302 = vld [vmem:[#allocation2 + $0x9c8] sm:$0xff]
    %v5303 = vld [vmem:[#allocation2 + $0x9d0] sm:$0xff]
    %v5304 = vld [vmem:[#allocation2 + $0x9d8] sm:$0xff]
    %v5305 = vld [vmem:[#allocation2 + $0x9e0] sm:$0xff]
    %v5306 = vld [vmem:[#allocation2 + $0x9e8] sm:$0xff]
    %v5307 = vld [vmem:[#allocation2 + $0x9f0] sm:$0xff]
    %v5308 = vld [vmem:[#allocation2 + $0x9f8] sm:$0xff]
    %v5309 = vld [vmem:[#allocation2 + $0xa00] sm:$0xff]
    %v5310 = vld [vmem:[#allocation2 + $0xa08] sm:$0xff]
    %v5311 = vld [vmem:[#allocation2 + $0xa10] sm:$0xff]
    %v5312 = vld [vmem:[#allocation2 + $0xa18] sm:$0xff]
    %v5313 = vld [vmem:[#allocation2 + $0xa20] sm:$0xff]
    %v5314 = vld [vmem:[#allocation2 + $0xa28] sm:$0xff]
    %v5315 = vld [vmem:[#allocation2 + $0xa30] sm:$0xff]
    %v5316 = vld [vmem:[#allocation2 + $0xa38] sm:$0xff]
    %v5317 = vld [vmem:[#allocation2 + $0xa40] sm:$0xff]
    %v5318 = vld [vmem:[#allocation2 + $0xa48] sm:$0xff]
    %v5319 = vld [vmem:[#allocation2 + $0xa50] sm:$0xff]
    %v5320 = vld [vmem:[#allocation2 + $0xa58] sm:$0xff]
    %v5321 = vld [vmem:[#allocation2 + $0xa60] sm:$0xff]
    %v5322 = vld [vmem:[#allocation2 + $0xa68] sm:$0xff]
    %v5323 = vld [vmem:[#allocation2 + $0xa70] sm:$0xff]
    %v5324 = vld [vmem:[#allocation2 + $0xa78] sm:$0xff]
    %v5325 = vld [vmem:[#allocation2 + $0xa80] sm:$0xff]
    %v5326 = vld [vmem:[#allocation2 + $0xa88] sm:$0xff]
    %v5327 = vld [vmem:[#allocation2 + $0xa90] sm:$0xff]
    %v5328 = vld [vmem:[#allocation2 + $0xa98] sm:$0xff]
    %v5329 = vld [vmem:[#allocation2 + $0xaa0] sm:$0xff]
    %v5330 = vld [vmem:[#allocation2 + $0xaa8] sm:$0xff]
    %v5331 = vld [vmem:[#allocation2 + $0xab0] sm:$0xff]
    %v5332 = vld [vmem:[#allocation2 + $0xab8] sm:$0xff]
    %v5333 = vld [vmem:[#allocation2 + $0xac0] sm:$0xff]
    %v5334 = vld [vmem:[#allocation2 + $0xac8] sm:$0xff]
    %v5335 = vld [vmem:[#allocation2 + $0xad0] sm:$0xff]
    %v5336 = vld [vmem:[#allocation2 + $0xad8] sm:$0xff]
    %v5337 = vld [vmem:[#allocation2 + $0xae0] sm:$0xff]
    %v5338 = vld [vmem:[#allocation2 + $0xae8] sm:$0xff]
    %v5339 = vld [vmem:[#allocation2 + $0xaf0] sm:$0xff]
    %v5340 = vld [vmem:[#allocation2 + $0xaf8] sm:$0xff]
    %v5341 = vld [vmem:[#allocation2 + $0xb00] sm:$0xff]
    %v5342 = vld [vmem:[#allocation2 + $0xb08] sm:$0xff]
    %v5343 = vld [vmem:[#allocation2 + $0xb10] sm:$0xff]
    %v5344 = vld [vmem:[#allocation2 + $0xb18] sm:$0xff]
    %v5345 = vld [vmem:[#allocation2 + $0xb20] sm:$0xff]
    %v5346 = vld [vmem:[#allocation2 + $0xb28] sm:$0xff]
    %v5347 = vld [vmem:[#allocation2 + $0xb30] sm:$0xff]
    %v5348 = vld [vmem:[#allocation2 + $0xb38] sm:$0xff]
    %v5349 = vld [vmem:[#allocation2 + $0xb40] sm:$0xff]
    %v5350 = vld [vmem:[#allocation2 + $0xb48] sm:$0xff]
    %v5351 = vld [vmem:[#allocation2 + $0xb50] sm:$0xff]
    %v5352 = vld [vmem:[#allocation2 + $0xb58] sm:$0xff]
    %v5353 = vld [vmem:[#allocation2 + $0xb60] sm:$0xff]
    %v5354 = vld [vmem:[#allocation2 + $0xb68] sm:$0xff]
    %v5355 = vld [vmem:[#allocation2 + $0xb70] sm:$0xff]
    %v5356 = vld [vmem:[#allocation2 + $0xb78] sm:$0xff]
    %v5357 = vld [vmem:[#allocation2 + $0xb80] sm:$0xff]
    %v5358 = vld [vmem:[#allocation2 + $0xb88] sm:$0xff]
    %v5359 = vld [vmem:[#allocation2 + $0xb90] sm:$0xff]
    %v5360 = vld [vmem:[#allocation2 + $0xb98] sm:$0xff]
    %v5361 = vld [vmem:[#allocation2 + $0xba0] sm:$0xff]
    %v5362 = vld [vmem:[#allocation2 + $0xba8] sm:$0xff]
    %v5363 = vld [vmem:[#allocation2 + $0xbb0] sm:$0xff]
    %v5364 = vld [vmem:[#allocation2 + $0xbb8] sm:$0xff]
    %v5365 = vld [vmem:[#allocation2 + $0xbc0] sm:$0xff]
    %v5366 = vld [vmem:[#allocation2 + $0xbc8] sm:$0xff]
    %v5367 = vld [vmem:[#allocation2 + $0xbd0] sm:$0xff]
    %v5368 = vld [vmem:[#allocation2 + $0xbd8] sm:$0xff]
    %v5369 = vld [vmem:[#allocation2 + $0xbe0] sm:$0xff]
    %v5370 = vld [vmem:[#allocation2 + $0xbe8] sm:$0xff]
    %v5371 = vld [vmem:[#allocation2 + $0xbf0] sm:$0xff]
    %v5372 = vld [vmem:[#allocation2 + $0xbf8] sm:$0xff]
    %v5373 = vld [vmem:[#allocation2 + $0xc00] sm:$0xff]
    %v5374 = vld [vmem:[#allocation2 + $0xc08] sm:$0xff]
    %v5375 = vld [vmem:[#allocation2 + $0xc10] sm:$0xff]
    %v5376 = vld [vmem:[#allocation2 + $0xc18] sm:$0xff]
    %v5377 = vld [vmem:[#allocation2 + $0xc20] sm:$0xff]
    %v5378 = vld [vmem:[#allocation2 + $0xc28] sm:$0xff]
    %v5379 = vld [vmem:[#allocation2 + $0xc30] sm:$0xff]
    %v5380 = vld [vmem:[#allocation2 + $0xc38] sm:$0xff]
    %v5381 = vld [vmem:[#allocation2 + $0xc40] sm:$0xff]
    %v5382 = vld [vmem:[#allocation2 + $0xc48] sm:$0xff]
    %v5383 = vld [vmem:[#allocation2 + $0xc50] sm:$0xff]
    %v5384 = vld [vmem:[#allocation2 + $0xc58] sm:$0xff]
    %v5385 = vld [vmem:[#allocation2 + $0xc60] sm:$0xff]
    %v5386 = vld [vmem:[#allocation2 + $0xc68] sm:$0xff]
    %v5387 = vld [vmem:[#allocation2 + $0xc70] sm:$0xff]
    %v5388 = vld [vmem:[#allocation2 + $0xc78] sm:$0xff]
    %v5389 = vld [vmem:[#allocation2 + $0xc80] sm:$0xff]
    %v5390 = vld [vmem:[#allocation2 + $0xc88] sm:$0xff]
    %v5391 = vld [vmem:[#allocation2 + $0xc90] sm:$0xff]
    %v5392 = vld [vmem:[#allocation2 + $0xc98] sm:$0xff]
    %v5393 = vld [vmem:[#allocation2 + $0xca0] sm:$0xff]
    %v5394 = vld [vmem:[#allocation2 + $0xca8] sm:$0xff]
    %v5395 = vld [vmem:[#allocation2 + $0xcb0] sm:$0xff]
    %v5396 = vld [vmem:[#allocation2 + $0xcb8] sm:$0xff]
    %v5397 = vld [vmem:[#allocation2 + $0xcc0] sm:$0xff]
    %v5398 = vld [vmem:[#allocation2 + $0xcc8] sm:$0xff]
    %v5399 = vld [vmem:[#allocation2 + $0xcd0] sm:$0xff]
    %v5400 = vld [vmem:[#allocation2 + $0xcd8] sm:$0xff]
    %v5401 = vld [vmem:[#allocation2 + $0xce0] sm:$0xff]
    %v5402 = vld [vmem:[#allocation2 + $0xce8] sm:$0xff]
    %v5403 = vld [vmem:[#allocation2 + $0xcf0] sm:$0xff]
    %v5404 = vld [vmem:[#allocation2 + $0xcf8] sm:$0xff]
    %v5405 = vld [vmem:[#allocation2 + $0xd00] sm:$0xff]
    %v5406 = vld [vmem:[#allocation2 + $0xd08] sm:$0xff]
    %v5407 = vld [vmem:[#allocation2 + $0xd10] sm:$0xff]
    %v5408 = vld [vmem:[#allocation2 + $0xd18] sm:$0xff]
    %v5409 = vld [vmem:[#allocation2 + $0xd20] sm:$0xff]
    %v5410 = vld [vmem:[#allocation2 + $0xd28] sm:$0xff]
    %v5411 = vld [vmem:[#allocation2 + $0xd30] sm:$0xff]
    %v5412 = vld [vmem:[#allocation2 + $0xd38] sm:$0xff]
    %v5413 = vld [vmem:[#allocation2 + $0xd40] sm:$0xff]
    %v5414 = vld [vmem:[#allocation2 + $0xd48] sm:$0xff]
    %v5415 = vld [vmem:[#allocation2 + $0xd50] sm:$0xff]
    %v5416 = vld [vmem:[#allocation2 + $0xd58] sm:$0xff]
    %v5417 = vld [vmem:[#allocation2 + $0xd60] sm:$0xff]
    %v5418 = vld [vmem:[#allocation2 + $0xd68] sm:$0xff]
    %v5419 = vld [vmem:[#allocation2 + $0xd70] sm:$0xff]
    %v5420 = vld [vmem:[#allocation2 + $0xd78] sm:$0xff]
    %v5421 = vld [vmem:[#allocation2 + $0xd80] sm:$0xff]
    %v5422 = vld [vmem:[#allocation2 + $0xd88] sm:$0xff]
    %v5423 = vld [vmem:[#allocation2 + $0xd90] sm:$0xff]
    %v5424 = vld [vmem:[#allocation2 + $0xd98] sm:$0xff]
    %v5425 = vld [vmem:[#allocation2 + $0xda0] sm:$0xff]
    %v5426 = vld [vmem:[#allocation2 + $0xda8] sm:$0xff]
    %v5427 = vld [vmem:[#allocation2 + $0xdb0] sm:$0xff]
    %v5428 = vld [vmem:[#allocation2 + $0xdb8] sm:$0xff]
    %v5429 = vld [vmem:[#allocation2 + $0xdc0] sm:$0xff]
    %v5430 = vld [vmem:[#allocation2 + $0xdc8] sm:$0xff]
    %v5431 = vld [vmem:[#allocation2 + $0xdd0] sm:$0xff]
    %v5432 = vld [vmem:[#allocation2 + $0xdd8] sm:$0xff]
    %v5433 = vld [vmem:[#allocation2 + $0xde0] sm:$0xff]
    %v5434 = vld [vmem:[#allocation2 + $0xde8] sm:$0xff]
    %v5435 = vld [vmem:[#allocation2 + $0xdf0] sm:$0xff]
    %v5436 = vld [vmem:[#allocation2 + $0xdf8] sm:$0xff]
    %v5437 = vld [vmem:[#allocation2 + $0xe00] sm:$0xff]
    %v5438 = vld [vmem:[#allocation2 + $0xe08] sm:$0xff]
    %v5439 = vld [vmem:[#allocation2 + $0xe10] sm:$0xff]
    %v5440 = vld [vmem:[#allocation2 + $0xe18] sm:$0xff]
    %v5441 = vld [vmem:[#allocation2 + $0xe20] sm:$0xff]
    %v5442 = vld [vmem:[#allocation2 + $0xe28] sm:$0xff]
    %v5443 = vld [vmem:[#allocation2 + $0xe30] sm:$0xff]
    %v5444 = vld [vmem:[#allocation2 + $0xe38] sm:$0xff]
    %v5445 = vld [vmem:[#allocation2 + $0xe40] sm:$0xff]
    %v5446 = vld [vmem:[#allocation2 + $0xe48] sm:$0xff]
    %v5447 = vld [vmem:[#allocation2 + $0xe50] sm:$0xff]
    %v5448 = vld [vmem:[#allocation2 + $0xe58] sm:$0xff]
    %v5449 = vld [vmem:[#allocation2 + $0xe60] sm:$0xff]
    %v5450 = vld [vmem:[#allocation2 + $0xe68] sm:$0xff]
    %v5451 = vld [vmem:[#allocation2 + $0xe70] sm:$0xff]
    %v5452 = vld [vmem:[#allocation2 + $0xe78] sm:$0xff]
    %v5453 = vld [vmem:[#allocation2 + $0xe80] sm:$0xff]
    %v5454 = vld [vmem:[#allocation2 + $0xe88] sm:$0xff]
    %v5455 = vld [vmem:[#allocation2 + $0xe90] sm:$0xff]
    %v5456 = vld [vmem:[#allocation2 + $0xe98] sm:$0xff]
    %v5457 = vld [vmem:[#allocation2 + $0xea0] sm:$0xff]
    %v5458 = vld [vmem:[#allocation2 + $0xea8] sm:$0xff]
    %v5459 = vld [vmem:[#allocation2 + $0xeb0] sm:$0xff]
    %v5460 = vld [vmem:[#allocation2 + $0xeb8] sm:$0xff]
    %v5461 = vld [vmem:[#allocation2 + $0xec0] sm:$0xff]
    %v5462 = vld [vmem:[#allocation2 + $0xec8] sm:$0xff]
    %v5463 = vld [vmem:[#allocation2 + $0xed0] sm:$0xff]
    %v5464 = vld [vmem:[#allocation2 + $0xed8] sm:$0xff]
    %v5465 = vld [vmem:[#allocation2 + $0xee0] sm:$0xff]
    %v5466 = vld [vmem:[#allocation2 + $0xee8] sm:$0xff]
    %v5467 = vld [vmem:[#allocation2 + $0xef0] sm:$0xff]
    %v5468 = vld [vmem:[#allocation2 + $0xef8] sm:$0xff]
    %v5469 = vld [vmem:[#allocation2 + $0xf00] sm:$0xff]
    %v5470 = vld [vmem:[#allocation2 + $0xf08] sm:$0xff]
    %v5471 = vld [vmem:[#allocation2 + $0xf10] sm:$0xff]
    %v5472 = vld [vmem:[#allocation2 + $0xf18] sm:$0xff]
    %v5473 = vld [vmem:[#allocation2 + $0xf20] sm:$0xff]
    %v5474 = vld [vmem:[#allocation2 + $0xf28] sm:$0xff]
    %v5475 = vld [vmem:[#allocation2 + $0xf30] sm:$0xff]
    %v5476 = vld [vmem:[#allocation2 + $0xf38] sm:$0xff]
    %v5477 = vld [vmem:[#allocation2 + $0xf40] sm:$0xff]
    %v5478 = vld [vmem:[#allocation2 + $0xf48] sm:$0xff]
    %v5479 = vld [vmem:[#allocation2 + $0xf50] sm:$0xff]
    %v5480 = vld [vmem:[#allocation2 + $0xf58] sm:$0xff]
    %v5481 = vld [vmem:[#allocation2 + $0xf60] sm:$0xff]
    %v5482 = vld [vmem:[#allocation2 + $0xf68] sm:$0xff]
    %v5483 = vld [vmem:[#allocation2 + $0xf70] sm:$0xff]
    %v5484 = vld [vmem:[#allocation2 + $0xf78] sm:$0xff]
    %v5485 = vld [vmem:[#allocation2 + $0xf80] sm:$0xff]
    %v5486 = vld [vmem:[#allocation2 + $0xf88] sm:$0xff]
    %v5487 = vld [vmem:[#allocation2 + $0xf90] sm:$0xff]
    %v5488 = vld [vmem:[#allocation2 + $0xf98] sm:$0xff]
    %v5489 = vld [vmem:[#allocation2 + $0xfa0] sm:$0xff]
    %v5490 = vld [vmem:[#allocation2 + $0xfa8] sm:$0xff]
    %v5491 = vld [vmem:[#allocation2 + $0xfb0] sm:$0xff]
    %v5492 = vld [vmem:[#allocation2 + $0xfb8] sm:$0xff]
    %v5493 = vld [vmem:[#allocation2 + $0xfc0] sm:$0xff]
    %v5494 = vld [vmem:[#allocation2 + $0xfc8] sm:$0xff]
    %v5495 = vld [vmem:[#allocation2 + $0xfd0] sm:$0xff]
    %v5496 = vld [vmem:[#allocation2 + $0xfd8] sm:$0xff]
    %v5497 = vld [vmem:[#allocation2 + $0xfe0] sm:$0xff]
    %v5498 = vld [vmem:[#allocation2 + $0xfe8] sm:$0xff]
    %v5499 = vld [vmem:[#allocation2 + $0xff0] sm:$0xff]
    %v5500 = vld [vmem:[#allocation2 + $0xff8] sm:$0xff]
    %v5501 = vld [vmem:[#allocation2 + $0x1000] sm:$0xff]
    %v5502 = vld [vmem:[#allocation2 + $0x1008] sm:$0xff]
    %v5503 = vld [vmem:[#allocation2 + $0x1010] sm:$0xff]
    %v5504 = vld [vmem:[#allocation2 + $0x1018] sm:$0xff]
    %v5505 = vld [vmem:[#allocation2 + $0x1020] sm:$0xff]
    %v5506 = vld [vmem:[#allocation2 + $0x1028] sm:$0xff]
    %v5507 = vld [vmem:[#allocation2 + $0x1030] sm:$0xff]
    %v5508 = vld [vmem:[#allocation2 + $0x1038] sm:$0xff]
    %v5509 = vld [vmem:[#allocation2 + $0x1040] sm:$0xff]
    %v5510 = vld [vmem:[#allocation2 + $0x1048] sm:$0xff]
    %v5511 = vld [vmem:[#allocation2 + $0x1050] sm:$0xff]
    %v5512 = vld [vmem:[#allocation2 + $0x1058] sm:$0xff]
    %v5513 = vld [vmem:[#allocation2 + $0x1060] sm:$0xff]
    %v5514 = vld [vmem:[#allocation2 + $0x1068] sm:$0xff]
    %v5515 = vld [vmem:[#allocation2 + $0x1070] sm:$0xff]
    %v5516 = vld [vmem:[#allocation2 + $0x1078] sm:$0xff]
    %v5517 = vld [vmem:[#allocation2 + $0x1080] sm:$0xff]
    %v5518 = vld [vmem:[#allocation2 + $0x1088] sm:$0xff]
    %v5519 = vld [vmem:[#allocation2 + $0x1090] sm:$0xff]
    %v5520 = vld [vmem:[#allocation2 + $0x1098] sm:$0xff]
    %v5521 = vld [vmem:[#allocation2 + $0x10a0] sm:$0xff]
    %v5522 = vld [vmem:[#allocation2 + $0x10a8] sm:$0xff]
    %v5523 = vld [vmem:[#allocation2 + $0x10b0] sm:$0xff]
    %v5524 = vld [vmem:[#allocation2 + $0x10b8] sm:$0xff]
    %v5525 = vld [vmem:[#allocation2 + $0x10c0] sm:$0xff]
    %v5526 = vld [vmem:[#allocation2 + $0x10c8] sm:$0xff]
    %v5527 = vld [vmem:[#allocation2 + $0x10d0] sm:$0xff]
    %v5528 = vld [vmem:[#allocation2 + $0x10d8] sm:$0xff]
    %v5529 = vld [vmem:[#allocation2 + $0x10e0] sm:$0xff]
    %v5530 = vld [vmem:[#allocation2 + $0x10e8] sm:$0xff]
    %v5531 = vld [vmem:[#allocation2 + $0x10f0] sm:$0xff]
    %v5532 = vld [vmem:[#allocation2 + $0x10f8] sm:$0xff]
    %v5533 = vld [vmem:[#allocation2 + $0x1100] sm:$0xff]
    %v5534 = vld [vmem:[#allocation2 + $0x1108] sm:$0xff]
    %v5535 = vld [vmem:[#allocation2 + $0x1110] sm:$0xff]
    %v5536 = vld [vmem:[#allocation2 + $0x1118] sm:$0xff]
    %v5537 = vld [vmem:[#allocation2 + $0x1120] sm:$0xff]
    %v5538 = vld [vmem:[#allocation2 + $0x1128] sm:$0xff]
    %v5539 = vld [vmem:[#allocation2 + $0x1130] sm:$0xff]
    %v5540 = vld [vmem:[#allocation2 + $0x1138] sm:$0xff]
    %v5541 = vld [vmem:[#allocation2 + $0x1140] sm:$0xff]
    %v5542 = vld [vmem:[#allocation2 + $0x1148] sm:$0xff]
    %v5543 = vld [vmem:[#allocation2 + $0x1150] sm:$0xff]
    %v5544 = vld [vmem:[#allocation2 + $0x1158] sm:$0xff]
    %v5545 = vld [vmem:[#allocation2 + $0x1160] sm:$0xff]
    %v5546 = vld [vmem:[#allocation2 + $0x1168] sm:$0xff]
    %v5547 = vld [vmem:[#allocation2 + $0x1170] sm:$0xff]
    %v5548 = vld [vmem:[#allocation2 + $0x1178] sm:$0xff]
    %v5549 = vld [vmem:[#allocation2 + $0x1180] sm:$0xff]
    %v5550 = vld [vmem:[#allocation2 + $0x1188] sm:$0xff]
    %v5551 = vld [vmem:[#allocation2 + $0x1190] sm:$0xff]
    %v5552 = vld [vmem:[#allocation2 + $0x1198] sm:$0xff]
    %v5553 = vld [vmem:[#allocation2 + $0x11a0] sm:$0xff]
    %v5554 = vld [vmem:[#allocation2 + $0x11a8] sm:$0xff]
    %v5555 = vld [vmem:[#allocation2 + $0x11b0] sm:$0xff]
    %v5556 = vld [vmem:[#allocation2 + $0x11b8] sm:$0xff]
    %v5557 = vld [vmem:[#allocation2 + $0x11c0] sm:$0xff]
    %v5558 = vld [vmem:[#allocation2 + $0x11c8] sm:$0xff]
    %v5559 = vld [vmem:[#allocation2 + $0x11d0] sm:$0xff]
    %v5560 = vld [vmem:[#allocation2 + $0x11d8] sm:$0xff]
    %v5561 = vld [vmem:[#allocation2 + $0x11e0] sm:$0xff]
    %v5562 = vld [vmem:[#allocation2 + $0x11e8] sm:$0xff]
    %v5563 = vld [vmem:[#allocation2 + $0x11f0] sm:$0xff]
    %v5564 = vld [vmem:[#allocation2 + $0x11f8] sm:$0xff]
    %v5565 = vld [vmem:[#allocation6] sm:$0xff]
    %v5566 = vld [vmem:[#allocation6 + $0x8] sm:$0xff]
    %v5567 = vld [vmem:[#allocation6 + $0x10] sm:$0xff]
    %v5568 = vld [vmem:[#allocation6 + $0x18] sm:$0xff]
    %v5569 = vld [vmem:[#allocation6 + $0x20] sm:$0xf]
    %v5570 = vld [vmem:[#allocation6 + $0x24] sm:$0xff]
    %v5571 = vld [vmem:[#allocation6 + $0x2c] sm:$0xff]
    %v5572 = vld [vmem:[#allocation6 + $0x34] sm:$0xff]
    %v5573 = vld [vmem:[#allocation6 + $0x3c] sm:$0xff]
    %v5574 = vld [vmem:[#allocation6 + $0x44] sm:$0xf]
    %v5575 = vld [vmem:[#allocation6 + $0x48] sm:$0xff]
    %v5576 = vld [vmem:[#allocation6 + $0x50] sm:$0xff]
    %v5577 = vld [vmem:[#allocation6 + $0x58] sm:$0xff]
    %v5578 = vld [vmem:[#allocation6 + $0x60] sm:$0xff]
    %v5579 = vld [vmem:[#allocation6 + $0x68] sm:$0xf]
    %v5580 = vld [vmem:[#allocation6 + $0x6c] sm:$0xff]
    %v5581 = vld [vmem:[#allocation6 + $0x74] sm:$0xff]
    %v5582 = vld [vmem:[#allocation6 + $0x7c] sm:$0xff]
    %v5583 = vld [vmem:[#allocation6 + $0x84] sm:$0xff]
    %v5584 = vld [vmem:[#allocation6 + $0x8c] sm:$0xf]
    %s5585 = scalar_lea.vmem [#allocation6], 144
    %v5586 = vld [vmem:[%s5585] sm:$0xff]
    %v5587 = vld [vmem:[%s5585 + $0x8] sm:$0xff]
    %v5588 = vld [vmem:[%s5585 + $0x10] sm:$0xff]
    %v5589 = vld [vmem:[%s5585 + $0x18] sm:$0xff]
    %v5590 = vld [vmem:[%s5585 + $0x20] sm:$0xf]
    %v5591 = vld [vmem:[%s5585 + $0x24] sm:$0xff]
    %v5592 = vld [vmem:[%s5585 + $0x2c] sm:$0xff]
    %v5593 = vld [vmem:[%s5585 + $0x34] sm:$0xff]
    %v5594 = vld [vmem:[%s5585 + $0x3c] sm:$0xff]
    %v5595 = vld [vmem:[%s5585 + $0x44] sm:$0xf]
    %v5596 = vld [vmem:[%s5585 + $0x48] sm:$0xff]
    %v5597 = vld [vmem:[%s5585 + $0x50] sm:$0xff]
    %v5598 = vld [vmem:[%s5585 + $0x58] sm:$0xff]
    %v5599 = vld [vmem:[%s5585 + $0x60] sm:$0xff]
    %v5600 = vld [vmem:[%s5585 + $0x68] sm:$0xf]
    %v5601 = vld [vmem:[%s5585 + $0x6c] sm:$0xff]
    %v5602 = vld [vmem:[%s5585 + $0x74] sm:$0xff]
    %v5603 = vld [vmem:[%s5585 + $0x7c] sm:$0xff]
    %v5604 = vld [vmem:[%s5585 + $0x84] sm:$0xff]
    %v5605 = vld [vmem:[%s5585 + $0x8c] sm:$0xf]
    %v5626 = vunpack.c.l.b16 %v5586
    %v5627 = vunpack.c.h.b16 %v5586
    %v5628 = vunpack.c.l.b16 %v5587
    %v5629 = vunpack.c.h.b16 %v5587
    %v5630 = vunpack.c.l.b16 %v5588
    %v5631 = vunpack.c.h.b16 %v5588
    %v5632 = vunpack.c.l.b16 %v5589
    %v5633 = vunpack.c.h.b16 %v5589
    %v5634 = vunpack.c.l.b16 %v5590
    %v5635 = vunpack.c.l.b16 %v5591
    %v5636 = vunpack.c.h.b16 %v5591
    %v5637 = vunpack.c.l.b16 %v5592
    %v5638 = vunpack.c.h.b16 %v5592
    %v5639 = vunpack.c.l.b16 %v5593
    %v5640 = vunpack.c.h.b16 %v5593
    %v5641 = vunpack.c.l.b16 %v5594
    %v5642 = vunpack.c.h.b16 %v5594
    %v5643 = vunpack.c.l.b16 %v5595
    %v5644 = vunpack.c.l.b16 %v5596
    %v5645 = vunpack.c.h.b16 %v5596
    %v5646 = vunpack.c.l.b16 %v5597
    %v5647 = vunpack.c.h.b16 %v5597
    %v5648 = vunpack.c.l.b16 %v5598
    %v5649 = vunpack.c.h.b16 %v5598
    %v5650 = vunpack.c.l.b16 %v5599
    %v5651 = vunpack.c.h.b16 %v5599
    %v5652 = vunpack.c.l.b16 %v5600
    %v5653 = vunpack.c.l.b16 %v5601
    %v5654 = vunpack.c.h.b16 %v5601
    %v5655 = vunpack.c.l.b16 %v5602
    %v5656 = vunpack.c.h.b16 %v5602
    %v5657 = vunpack.c.l.b16 %v5603
    %v5658 = vunpack.c.h.b16 %v5603
    %v5659 = vunpack.c.l.b16 %v5604
    %v5660 = vunpack.c.h.b16 %v5604
    %v5661 = vunpack.c.l.b16 %v5605
    %v5662 = vpack.c.b16 %v5635, %v5626
    %v5663 = vpack.c.b16 %v5636, %v5627
    %v5664 = vpack.c.b16 %v5637, %v5628
    %v5665 = vpack.c.b16 %v5638, %v5629
    %v5666 = vpack.c.b16 %v5639, %v5630
    %v5667 = vpack.c.b16 %v5640, %v5631
    %v5668 = vpack.c.b16 %v5641, %v5632
    %v5669 = vpack.c.b16 %v5642, %v5633
    %v5670 = vpack.c.b16 %v5643, %v5634
    %v5671 = vpack.c.b16 %v5653, %v5644
    %v5672 = vpack.c.b16 %v5654, %v5645
    %v5673 = vpack.c.b16 %v5655, %v5646
    %v5674 = vpack.c.b16 %v5656, %v5647
    %v5675 = vpack.c.b16 %v5657, %v5648
    %v5676 = vpack.c.b16 %v5658, %v5649
    %v5677 = vpack.c.b16 %v5659, %v5650
    %v5678 = vpack.c.b16 %v5660, %v5651
    %v5679 = vpack.c.b16 %v5661, %v5652
    %5698 = vmatprep.subr.bf16.mxu0 %v4990
    %5699 = vmatpush1.bf16.msra.mxu0 %v4989
    %5700 = vmatprep.subr.bf16.mxu0 %v4998
    %5701 = vmatpush1.bf16.msra.mxu0 %v4997
    %5702 = vmatprep.subr.bf16.mxu0 %v5006
    %5703 = vmatpush1.bf16.msra.mxu0 %v5005
    %5704 = vmatprep.subr.bf16.mxu0 %v5014
    %5705 = vmatpush1.bf16.msra.mxu0 %v5013
    %5706 = vmatprep.subr.bf16.mxu0 %v5022
    %5707 = vmatpush1.bf16.msra.mxu0 %v5021
    %5708 = vmatprep.subr.bf16.mxu0 %v5030
    %5709 = vmatpush1.bf16.msra.mxu0 %v5029
    %5710 = vmatprep.subr.bf16.mxu0 %v5038
    %5711 = vmatpush1.bf16.msra.mxu0 %v5037
    %5712 = vmatprep.subr.bf16.mxu0 %v5046
    %5713 = vmatpush1.bf16.msra.mxu0 %v5045
    %5714 = vmatprep.subr.bf16.mxu0 %v5054
    %5715 = vmatpush1.bf16.msra.mxu0 %v5053
    %5716 = vmatprep.subr.bf16.mxu0 %v5062
    %5717 = vmatpush1.bf16.msra.mxu0 %v5061
    %5718 = vmatprep.subr.bf16.mxu0 %v5070
    %5719 = vmatpush1.bf16.msra.mxu0 %v5069
    %5720 = vmatprep.subr.bf16.mxu0 %v5078
    %5721 = vmatpush1.bf16.msra.mxu0 %v5077
    %5722 = vmatprep.subr.bf16.mxu0 %v5086
    %5723 = vmatpush1.bf16.msra.mxu0 %v5085
    %5724 = vmatprep.subr.bf16.mxu0 %v5094
    %5725 = vmatpush1.bf16.msra.mxu0 %v5093
    %5726 = vmatprep.subr.bf16.mxu0 %v5102
    %5727 = vmatpush1.bf16.msra.mxu0 %v5101
    %5728 = vmatprep.subr.bf16.mxu0 %v5110
    %5729 = vmatpush1.bf16.msra.mxu0 %v5109
    %5730 = vmatprep.mubr.bf16.mxu0 %v5663
    %5731 = vmatmul.mubr.bf16.gmra.mrb[0].mxu0 %v5662
    %v5732 = vpop.f32.mrb[0].mxu0
    %v5733 = vadd.f32 0.0, %v5732
    %v5734 = vpop.f32.mrb[0].mxu0
    %v5735 = vadd.f32 0.0, %v5734
    %v5736 = vpop.f32.mrb[0].mxu0
    %v5737 = vadd.f32 0.0, %v5736
    %v5738 = vpop.f32.mrb[0].mxu0
    %v5739 = vadd.f32 0.0, %v5738
    %5740 = vmatprep.mubr.bf16.mxu0 %v5672
    %5741 = vmatmul.mubr.bf16.gmra.mrb[0].mxu0 %v5671
    %v5742 = vpop.f32.mrb[0].mxu0
    %v5743 = vadd.f32 0.0, %v5742
    %v5744 = vpop.f32.mrb[0].mxu0
    %v5745 = vadd.f32 0.0, %v5744
    %v5746 = vpop.f32.mrb[0].mxu0
    %v5747 = vadd.f32 0.0, %v5746
    %v5748 = vpop.f32.mrb[0].mxu0
    %v5749 = vadd.f32 0.0, %v5748
    %5750 = vdwg.mxu0
    %5751 = vmatprep.subr.bf16.mxu0 %v5118
    %5752 = vmatpush1.bf16.msra.mxu0 %v5117
    %5753 = vmatprep.subr.bf16.mxu0 %v5126
    %5754 = vmatpush1.bf16.msra.mxu0 %v5125
    %5755 = vmatprep.subr.bf16.mxu0 %v5134
    %5756 = vmatpush1.bf16.msra.mxu0 %v5133
    %5757 = vmatprep.subr.bf16.mxu0 %v5142
    %5758 = vmatpush1.bf16.msra.mxu0 %v5141
    %5759 = vmatprep.subr.bf16.mxu0 %v5150
    %5760 = vmatpush1.bf16.msra.mxu0 %v5149
    %5761 = vmatprep.subr.bf16.mxu0 %v5158
    %5762 = vmatpush1.bf16.msra.mxu0 %v5157
    %5763 = vmatprep.subr.bf16.mxu0 %v5166
    %5764 = vmatpush1.bf16.msra.mxu0 %v5165
    %5765 = vmatprep.subr.bf16.mxu0 %v5174
    %5766 = vmatpush1.bf16.msra.mxu0 %v5173
    %5767 = vmatprep.subr.bf16.mxu0 %v5182
    %5768 = vmatpush1.bf16.msra.mxu0 %v5181
    %5769 = vmatprep.subr.bf16.mxu0 %v5190
    %5770 = vmatpush1.bf16.msra.mxu0 %v5189
    %5771 = vmatprep.subr.bf16.mxu0 %v5198
    %5772 = vmatpush1.bf16.msra.mxu0 %v5197
    %5773 = vmatprep.subr.bf16.mxu0 %v5206
    %5774 = vmatpush1.bf16.msra.mxu0 %v5205
    %5775 = vmatprep.subr.bf16.mxu0 %v5214
    %5776 = vmatpush1.bf16.msra.mxu0 %v5213
    %5777 = vmatprep.subr.bf16.mxu0 %v5222
    %5778 = vmatpush1.bf16.msra.mxu0 %v5221
    %5779 = vmatprep.subr.bf16.mxu0 %v5230
    %5780 = vmatpush1.bf16.msra.mxu0 %v5229
    %5781 = vmatprep.subr.bf16.mxu0 %v5238
    %5782 = vmatpush1.bf16.msra.mxu0 %v5237
    %5783 = vmatprep.mubr.bf16.mxu0 %v5665
    %5784 = vmatmul.mubr.bf16.gmra.mrb[0].mxu0 %v5664
    %v5785 = vpop.f32.mrb[0].mxu0
    %v5786 = vadd.f32 %v5733, %v5785
    %v5787 = vpop.f32.mrb[0].mxu0
    %v5788 = vadd.f32 %v5735, %v5787
    %v5789 = vpop.f32.mrb[0].mxu0
    %v5790 = vadd.f32 %v5737, %v5789
    %v5791 = vpop.f32.mrb[0].mxu0
    %v5792 = vadd.f32 %v5739, %v5791
    %5793 = vmatprep.mubr.bf16.mxu0 %v5674
    %5794 = vmatmul.mubr.bf16.gmra.mrb[0].mxu0 %v5673
    %v5795 = vpop.f32.mrb[0].mxu0
    %v5796 = vadd.f32 %v5743, %v5795
    %v5797 = vpop.f32.mrb[0].mxu0
    %v5798 = vadd.f32 %v5745, %v5797
    %v5799 = vpop.f32.mrb[0].mxu0
    %v5800 = vadd.f32 %v5747, %v5799
    %v5801 = vpop.f32.mrb[0].mxu0
    %v5802 = vadd.f32 %v5749, %v5801
    %5803 = vdwg.mxu0
    %5804 = vmatprep.subr.bf16.mxu0 %v5246
    %5805 = vmatpush1.bf16.msra.mxu0 %v5245
    %5806 = vmatprep.subr.bf16.mxu0 %v5254
    %5807 = vmatpush1.bf16.msra.mxu0 %v5253
    %5808 = vmatprep.subr.bf16.mxu0 %v5262
    %5809 = vmatpush1.bf16.msra.mxu0 %v5261
    %5810 = vmatprep.subr.bf16.mxu0 %v5270
    %5811 = vmatpush1.bf16.msra.mxu0 %v5269
    %5812 = vmatprep.subr.bf16.mxu0 %v5278
    %5813 = vmatpush1.bf16.msra.mxu0 %v5277
    %5814 = vmatprep.subr.bf16.mxu0 %v5286
    %5815 = vmatpush1.bf16.msra.mxu0 %v5285
    %5816 = vmatprep.subr.bf16.mxu0 %v5294
    %5817 = vmatpush1.bf16.msra.mxu0 %v5293
    %5818 = vmatprep.subr.bf16.mxu0 %v5302
    %5819 = vmatpush1.bf16.msra.mxu0 %v5301
    %5820 = vmatprep.subr.bf16.mxu0 %v5310
    %5821 = vmatpush1.bf16.msra.mxu0 %v5309
    %5822 = vmatprep.subr.bf16.mxu0 %v5318
    %5823 = vmatpush1.bf16.msra.mxu0 %v5317
    %5824 = vmatprep.subr.bf16.mxu0 %v5326
    %5825 = vmatpush1.bf16.msra.mxu0 %v5325
    %5826 = vmatprep.subr.bf16.mxu0 %v5334
    %5827 = vmatpush1.bf16.msra.mxu0 %v5333
    %5828 = vmatprep.subr.bf16.mxu0 %v5342
    %5829 = vmatpush1.bf16.msra.mxu0 %v5341
    %5830 = vmatprep.subr.bf16.mxu0 %v5350
    %5831 = vmatpush1.bf16.msra.mxu0 %v5349
    %5832 = vmatprep.subr.bf16.mxu0 %v5358
    %5833 = vmatpush1.bf16.msra.mxu0 %v5357
    %5834 = vmatprep.subr.bf16.mxu0 %v5366
    %5835 = vmatpush1.bf16.msra.mxu0 %v5365
    %5836 = vmatprep.mubr.bf16.mxu0 %v5667
    %5837 = vmatmul.mubr.bf16.gmra.mrb[0].mxu0 %v5666
    %v5838 = vpop.f32.mrb[0].mxu0
    %v5839 = vadd.f32 %v5786, %v5838
    %v5840 = vpop.f32.mrb[0].mxu0
    %v5841 = vadd.f32 %v5788, %v5840
    %v5842 = vpop.f32.mrb[0].mxu0
    %v5843 = vadd.f32 %v5790, %v5842
    %v5844 = vpop.f32.mrb[0].mxu0
    %v5845 = vadd.f32 %v5792, %v5844
    %5846 = vmatprep.mubr.bf16.mxu0 %v5676
    %5847 = vmatmul.mubr.bf16.gmra.mrb[0].mxu0 %v5675
    %v5848 = vpop.f32.mrb[0].mxu0
    %v5849 = vadd.f32 %v5796, %v5848
    %v5850 = vpop.f32.mrb[0].mxu0
    %v5851 = vadd.f32 %v5798, %v5850
    %v5852 = vpop.f32.mrb[0].mxu0
    %v5853 = vadd.f32 %v5800, %v5852
    %v5854 = vpop.f32.mrb[0].mxu0
    %v5855 = vadd.f32 %v5802, %v5854
    %5856 = vdwg.mxu0
    %5857 = vmatprep.subr.bf16.mxu0 %v5374
    %5858 = vmatpush1.bf16.msra.mxu0 %v5373
    %5859 = vmatprep.subr.bf16.mxu0 %v5382
    %5860 = vmatpush1.bf16.msra.mxu0 %v5381
    %5861 = vmatprep.subr.bf16.mxu0 %v5390
    %5862 = vmatpush1.bf16.msra.mxu0 %v5389
    %5863 = vmatprep.subr.bf16.mxu0 %v5398
    %5864 = vmatpush1.bf16.msra.mxu0 %v5397
    %5865 = vmatprep.subr.bf16.mxu0 %v5406
    %5866 = vmatpush1.bf16.msra.mxu0 %v5405
    %5867 = vmatprep.subr.bf16.mxu0 %v5414
    %5868 = vmatpush1.bf16.msra.mxu0 %v5413
    %5869 = vmatprep.subr.bf16.mxu0 %v5422
    %5870 = vmatpush1.bf16.msra.mxu0 %v5421
    %5871 = vmatprep.subr.bf16.mxu0 %v5430
    %5872 = vmatpush1.bf16.msra.mxu0 %v5429
    %5873 = vmatprep.subr.bf16.mxu0 %v5438
    %5874 = vmatpush1.bf16.msra.mxu0 %v5437
    %5875 = vmatprep.subr.bf16.mxu0 %v5446
    %5876 = vmatpush1.bf16.msra.mxu0 %v5445
    %5877 = vmatprep.subr.bf16.mxu0 %v5454
    %5878 = vmatpush1.bf16.msra.mxu0 %v5453
    %5879 = vmatprep.subr.bf16.mxu0 %v5462
    %5880 = vmatpush1.bf16.msra.mxu0 %v5461
    %5881 = vmatprep.subr.bf16.mxu0 %v5470
    %5882 = vmatpush1.bf16.msra.mxu0 %v5469
    %5883 = vmatprep.subr.bf16.mxu0 %v5478
    %5884 = vmatpush1.bf16.msra.mxu0 %v5477
    %5885 = vmatprep.subr.bf16.mxu0 %v5486
    %5886 = vmatpush1.bf16.msra.mxu0 %v5485
    %5887 = vmatprep.subr.bf16.mxu0 %v5494
    %5888 = vmatpush1.bf16.msra.mxu0 %v5493
    %5889 = vmatprep.mubr.bf16.mxu0 %v5669
    %5890 = vmatmul.mubr.bf16.gmra.mrb[0].mxu0 %v5668
    %v5891 = vpop.f32.mrb[0].mxu0
    %v5892 = vadd.f32 %v5839, %v5891
    %v5893 = vpop.f32.mrb[0].mxu0
    %v5894 = vadd.f32 %v5841, %v5893
    %v5895 = vpop.f32.mrb[0].mxu0
    %v5896 = vadd.f32 %v5843, %v5895
    %v5897 = vpop.f32.mrb[0].mxu0
    %v5898 = vadd.f32 %v5845, %v5897
    %5899 = vmatprep.mubr.bf16.mxu0 %v5678
    %5900 = vmatmul.mubr.bf16.gmra.mrb[0].mxu0 %v5677
    %v5901 = vpop.f32.mrb[0].mxu0
    %v5902 = vadd.f32 %v5849, %v5901
    %v5903 = vpop.f32.mrb[0].mxu0
    %v5904 = vadd.f32 %v5851, %v5903
    %v5905 = vpop.f32.mrb[0].mxu0
    %v5906 = vadd.f32 %v5853, %v5905
    %v5907 = vpop.f32.mrb[0].mxu0
    %v5908 = vadd.f32 %v5855, %v5907
    %5909 = vdwg.mxu0
    %5910 = vmatprep.subr.bf16.mxu0 %v5502
    %5911 = vmatpush1.bf16.msra.mxu0 %v5501
    %5912 = vmatprep.subr.bf16.mxu0 %v5510
    %5913 = vmatpush1.bf16.msra.mxu0 %v5509
    %5914 = vmatprep.subr.bf16.mxu0 %v5518
    %5915 = vmatpush1.bf16.msra.mxu0 %v5517
    %5916 = vmatprep.subr.bf16.mxu0 %v5526
    %5917 = vmatpush1.bf16.msra.mxu0 %v5525
    %5918 = vmatprep.subr.bf16.mxu0 %v5534
    %5919 = vmatpush1.bf16.msra.mxu0 %v5533
    %5920 = vmatprep.subr.bf16.mxu0 %v5542
    %5921 = vmatpush1.bf16.msra.mxu0 %v5541
    %5922 = vmatprep.subr.bf16.mxu0 %v5550
    %5923 = vmatpush1.bf16.msra.mxu0 %v5549
    %5924 = vmatprep.subr.bf16.mxu0 %v5558
    %5925 = vmatpush1.bf16.msra.mxu0 %v5557
    %5926 = vmatprep.subr.bf16.mxu0 0
    %5927 = vmatpush1.bf16.msra.mxu0 0
    %5928 = vmatprep.subr.bf16.mxu0 0
    %5929 = vmatpush1.bf16.msra.mxu0 0
    %5930 = vmatprep.subr.bf16.mxu0 0
    %5931 = vmatpush1.bf16.msra.mxu0 0
    %5932 = vmatprep.subr.bf16.mxu0 0
    %5933 = vmatpush1.bf16.msra.mxu0 0
    %5934 = vmatprep.subr.bf16.mxu0 0
    %5935 = vmatpush1.bf16.msra.mxu0 0
    %5936 = vmatprep.subr.bf16.mxu0 0
    %5937 = vmatpush1.bf16.msra.mxu0 0
    %5938 = vmatprep.subr.bf16.mxu0 0
    %5939 = vmatpush1.bf16.msra.mxu0 0
    %5940 = vmatprep.subr.bf16.mxu0 0
    %5941 = vmatpush1.bf16.msra.mxu0 0
    %5942 = vmatprep.mubr.bf16.mxu0 0
    %5943 = vmatmul.mubr.bf16.gmra.mrb[0].mxu0 %v5670
    %v5944 = vpop.f32.mrb[0].mxu0
    %v5945 = vadd.f32 %v5892, %v5944
    %v5946 = vpop.f32.mrb[0].mxu0
    %v5947 = vadd.f32 %v5894, %v5946
    %v5948 = vpop.f32.mrb[0].mxu0
    %v5949 = vadd.f32 %v5896, %v5948
    %v5950 = vpop.f32.mrb[0].mxu0
    %v5951 = vadd.f32 %v5898, %v5950
    %5952 = vmatprep.mubr.bf16.mxu0 0
    %5953 = vmatmul.mubr.bf16.gmra.mrb[0].mxu0 %v5679
    %v5954 = vpop.f32.mrb[0].mxu0
    %v5955 = vadd.f32 %v5902, %v5954
    %v5956 = vpop.f32.mrb[0].mxu0
    %v5957 = vadd.f32 %v5904, %v5956
    %v5958 = vpop.f32.mrb[0].mxu0
    %v5959 = vadd.f32 %v5906, %v5958
    %v5960 = vpop.f32.mrb[0].mxu0
    %v5961 = vadd.f32 %v5908, %v5960
    %5962 = vdwg.mxu0
    %5963 = vmatprep.subr.bf16.mxu0 %v4992
    %5964 = vmatpush1.bf16.msra.mxu0 %v4991
    %5965 = vmatprep.subr.bf16.mxu0 %v5000
    %5966 = vmatpush1.bf16.msra.mxu0 %v4999
    %5967 = vmatprep.subr.bf16.mxu0 %v5008
    %5968 = vmatpush1.bf16.msra.mxu0 %v5007
    %5969 = vmatprep.subr.bf16.mxu0 %v5016
    %5970 = vmatpush1.bf16.msra.mxu0 %v5015
    %5971 = vmatprep.subr.bf16.mxu0 %v5024
    %5972 = vmatpush1.bf16.msra.mxu0 %v5023
    %5973 = vmatprep.subr.bf16.mxu0 %v5032
    %5974 = vmatpush1.bf16.msra.mxu0 %v5031
    %5975 = vmatprep.subr.bf16.mxu0 %v5040
    %5976 = vmatpush1.bf16.msra.mxu0 %v5039
    %5977 = vmatprep.subr.bf16.mxu0 %v5048
    %5978 = vmatpush1.bf16.msra.mxu0 %v5047
    %5979 = vmatprep.subr.bf16.mxu0 %v5056
    %5980 = vmatpush1.bf16.msra.mxu0 %v5055
    %5981 = vmatprep.subr.bf16.mxu0 %v5064
    %5982 = vmatpush1.bf16.msra.mxu0 %v5063
    %5983 = vmatprep.subr.bf16.mxu0 %v5072
    %5984 = vmatpush1.bf16.msra.mxu0 %v5071
    %5985 = vmatprep.subr.bf16.mxu0 %v5080
    %5986 = vmatpush1.bf16.msra.mxu0 %v5079
    %5987 = vmatprep.subr.bf16.mxu0 %v5088
    %5988 = vmatpush1.bf16.msra.mxu0 %v5087
    %5989 = vmatprep.subr.bf16.mxu0 %v5096
    %5990 = vmatpush1.bf16.msra.mxu0 %v5095
    %5991 = vmatprep.subr.bf16.mxu0 %v5104
    %5992 = vmatpush1.bf16.msra.mxu0 %v5103
    %5993 = vmatprep.subr.bf16.mxu0 %v5112
    %5994 = vmatpush1.bf16.msra.mxu0 %v5111
    %5995 = vmatprep.mubr.bf16.mxu0 %v5663
    %5996 = vmatmul.mubr.bf16.gmra.mrb[0].mxu0 %v5662
    %v5997 = vpop.f32.mrb[0].mxu0
    %v5998 = vadd.f32 0.0, %v5997
    %v5999 = vpop.f32.mrb[0].mxu0
    %v6000 = vadd.f32 0.0, %v5999
    %v6001 = vpop.f32.mrb[0].mxu0
    %v6002 = vadd.f32 0.0, %v6001
    %v6003 = vpop.f32.mrb[0].mxu0
    %v6004 = vadd.f32 0.0, %v6003
    %6005 = vmatprep.mubr.bf16.mxu0 %v5672
    %6006 = vmatmul.mubr.bf16.gmra.mrb[0].mxu0 %v5671
    %v6007 = vpop.f32.mrb[0].mxu0
    %v6008 = vadd.f32 0.0, %v6007
    %v6009 = vpop.f32.mrb[0].mxu0
    %v6010 = vadd.f32 0.0, %v6009
    %v6011 = vpop.f32.mrb[0].mxu0
    %v6012 = vadd.f32 0.0, %v6011
    %v6013 = vpop.f32.mrb[0].mxu0
    %v6014 = vadd.f32 0.0, %v6013
    %6015 = vdwg.mxu0
    %6016 = vmatprep.subr.bf16.mxu0 %v5120
    %6017 = vmatpush1.bf16.msra.mxu0 %v5119
    %6018 = vmatprep.subr.bf16.mxu0 %v5128
    %6019 = vmatpush1.bf16.msra.mxu0 %v5127
    %6020 = vmatprep.subr.bf16.mxu0 %v5136
    %6021 = vmatpush1.bf16.msra.mxu0 %v5135
    %6022 = vmatprep.subr.bf16.mxu0 %v5144
    %6023 = vmatpush1.bf16.msra.mxu0 %v5143
    %6024 = vmatprep.subr.bf16.mxu0 %v5152
    %6025 = vmatpush1.bf16.msra.mxu0 %v5151
    %6026 = vmatprep.subr.bf16.mxu0 %v5160
    %6027 = vmatpush1.bf16.msra.mxu0 %v5159
    %6028 = vmatprep.subr.bf16.mxu0 %v5168
    %6029 = vmatpush1.bf16.msra.mxu0 %v5167
    %6030 = vmatprep.subr.bf16.mxu0 %v5176
    %6031 = vmatpush1.bf16.msra.mxu0 %v5175
    %6032 = vmatprep.subr.bf16.mxu0 %v5184
    %6033 = vmatpush1.bf16.msra.mxu0 %v5183
    %6034 = vmatprep.subr.bf16.mxu0 %v5192
    %6035 = vmatpush1.bf16.msra.mxu0 %v5191
    %6036 = vmatprep.subr.bf16.mxu0 %v5200
    %6037 = vmatpush1.bf16.msra.mxu0 %v5199
    %6038 = vmatprep.subr.bf16.mxu0 %v5208
    %6039 = vmatpush1.bf16.msra.mxu0 %v5207
    %6040 = vmatprep.subr.bf16.mxu0 %v5216
    %6041 = vmatpush1.bf16.msra.mxu0 %v5215
    %6042 = vmatprep.subr.bf16.mxu0 %v5224
    %6043 = vmatpush1.bf16.msra.mxu0 %v5223
    %6044 = vmatprep.subr.bf16.mxu0 %v5232
    %6045 = vmatpush1.bf16.msra.mxu0 %v5231
    %6046 = vmatprep.subr.bf16.mxu0 %v5240
    %6047 = vmatpush1.bf16.msra.mxu0 %v5239
    %6048 = vmatprep.mubr.bf16.mxu0 %v5665
    %6049 = vmatmul.mubr.bf16.gmra.mrb[0].mxu0 %v5664
    %v6050 = vpop.f32.mrb[0].mxu0
    %v6051 = vadd.f32 %v5998, %v6050
    %v6052 = vpop.f32.mrb[0].mxu0
    %v6053 = vadd.f32 %v6000, %v6052
    %v6054 = vpop.f32.mrb[0].mxu0
    %v6055 = vadd.f32 %v6002, %v6054
    %v6056 = vpop.f32.mrb[0].mxu0
    %v6057 = vadd.f32 %v6004, %v6056
    %6058 = vmatprep.mubr.bf16.mxu0 %v5674
    %6059 = vmatmul.mubr.bf16.gmra.mrb[0].mxu0 %v5673
    %v6060 = vpop.f32.mrb[0].mxu0
    %v6061 = vadd.f32 %v6008, %v6060
    %v6062 = vpop.f32.mrb[0].mxu0
    %v6063 = vadd.f32 %v6010, %v6062
    %v6064 = vpop.f32.mrb[0].mxu0
    %v6065 = vadd.f32 %v6012, %v6064
    %v6066 = vpop.f32.mrb[0].mxu0
    %v6067 = vadd.f32 %v6014, %v6066
    %6068 = vdwg.mxu0
    %6069 = vmatprep.subr.bf16.mxu0 %v5248
    %6070 = vmatpush1.bf16.msra.mxu0 %v5247
    %6071 = vmatprep.subr.bf16.mxu0 %v5256
    %6072 = vmatpush1.bf16.msra.mxu0 %v5255
    %6073 = vmatprep.subr.bf16.mxu0 %v5264
    %6074 = vmatpush1.bf16.msra.mxu0 %v5263
    %6075 = vmatprep.subr.bf16.mxu0 %v5272
    %6076 = vmatpush1.bf16.msra.mxu0 %v5271
    %6077 = vmatprep.subr.bf16.mxu0 %v5280
    %6078 = vmatpush1.bf16.msra.mxu0 %v5279
    %6079 = vmatprep.subr.bf16.mxu0 %v5288
    %6080 = vmatpush1.bf16.msra.mxu0 %v5287
    %6081 = vmatprep.subr.bf16.mxu0 %v5296
    %6082 = vmatpush1.bf16.msra.mxu0 %v5295
    %6083 = vmatprep.subr.bf16.mxu0 %v5304
    %6084 = vmatpush1.bf16.msra.mxu0 %v5303
    %6085 = vmatprep.subr.bf16.mxu0 %v5312
    %6086 = vmatpush1.bf16.msra.mxu0 %v5311
    %6087 = vmatprep.subr.bf16.mxu0 %v5320
    %6088 = vmatpush1.bf16.msra.mxu0 %v5319
    %6089 = vmatprep.subr.bf16.mxu0 %v5328
    %6090 = vmatpush1.bf16.msra.mxu0 %v5327
    %6091 = vmatprep.subr.bf16.mxu0 %v5336
    %6092 = vmatpush1.bf16.msra.mxu0 %v5335
    %6093 = vmatprep.subr.bf16.mxu0 %v5344
    %6094 = vmatpush1.bf16.msra.mxu0 %v5343
    %6095 = vmatprep.subr.bf16.mxu0 %v5352
    %6096 = vmatpush1.bf16.msra.mxu0 %v5351
    %6097 = vmatprep.subr.bf16.mxu0 %v5360
    %6098 = vmatpush1.bf16.msra.mxu0 %v5359
    %6099 = vmatprep.subr.bf16.mxu0 %v5368
    %6100 = vmatpush1.bf16.msra.mxu0 %v5367
    %6101 = vmatprep.mubr.bf16.mxu0 %v5667
    %6102 = vmatmul.mubr.bf16.gmra.mrb[0].mxu0 %v5666
    %v6103 = vpop.f32.mrb[0].mxu0
    %v6104 = vadd.f32 %v6051, %v6103
    %v6105 = vpop.f32.mrb[0].mxu0
    %v6106 = vadd.f32 %v6053, %v6105
    %v6107 = vpop.f32.mrb[0].mxu0
    %v6108 = vadd.f32 %v6055, %v6107
    %v6109 = vpop.f32.mrb[0].mxu0
    %v6110 = vadd.f32 %v6057, %v6109
    %6111 = vmatprep.mubr.bf16.mxu0 %v5676
    %6112 = vmatmul.mubr.bf16.gmra.mrb[0].mxu0 %v5675
    %v6113 = vpop.f32.mrb[0].mxu0
    %v6114 = vadd.f32 %v6061, %v6113
    %v6115 = vpop.f32.mrb[0].mxu0
    %v6116 = vadd.f32 %v6063, %v6115
    %v6117 = vpop.f32.mrb[0].mxu0
    %v6118 = vadd.f32 %v6065, %v6117
    %v6119 = vpop.f32.mrb[0].mxu0
    %v6120 = vadd.f32 %v6067, %v6119
    %6121 = vdwg.mxu0
    %6122 = vmatprep.subr.bf16.mxu0 %v5376
    %6123 = vmatpush1.bf16.msra.mxu0 %v5375
    %6124 = vmatprep.subr.bf16.mxu0 %v5384
    %6125 = vmatpush1.bf16.msra.mxu0 %v5383
    %6126 = vmatprep.subr.bf16.mxu0 %v5392
    %6127 = vmatpush1.bf16.msra.mxu0 %v5391
    %6128 = vmatprep.subr.bf16.mxu0 %v5400
    %6129 = vmatpush1.bf16.msra.mxu0 %v5399
    %6130 = vmatprep.subr.bf16.mxu0 %v5408
    %6131 = vmatpush1.bf16.msra.mxu0 %v5407
    %6132 = vmatprep.subr.bf16.mxu0 %v5416
    %6133 = vmatpush1.bf16.msra.mxu0 %v5415
    %6134 = vmatprep.subr.bf16.mxu0 %v5424
    %6135 = vmatpush1.bf16.msra.mxu0 %v5423
    %6136 = vmatprep.subr.bf16.mxu0 %v5432
    %6137 = vmatpush1.bf16.msra.mxu0 %v5431
    %6138 = vmatprep.subr.bf16.mxu0 %v5440
    %6139 = vmatpush1.bf16.msra.mxu0 %v5439
    %6140 = vmatprep.subr.bf16.mxu0 %v5448
    %6141 = vmatpush1.bf16.msra.mxu0 %v5447
    %6142 = vmatprep.subr.bf16.mxu0 %v5456
    %6143 = vmatpush1.bf16.msra.mxu0 %v5455
    %6144 = vmatprep.subr.bf16.mxu0 %v5464
    %6145 = vmatpush1.bf16.msra.mxu0 %v5463
    %6146 = vmatprep.subr.bf16.mxu0 %v5472
    %6147 = vmatpush1.bf16.msra.mxu0 %v5471
    %6148 = vmatprep.subr.bf16.mxu0 %v5480
    %6149 = vmatpush1.bf16.msra.mxu0 %v5479
    %6150 = vmatprep.subr.bf16.mxu0 %v5488
    %6151 = vmatpush1.bf16.msra.mxu0 %v5487
    %6152 = vmatprep.subr.bf16.mxu0 %v5496
    %6153 = vmatpush1.bf16.msra.mxu0 %v5495
    %6154 = vmatprep.mubr.bf16.mxu0 %v5669
    %6155 = vmatmul.mubr.bf16.gmra.mrb[0].mxu0 %v5668
    %v6156 = vpop.f32.mrb[0].mxu0
    %v6157 = vadd.f32 %v6104, %v6156
    %v6158 = vpop.f32.mrb[0].mxu0
    %v6159 = vadd.f32 %v6106, %v6158
    %v6160 = vpop.f32.mrb[0].mxu0
    %v6161 = vadd.f32 %v6108, %v6160
    %v6162 = vpop.f32.mrb[0].mxu0
    %v6163 = vadd.f32 %v6110, %v6162
    %6164 = vmatprep.mubr.bf16.mxu0 %v5678
    %6165 = vmatmul.mubr.bf16.gmra.mrb[0].mxu0 %v5677
    %v6166 = vpop.f32.mrb[0].mxu0
    %v6167 = vadd.f32 %v6114, %v6166
    %v6168 = vpop.f32.mrb[0].mxu0
    %v6169 = vadd.f32 %v6116, %v6168
    %v6170 = vpop.f32.mrb[0].mxu0
    %v6171 = vadd.f32 %v6118, %v6170
    %v6172 = vpop.f32.mrb[0].mxu0
    %v6173 = vadd.f32 %v6120, %v6172
    %6174 = vdwg.mxu0
    %6175 = vmatprep.subr.bf16.mxu0 %v5504
    %6176 = vmatpush1.bf16.msra.mxu0 %v5503
    %6177 = vmatprep.subr.bf16.mxu0 %v5512
    %6178 = vmatpush1.bf16.msra.mxu0 %v5511
    %6179 = vmatprep.subr.bf16.mxu0 %v5520
    %6180 = vmatpush1.bf16.msra.mxu0 %v5519
    %6181 = vmatprep.subr.bf16.mxu0 %v5528
    %6182 = vmatpush1.bf16.msra.mxu0 %v5527
    %6183 = vmatprep.subr.bf16.mxu0 %v5536
    %6184 = vmatpush1.bf16.msra.mxu0 %v5535
    %6185 = vmatprep.subr.bf16.mxu0 %v5544
    %6186 = vmatpush1.bf16.msra.mxu0 %v5543
    %6187 = vmatprep.subr.bf16.mxu0 %v5552
    %6188 = vmatpush1.bf16.msra.mxu0 %v5551
    %6189 = vmatprep.subr.bf16.mxu0 %v5560
    %6190 = vmatpush1.bf16.msra.mxu0 %v5559
    %6191 = vmatprep.subr.bf16.mxu0 0
    %6192 = vmatpush1.bf16.msra.mxu0 0
    %6193 = vmatprep.subr.bf16.mxu0 0
    %6194 = vmatpush1.bf16.msra.mxu0 0
    %6195 = vmatprep.subr.bf16.mxu0 0
    %6196 = vmatpush1.bf16.msra.mxu0 0
    %6197 = vmatprep.subr.bf16.mxu0 0
    %6198 = vmatpush1.bf16.msra.mxu0 0
    %6199 = vmatprep.subr.bf16.mxu0 0
    %6200 = vmatpush1.bf16.msra.mxu0 0
    %6201 = vmatprep.subr.bf16.mxu0 0
    %6202 = vmatpush1.bf16.msra.mxu0 0
    %6203 = vmatprep.subr.bf16.mxu0 0
    %6204 = vmatpush1.bf16.msra.mxu0 0
    %6205 = vmatprep.subr.bf16.mxu0 0
    %6206 = vmatpush1.bf16.msra.mxu0 0
    %6207 = vmatprep.mubr.bf16.mxu0 0
    %6208 = vmatmul.mubr.bf16.gmra.mrb[0].mxu0 %v5670
    %v6209 = vpop.f32.mrb[0].mxu0
    %v6210 = vadd.f32 %v6157, %v6209
    %v6211 = vpop.f32.mrb[0].mxu0
    %v6212 = vadd.f32 %v6159, %v6211
    %v6213 = vpop.f32.mrb[0].mxu0
    %v6214 = vadd.f32 %v6161, %v6213
    %v6215 = vpop.f32.mrb[0].mxu0
    %v6216 = vadd.f32 %v6163, %v6215
    %6217 = vmatprep.mubr.bf16.mxu0 0
    %6218 = vmatmul.mubr.bf16.gmra.mrb[0].mxu0 %v5679
    %v6219 = vpop.f32.mrb[0].mxu0
    %v6220 = vadd.f32 %v6167, %v6219
    %v6221 = vpop.f32.mrb[0].mxu0
    %v6222 = vadd.f32 %v6169, %v6221
    %v6223 = vpop.f32.mrb[0].mxu0
    %v6224 = vadd.f32 %v6171, %v6223
    %v6225 = vpop.f32.mrb[0].mxu0
    %v6226 = vadd.f32 %v6173, %v6225
    %6227 = vdwg.mxu0
    %6228 = vmatprep.subr.bf16.mxu0 %v4994
    %6229 = vmatpush1.bf16.msra.mxu0 %v4993
    %6230 = vmatprep.subr.bf16.mxu0 %v5002
    %6231 = vmatpush1.bf16.msra.mxu0 %v5001
    %6232 = vmatprep.subr.bf16.mxu0 %v5010
    %6233 = vmatpush1.bf16.msra.mxu0 %v5009
    %6234 = vmatprep.subr.bf16.mxu0 %v5018
    %6235 = vmatpush1.bf16.msra.mxu0 %v5017
    %6236 = vmatprep.subr.bf16.mxu0 %v5026
    %6237 = vmatpush1.bf16.msra.mxu0 %v5025
    %6238 = vmatprep.subr.bf16.mxu0 %v5034
    %6239 = vmatpush1.bf16.msra.mxu0 %v5033
    %6240 = vmatprep.subr.bf16.mxu0 %v5042
    %6241 = vmatpush1.bf16.msra.mxu0 %v5041
    %6242 = vmatprep.subr.bf16.mxu0 %v5050
    %6243 = vmatpush1.bf16.msra.mxu0 %v5049
    %6244 = vmatprep.subr.bf16.mxu0 %v5058
    %6245 = vmatpush1.bf16.msra.mxu0 %v5057
    %6246 = vmatprep.subr.bf16.mxu0 %v5066
    %6247 = vmatpush1.bf16.msra.mxu0 %v5065
    %6248 = vmatprep.subr.bf16.mxu0 %v5074
    %6249 = vmatpush1.bf16.msra.mxu0 %v5073
    %6250 = vmatprep.subr.bf16.mxu0 %v5082
    %6251 = vmatpush1.bf16.msra.mxu0 %v5081
    %6252 = vmatprep.subr.bf16.mxu0 %v5090
    %6253 = vmatpush1.bf16.msra.mxu0 %v5089
    %6254 = vmatprep.subr.bf16.mxu0 %v5098
    %6255 = vmatpush1.bf16.msra.mxu0 %v5097
    %6256 = vmatprep.subr.bf16.mxu0 %v5106
    %6257 = vmatpush1.bf16.msra.mxu0 %v5105
    %6258 = vmatprep.subr.bf16.mxu0 %v5114
    %6259 = vmatpush1.bf16.msra.mxu0 %v5113
    %6260 = vmatprep.mubr.bf16.mxu0 %v5663
    %6261 = vmatmul.mubr.bf16.gmra.mrb[0].mxu0 %v5662
    %v6262 = vpop.f32.mrb[0].mxu0
    %v6263 = vadd.f32 0.0, %v6262
    %v6264 = vpop.f32.mrb[0].mxu0
    %v6265 = vadd.f32 0.0, %v6264
    %v6266 = vpop.f32.mrb[0].mxu0
    %v6267 = vadd.f32 0.0, %v6266
    %v6268 = vpop.f32.mrb[0].mxu0
    %v6269 = vadd.f32 0.0, %v6268
    %6270 = vmatprep.mubr.bf16.mxu0 %v5672
    %6271 = vmatmul.mubr.bf16.gmra.mrb[0].mxu0 %v5671
    %v6272 = vpop.f32.mrb[0].mxu0
    %v6273 = vadd.f32 0.0, %v6272
    %v6274 = vpop.f32.mrb[0].mxu0
    %v6275 = vadd.f32 0.0, %v6274
    %v6276 = vpop.f32.mrb[0].mxu0
    %v6277 = vadd.f32 0.0, %v6276
    %v6278 = vpop.f32.mrb[0].mxu0
    %v6279 = vadd.f32 0.0, %v6278
    %6280 = vdwg.mxu0
    %6281 = vmatprep.subr.bf16.mxu0 %v5122
    %6282 = vmatpush1.bf16.msra.mxu0 %v5121
    %6283 = vmatprep.subr.bf16.mxu0 %v5130
    %6284 = vmatpush1.bf16.msra.mxu0 %v5129
    %6285 = vmatprep.subr.bf16.mxu0 %v5138
    %6286 = vmatpush1.bf16.msra.mxu0 %v5137
    %6287 = vmatprep.subr.bf16.mxu0 %v5146
    %6288 = vmatpush1.bf16.msra.mxu0 %v5145
    %6289 = vmatprep.subr.bf16.mxu0 %v5154
    %6290 = vmatpush1.bf16.msra.mxu0 %v5153
    %6291 = vmatprep.subr.bf16.mxu0 %v5162
    %6292 = vmatpush1.bf16.msra.mxu0 %v5161
    %6293 = vmatprep.subr.bf16.mxu0 %v5170
    %6294 = vmatpush1.bf16.msra.mxu0 %v5169
    %6295 = vmatprep.subr.bf16.mxu0 %v5178
    %6296 = vmatpush1.bf16.msra.mxu0 %v5177
    %6297 = vmatprep.subr.bf16.mxu0 %v5186
    %6298 = vmatpush1.bf16.msra.mxu0 %v5185
    %6299 = vmatprep.subr.bf16.mxu0 %v5194
    %6300 = vmatpush1.bf16.msra.mxu0 %v5193
    %6301 = vmatprep.subr.bf16.mxu0 %v5202
    %6302 = vmatpush1.bf16.msra.mxu0 %v5201
    %6303 = vmatprep.subr.bf16.mxu0 %v5210
    %6304 = vmatpush1.bf16.msra.mxu0 %v5209
    %6305 = vmatprep.subr.bf16.mxu0 %v5218
    %6306 = vmatpush1.bf16.msra.mxu0 %v5217
    %6307 = vmatprep.subr.bf16.mxu0 %v5226
    %6308 = vmatpush1.bf16.msra.mxu0 %v5225
    %6309 = vmatprep.subr.bf16.mxu0 %v5234
    %6310 = vmatpush1.bf16.msra.mxu0 %v5233
    %6311 = vmatprep.subr.bf16.mxu0 %v5242
    %6312 = vmatpush1.bf16.msra.mxu0 %v5241
    %6313 = vmatprep.mubr.bf16.mxu0 %v5665
    %6314 = vmatmul.mubr.bf16.gmra.mrb[0].mxu0 %v5664
    %v6315 = vpop.f32.mrb[0].mxu0
    %v6316 = vadd.f32 %v6263, %v6315
    %v6317 = vpop.f32.mrb[0].mxu0
    %v6318 = vadd.f32 %v6265, %v6317
    %v6319 = vpop.f32.mrb[0].mxu0
    %v6320 = vadd.f32 %v6267, %v6319
    %v6321 = vpop.f32.mrb[0].mxu0
    %v6322 = vadd.f32 %v6269, %v6321
    %6323 = vmatprep.mubr.bf16.mxu0 %v5674
    %6324 = vmatmul.mubr.bf16.gmra.mrb[0].mxu0 %v5673
    %v6325 = vpop.f32.mrb[0].mxu0
    %v6326 = vadd.f32 %v6273, %v6325
    %v6327 = vpop.f32.mrb[0].mxu0
    %v6328 = vadd.f32 %v6275, %v6327
    %v6329 = vpop.f32.mrb[0].mxu0
    %v6330 = vadd.f32 %v6277, %v6329
    %v6331 = vpop.f32.mrb[0].mxu0
    %v6332 = vadd.f32 %v6279, %v6331
    %6333 = vdwg.mxu0
    %6334 = vmatprep.subr.bf16.mxu0 %v5250
    %6335 = vmatpush1.bf16.msra.mxu0 %v5249
    %6336 = vmatprep.subr.bf16.mxu0 %v5258
    %6337 = vmatpush1.bf16.msra.mxu0 %v5257
    %6338 = vmatprep.subr.bf16.mxu0 %v5266
    %6339 = vmatpush1.bf16.msra.mxu0 %v5265
    %6340 = vmatprep.subr.bf16.mxu0 %v5274
    %6341 = vmatpush1.bf16.msra.mxu0 %v5273
    %6342 = vmatprep.subr.bf16.mxu0 %v5282
    %6343 = vmatpush1.bf16.msra.mxu0 %v5281
    %6344 = vmatprep.subr.bf16.mxu0 %v5290
    %6345 = vmatpush1.bf16.msra.mxu0 %v5289
    %6346 = vmatprep.subr.bf16.mxu0 %v5298
    %6347 = vmatpush1.bf16.msra.mxu0 %v5297
    %6348 = vmatprep.subr.bf16.mxu0 %v5306
    %6349 = vmatpush1.bf16.msra.mxu0 %v5305
    %6350 = vmatprep.subr.bf16.mxu0 %v5314
    %6351 = vmatpush1.bf16.msra.mxu0 %v5313
    %6352 = vmatprep.subr.bf16.mxu0 %v5322
    %6353 = vmatpush1.bf16.msra.mxu0 %v5321
    %6354 = vmatprep.subr.bf16.mxu0 %v5330
    %6355 = vmatpush1.bf16.msra.mxu0 %v5329
    %6356 = vmatprep.subr.bf16.mxu0 %v5338
    %6357 = vmatpush1.bf16.msra.mxu0 %v5337
    %6358 = vmatprep.subr.bf16.mxu0 %v5346
    %6359 = vmatpush1.bf16.msra.mxu0 %v5345
    %6360 = vmatprep.subr.bf16.mxu0 %v5354
    %6361 = vmatpush1.bf16.msra.mxu0 %v5353
    %6362 = vmatprep.subr.bf16.mxu0 %v5362
    %6363 = vmatpush1.bf16.msra.mxu0 %v5361
    %6364 = vmatprep.subr.bf16.mxu0 %v5370
    %6365 = vmatpush1.bf16.msra.mxu0 %v5369
    %6366 = vmatprep.mubr.bf16.mxu0 %v5667
    %6367 = vmatmul.mubr.bf16.gmra.mrb[0].mxu0 %v5666
    %v6368 = vpop.f32.mrb[0].mxu0
    %v6369 = vadd.f32 %v6316, %v6368
    %v6370 = vpop.f32.mrb[0].mxu0
    %v6371 = vadd.f32 %v6318, %v6370
    %v6372 = vpop.f32.mrb[0].mxu0
    %v6373 = vadd.f32 %v6320, %v6372
    %v6374 = vpop.f32.mrb[0].mxu0
    %v6375 = vadd.f32 %v6322, %v6374
    %6376 = vmatprep.mubr.bf16.mxu0 %v5676
    %6377 = vmatmul.mubr.bf16.gmra.mrb[0].mxu0 %v5675
    %v6378 = vpop.f32.mrb[0].mxu0
    %v6379 = vadd.f32 %v6326, %v6378
    %v6380 = vpop.f32.mrb[0].mxu0
    %v6381 = vadd.f32 %v6328, %v6380
    %v6382 = vpop.f32.mrb[0].mxu0
    %v6383 = vadd.f32 %v6330, %v6382
    %v6384 = vpop.f32.mrb[0].mxu0
    %v6385 = vadd.f32 %v6332, %v6384
    %6386 = vdwg.mxu0
    %6387 = vmatprep.subr.bf16.mxu0 %v5378
    %6388 = vmatpush1.bf16.msra.mxu0 %v5377
    %6389 = vmatprep.subr.bf16.mxu0 %v5386
    %6390 = vmatpush1.bf16.msra.mxu0 %v5385
    %6391 = vmatprep.subr.bf16.mxu0 %v5394
    %6392 = vmatpush1.bf16.msra.mxu0 %v5393
    %6393 = vmatprep.subr.bf16.mxu0 %v5402
    %6394 = vmatpush1.bf16.msra.mxu0 %v5401
    %6395 = vmatprep.subr.bf16.mxu0 %v5410
    %6396 = vmatpush1.bf16.msra.mxu0 %v5409
    %6397 = vmatprep.subr.bf16.mxu0 %v5418
    %6398 = vmatpush1.bf16.msra.mxu0 %v5417
    %6399 = vmatprep.subr.bf16.mxu0 %v5426
    %6400 = vmatpush1.bf16.msra.mxu0 %v5425
    %6401 = vmatprep.subr.bf16.mxu0 %v5434
    %6402 = vmatpush1.bf16.msra.mxu0 %v5433
    %6403 = vmatprep.subr.bf16.mxu0 %v5442
    %6404 = vmatpush1.bf16.msra.mxu0 %v5441
    %6405 = vmatprep.subr.bf16.mxu0 %v5450
    %6406 = vmatpush1.bf16.msra.mxu0 %v5449
    %6407 = vmatprep.subr.bf16.mxu0 %v5458
    %6408 = vmatpush1.bf16.msra.mxu0 %v5457
    %6409 = vmatprep.subr.bf16.mxu0 %v5466
    %6410 = vmatpush1.bf16.msra.mxu0 %v5465
    %6411 = vmatprep.subr.bf16.mxu0 %v5474
    %6412 = vmatpush1.bf16.msra.mxu0 %v5473
    %6413 = vmatprep.subr.bf16.mxu0 %v5482
    %6414 = vmatpush1.bf16.msra.mxu0 %v5481
    %6415 = vmatprep.subr.bf16.mxu0 %v5490
    %6416 = vmatpush1.bf16.msra.mxu0 %v5489
    %6417 = vmatprep.subr.bf16.mxu0 %v5498
    %6418 = vmatpush1.bf16.msra.mxu0 %v5497
    %6419 = vmatprep.mubr.bf16.mxu0 %v5669
    %6420 = vmatmul.mubr.bf16.gmra.mrb[0].mxu0 %v5668
    %v6421 = vpop.f32.mrb[0].mxu0
    %v6422 = vadd.f32 %v6369, %v6421
    %v6423 = vpop.f32.mrb[0].mxu0
    %v6424 = vadd.f32 %v6371, %v6423
    %v6425 = vpop.f32.mrb[0].mxu0
    %v6426 = vadd.f32 %v6373, %v6425
    %v6427 = vpop.f32.mrb[0].mxu0
    %v6428 = vadd.f32 %v6375, %v6427
    %6429 = vmatprep.mubr.bf16.mxu0 %v5678
    %6430 = vmatmul.mubr.bf16.gmra.mrb[0].mxu0 %v5677
    %v6431 = vpop.f32.mrb[0].mxu0
    %v6432 = vadd.f32 %v6379, %v6431
    %v6433 = vpop.f32.mrb[0].mxu0
    %v6434 = vadd.f32 %v6381, %v6433
    %v6435 = vpop.f32.mrb[0].mxu0
    %v6436 = vadd.f32 %v6383, %v6435
    %v6437 = vpop.f32.mrb[0].mxu0
    %v6438 = vadd.f32 %v6385, %v6437
    %6439 = vdwg.mxu0
    %6440 = vmatprep.subr.bf16.mxu0 %v5506
    %6441 = vmatpush1.bf16.msra.mxu0 %v5505
    %6442 = vmatprep.subr.bf16.mxu0 %v5514
    %6443 = vmatpush1.bf16.msra.mxu0 %v5513
    %6444 = vmatprep.subr.bf16.mxu0 %v5522
    %6445 = vmatpush1.bf16.msra.mxu0 %v5521
    %6446 = vmatprep.subr.bf16.mxu0 %v5530
    %6447 = vmatpush1.bf16.msra.mxu0 %v5529
    %6448 = vmatprep.subr.bf16.mxu0 %v5538
    %6449 = vmatpush1.bf16.msra.mxu0 %v5537
    %6450 = vmatprep.subr.bf16.mxu0 %v5546
    %6451 = vmatpush1.bf16.msra.mxu0 %v5545
    %6452 = vmatprep.subr.bf16.mxu0 %v5554
    %6453 = vmatpush1.bf16.msra.mxu0 %v5553
    %6454 = vmatprep.subr.bf16.mxu0 %v5562
    %6455 = vmatpush1.bf16.msra.mxu0 %v5561
    %6456 = vmatprep.subr.bf16.mxu0 0
    %6457 = vmatpush1.bf16.msra.mxu0 0
    %6458 = vmatprep.subr.bf16.mxu0 0
    %6459 = vmatpush1.bf16.msra.mxu0 0
    %6460 = vmatprep.subr.bf16.mxu0 0
    %6461 = vmatpush1.bf16.msra.mxu0 0
    %6462 = vmatprep.subr.bf16.mxu0 0
    %6463 = vmatpush1.bf16.msra.mxu0 0
    %6464 = vmatprep.subr.bf16.mxu0 0
    %6465 = vmatpush1.bf16.msra.mxu0 0
    %6466 = vmatprep.subr.bf16.mxu0 0
    %6467 = vmatpush1.bf16.msra.mxu0 0
    %6468 = vmatprep.subr.bf16.mxu0 0
    %6469 = vmatpush1.bf16.msra.mxu0 0
    %6470 = vmatprep.subr.bf16.mxu0 0
    %6471 = vmatpush1.bf16.msra.mxu0 0
    %6472 = vmatprep.mubr.bf16.mxu0 0
    %6473 = vmatmul.mubr.bf16.gmra.mrb[0].mxu0 %v5670
    %v6474 = vpop.f32.mrb[0].mxu0
    %v6475 = vadd.f32 %v6422, %v6474
    %v6476 = vpop.f32.mrb[0].mxu0
    %v6477 = vadd.f32 %v6424, %v6476
    %v6478 = vpop.f32.mrb[0].mxu0
    %v6479 = vadd.f32 %v6426, %v6478
    %v6480 = vpop.f32.mrb[0].mxu0
    %v6481 = vadd.f32 %v6428, %v6480
    %6482 = vmatprep.mubr.bf16.mxu0 0
    %6483 = vmatmul.mubr.bf16.gmra.mrb[0].mxu0 %v5679
    %v6484 = vpop.f32.mrb[0].mxu0
    %v6485 = vadd.f32 %v6432, %v6484
    %v6486 = vpop.f32.mrb[0].mxu0
    %v6487 = vadd.f32 %v6434, %v6486
    %v6488 = vpop.f32.mrb[0].mxu0
    %v6489 = vadd.f32 %v6436, %v6488
    %v6490 = vpop.f32.mrb[0].mxu0
    %v6491 = vadd.f32 %v6438, %v6490
    %6492 = vdwg.mxu0
    %6493 = vmatprep.subr.bf16.mxu0 %v4996
    %6494 = vmatpush1.bf16.msra.mxu0 %v4995
    %6495 = vmatprep.subr.bf16.mxu0 %v5004
    %6496 = vmatpush1.bf16.msra.mxu0 %v5003
    %6497 = vmatprep.subr.bf16.mxu0 %v5012
    %6498 = vmatpush1.bf16.msra.mxu0 %v5011
    %6499 = vmatprep.subr.bf16.mxu0 %v5020
    %6500 = vmatpush1.bf16.msra.mxu0 %v5019
    %6501 = vmatprep.subr.bf16.mxu0 %v5028
    %6502 = vmatpush1.bf16.msra.mxu0 %v5027
    %6503 = vmatprep.subr.bf16.mxu0 %v5036
    %6504 = vmatpush1.bf16.msra.mxu0 %v5035
    %6505 = vmatprep.subr.bf16.mxu0 %v5044
    %6506 = vmatpush1.bf16.msra.mxu0 %v5043
    %6507 = vmatprep.subr.bf16.mxu0 %v5052
    %6508 = vmatpush1.bf16.msra.mxu0 %v5051
    %6509 = vmatprep.subr.bf16.mxu0 %v5060
    %6510 = vmatpush1.bf16.msra.mxu0 %v5059
    %6511 = vmatprep.subr.bf16.mxu0 %v5068
    %6512 = vmatpush1.bf16.msra.mxu0 %v5067
    %6513 = vmatprep.subr.bf16.mxu0 %v5076
    %6514 = vmatpush1.bf16.msra.mxu0 %v5075
    %6515 = vmatprep.subr.bf16.mxu0 %v5084
    %6516 = vmatpush1.bf16.msra.mxu0 %v5083
    %6517 = vmatprep.subr.bf16.mxu0 %v5092
    %6518 = vmatpush1.bf16.msra.mxu0 %v5091
    %6519 = vmatprep.subr.bf16.mxu0 %v5100
    %6520 = vmatpush1.bf16.msra.mxu0 %v5099
    %6521 = vmatprep.subr.bf16.mxu0 %v5108
    %6522 = vmatpush1.bf16.msra.mxu0 %v5107
    %6523 = vmatprep.subr.bf16.mxu0 %v5116
    %6524 = vmatpush1.bf16.msra.mxu0 %v5115
    %6525 = vmatprep.mubr.bf16.mxu0 %v5663
    %6526 = vmatmul.mubr.bf16.gmra.mrb[0].mxu0 %v5662
    %v6527 = vpop.f32.mrb[0].mxu0
    %v6528 = vadd.f32 0.0, %v6527
    %v6529 = vpop.f32.mrb[0].mxu0
    %v6530 = vadd.f32 0.0, %v6529
    %v6531 = vpop.f32.mrb[0].mxu0
    %v6532 = vadd.f32 0.0, %v6531
    %v6533 = vpop.f32.mrb[0].mxu0
    %v6534 = vadd.f32 0.0, %v6533
    %6535 = vmatprep.mubr.bf16.mxu0 %v5672
    %6536 = vmatmul.mubr.bf16.gmra.mrb[0].mxu0 %v5671
    %v6537 = vpop.f32.mrb[0].mxu0
    %v6538 = vadd.f32 0.0, %v6537
    %v6539 = vpop.f32.mrb[0].mxu0
    %v6540 = vadd.f32 0.0, %v6539
    %v6541 = vpop.f32.mrb[0].mxu0
    %v6542 = vadd.f32 0.0, %v6541
    %v6543 = vpop.f32.mrb[0].mxu0
    %v6544 = vadd.f32 0.0, %v6543
    %6545 = vdwg.mxu0
    %6546 = vmatprep.subr.bf16.mxu0 %v5124
    %6547 = vmatpush1.bf16.msra.mxu0 %v5123
    %6548 = vmatprep.subr.bf16.mxu0 %v5132
    %6549 = vmatpush1.bf16.msra.mxu0 %v5131
    %6550 = vmatprep.subr.bf16.mxu0 %v5140
    %6551 = vmatpush1.bf16.msra.mxu0 %v5139
    %6552 = vmatprep.subr.bf16.mxu0 %v5148
    %6553 = vmatpush1.bf16.msra.mxu0 %v5147
    %6554 = vmatprep.subr.bf16.mxu0 %v5156
    %6555 = vmatpush1.bf16.msra.mxu0 %v5155
    %6556 = vmatprep.subr.bf16.mxu0 %v5164
    %6557 = vmatpush1.bf16.msra.mxu0 %v5163
    %6558 = vmatprep.subr.bf16.mxu0 %v5172
    %6559 = vmatpush1.bf16.msra.mxu0 %v5171
    %6560 = vmatprep.subr.bf16.mxu0 %v5180
    %6561 = vmatpush1.bf16.msra.mxu0 %v5179
    %6562 = vmatprep.subr.bf16.mxu0 %v5188
    %6563 = vmatpush1.bf16.msra.mxu0 %v5187
    %6564 = vmatprep.subr.bf16.mxu0 %v5196
    %6565 = vmatpush1.bf16.msra.mxu0 %v5195
    %6566 = vmatprep.subr.bf16.mxu0 %v5204
    %6567 = vmatpush1.bf16.msra.mxu0 %v5203
    %6568 = vmatprep.subr.bf16.mxu0 %v5212
    %6569 = vmatpush1.bf16.msra.mxu0 %v5211
    %6570 = vmatprep.subr.bf16.mxu0 %v5220
    %6571 = vmatpush1.bf16.msra.mxu0 %v5219
    %6572 = vmatprep.subr.bf16.mxu0 %v5228
    %6573 = vmatpush1.bf16.msra.mxu0 %v5227
    %6574 = vmatprep.subr.bf16.mxu0 %v5236
    %6575 = vmatpush1.bf16.msra.mxu0 %v5235
    %6576 = vmatprep.subr.bf16.mxu0 %v5244
    %6577 = vmatpush1.bf16.msra.mxu0 %v5243
    %6578 = vmatprep.mubr.bf16.mxu0 %v5665
    %6579 = vmatmul.mubr.bf16.gmra.mrb[0].mxu0 %v5664
    %v6580 = vpop.f32.mrb[0].mxu0
    %v6581 = vadd.f32 %v6528, %v6580
    %v6582 = vpop.f32.mrb[0].mxu0
    %v6583 = vadd.f32 %v6530, %v6582
    %v6584 = vpop.f32.mrb[0].mxu0
    %v6585 = vadd.f32 %v6532, %v6584
    %v6586 = vpop.f32.mrb[0].mxu0
    %v6587 = vadd.f32 %v6534, %v6586
    %6588 = vmatprep.mubr.bf16.mxu0 %v5674
    %6589 = vmatmul.mubr.bf16.gmra.mrb[0].mxu0 %v5673
    %v6590 = vpop.f32.mrb[0].mxu0
    %v6591 = vadd.f32 %v6538, %v6590
    %v6592 = vpop.f32.mrb[0].mxu0
    %v6593 = vadd.f32 %v6540, %v6592
    %v6594 = vpop.f32.mrb[0].mxu0
    %v6595 = vadd.f32 %v6542, %v6594
    %v6596 = vpop.f32.mrb[0].mxu0
    %v6597 = vadd.f32 %v6544, %v6596
    %6598 = vdwg.mxu0
    %6599 = vmatprep.subr.bf16.mxu0 %v5252
    %6600 = vmatpush1.bf16.msra.mxu0 %v5251
    %6601 = vmatprep.subr.bf16.mxu0 %v5260
    %6602 = vmatpush1.bf16.msra.mxu0 %v5259
    %6603 = vmatprep.subr.bf16.mxu0 %v5268
    %6604 = vmatpush1.bf16.msra.mxu0 %v5267
    %6605 = vmatprep.subr.bf16.mxu0 %v5276
    %6606 = vmatpush1.bf16.msra.mxu0 %v5275
    %6607 = vmatprep.subr.bf16.mxu0 %v5284
    %6608 = vmatpush1.bf16.msra.mxu0 %v5283
    %6609 = vmatprep.subr.bf16.mxu0 %v5292
    %6610 = vmatpush1.bf16.msra.mxu0 %v5291
    %6611 = vmatprep.subr.bf16.mxu0 %v5300
    %6612 = vmatpush1.bf16.msra.mxu0 %v5299
    %6613 = vmatprep.subr.bf16.mxu0 %v5308
    %6614 = vmatpush1.bf16.msra.mxu0 %v5307
    %6615 = vmatprep.subr.bf16.mxu0 %v5316
    %6616 = vmatpush1.bf16.msra.mxu0 %v5315
    %6617 = vmatprep.subr.bf16.mxu0 %v5324
    %6618 = vmatpush1.bf16.msra.mxu0 %v5323
    %6619 = vmatprep.subr.bf16.mxu0 %v5332
    %6620 = vmatpush1.bf16.msra.mxu0 %v5331
    %6621 = vmatprep.subr.bf16.mxu0 %v5340
    %6622 = vmatpush1.bf16.msra.mxu0 %v5339
    %6623 = vmatprep.subr.bf16.mxu0 %v5348
    %6624 = vmatpush1.bf16.msra.mxu0 %v5347
    %6625 = vmatprep.subr.bf16.mxu0 %v5356
    %6626 = vmatpush1.bf16.msra.mxu0 %v5355
    %6627 = vmatprep.subr.bf16.mxu0 %v5364
    %6628 = vmatpush1.bf16.msra.mxu0 %v5363
    %6629 = vmatprep.subr.bf16.mxu0 %v5372
    %6630 = vmatpush1.bf16.msra.mxu0 %v5371
    %6631 = vmatprep.mubr.bf16.mxu0 %v5667
    %6632 = vmatmul.mubr.bf16.gmra.mrb[0].mxu0 %v5666
    %v6633 = vpop.f32.mrb[0].mxu0
    %v6634 = vadd.f32 %v6581, %v6633
    %v6635 = vpop.f32.mrb[0].mxu0
    %v6636 = vadd.f32 %v6583, %v6635
    %v6637 = vpop.f32.mrb[0].mxu0
    %v6638 = vadd.f32 %v6585, %v6637
    %v6639 = vpop.f32.mrb[0].mxu0
    %v6640 = vadd.f32 %v6587, %v6639
    %6641 = vmatprep.mubr.bf16.mxu0 %v5676
    %6642 = vmatmul.mubr.bf16.gmra.mrb[0].mxu0 %v5675
    %v6643 = vpop.f32.mrb[0].mxu0
    %v6644 = vadd.f32 %v6591, %v6643
    %v6645 = vpop.f32.mrb[0].mxu0
    %v6646 = vadd.f32 %v6593, %v6645
    %v6647 = vpop.f32.mrb[0].mxu0
    %v6648 = vadd.f32 %v6595, %v6647
    %v6649 = vpop.f32.mrb[0].mxu0
    %v6650 = vadd.f32 %v6597, %v6649
    %6651 = vdwg.mxu0
    %6652 = vmatprep.subr.bf16.mxu0 %v5380
    %6653 = vmatpush1.bf16.msra.mxu0 %v5379
    %6654 = vmatprep.subr.bf16.mxu0 %v5388
    %6655 = vmatpush1.bf16.msra.mxu0 %v5387
    %6656 = vmatprep.subr.bf16.mxu0 %v5396
    %6657 = vmatpush1.bf16.msra.mxu0 %v5395
    %6658 = vmatprep.subr.bf16.mxu0 %v5404
    %6659 = vmatpush1.bf16.msra.mxu0 %v5403
    %6660 = vmatprep.subr.bf16.mxu0 %v5412
    %6661 = vmatpush1.bf16.msra.mxu0 %v5411
    %6662 = vmatprep.subr.bf16.mxu0 %v5420
    %6663 = vmatpush1.bf16.msra.mxu0 %v5419
    %6664 = vmatprep.subr.bf16.mxu0 %v5428
    %6665 = vmatpush1.bf16.msra.mxu0 %v5427
    %6666 = vmatprep.subr.bf16.mxu0 %v5436
    %6667 = vmatpush1.bf16.msra.mxu0 %v5435
    %6668 = vmatprep.subr.bf16.mxu0 %v5444
    %6669 = vmatpush1.bf16.msra.mxu0 %v5443
    %6670 = vmatprep.subr.bf16.mxu0 %v5452
    %6671 = vmatpush1.bf16.msra.mxu0 %v5451
    %6672 = vmatprep.subr.bf16.mxu0 %v5460
    %6673 = vmatpush1.bf16.msra.mxu0 %v5459
    %6674 = vmatprep.subr.bf16.mxu0 %v5468
    %6675 = vmatpush1.bf16.msra.mxu0 %v5467
    %6676 = vmatprep.subr.bf16.mxu0 %v5476
    %6677 = vmatpush1.bf16.msra.mxu0 %v5475
    %6678 = vmatprep.subr.bf16.mxu0 %v5484
    %6679 = vmatpush1.bf16.msra.mxu0 %v5483
    %6680 = vmatprep.subr.bf16.mxu0 %v5492
    %6681 = vmatpush1.bf16.msra.mxu0 %v5491
    %6682 = vmatprep.subr.bf16.mxu0 %v5500
    %6683 = vmatpush1.bf16.msra.mxu0 %v5499
    %6684 = vmatprep.mubr.bf16.mxu0 %v5669
    %6685 = vmatmul.mubr.bf16.gmra.mrb[0].mxu0 %v5668
    %v6686 = vpop.f32.mrb[0].mxu0
    %v6687 = vadd.f32 %v6634, %v6686
    %v6688 = vpop.f32.mrb[0].mxu0
    %v6689 = vadd.f32 %v6636, %v6688
    %v6690 = vpop.f32.mrb[0].mxu0
    %v6691 = vadd.f32 %v6638, %v6690
    %v6692 = vpop.f32.mrb[0].mxu0
    %v6693 = vadd.f32 %v6640, %v6692
    %6694 = vmatprep.mubr.bf16.mxu0 %v5678
    %6695 = vmatmul.mubr.bf16.gmra.mrb[0].mxu0 %v5677
    %v6696 = vpop.f32.mrb[0].mxu0
    %v6697 = vadd.f32 %v6644, %v6696
    %v6698 = vpop.f32.mrb[0].mxu0
    %v6699 = vadd.f32 %v6646, %v6698
    %v6700 = vpop.f32.mrb[0].mxu0
    %v6701 = vadd.f32 %v6648, %v6700
    %v6702 = vpop.f32.mrb[0].mxu0
    %v6703 = vadd.f32 %v6650, %v6702
    %6704 = vdwg.mxu0
    %6705 = vmatprep.subr.bf16.mxu0 %v5508
    %6706 = vmatpush1.bf16.msra.mxu0 %v5507
    %6707 = vmatprep.subr.bf16.mxu0 %v5516
    %6708 = vmatpush1.bf16.msra.mxu0 %v5515
    %6709 = vmatprep.subr.bf16.mxu0 %v5524
    %6710 = vmatpush1.bf16.msra.mxu0 %v5523
    %6711 = vmatprep.subr.bf16.mxu0 %v5532
    %6712 = vmatpush1.bf16.msra.mxu0 %v5531
    %6713 = vmatprep.subr.bf16.mxu0 %v5540
    %6714 = vmatpush1.bf16.msra.mxu0 %v5539
    %6715 = vmatprep.subr.bf16.mxu0 %v5548
    %6716 = vmatpush1.bf16.msra.mxu0 %v5547
    %6717 = vmatprep.subr.bf16.mxu0 %v5556
    %6718 = vmatpush1.bf16.msra.mxu0 %v5555
    %6719 = vmatprep.subr.bf16.mxu0 %v5564
    %6720 = vmatpush1.bf16.msra.mxu0 %v5563
    %6721 = vmatprep.subr.bf16.mxu0 0
    %6722 = vmatpush1.bf16.msra.mxu0 0
    %6723 = vmatprep.subr.bf16.mxu0 0
    %6724 = vmatpush1.bf16.msra.mxu0 0
    %6725 = vmatprep.subr.bf16.mxu0 0
    %6726 = vmatpush1.bf16.msra.mxu0 0
    %6727 = vmatprep.subr.bf16.mxu0 0
    %6728 = vmatpush1.bf16.msra.mxu0 0
    %6729 = vmatprep.subr.bf16.mxu0 0
    %6730 = vmatpush1.bf16.msra.mxu0 0
    %6731 = vmatprep.subr.bf16.mxu0 0
    %6732 = vmatpush1.bf16.msra.mxu0 0
    %6733 = vmatprep.subr.bf16.mxu0 0
    %6734 = vmatpush1.bf16.msra.mxu0 0
    %6735 = vmatprep.subr.bf16.mxu0 0
    %6736 = vmatpush1.bf16.msra.mxu0 0
    %6737 = vmatprep.mubr.bf16.mxu0 0
    %6738 = vmatmul.mubr.bf16.gmra.mrb[0].mxu0 %v5670
    %v6739 = vpop.f32.mrb[0].mxu0
    %v6740 = vadd.f32 %v6687, %v6739
    %v6741 = vpop.f32.mrb[0].mxu0
    %v6742 = vadd.f32 %v6689, %v6741
    %v6743 = vpop.f32.mrb[0].mxu0
    %v6744 = vadd.f32 %v6691, %v6743
    %v6745 = vpop.f32.mrb[0].mxu0
    %v6746 = vadd.f32 %v6693, %v6745
    %6747 = vmatprep.mubr.bf16.mxu0 0
    %6748 = vmatmul.mubr.bf16.gmra.mrb[0].mxu0 %v5679
    %v6749 = vpop.f32.mrb[0].mxu0
    %v6750 = vadd.f32 %v6697, %v6749
    %v6751 = vpop.f32.mrb[0].mxu0
    %v6752 = vadd.f32 %v6699, %v6751
    %v6753 = vpop.f32.mrb[0].mxu0
    %v6754 = vadd.f32 %v6701, %v6753
    %v6755 = vpop.f32.mrb[0].mxu0
    %v6756 = vadd.f32 %v6703, %v6755
    %6757 = vdwg.mxu0
    %v6778 = vunpack.c.l.b16 %v5565
    %v6779 = vunpack.c.h.b16 %v5565
    %v6780 = vunpack.c.l.b16 %v5566
    %v6781 = vunpack.c.h.b16 %v5566
    %v6782 = vunpack.c.l.b16 %v5567
    %v6783 = vunpack.c.h.b16 %v5567
    %v6784 = vunpack.c.l.b16 %v5568
    %v6785 = vunpack.c.h.b16 %v5568
    %v6786 = vunpack.c.l.b16 %v5569
    %v6787 = vunpack.c.l.b16 %v5570
    %v6788 = vunpack.c.h.b16 %v5570
    %v6789 = vunpack.c.l.b16 %v5571
    %v6790 = vunpack.c.h.b16 %v5571
    %v6791 = vunpack.c.l.b16 %v5572
    %v6792 = vunpack.c.h.b16 %v5572
    %v6793 = vunpack.c.l.b16 %v5573
    %v6794 = vunpack.c.h.b16 %v5573
    %v6795 = vunpack.c.l.b16 %v5574
    %v6796 = vunpack.c.l.b16 %v5575
    %v6797 = vunpack.c.h.b16 %v5575
    %v6798 = vunpack.c.l.b16 %v5576
    %v6799 = vunpack.c.h.b16 %v5576
    %v6800 = vunpack.c.l.b16 %v5577
    %v6801 = vunpack.c.h.b16 %v5577
    %v6802 = vunpack.c.l.b16 %v5578
    %v6803 = vunpack.c.h.b16 %v5578
    %v6804 = vunpack.c.l.b16 %v5579
    %v6805 = vunpack.c.l.b16 %v5580
    %v6806 = vunpack.c.h.b16 %v5580
    %v6807 = vunpack.c.l.b16 %v5581
    %v6808 = vunpack.c.h.b16 %v5581
    %v6809 = vunpack.c.l.b16 %v5582
    %v6810 = vunpack.c.h.b16 %v5582
    %v6811 = vunpack.c.l.b16 %v5583
    %v6812 = vunpack.c.h.b16 %v5583
    %v6813 = vunpack.c.l.b16 %v5584
    %v6814 = vpack.c.b16 %v6787, %v6778
    %v6815 = vpack.c.b16 %v6788, %v6779
    %v6816 = vpack.c.b16 %v6789, %v6780
    %v6817 = vpack.c.b16 %v6790, %v6781
    %v6818 = vpack.c.b16 %v6791, %v6782
    %v6819 = vpack.c.b16 %v6792, %v6783
    %v6820 = vpack.c.b16 %v6793, %v6784
    %v6821 = vpack.c.b16 %v6794, %v6785
    %v6822 = vpack.c.b16 %v6795, %v6786
    %v6823 = vpack.c.b16 %v6805, %v6796
    %v6824 = vpack.c.b16 %v6806, %v6797
    %v6825 = vpack.c.b16 %v6807, %v6798
    %v6826 = vpack.c.b16 %v6808, %v6799
    %v6827 = vpack.c.b16 %v6809, %v6800
    %v6828 = vpack.c.b16 %v6810, %v6801
    %v6829 = vpack.c.b16 %v6811, %v6802
    %v6830 = vpack.c.b16 %v6812, %v6803
    %v6831 = vpack.c.b16 %v6813, %v6804
    %6850 = vmatprep.subr.bf16.mxu0 %v4990
    %6851 = vmatpush1.bf16.msra.mxu0 %v4989
    %6852 = vmatprep.subr.bf16.mxu0 %v4998
    %6853 = vmatpush1.bf16.msra.mxu0 %v4997
    %6854 = vmatprep.subr.bf16.mxu0 %v5006
    %6855 = vmatpush1.bf16.msra.mxu0 %v5005
    %6856 = vmatprep.subr.bf16.mxu0 %v5014
    %6857 = vmatpush1.bf16.msra.mxu0 %v5013
    %6858 = vmatprep.subr.bf16.mxu0 %v5022
    %6859 = vmatpush1.bf16.msra.mxu0 %v5021
    %6860 = vmatprep.subr.bf16.mxu0 %v5030
    %6861 = vmatpush1.bf16.msra.mxu0 %v5029
    %6862 = vmatprep.subr.bf16.mxu0 %v5038
    %6863 = vmatpush1.bf16.msra.mxu0 %v5037
    %6864 = vmatprep.subr.bf16.mxu0 %v5046
    %6865 = vmatpush1.bf16.msra.mxu0 %v5045
    %6866 = vmatprep.subr.bf16.mxu0 %v5054
    %6867 = vmatpush1.bf16.msra.mxu0 %v5053
    %6868 = vmatprep.subr.bf16.mxu0 %v5062
    %6869 = vmatpush1.bf16.msra.mxu0 %v5061
    %6870 = vmatprep.subr.bf16.mxu0 %v5070
    %6871 = vmatpush1.bf16.msra.mxu0 %v5069
    %6872 = vmatprep.subr.bf16.mxu0 %v5078
    %6873 = vmatpush1.bf16.msra.mxu0 %v5077
    %6874 = vmatprep.subr.bf16.mxu0 %v5086
    %6875 = vmatpush1.bf16.msra.mxu0 %v5085
    %6876 = vmatprep.subr.bf16.mxu0 %v5094
    %6877 = vmatpush1.bf16.msra.mxu0 %v5093
    %6878 = vmatprep.subr.bf16.mxu0 %v5102
    %6879 = vmatpush1.bf16.msra.mxu0 %v5101
    %6880 = vmatprep.subr.bf16.mxu0 %v5110
    %6881 = vmatpush1.bf16.msra.mxu0 %v5109
    %6882 = vmatprep.mubr.bf16.mxu0 %v6815
    %6883 = vmatmul.mubr.bf16.gmra.mrb[0].mxu0 %v6814
    %v6884 = vpop.f32.mrb[0].mxu0
    %v6885 = vadd.f32 %v5945, %v6884
    %v6886 = vpop.f32.mrb[0].mxu0
    %v6887 = vadd.f32 %v5947, %v6886
    %v6888 = vpop.f32.mrb[0].mxu0
    %v6889 = vadd.f32 %v5949, %v6888
    %v6890 = vpop.f32.mrb[0].mxu0
    %v6891 = vadd.f32 %v5951, %v6890
    %6892 = vmatprep.mubr.bf16.mxu0 %v6824
    %6893 = vmatmul.mubr.bf16.gmra.mrb[0].mxu0 %v6823
    %v6894 = vpop.f32.mrb[0].mxu0
    %v6895 = vadd.f32 %v5955, %v6894
    %v6896 = vpop.f32.mrb[0].mxu0
    %v6897 = vadd.f32 %v5957, %v6896
    %v6898 = vpop.f32.mrb[0].mxu0
    %v6899 = vadd.f32 %v5959, %v6898
    %v6900 = vpop.f32.mrb[0].mxu0
    %v6901 = vadd.f32 %v5961, %v6900
    %6902 = vdwg.mxu0
    %6903 = vmatprep.subr.bf16.mxu0 %v5118
    %6904 = vmatpush1.bf16.msra.mxu0 %v5117
    %6905 = vmatprep.subr.bf16.mxu0 %v5126
    %6906 = vmatpush1.bf16.msra.mxu0 %v5125
    %6907 = vmatprep.subr.bf16.mxu0 %v5134
    %6908 = vmatpush1.bf16.msra.mxu0 %v5133
    %6909 = vmatprep.subr.bf16.mxu0 %v5142
    %6910 = vmatpush1.bf16.msra.mxu0 %v5141
    %6911 = vmatprep.subr.bf16.mxu0 %v5150
    %6912 = vmatpush1.bf16.msra.mxu0 %v5149
    %6913 = vmatprep.subr.bf16.mxu0 %v5158
    %6914 = vmatpush1.bf16.msra.mxu0 %v5157
    %6915 = vmatprep.subr.bf16.mxu0 %v5166
    %6916 = vmatpush1.bf16.msra.mxu0 %v5165
    %6917 = vmatprep.subr.bf16.mxu0 %v5174
    %6918 = vmatpush1.bf16.msra.mxu0 %v5173
    %6919 = vmatprep.subr.bf16.mxu0 %v5182
    %6920 = vmatpush1.bf16.msra.mxu0 %v5181
    %6921 = vmatprep.subr.bf16.mxu0 %v5190
    %6922 = vmatpush1.bf16.msra.mxu0 %v5189
    %6923 = vmatprep.subr.bf16.mxu0 %v5198
    %6924 = vmatpush1.bf16.msra.mxu0 %v5197
    %6925 = vmatprep.subr.bf16.mxu0 %v5206
    %6926 = vmatpush1.bf16.msra.mxu0 %v5205
    %6927 = vmatprep.subr.bf16.mxu0 %v5214
    %6928 = vmatpush1.bf16.msra.mxu0 %v5213
    %6929 = vmatprep.subr.bf16.mxu0 %v5222
    %6930 = vmatpush1.bf16.msra.mxu0 %v5221
    %6931 = vmatprep.subr.bf16.mxu0 %v5230
    %6932 = vmatpush1.bf16.msra.mxu0 %v5229
    %6933 = vmatprep.subr.bf16.mxu0 %v5238
    %6934 = vmatpush1.bf16.msra.mxu0 %v5237
    %6935 = vmatprep.mubr.bf16.mxu0 %v6817
    %6936 = vmatmul.mubr.bf16.gmra.mrb[0].mxu0 %v6816
    %v6937 = vpop.f32.mrb[0].mxu0
    %v6938 = vadd.f32 %v6885, %v6937
    %v6939 = vpop.f32.mrb[0].mxu0
    %v6940 = vadd.f32 %v6887, %v6939
    %v6941 = vpop.f32.mrb[0].mxu0
    %v6942 = vadd.f32 %v6889, %v6941
    %v6943 = vpop.f32.mrb[0].mxu0
    %v6944 = vadd.f32 %v6891, %v6943
    %6945 = vmatprep.mubr.bf16.mxu0 %v6826
    %6946 = vmatmul.mubr.bf16.gmra.mrb[0].mxu0 %v6825
    %v6947 = vpop.f32.mrb[0].mxu0
    %v6948 = vadd.f32 %v6895, %v6947
    %v6949 = vpop.f32.mrb[0].mxu0
    %v6950 = vadd.f32 %v6897, %v6949
    %v6951 = vpop.f32.mrb[0].mxu0
    %v6952 = vadd.f32 %v6899, %v6951
    %v6953 = vpop.f32.mrb[0].mxu0
    %v6954 = vadd.f32 %v6901, %v6953
    %6955 = vdwg.mxu0
    %6956 = vmatprep.subr.bf16.mxu0 %v5246
    %6957 = vmatpush1.bf16.msra.mxu0 %v5245
    %6958 = vmatprep.subr.bf16.mxu0 %v5254
    %6959 = vmatpush1.bf16.msra.mxu0 %v5253
    %6960 = vmatprep.subr.bf16.mxu0 %v5262
    %6961 = vmatpush1.bf16.msra.mxu0 %v5261
    %6962 = vmatprep.subr.bf16.mxu0 %v5270
    %6963 = vmatpush1.bf16.msra.mxu0 %v5269
    %6964 = vmatprep.subr.bf16.mxu0 %v5278
    %6965 = vmatpush1.bf16.msra.mxu0 %v5277
    %6966 = vmatprep.subr.bf16.mxu0 %v5286
    %6967 = vmatpush1.bf16.msra.mxu0 %v5285
    %6968 = vmatprep.subr.bf16.mxu0 %v5294
    %6969 = vmatpush1.bf16.msra.mxu0 %v5293
    %6970 = vmatprep.subr.bf16.mxu0 %v5302
    %6971 = vmatpush1.bf16.msra.mxu0 %v5301
    %6972 = vmatprep.subr.bf16.mxu0 %v5310
    %6973 = vmatpush1.bf16.msra.mxu0 %v5309
    %6974 = vmatprep.subr.bf16.mxu0 %v5318
    %6975 = vmatpush1.bf16.msra.mxu0 %v5317
    %6976 = vmatprep.subr.bf16.mxu0 %v5326
    %6977 = vmatpush1.bf16.msra.mxu0 %v5325
    %6978 = vmatprep.subr.bf16.mxu0 %v5334
    %6979 = vmatpush1.bf16.msra.mxu0 %v5333
    %6980 = vmatprep.subr.bf16.mxu0 %v5342
    %6981 = vmatpush1.bf16.msra.mxu0 %v5341
    %6982 = vmatprep.subr.bf16.mxu0 %v5350
    %6983 = vmatpush1.bf16.msra.mxu0 %v5349
    %6984 = vmatprep.subr.bf16.mxu0 %v5358
    %6985 = vmatpush1.bf16.msra.mxu0 %v5357
    %6986 = vmatprep.subr.bf16.mxu0 %v5366
    %6987 = vmatpush1.bf16.msra.mxu0 %v5365
    %6988 = vmatprep.mubr.bf16.mxu0 %v6819
    %6989 = vmatmul.mubr.bf16.gmra.mrb[0].mxu0 %v6818
    %v6990 = vpop.f32.mrb[0].mxu0
    %v6991 = vadd.f32 %v6938, %v6990
    %v6992 = vpop.f32.mrb[0].mxu0
    %v6993 = vadd.f32 %v6940, %v6992
    %v6994 = vpop.f32.mrb[0].mxu0
    %v6995 = vadd.f32 %v6942, %v6994
    %v6996 = vpop.f32.mrb[0].mxu0
    %v6997 = vadd.f32 %v6944, %v6996
    %6998 = vmatprep.mubr.bf16.mxu0 %v6828
    %6999 = vmatmul.mubr.bf16.gmra.mrb[0].mxu0 %v6827
    %v7000 = vpop.f32.mrb[0].mxu0
    %v7001 = vadd.f32 %v6948, %v7000
    %v7002 = vpop.f32.mrb[0].mxu0
    %v7003 = vadd.f32 %v6950, %v7002
    %v7004 = vpop.f32.mrb[0].mxu0
    %v7005 = vadd.f32 %v6952, %v7004
    %v7006 = vpop.f32.mrb[0].mxu0
    %v7007 = vadd.f32 %v6954, %v7006
    %7008 = vdwg.mxu0
    %7009 = vmatprep.subr.bf16.mxu0 %v5374
    %7010 = vmatpush1.bf16.msra.mxu0 %v5373
    %7011 = vmatprep.subr.bf16.mxu0 %v5382
    %7012 = vmatpush1.bf16.msra.mxu0 %v5381
    %7013 = vmatprep.subr.bf16.mxu0 %v5390
    %7014 = vmatpush1.bf16.msra.mxu0 %v5389
    %7015 = vmatprep.subr.bf16.mxu0 %v5398
    %7016 = vmatpush1.bf16.msra.mxu0 %v5397
    %7017 = vmatprep.subr.bf16.mxu0 %v5406
    %7018 = vmatpush1.bf16.msra.mxu0 %v5405
    %7019 = vmatprep.subr.bf16.mxu0 %v5414
    %7020 = vmatpush1.bf16.msra.mxu0 %v5413
    %7021 = vmatprep.subr.bf16.mxu0 %v5422
    %7022 = vmatpush1.bf16.msra.mxu0 %v5421
    %7023 = vmatprep.subr.bf16.mxu0 %v5430
    %7024 = vmatpush1.bf16.msra.mxu0 %v5429
    %7025 = vmatprep.subr.bf16.mxu0 %v5438
    %7026 = vmatpush1.bf16.msra.mxu0 %v5437
    %7027 = vmatprep.subr.bf16.mxu0 %v5446
    %7028 = vmatpush1.bf16.msra.mxu0 %v5445
    %7029 = vmatprep.subr.bf16.mxu0 %v5454
    %7030 = vmatpush1.bf16.msra.mxu0 %v5453
    %7031 = vmatprep.subr.bf16.mxu0 %v5462
    %7032 = vmatpush1.bf16.msra.mxu0 %v5461
    %7033 = vmatprep.subr.bf16.mxu0 %v5470
    %7034 = vmatpush1.bf16.msra.mxu0 %v5469
    %7035 = vmatprep.subr.bf16.mxu0 %v5478
    %7036 = vmatpush1.bf16.msra.mxu0 %v5477
    %7037 = vmatprep.subr.bf16.mxu0 %v5486
    %7038 = vmatpush1.bf16.msra.mxu0 %v5485
    %7039 = vmatprep.subr.bf16.mxu0 %v5494
    %7040 = vmatpush1.bf16.msra.mxu0 %v5493
    %7041 = vmatprep.mubr.bf16.mxu0 %v6821
    %7042 = vmatmul.mubr.bf16.gmra.mrb[0].mxu0 %v6820
    %v7043 = vpop.f32.mrb[0].mxu0
    %v7044 = vadd.f32 %v6991, %v7043
    %v7045 = vpop.f32.mrb[0].mxu0
    %v7046 = vadd.f32 %v6993, %v7045
    %v7047 = vpop.f32.mrb[0].mxu0
    %v7048 = vadd.f32 %v6995, %v7047
    %v7049 = vpop.f32.mrb[0].mxu0
    %v7050 = vadd.f32 %v6997, %v7049
    %7051 = vmatprep.mubr.bf16.mxu0 %v6830
    %7052 = vmatmul.mubr.bf16.gmra.mrb[0].mxu0 %v6829
    %v7053 = vpop.f32.mrb[0].mxu0
    %v7054 = vadd.f32 %v7001, %v7053
    %v7055 = vpop.f32.mrb[0].mxu0
    %v7056 = vadd.f32 %v7003, %v7055
    %v7057 = vpop.f32.mrb[0].mxu0
    %v7058 = vadd.f32 %v7005, %v7057
    %v7059 = vpop.f32.mrb[0].mxu0
    %v7060 = vadd.f32 %v7007, %v7059
    %7061 = vdwg.mxu0
    %7062 = vmatprep.subr.bf16.mxu0 %v5502
    %7063 = vmatpush1.bf16.msra.mxu0 %v5501
    %7064 = vmatprep.subr.bf16.mxu0 %v5510
    %7065 = vmatpush1.bf16.msra.mxu0 %v5509
    %7066 = vmatprep.subr.bf16.mxu0 %v5518
    %7067 = vmatpush1.bf16.msra.mxu0 %v5517
    %7068 = vmatprep.subr.bf16.mxu0 %v5526
    %7069 = vmatpush1.bf16.msra.mxu0 %v5525
    %7070 = vmatprep.subr.bf16.mxu0 %v5534
    %7071 = vmatpush1.bf16.msra.mxu0 %v5533
    %7072 = vmatprep.subr.bf16.mxu0 %v5542
    %7073 = vmatpush1.bf16.msra.mxu0 %v5541
    %7074 = vmatprep.subr.bf16.mxu0 %v5550
    %7075 = vmatpush1.bf16.msra.mxu0 %v5549
    %7076 = vmatprep.subr.bf16.mxu0 %v5558
    %7077 = vmatpush1.bf16.msra.mxu0 %v5557
    %7078 = vmatprep.subr.bf16.mxu0 0
    %7079 = vmatpush1.bf16.msra.mxu0 0
    %7080 = vmatprep.subr.bf16.mxu0 0
    %7081 = vmatpush1.bf16.msra.mxu0 0
    %7082 = vmatprep.subr.bf16.mxu0 0
    %7083 = vmatpush1.bf16.msra.mxu0 0
    %7084 = vmatprep.subr.bf16.mxu0 0
    %7085 = vmatpush1.bf16.msra.mxu0 0
    %7086 = vmatprep.subr.bf16.mxu0 0
    %7087 = vmatpush1.bf16.msra.mxu0 0
    %7088 = vmatprep.subr.bf16.mxu0 0
    %7089 = vmatpush1.bf16.msra.mxu0 0
    %7090 = vmatprep.subr.bf16.mxu0 0
    %7091 = vmatpush1.bf16.msra.mxu0 0
    %7092 = vmatprep.subr.bf16.mxu0 0
    %7093 = vmatpush1.bf16.msra.mxu0 0
    %7094 = vmatprep.mubr.bf16.mxu0 0
    %7095 = vmatmul.mubr.bf16.gmra.mrb[0].mxu0 %v6822
    %v7096 = vpop.f32.mrb[0].mxu0
    %v7097 = vadd.f32 %v7044, %v7096
    %v7098 = vpop.f32.mrb[0].mxu0
    %v7099 = vadd.f32 %v7046, %v7098
    %v7100 = vpop.f32.mrb[0].mxu0
    %v7101 = vadd.f32 %v7048, %v7100
    %v7102 = vpop.f32.mrb[0].mxu0
    %v7103 = vadd.f32 %v7050, %v7102
    %7104 = vmatprep.mubr.bf16.mxu0 0
    %7105 = vmatmul.mubr.bf16.gmra.mrb[0].mxu0 %v6831
    %v7106 = vpop.f32.mrb[0].mxu0
    %v7107 = vadd.f32 %v7054, %v7106
    %v7108 = vpop.f32.mrb[0].mxu0
    %v7109 = vadd.f32 %v7056, %v7108
    %v7110 = vpop.f32.mrb[0].mxu0
    %v7111 = vadd.f32 %v7058, %v7110
    %v7112 = vpop.f32.mrb[0].mxu0
    %v7113 = vadd.f32 %v7060, %v7112
    %7114 = vdwg.mxu0
    %7115 = vmatprep.subr.bf16.mxu0 %v4992
    %7116 = vmatpush1.bf16.msra.mxu0 %v4991
    %7117 = vmatprep.subr.bf16.mxu0 %v5000
    %7118 = vmatpush1.bf16.msra.mxu0 %v4999
    %7119 = vmatprep.subr.bf16.mxu0 %v5008
    %7120 = vmatpush1.bf16.msra.mxu0 %v5007
    %7121 = vmatprep.subr.bf16.mxu0 %v5016
    %7122 = vmatpush1.bf16.msra.mxu0 %v5015
    %7123 = vmatprep.subr.bf16.mxu0 %v5024
    %7124 = vmatpush1.bf16.msra.mxu0 %v5023
    %7125 = vmatprep.subr.bf16.mxu0 %v5032
    %7126 = vmatpush1.bf16.msra.mxu0 %v5031
    %7127 = vmatprep.subr.bf16.mxu0 %v5040
    %7128 = vmatpush1.bf16.msra.mxu0 %v5039
    %7129 = vmatprep.subr.bf16.mxu0 %v5048
    %7130 = vmatpush1.bf16.msra.mxu0 %v5047
    %7131 = vmatprep.subr.bf16.mxu0 %v5056
    %7132 = vmatpush1.bf16.msra.mxu0 %v5055
    %7133 = vmatprep.subr.bf16.mxu0 %v5064
    %7134 = vmatpush1.bf16.msra.mxu0 %v5063
    %7135 = vmatprep.subr.bf16.mxu0 %v5072
    %7136 = vmatpush1.bf16.msra.mxu0 %v5071
    %7137 = vmatprep.subr.bf16.mxu0 %v5080
    %7138 = vmatpush1.bf16.msra.mxu0 %v5079
    %7139 = vmatprep.subr.bf16.mxu0 %v5088
    %7140 = vmatpush1.bf16.msra.mxu0 %v5087
    %7141 = vmatprep.subr.bf16.mxu0 %v5096
    %7142 = vmatpush1.bf16.msra.mxu0 %v5095
    %7143 = vmatprep.subr.bf16.mxu0 %v5104
    %7144 = vmatpush1.bf16.msra.mxu0 %v5103
    %7145 = vmatprep.subr.bf16.mxu0 %v5112
    %7146 = vmatpush1.bf16.msra.mxu0 %v5111
    %7147 = vmatprep.mubr.bf16.mxu0 %v6815
    %7148 = vmatmul.mubr.bf16.gmra.mrb[0].mxu0 %v6814
    %v7149 = vpop.f32.mrb[0].mxu0
    %v7150 = vadd.f32 %v6210, %v7149
    %v7151 = vpop.f32.mrb[0].mxu0
    %v7152 = vadd.f32 %v6212, %v7151
    %v7153 = vpop.f32.mrb[0].mxu0
    %v7154 = vadd.f32 %v6214, %v7153
    %v7155 = vpop.f32.mrb[0].mxu0
    %v7156 = vadd.f32 %v6216, %v7155
    %7157 = vmatprep.mubr.bf16.mxu0 %v6824
    %7158 = vmatmul.mubr.bf16.gmra.mrb[0].mxu0 %v6823
    %v7159 = vpop.f32.mrb[0].mxu0
    %v7160 = vadd.f32 %v6220, %v7159
    %v7161 = vpop.f32.mrb[0].mxu0
    %v7162 = vadd.f32 %v6222, %v7161
    %v7163 = vpop.f32.mrb[0].mxu0
    %v7164 = vadd.f32 %v6224, %v7163
    %v7165 = vpop.f32.mrb[0].mxu0
    %v7166 = vadd.f32 %v6226, %v7165
    %7167 = vdwg.mxu0
    %7168 = vmatprep.subr.bf16.mxu0 %v5120
    %7169 = vmatpush1.bf16.msra.mxu0 %v5119
    %7170 = vmatprep.subr.bf16.mxu0 %v5128
    %7171 = vmatpush1.bf16.msra.mxu0 %v5127
    %7172 = vmatprep.subr.bf16.mxu0 %v5136
    %7173 = vmatpush1.bf16.msra.mxu0 %v5135
    %7174 = vmatprep.subr.bf16.mxu0 %v5144
    %7175 = vmatpush1.bf16.msra.mxu0 %v5143
    %7176 = vmatprep.subr.bf16.mxu0 %v5152
    %7177 = vmatpush1.bf16.msra.mxu0 %v5151
    %7178 = vmatprep.subr.bf16.mxu0 %v5160
    %7179 = vmatpush1.bf16.msra.mxu0 %v5159
    %7180 = vmatprep.subr.bf16.mxu0 %v5168
    %7181 = vmatpush1.bf16.msra.mxu0 %v5167
    %7182 = vmatprep.subr.bf16.mxu0 %v5176
    %7183 = vmatpush1.bf16.msra.mxu0 %v5175
    %7184 = vmatprep.subr.bf16.mxu0 %v5184
    %7185 = vmatpush1.bf16.msra.mxu0 %v5183
    %7186 = vmatprep.subr.bf16.mxu0 %v5192
    %7187 = vmatpush1.bf16.msra.mxu0 %v5191
    %7188 = vmatprep.subr.bf16.mxu0 %v5200
    %7189 = vmatpush1.bf16.msra.mxu0 %v5199
    %7190 = vmatprep.subr.bf16.mxu0 %v5208
    %7191 = vmatpush1.bf16.msra.mxu0 %v5207
    %7192 = vmatprep.subr.bf16.mxu0 %v5216
    %7193 = vmatpush1.bf16.msra.mxu0 %v5215
    %7194 = vmatprep.subr.bf16.mxu0 %v5224
    %7195 = vmatpush1.bf16.msra.mxu0 %v5223
    %7196 = vmatprep.subr.bf16.mxu0 %v5232
    %7197 = vmatpush1.bf16.msra.mxu0 %v5231
    %7198 = vmatprep.subr.bf16.mxu0 %v5240
    %7199 = vmatpush1.bf16.msra.mxu0 %v5239
    %7200 = vmatprep.mubr.bf16.mxu0 %v6817
    %7201 = vmatmul.mubr.bf16.gmra.mrb[0].mxu0 %v6816
    %v7202 = vpop.f32.mrb[0].mxu0
    %v7203 = vadd.f32 %v7150, %v7202
    %v7204 = vpop.f32.mrb[0].mxu0
    %v7205 = vadd.f32 %v7152, %v7204
    %v7206 = vpop.f32.mrb[0].mxu0
    %v7207 = vadd.f32 %v7154, %v7206
    %v7208 = vpop.f32.mrb[0].mxu0
    %v7209 = vadd.f32 %v7156, %v7208
    %7210 = vmatprep.mubr.bf16.mxu0 %v6826
    %7211 = vmatmul.mubr.bf16.gmra.mrb[0].mxu0 %v6825
    %v7212 = vpop.f32.mrb[0].mxu0
    %v7213 = vadd.f32 %v7160, %v7212
    %v7214 = vpop.f32.mrb[0].mxu0
    %v7215 = vadd.f32 %v7162, %v7214
    %v7216 = vpop.f32.mrb[0].mxu0
    %v7217 = vadd.f32 %v7164, %v7216
    %v7218 = vpop.f32.mrb[0].mxu0
    %v7219 = vadd.f32 %v7166, %v7218
    %7220 = vdwg.mxu0
    %7221 = vmatprep.subr.bf16.mxu0 %v5248
    %7222 = vmatpush1.bf16.msra.mxu0 %v5247
    %7223 = vmatprep.subr.bf16.mxu0 %v5256
    %7224 = vmatpush1.bf16.msra.mxu0 %v5255
    %7225 = vmatprep.subr.bf16.mxu0 %v5264
    %7226 = vmatpush1.bf16.msra.mxu0 %v5263
    %7227 = vmatprep.subr.bf16.mxu0 %v5272
    %7228 = vmatpush1.bf16.msra.mxu0 %v5271
    %7229 = vmatprep.subr.bf16.mxu0 %v5280
    %7230 = vmatpush1.bf16.msra.mxu0 %v5279
    %7231 = vmatprep.subr.bf16.mxu0 %v5288
    %7232 = vmatpush1.bf16.msra.mxu0 %v5287
    %7233 = vmatprep.subr.bf16.mxu0 %v5296
    %7234 = vmatpush1.bf16.msra.mxu0 %v5295
    %7235 = vmatprep.subr.bf16.mxu0 %v5304
    %7236 = vmatpush1.bf16.msra.mxu0 %v5303
    %7237 = vmatprep.subr.bf16.mxu0 %v5312
    %7238 = vmatpush1.bf16.msra.mxu0 %v5311
    %7239 = vmatprep.subr.bf16.mxu0 %v5320
    %7240 = vmatpush1.bf16.msra.mxu0 %v5319
    %7241 = vmatprep.subr.bf16.mxu0 %v5328
    %7242 = vmatpush1.bf16.msra.mxu0 %v5327
    %7243 = vmatprep.subr.bf16.mxu0 %v5336
    %7244 = vmatpush1.bf16.msra.mxu0 %v5335
    %7245 = vmatprep.subr.bf16.mxu0 %v5344
    %7246 = vmatpush1.bf16.msra.mxu0 %v5343
    %7247 = vmatprep.subr.bf16.mxu0 %v5352
    %7248 = vmatpush1.bf16.msra.mxu0 %v5351
    %7249 = vmatprep.subr.bf16.mxu0 %v5360
    %7250 = vmatpush1.bf16.msra.mxu0 %v5359
    %7251 = vmatprep.subr.bf16.mxu0 %v5368
    %7252 = vmatpush1.bf16.msra.mxu0 %v5367
    %7253 = vmatprep.mubr.bf16.mxu0 %v6819
    %7254 = vmatmul.mubr.bf16.gmra.mrb[0].mxu0 %v6818
    %v7255 = vpop.f32.mrb[0].mxu0
    %v7256 = vadd.f32 %v7203, %v7255
    %v7257 = vpop.f32.mrb[0].mxu0
    %v7258 = vadd.f32 %v7205, %v7257
    %v7259 = vpop.f32.mrb[0].mxu0
    %v7260 = vadd.f32 %v7207, %v7259
    %v7261 = vpop.f32.mrb[0].mxu0
    %v7262 = vadd.f32 %v7209, %v7261
    %7263 = vmatprep.mubr.bf16.mxu0 %v6828
    %7264 = vmatmul.mubr.bf16.gmra.mrb[0].mxu0 %v6827
    %v7265 = vpop.f32.mrb[0].mxu0
    %v7266 = vadd.f32 %v7213, %v7265
    %v7267 = vpop.f32.mrb[0].mxu0
    %v7268 = vadd.f32 %v7215, %v7267
    %v7269 = vpop.f32.mrb[0].mxu0
    %v7270 = vadd.f32 %v7217, %v7269
    %v7271 = vpop.f32.mrb[0].mxu0
    %v7272 = vadd.f32 %v7219, %v7271
    %7273 = vdwg.mxu0
    %7274 = vmatprep.subr.bf16.mxu0 %v5376
    %7275 = vmatpush1.bf16.msra.mxu0 %v5375
    %7276 = vmatprep.subr.bf16.mxu0 %v5384
    %7277 = vmatpush1.bf16.msra.mxu0 %v5383
    %7278 = vmatprep.subr.bf16.mxu0 %v5392
    %7279 = vmatpush1.bf16.msra.mxu0 %v5391
    %7280 = vmatprep.subr.bf16.mxu0 %v5400
    %7281 = vmatpush1.bf16.msra.mxu0 %v5399
    %7282 = vmatprep.subr.bf16.mxu0 %v5408
    %7283 = vmatpush1.bf16.msra.mxu0 %v5407
    %7284 = vmatprep.subr.bf16.mxu0 %v5416
    %7285 = vmatpush1.bf16.msra.mxu0 %v5415
    %7286 = vmatprep.subr.bf16.mxu0 %v5424
    %7287 = vmatpush1.bf16.msra.mxu0 %v5423
    %7288 = vmatprep.subr.bf16.mxu0 %v5432
    %7289 = vmatpush1.bf16.msra.mxu0 %v5431
    %7290 = vmatprep.subr.bf16.mxu0 %v5440
    %7291 = vmatpush1.bf16.msra.mxu0 %v5439
    %7292 = vmatprep.subr.bf16.mxu0 %v5448
    %7293 = vmatpush1.bf16.msra.mxu0 %v5447
    %7294 = vmatprep.subr.bf16.mxu0 %v5456
    %7295 = vmatpush1.bf16.msra.mxu0 %v5455
    %7296 = vmatprep.subr.bf16.mxu0 %v5464
    %7297 = vmatpush1.bf16.msra.mxu0 %v5463
    %7298 = vmatprep.subr.bf16.mxu0 %v5472
    %7299 = vmatpush1.bf16.msra.mxu0 %v5471
    %7300 = vmatprep.subr.bf16.mxu0 %v5480
    %7301 = vmatpush1.bf16.msra.mxu0 %v5479
    %7302 = vmatprep.subr.bf16.mxu0 %v5488
    %7303 = vmatpush1.bf16.msra.mxu0 %v5487
    %7304 = vmatprep.subr.bf16.mxu0 %v5496
    %7305 = vmatpush1.bf16.msra.mxu0 %v5495
    %7306 = vmatprep.mubr.bf16.mxu0 %v6821
    %7307 = vmatmul.mubr.bf16.gmra.mrb[0].mxu0 %v6820
    %v7308 = vpop.f32.mrb[0].mxu0
    %v7309 = vadd.f32 %v7256, %v7308
    %v7310 = vpop.f32.mrb[0].mxu0
    %v7311 = vadd.f32 %v7258, %v7310
    %v7312 = vpop.f32.mrb[0].mxu0
    %v7313 = vadd.f32 %v7260, %v7312
    %v7314 = vpop.f32.mrb[0].mxu0
    %v7315 = vadd.f32 %v7262, %v7314
    %7316 = vmatprep.mubr.bf16.mxu0 %v6830
    %7317 = vmatmul.mubr.bf16.gmra.mrb[0].mxu0 %v6829
    %v7318 = vpop.f32.mrb[0].mxu0
    %v7319 = vadd.f32 %v7266, %v7318
    %v7320 = vpop.f32.mrb[0].mxu0
    %v7321 = vadd.f32 %v7268, %v7320
    %v7322 = vpop.f32.mrb[0].mxu0
    %v7323 = vadd.f32 %v7270, %v7322
    %v7324 = vpop.f32.mrb[0].mxu0
    %v7325 = vadd.f32 %v7272, %v7324
    %7326 = vdwg.mxu0
    %7327 = vmatprep.subr.bf16.mxu0 %v5504
    %7328 = vmatpush1.bf16.msra.mxu0 %v5503
    %7329 = vmatprep.subr.bf16.mxu0 %v5512
    %7330 = vmatpush1.bf16.msra.mxu0 %v5511
    %7331 = vmatprep.subr.bf16.mxu0 %v5520
    %7332 = vmatpush1.bf16.msra.mxu0 %v5519
    %7333 = vmatprep.subr.bf16.mxu0 %v5528
    %7334 = vmatpush1.bf16.msra.mxu0 %v5527
    %7335 = vmatprep.subr.bf16.mxu0 %v5536
    %7336 = vmatpush1.bf16.msra.mxu0 %v5535
    %7337 = vmatprep.subr.bf16.mxu0 %v5544
    %7338 = vmatpush1.bf16.msra.mxu0 %v5543
    %7339 = vmatprep.subr.bf16.mxu0 %v5552
    %7340 = vmatpush1.bf16.msra.mxu0 %v5551
    %7341 = vmatprep.subr.bf16.mxu0 %v5560
    %7342 = vmatpush1.bf16.msra.mxu0 %v5559
    %7343 = vmatprep.subr.bf16.mxu0 0
    %7344 = vmatpush1.bf16.msra.mxu0 0
    %7345 = vmatprep.subr.bf16.mxu0 0
    %7346 = vmatpush1.bf16.msra.mxu0 0
    %7347 = vmatprep.subr.bf16.mxu0 0
    %7348 = vmatpush1.bf16.msra.mxu0 0
    %7349 = vmatprep.subr.bf16.mxu0 0
    %7350 = vmatpush1.bf16.msra.mxu0 0
    %7351 = vmatprep.subr.bf16.mxu0 0
    %7352 = vmatpush1.bf16.msra.mxu0 0
    %7353 = vmatprep.subr.bf16.mxu0 0
    %7354 = vmatpush1.bf16.msra.mxu0 0
    %7355 = vmatprep.subr.bf16.mxu0 0
    %7356 = vmatpush1.bf16.msra.mxu0 0
    %7357 = vmatprep.subr.bf16.mxu0 0
    %7358 = vmatpush1.bf16.msra.mxu0 0
    %7359 = vmatprep.mubr.bf16.mxu0 0
    %7360 = vmatmul.mubr.bf16.gmra.mrb[0].mxu0 %v6822
    %v7361 = vpop.f32.mrb[0].mxu0
    %v7362 = vadd.f32 %v7309, %v7361
    %v7363 = vpop.f32.mrb[0].mxu0
    %v7364 = vadd.f32 %v7311, %v7363
    %v7365 = vpop.f32.mrb[0].mxu0
    %v7366 = vadd.f32 %v7313, %v7365
    %v7367 = vpop.f32.mrb[0].mxu0
    %v7368 = vadd.f32 %v7315, %v7367
    %7369 = vmatprep.mubr.bf16.mxu0 0
    %7370 = vmatmul.mubr.bf16.gmra.mrb[0].mxu0 %v6831
    %v7371 = vpop.f32.mrb[0].mxu0
    %v7372 = vadd.f32 %v7319, %v7371
    %v7373 = vpop.f32.mrb[0].mxu0
    %v7374 = vadd.f32 %v7321, %v7373
    %v7375 = vpop.f32.mrb[0].mxu0
    %v7376 = vadd.f32 %v7323, %v7375
    %v7377 = vpop.f32.mrb[0].mxu0
    %v7378 = vadd.f32 %v7325, %v7377
    %7379 = vdwg.mxu0
    %7380 = vmatprep.subr.bf16.mxu0 %v4994
    %7381 = vmatpush1.bf16.msra.mxu0 %v4993
    %7382 = vmatprep.subr.bf16.mxu0 %v5002
    %7383 = vmatpush1.bf16.msra.mxu0 %v5001
    %7384 = vmatprep.subr.bf16.mxu0 %v5010
    %7385 = vmatpush1.bf16.msra.mxu0 %v5009
    %7386 = vmatprep.subr.bf16.mxu0 %v5018
    %7387 = vmatpush1.bf16.msra.mxu0 %v5017
    %7388 = vmatprep.subr.bf16.mxu0 %v5026
    %7389 = vmatpush1.bf16.msra.mxu0 %v5025
    %7390 = vmatprep.subr.bf16.mxu0 %v5034
    %7391 = vmatpush1.bf16.msra.mxu0 %v5033
    %7392 = vmatprep.subr.bf16.mxu0 %v5042
    %7393 = vmatpush1.bf16.msra.mxu0 %v5041
    %7394 = vmatprep.subr.bf16.mxu0 %v5050
    %7395 = vmatpush1.bf16.msra.mxu0 %v5049
    %7396 = vmatprep.subr.bf16.mxu0 %v5058
    %7397 = vmatpush1.bf16.msra.mxu0 %v5057
    %7398 = vmatprep.subr.bf16.mxu0 %v5066
    %7399 = vmatpush1.bf16.msra.mxu0 %v5065
    %7400 = vmatprep.subr.bf16.mxu0 %v5074
    %7401 = vmatpush1.bf16.msra.mxu0 %v5073
    %7402 = vmatprep.subr.bf16.mxu0 %v5082
    %7403 = vmatpush1.bf16.msra.mxu0 %v5081
    %7404 = vmatprep.subr.bf16.mxu0 %v5090
    %7405 = vmatpush1.bf16.msra.mxu0 %v5089
    %7406 = vmatprep.subr.bf16.mxu0 %v5098
    %7407 = vmatpush1.bf16.msra.mxu0 %v5097
    %7408 = vmatprep.subr.bf16.mxu0 %v5106
    %7409 = vmatpush1.bf16.msra.mxu0 %v5105
    %7410 = vmatprep.subr.bf16.mxu0 %v5114
    %7411 = vmatpush1.bf16.msra.mxu0 %v5113
    %7412 = vmatprep.mubr.bf16.mxu0 %v6815
    %7413 = vmatmul.mubr.bf16.gmra.mrb[0].mxu0 %v6814
    %v7414 = vpop.f32.mrb[0].mxu0
    %v7415 = vadd.f32 %v6475, %v7414
    %v7416 = vpop.f32.mrb[0].mxu0
    %v7417 = vadd.f32 %v6477, %v7416
    %v7418 = vpop.f32.mrb[0].mxu0
    %v7419 = vadd.f32 %v6479, %v7418
    %v7420 = vpop.f32.mrb[0].mxu0
    %v7421 = vadd.f32 %v6481, %v7420
    %7422 = vmatprep.mubr.bf16.mxu0 %v6824
    %7423 = vmatmul.mubr.bf16.gmra.mrb[0].mxu0 %v6823
    %v7424 = vpop.f32.mrb[0].mxu0
    %v7425 = vadd.f32 %v6485, %v7424
    %v7426 = vpop.f32.mrb[0].mxu0
    %v7427 = vadd.f32 %v6487, %v7426
    %v7428 = vpop.f32.mrb[0].mxu0
    %v7429 = vadd.f32 %v6489, %v7428
    %v7430 = vpop.f32.mrb[0].mxu0
    %v7431 = vadd.f32 %v6491, %v7430
    %7432 = vdwg.mxu0
    %7433 = vmatprep.subr.bf16.mxu0 %v5122
    %7434 = vmatpush1.bf16.msra.mxu0 %v5121
    %7435 = vmatprep.subr.bf16.mxu0 %v5130
    %7436 = vmatpush1.bf16.msra.mxu0 %v5129
    %7437 = vmatprep.subr.bf16.mxu0 %v5138
    %7438 = vmatpush1.bf16.msra.mxu0 %v5137
    %7439 = vmatprep.subr.bf16.mxu0 %v5146
    %7440 = vmatpush1.bf16.msra.mxu0 %v5145
    %7441 = vmatprep.subr.bf16.mxu0 %v5154
    %7442 = vmatpush1.bf16.msra.mxu0 %v5153
    %7443 = vmatprep.subr.bf16.mxu0 %v5162
    %7444 = vmatpush1.bf16.msra.mxu0 %v5161
    %7445 = vmatprep.subr.bf16.mxu0 %v5170
    %7446 = vmatpush1.bf16.msra.mxu0 %v5169
    %7447 = vmatprep.subr.bf16.mxu0 %v5178
    %7448 = vmatpush1.bf16.msra.mxu0 %v5177
    %7449 = vmatprep.subr.bf16.mxu0 %v5186
    %7450 = vmatpush1.bf16.msra.mxu0 %v5185
    %7451 = vmatprep.subr.bf16.mxu0 %v5194
    %7452 = vmatpush1.bf16.msra.mxu0 %v5193
    %7453 = vmatprep.subr.bf16.mxu0 %v5202
    %7454 = vmatpush1.bf16.msra.mxu0 %v5201
    %7455 = vmatprep.subr.bf16.mxu0 %v5210
    %7456 = vmatpush1.bf16.msra.mxu0 %v5209
    %7457 = vmatprep.subr.bf16.mxu0 %v5218
    %7458 = vmatpush1.bf16.msra.mxu0 %v5217
    %7459 = vmatprep.subr.bf16.mxu0 %v5226
    %7460 = vmatpush1.bf16.msra.mxu0 %v5225
    %7461 = vmatprep.subr.bf16.mxu0 %v5234
    %7462 = vmatpush1.bf16.msra.mxu0 %v5233
    %7463 = vmatprep.subr.bf16.mxu0 %v5242
    %7464 = vmatpush1.bf16.msra.mxu0 %v5241
    %7465 = vmatprep.mubr.bf16.mxu0 %v6817
    %7466 = vmatmul.mubr.bf16.gmra.mrb[0].mxu0 %v6816
    %v7467 = vpop.f32.mrb[0].mxu0
    %v7468 = vadd.f32 %v7415, %v7467
    %v7469 = vpop.f32.mrb[0].mxu0
    %v7470 = vadd.f32 %v7417, %v7469
    %v7471 = vpop.f32.mrb[0].mxu0
    %v7472 = vadd.f32 %v7419, %v7471
    %v7473 = vpop.f32.mrb[0].mxu0
    %v7474 = vadd.f32 %v7421, %v7473
    %7475 = vmatprep.mubr.bf16.mxu0 %v6826
    %7476 = vmatmul.mubr.bf16.gmra.mrb[0].mxu0 %v6825
    %v7477 = vpop.f32.mrb[0].mxu0
    %v7478 = vadd.f32 %v7425, %v7477
    %v7479 = vpop.f32.mrb[0].mxu0
    %v7480 = vadd.f32 %v7427, %v7479
    %v7481 = vpop.f32.mrb[0].mxu0
    %v7482 = vadd.f32 %v7429, %v7481
    %v7483 = vpop.f32.mrb[0].mxu0
    %v7484 = vadd.f32 %v7431, %v7483
    %7485 = vdwg.mxu0
    %7486 = vmatprep.subr.bf16.mxu0 %v5250
    %7487 = vmatpush1.bf16.msra.mxu0 %v5249
    %7488 = vmatprep.subr.bf16.mxu0 %v5258
    %7489 = vmatpush1.bf16.msra.mxu0 %v5257
    %7490 = vmatprep.subr.bf16.mxu0 %v5266
    %7491 = vmatpush1.bf16.msra.mxu0 %v5265
    %7492 = vmatprep.subr.bf16.mxu0 %v5274
    %7493 = vmatpush1.bf16.msra.mxu0 %v5273
    %7494 = vmatprep.subr.bf16.mxu0 %v5282
    %7495 = vmatpush1.bf16.msra.mxu0 %v5281
    %7496 = vmatprep.subr.bf16.mxu0 %v5290
    %7497 = vmatpush1.bf16.msra.mxu0 %v5289
    %7498 = vmatprep.subr.bf16.mxu0 %v5298
    %7499 = vmatpush1.bf16.msra.mxu0 %v5297
    %7500 = vmatprep.subr.bf16.mxu0 %v5306
    %7501 = vmatpush1.bf16.msra.mxu0 %v5305
    %7502 = vmatprep.subr.bf16.mxu0 %v5314
    %7503 = vmatpush1.bf16.msra.mxu0 %v5313
    %7504 = vmatprep.subr.bf16.mxu0 %v5322
    %7505 = vmatpush1.bf16.msra.mxu0 %v5321
    %7506 = vmatprep.subr.bf16.mxu0 %v5330
    %7507 = vmatpush1.bf16.msra.mxu0 %v5329
    %7508 = vmatprep.subr.bf16.mxu0 %v5338
    %7509 = vmatpush1.bf16.msra.mxu0 %v5337
    %7510 = vmatprep.subr.bf16.mxu0 %v5346
    %7511 = vmatpush1.bf16.msra.mxu0 %v5345
    %7512 = vmatprep.subr.bf16.mxu0 %v5354
    %7513 = vmatpush1.bf16.msra.mxu0 %v5353
    %7514 = vmatprep.subr.bf16.mxu0 %v5362
    %7515 = vmatpush1.bf16.msra.mxu0 %v5361
    %7516 = vmatprep.subr.bf16.mxu0 %v5370
    %7517 = vmatpush1.bf16.msra.mxu0 %v5369
    %7518 = vmatprep.mubr.bf16.mxu0 %v6819
    %7519 = vmatmul.mubr.bf16.gmra.mrb[0].mxu0 %v6818
    %v7520 = vpop.f32.mrb[0].mxu0
    %v7521 = vadd.f32 %v7468, %v7520
    %v7522 = vpop.f32.mrb[0].mxu0
    %v7523 = vadd.f32 %v7470, %v7522
    %v7524 = vpop.f32.mrb[0].mxu0
    %v7525 = vadd.f32 %v7472, %v7524
    %v7526 = vpop.f32.mrb[0].mxu0
    %v7527 = vadd.f32 %v7474, %v7526
    %7528 = vmatprep.mubr.bf16.mxu0 %v6828
    %7529 = vmatmul.mubr.bf16.gmra.mrb[0].mxu0 %v6827
    %v7530 = vpop.f32.mrb[0].mxu0
    %v7531 = vadd.f32 %v7478, %v7530
    %v7532 = vpop.f32.mrb[0].mxu0
    %v7533 = vadd.f32 %v7480, %v7532
    %v7534 = vpop.f32.mrb[0].mxu0
    %v7535 = vadd.f32 %v7482, %v7534
    %v7536 = vpop.f32.mrb[0].mxu0
    %v7537 = vadd.f32 %v7484, %v7536
    %7538 = vdwg.mxu0
    %7539 = vmatprep.subr.bf16.mxu0 %v5378
    %7540 = vmatpush1.bf16.msra.mxu0 %v5377
    %7541 = vmatprep.subr.bf16.mxu0 %v5386
    %7542 = vmatpush1.bf16.msra.mxu0 %v5385
    %7543 = vmatprep.subr.bf16.mxu0 %v5394
    %7544 = vmatpush1.bf16.msra.mxu0 %v5393
    %7545 = vmatprep.subr.bf16.mxu0 %v5402
    %7546 = vmatpush1.bf16.msra.mxu0 %v5401
    %7547 = vmatprep.subr.bf16.mxu0 %v5410
    %7548 = vmatpush1.bf16.msra.mxu0 %v5409
    %7549 = vmatprep.subr.bf16.mxu0 %v5418
    %7550 = vmatpush1.bf16.msra.mxu0 %v5417
    %7551 = vmatprep.subr.bf16.mxu0 %v5426
    %7552 = vmatpush1.bf16.msra.mxu0 %v5425
    %7553 = vmatprep.subr.bf16.mxu0 %v5434
    %7554 = vmatpush1.bf16.msra.mxu0 %v5433
    %7555 = vmatprep.subr.bf16.mxu0 %v5442
    %7556 = vmatpush1.bf16.msra.mxu0 %v5441
    %7557 = vmatprep.subr.bf16.mxu0 %v5450
    %7558 = vmatpush1.bf16.msra.mxu0 %v5449
    %7559 = vmatprep.subr.bf16.mxu0 %v5458
    %7560 = vmatpush1.bf16.msra.mxu0 %v5457
    %7561 = vmatprep.subr.bf16.mxu0 %v5466
    %7562 = vmatpush1.bf16.msra.mxu0 %v5465
    %7563 = vmatprep.subr.bf16.mxu0 %v5474
    %7564 = vmatpush1.bf16.msra.mxu0 %v5473
    %7565 = vmatprep.subr.bf16.mxu0 %v5482
    %7566 = vmatpush1.bf16.msra.mxu0 %v5481
    %7567 = vmatprep.subr.bf16.mxu0 %v5490
    %7568 = vmatpush1.bf16.msra.mxu0 %v5489
    %7569 = vmatprep.subr.bf16.mxu0 %v5498
    %7570 = vmatpush1.bf16.msra.mxu0 %v5497
    %7571 = vmatprep.mubr.bf16.mxu0 %v6821
    %7572 = vmatmul.mubr.bf16.gmra.mrb[0].mxu0 %v6820
    %v7573 = vpop.f32.mrb[0].mxu0
    %v7574 = vadd.f32 %v7521, %v7573
    %v7575 = vpop.f32.mrb[0].mxu0
    %v7576 = vadd.f32 %v7523, %v7575
    %v7577 = vpop.f32.mrb[0].mxu0
    %v7578 = vadd.f32 %v7525, %v7577
    %v7579 = vpop.f32.mrb[0].mxu0
    %v7580 = vadd.f32 %v7527, %v7579
    %7581 = vmatprep.mubr.bf16.mxu0 %v6830
    %7582 = vmatmul.mubr.bf16.gmra.mrb[0].mxu0 %v6829
    %v7583 = vpop.f32.mrb[0].mxu0
    %v7584 = vadd.f32 %v7531, %v7583
    %v7585 = vpop.f32.mrb[0].mxu0
    %v7586 = vadd.f32 %v7533, %v7585
    %v7587 = vpop.f32.mrb[0].mxu0
    %v7588 = vadd.f32 %v7535, %v7587
    %v7589 = vpop.f32.mrb[0].mxu0
    %v7590 = vadd.f32 %v7537, %v7589
    %7591 = vdwg.mxu0
    %7592 = vmatprep.subr.bf16.mxu0 %v5506
    %7593 = vmatpush1.bf16.msra.mxu0 %v5505
    %7594 = vmatprep.subr.bf16.mxu0 %v5514
    %7595 = vmatpush1.bf16.msra.mxu0 %v5513
    %7596 = vmatprep.subr.bf16.mxu0 %v5522
    %7597 = vmatpush1.bf16.msra.mxu0 %v5521
    %7598 = vmatprep.subr.bf16.mxu0 %v5530
    %7599 = vmatpush1.bf16.msra.mxu0 %v5529
    %7600 = vmatprep.subr.bf16.mxu0 %v5538
    %7601 = vmatpush1.bf16.msra.mxu0 %v5537
    %7602 = vmatprep.subr.bf16.mxu0 %v5546
    %7603 = vmatpush1.bf16.msra.mxu0 %v5545
    %7604 = vmatprep.subr.bf16.mxu0 %v5554
    %7605 = vmatpush1.bf16.msra.mxu0 %v5553
    %7606 = vmatprep.subr.bf16.mxu0 %v5562
    %7607 = vmatpush1.bf16.msra.mxu0 %v5561
    %7608 = vmatprep.subr.bf16.mxu0 0
    %7609 = vmatpush1.bf16.msra.mxu0 0
    %7610 = vmatprep.subr.bf16.mxu0 0
    %7611 = vmatpush1.bf16.msra.mxu0 0
    %7612 = vmatprep.subr.bf16.mxu0 0
    %7613 = vmatpush1.bf16.msra.mxu0 0
    %7614 = vmatprep.subr.bf16.mxu0 0
    %7615 = vmatpush1.bf16.msra.mxu0 0
    %7616 = vmatprep.subr.bf16.mxu0 0
    %7617 = vmatpush1.bf16.msra.mxu0 0
    %7618 = vmatprep.subr.bf16.mxu0 0
    %7619 = vmatpush1.bf16.msra.mxu0 0
    %7620 = vmatprep.subr.bf16.mxu0 0
    %7621 = vmatpush1.bf16.msra.mxu0 0
    %7622 = vmatprep.subr.bf16.mxu0 0
    %7623 = vmatpush1.bf16.msra.mxu0 0
    %7624 = vmatprep.mubr.bf16.mxu0 0
    %7625 = vmatmul.mubr.bf16.gmra.mrb[0].mxu0 %v6822
    %v7626 = vpop.f32.mrb[0].mxu0
    %v7627 = vadd.f32 %v7574, %v7626
    %v7628 = vpop.f32.mrb[0].mxu0
    %v7629 = vadd.f32 %v7576, %v7628
    %v7630 = vpop.f32.mrb[0].mxu0
    %v7631 = vadd.f32 %v7578, %v7630
    %v7632 = vpop.f32.mrb[0].mxu0
    %v7633 = vadd.f32 %v7580, %v7632
    %7634 = vmatprep.mubr.bf16.mxu0 0
    %7635 = vmatmul.mubr.bf16.gmra.mrb[0].mxu0 %v6831
    %v7636 = vpop.f32.mrb[0].mxu0
    %v7637 = vadd.f32 %v7584, %v7636
    %v7638 = vpop.f32.mrb[0].mxu0
    %v7639 = vadd.f32 %v7586, %v7638
    %v7640 = vpop.f32.mrb[0].mxu0
    %v7641 = vadd.f32 %v7588, %v7640
    %v7642 = vpop.f32.mrb[0].mxu0
    %v7643 = vadd.f32 %v7590, %v7642
    %7644 = vdwg.mxu0
    %7645 = vmatprep.subr.bf16.mxu0 %v4996
    %7646 = vmatpush1.bf16.msra.mxu0 %v4995
    %7647 = vmatprep.subr.bf16.mxu0 %v5004
    %7648 = vmatpush1.bf16.msra.mxu0 %v5003
    %7649 = vmatprep.subr.bf16.mxu0 %v5012
    %7650 = vmatpush1.bf16.msra.mxu0 %v5011
    %7651 = vmatprep.subr.bf16.mxu0 %v5020
    %7652 = vmatpush1.bf16.msra.mxu0 %v5019
    %7653 = vmatprep.subr.bf16.mxu0 %v5028
    %7654 = vmatpush1.bf16.msra.mxu0 %v5027
    %7655 = vmatprep.subr.bf16.mxu0 %v5036
    %7656 = vmatpush1.bf16.msra.mxu0 %v5035
    %7657 = vmatprep.subr.bf16.mxu0 %v5044
    %7658 = vmatpush1.bf16.msra.mxu0 %v5043
    %7659 = vmatprep.subr.bf16.mxu0 %v5052
    %7660 = vmatpush1.bf16.msra.mxu0 %v5051
    %7661 = vmatprep.subr.bf16.mxu0 %v5060
    %7662 = vmatpush1.bf16.msra.mxu0 %v5059
    %7663 = vmatprep.subr.bf16.mxu0 %v5068
    %7664 = vmatpush1.bf16.msra.mxu0 %v5067
    %7665 = vmatprep.subr.bf16.mxu0 %v5076
    %7666 = vmatpush1.bf16.msra.mxu0 %v5075
    %7667 = vmatprep.subr.bf16.mxu0 %v5084
    %7668 = vmatpush1.bf16.msra.mxu0 %v5083
    %7669 = vmatprep.subr.bf16.mxu0 %v5092
    %7670 = vmatpush1.bf16.msra.mxu0 %v5091
    %7671 = vmatprep.subr.bf16.mxu0 %v5100
    %7672 = vmatpush1.bf16.msra.mxu0 %v5099
    %7673 = vmatprep.subr.bf16.mxu0 %v5108
    %7674 = vmatpush1.bf16.msra.mxu0 %v5107
    %7675 = vmatprep.subr.bf16.mxu0 %v5116
    %7676 = vmatpush1.bf16.msra.mxu0 %v5115
    %7677 = vmatprep.mubr.bf16.mxu0 %v6815
    %7678 = vmatmul.mubr.bf16.gmra.mrb[0].mxu0 %v6814
    %v7679 = vpop.f32.mrb[0].mxu0
    %v7680 = vadd.f32 %v6740, %v7679
    %v7681 = vpop.f32.mrb[0].mxu0
    %v7682 = vadd.f32 %v6742, %v7681
    %v7683 = vpop.f32.mrb[0].mxu0
    %v7684 = vadd.f32 %v6744, %v7683
    %v7685 = vpop.f32.mrb[0].mxu0
    %v7686 = vadd.f32 %v6746, %v7685
    %7687 = vmatprep.mubr.bf16.mxu0 %v6824
    %7688 = vmatmul.mubr.bf16.gmra.mrb[0].mxu0 %v6823
    %v7689 = vpop.f32.mrb[0].mxu0
    %v7690 = vadd.f32 %v6750, %v7689
    %v7691 = vpop.f32.mrb[0].mxu0
    %v7692 = vadd.f32 %v6752, %v7691
    %v7693 = vpop.f32.mrb[0].mxu0
    %v7694 = vadd.f32 %v6754, %v7693
    %v7695 = vpop.f32.mrb[0].mxu0
    %v7696 = vadd.f32 %v6756, %v7695
    %7697 = vdwg.mxu0
    %7698 = vmatprep.subr.bf16.mxu0 %v5124
    %7699 = vmatpush1.bf16.msra.mxu0 %v5123
    %7700 = vmatprep.subr.bf16.mxu0 %v5132
    %7701 = vmatpush1.bf16.msra.mxu0 %v5131
    %7702 = vmatprep.subr.bf16.mxu0 %v5140
    %7703 = vmatpush1.bf16.msra.mxu0 %v5139
    %7704 = vmatprep.subr.bf16.mxu0 %v5148
    %7705 = vmatpush1.bf16.msra.mxu0 %v5147
    %7706 = vmatprep.subr.bf16.mxu0 %v5156
    %7707 = vmatpush1.bf16.msra.mxu0 %v5155
    %7708 = vmatprep.subr.bf16.mxu0 %v5164
    %7709 = vmatpush1.bf16.msra.mxu0 %v5163
    %7710 = vmatprep.subr.bf16.mxu0 %v5172
    %7711 = vmatpush1.bf16.msra.mxu0 %v5171
    %7712 = vmatprep.subr.bf16.mxu0 %v5180
    %7713 = vmatpush1.bf16.msra.mxu0 %v5179
    %7714 = vmatprep.subr.bf16.mxu0 %v5188
    %7715 = vmatpush1.bf16.msra.mxu0 %v5187
    %7716 = vmatprep.subr.bf16.mxu0 %v5196
    %7717 = vmatpush1.bf16.msra.mxu0 %v5195
    %7718 = vmatprep.subr.bf16.mxu0 %v5204
    %7719 = vmatpush1.bf16.msra.mxu0 %v5203
    %7720 = vmatprep.subr.bf16.mxu0 %v5212
    %7721 = vmatpush1.bf16.msra.mxu0 %v5211
    %7722 = vmatprep.subr.bf16.mxu0 %v5220
    %7723 = vmatpush1.bf16.msra.mxu0 %v5219
    %7724 = vmatprep.subr.bf16.mxu0 %v5228
    %7725 = vmatpush1.bf16.msra.mxu0 %v5227
    %7726 = vmatprep.subr.bf16.mxu0 %v5236
    %7727 = vmatpush1.bf16.msra.mxu0 %v5235
    %7728 = vmatprep.subr.bf16.mxu0 %v5244
    %7729 = vmatpush1.bf16.msra.mxu0 %v5243
    %7730 = vmatprep.mubr.bf16.mxu0 %v6817
    %7731 = vmatmul.mubr.bf16.gmra.mrb[0].mxu0 %v6816
    %v7732 = vpop.f32.mrb[0].mxu0
    %v7733 = vadd.f32 %v7680, %v7732
    %v7734 = vpop.f32.mrb[0].mxu0
    %v7735 = vadd.f32 %v7682, %v7734
    %v7736 = vpop.f32.mrb[0].mxu0
    %v7737 = vadd.f32 %v7684, %v7736
    %v7738 = vpop.f32.mrb[0].mxu0
    %v7739 = vadd.f32 %v7686, %v7738
    %7740 = vmatprep.mubr.bf16.mxu0 %v6826
    %7741 = vmatmul.mubr.bf16.gmra.mrb[0].mxu0 %v6825
    %v7742 = vpop.f32.mrb[0].mxu0
    %v7743 = vadd.f32 %v7690, %v7742
    %v7744 = vpop.f32.mrb[0].mxu0
    %v7745 = vadd.f32 %v7692, %v7744
    %v7746 = vpop.f32.mrb[0].mxu0
    %v7747 = vadd.f32 %v7694, %v7746
    %v7748 = vpop.f32.mrb[0].mxu0
    %v7749 = vadd.f32 %v7696, %v7748
    %7750 = vdwg.mxu0
    %7751 = vmatprep.subr.bf16.mxu0 %v5252
    %7752 = vmatpush1.bf16.msra.mxu0 %v5251
    %7753 = vmatprep.subr.bf16.mxu0 %v5260
    %7754 = vmatpush1.bf16.msra.mxu0 %v5259
    %7755 = vmatprep.subr.bf16.mxu0 %v5268
    %7756 = vmatpush1.bf16.msra.mxu0 %v5267
    %7757 = vmatprep.subr.bf16.mxu0 %v5276
    %7758 = vmatpush1.bf16.msra.mxu0 %v5275
    %7759 = vmatprep.subr.bf16.mxu0 %v5284
    %7760 = vmatpush1.bf16.msra.mxu0 %v5283
    %7761 = vmatprep.subr.bf16.mxu0 %v5292
    %7762 = vmatpush1.bf16.msra.mxu0 %v5291
    %7763 = vmatprep.subr.bf16.mxu0 %v5300
    %7764 = vmatpush1.bf16.msra.mxu0 %v5299
    %7765 = vmatprep.subr.bf16.mxu0 %v5308
    %7766 = vmatpush1.bf16.msra.mxu0 %v5307
    %7767 = vmatprep.subr.bf16.mxu0 %v5316
    %7768 = vmatpush1.bf16.msra.mxu0 %v5315
    %7769 = vmatprep.subr.bf16.mxu0 %v5324
    %7770 = vmatpush1.bf16.msra.mxu0 %v5323
    %7771 = vmatprep.subr.bf16.mxu0 %v5332
    %7772 = vmatpush1.bf16.msra.mxu0 %v5331
    %7773 = vmatprep.subr.bf16.mxu0 %v5340
    %7774 = vmatpush1.bf16.msra.mxu0 %v5339
    %7775 = vmatprep.subr.bf16.mxu0 %v5348
    %7776 = vmatpush1.bf16.msra.mxu0 %v5347
    %7777 = vmatprep.subr.bf16.mxu0 %v5356
    %7778 = vmatpush1.bf16.msra.mxu0 %v5355
    %7779 = vmatprep.subr.bf16.mxu0 %v5364
    %7780 = vmatpush1.bf16.msra.mxu0 %v5363
    %7781 = vmatprep.subr.bf16.mxu0 %v5372
    %7782 = vmatpush1.bf16.msra.mxu0 %v5371
    %7783 = vmatprep.mubr.bf16.mxu0 %v6819
    %7784 = vmatmul.mubr.bf16.gmra.mrb[0].mxu0 %v6818
    %v7785 = vpop.f32.mrb[0].mxu0
    %v7786 = vadd.f32 %v7733, %v7785
    %v7787 = vpop.f32.mrb[0].mxu0
    %v7788 = vadd.f32 %v7735, %v7787
    %v7789 = vpop.f32.mrb[0].mxu0
    %v7790 = vadd.f32 %v7737, %v7789
    %v7791 = vpop.f32.mrb[0].mxu0
    %v7792 = vadd.f32 %v7739, %v7791
    %7793 = vmatprep.mubr.bf16.mxu0 %v6828
    %7794 = vmatmul.mubr.bf16.gmra.mrb[0].mxu0 %v6827
    %v7795 = vpop.f32.mrb[0].mxu0
    %v7796 = vadd.f32 %v7743, %v7795
    %v7797 = vpop.f32.mrb[0].mxu0
    %v7798 = vadd.f32 %v7745, %v7797
    %v7799 = vpop.f32.mrb[0].mxu0
    %v7800 = vadd.f32 %v7747, %v7799
    %v7801 = vpop.f32.mrb[0].mxu0
    %v7802 = vadd.f32 %v7749, %v7801
    %7803 = vdwg.mxu0
    %7804 = vmatprep.subr.bf16.mxu0 %v5380
    %7805 = vmatpush1.bf16.msra.mxu0 %v5379
    %7806 = vmatprep.subr.bf16.mxu0 %v5388
    %7807 = vmatpush1.bf16.msra.mxu0 %v5387
    %7808 = vmatprep.subr.bf16.mxu0 %v5396
    %7809 = vmatpush1.bf16.msra.mxu0 %v5395
    %7810 = vmatprep.subr.bf16.mxu0 %v5404
    %7811 = vmatpush1.bf16.msra.mxu0 %v5403
    %7812 = vmatprep.subr.bf16.mxu0 %v5412
    %7813 = vmatpush1.bf16.msra.mxu0 %v5411
    %7814 = vmatprep.subr.bf16.mxu0 %v5420
    %7815 = vmatpush1.bf16.msra.mxu0 %v5419
    %7816 = vmatprep.subr.bf16.mxu0 %v5428
    %7817 = vmatpush1.bf16.msra.mxu0 %v5427
    %7818 = vmatprep.subr.bf16.mxu0 %v5436
    %7819 = vmatpush1.bf16.msra.mxu0 %v5435
    %7820 = vmatprep.subr.bf16.mxu0 %v5444
    %7821 = vmatpush1.bf16.msra.mxu0 %v5443
    %7822 = vmatprep.subr.bf16.mxu0 %v5452
    %7823 = vmatpush1.bf16.msra.mxu0 %v5451
    %7824 = vmatprep.subr.bf16.mxu0 %v5460
    %7825 = vmatpush1.bf16.msra.mxu0 %v5459
    %7826 = vmatprep.subr.bf16.mxu0 %v5468
    %7827 = vmatpush1.bf16.msra.mxu0 %v5467
    %7828 = vmatprep.subr.bf16.mxu0 %v5476
    %7829 = vmatpush1.bf16.msra.mxu0 %v5475
    %7830 = vmatprep.subr.bf16.mxu0 %v5484
    %7831 = vmatpush1.bf16.msra.mxu0 %v5483
    %7832 = vmatprep.subr.bf16.mxu0 %v5492
    %7833 = vmatpush1.bf16.msra.mxu0 %v5491
    %7834 = vmatprep.subr.bf16.mxu0 %v5500
    %7835 = vmatpush1.bf16.msra.mxu0 %v5499
    %7836 = vmatprep.mubr.bf16.mxu0 %v6821
    %7837 = vmatmul.mubr.bf16.gmra.mrb[0].mxu0 %v6820
    %v7838 = vpop.f32.mrb[0].mxu0
    %v7839 = vadd.f32 %v7786, %v7838
    %v7840 = vpop.f32.mrb[0].mxu0
    %v7841 = vadd.f32 %v7788, %v7840
    %v7842 = vpop.f32.mrb[0].mxu0
    %v7843 = vadd.f32 %v7790, %v7842
    %v7844 = vpop.f32.mrb[0].mxu0
    %v7845 = vadd.f32 %v7792, %v7844
    %7846 = vmatprep.mubr.bf16.mxu0 %v6830
    %7847 = vmatmul.mubr.bf16.gmra.mrb[0].mxu0 %v6829
    %v7848 = vpop.f32.mrb[0].mxu0
    %v7849 = vadd.f32 %v7796, %v7848
    %v7850 = vpop.f32.mrb[0].mxu0
    %v7851 = vadd.f32 %v7798, %v7850
    %v7852 = vpop.f32.mrb[0].mxu0
    %v7853 = vadd.f32 %v7800, %v7852
    %v7854 = vpop.f32.mrb[0].mxu0
    %v7855 = vadd.f32 %v7802, %v7854
    %7856 = vdwg.mxu0
    %7857 = vmatprep.subr.bf16.mxu0 %v5508
    %7858 = vmatpush1.bf16.msra.mxu0 %v5507
    %7859 = vmatprep.subr.bf16.mxu0 %v5516
    %7860 = vmatpush1.bf16.msra.mxu0 %v5515
    %7861 = vmatprep.subr.bf16.mxu0 %v5524
    %7862 = vmatpush1.bf16.msra.mxu0 %v5523
    %7863 = vmatprep.subr.bf16.mxu0 %v5532
    %7864 = vmatpush1.bf16.msra.mxu0 %v5531
    %7865 = vmatprep.subr.bf16.mxu0 %v5540
    %7866 = vmatpush1.bf16.msra.mxu0 %v5539
    %7867 = vmatprep.subr.bf16.mxu0 %v5548
    %7868 = vmatpush1.bf16.msra.mxu0 %v5547
    %7869 = vmatprep.subr.bf16.mxu0 %v5556
    %7870 = vmatpush1.bf16.msra.mxu0 %v5555
    %7871 = vmatprep.subr.bf16.mxu0 %v5564
    %7872 = vmatpush1.bf16.msra.mxu0 %v5563
    %7873 = vmatprep.subr.bf16.mxu0 0
    %7874 = vmatpush1.bf16.msra.mxu0 0
    %7875 = vmatprep.subr.bf16.mxu0 0
    %7876 = vmatpush1.bf16.msra.mxu0 0
    %7877 = vmatprep.subr.bf16.mxu0 0
    %7878 = vmatpush1.bf16.msra.mxu0 0
    %7879 = vmatprep.subr.bf16.mxu0 0
    %7880 = vmatpush1.bf16.msra.mxu0 0
    %7881 = vmatprep.subr.bf16.mxu0 0
    %7882 = vmatpush1.bf16.msra.mxu0 0
    %7883 = vmatprep.subr.bf16.mxu0 0
    %7884 = vmatpush1.bf16.msra.mxu0 0
    %7885 = vmatprep.subr.bf16.mxu0 0
    %7886 = vmatpush1.bf16.msra.mxu0 0
    %7887 = vmatprep.subr.bf16.mxu0 0
    %7888 = vmatpush1.bf16.msra.mxu0 0
    %7889 = vmatprep.mubr.bf16.mxu0 0
    %7890 = vmatmul.mubr.bf16.gmra.mrb[0].mxu0 %v6822
    %v7891 = vpop.f32.mrb[0].mxu0
    %v7892 = vadd.f32 %v7839, %v7891
    %v7893 = vpop.f32.mrb[0].mxu0
    %v7894 = vadd.f32 %v7841, %v7893
    %v7895 = vpop.f32.mrb[0].mxu0
    %v7896 = vadd.f32 %v7843, %v7895
    %v7897 = vpop.f32.mrb[0].mxu0
    %v7898 = vadd.f32 %v7845, %v7897
    %7899 = vmatprep.mubr.bf16.mxu0 0
    %7900 = vmatmul.mubr.bf16.gmra.mrb[0].mxu0 %v6831
    %v7901 = vpop.f32.mrb[0].mxu0
    %v7902 = vadd.f32 %v7849, %v7901
    %v7903 = vpop.f32.mrb[0].mxu0
    %v7904 = vadd.f32 %v7851, %v7903
    %v7905 = vpop.f32.mrb[0].mxu0
    %v7906 = vadd.f32 %v7853, %v7905
    %v7907 = vpop.f32.mrb[0].mxu0
    %v7908 = vadd.f32 %v7855, %v7907
    %7909 = vdwg.mxu0
    %s7910 = scalar_lea.vmem [#allocation6], 288
    %v7911 = vld [vmem:[%s7910] sm:$0xff]
    %v7912 = vld [vmem:[%s7910 + $0x8] sm:$0xff]
    %v7913 = vld [vmem:[%s7910 + $0x10] sm:$0xff]
    %v7914 = vld [vmem:[%s7910 + $0x18] sm:$0xff]
    %v7915 = vld [vmem:[%s7910 + $0x20] sm:$0xf]
    %v7916 = vld [vmem:[%s7910 + $0x24] sm:$0xff]
    %v7917 = vld [vmem:[%s7910 + $0x2c] sm:$0xff]
    %v7918 = vld [vmem:[%s7910 + $0x34] sm:$0xff]
    %v7919 = vld [vmem:[%s7910 + $0x3c] sm:$0xff]
    %v7920 = vld [vmem:[%s7910 + $0x44] sm:$0xf]
    %v7921 = vld [vmem:[%s7910 + $0x48] sm:$0xff]
    %v7922 = vld [vmem:[%s7910 + $0x50] sm:$0xff]
    %v7923 = vld [vmem:[%s7910 + $0x58] sm:$0xff]
    %v7924 = vld [vmem:[%s7910 + $0x60] sm:$0xff]
    %v7925 = vld [vmem:[%s7910 + $0x68] sm:$0xf]
    %v7926 = vld [vmem:[%s7910 + $0x6c] sm:$0xff]
    %v7927 = vld [vmem:[%s7910 + $0x74] sm:$0xff]
    %v7928 = vld [vmem:[%s7910 + $0x7c] sm:$0xff]
    %v7929 = vld [vmem:[%s7910 + $0x84] sm:$0xff]
    %v7930 = vld [vmem:[%s7910 + $0x8c] sm:$0xf]
    %v7951 = vunpack.c.l.b16 %v7911
    %v7952 = vunpack.c.h.b16 %v7911
    %v7953 = vunpack.c.l.b16 %v7912
    %v7954 = vunpack.c.h.b16 %v7912
    %v7955 = vunpack.c.l.b16 %v7913
    %v7956 = vunpack.c.h.b16 %v7913
    %v7957 = vunpack.c.l.b16 %v7914
    %v7958 = vunpack.c.h.b16 %v7914
    %v7959 = vunpack.c.l.b16 %v7915
    %v7960 = vunpack.c.l.b16 %v7916
    %v7961 = vunpack.c.h.b16 %v7916
    %v7962 = vunpack.c.l.b16 %v7917
    %v7963 = vunpack.c.h.b16 %v7917
    %v7964 = vunpack.c.l.b16 %v7918
    %v7965 = vunpack.c.h.b16 %v7918
    %v7966 = vunpack.c.l.b16 %v7919
    %v7967 = vunpack.c.h.b16 %v7919
    %v7968 = vunpack.c.l.b16 %v7920
    %v7969 = vunpack.c.l.b16 %v7921
    %v7970 = vunpack.c.h.b16 %v7921
    %v7971 = vunpack.c.l.b16 %v7922
    %v7972 = vunpack.c.h.b16 %v7922
    %v7973 = vunpack.c.l.b16 %v7923
    %v7974 = vunpack.c.h.b16 %v7923
    %v7975 = vunpack.c.l.b16 %v7924
    %v7976 = vunpack.c.h.b16 %v7924
    %v7977 = vunpack.c.l.b16 %v7925
    %v7978 = vunpack.c.l.b16 %v7926
    %v7979 = vunpack.c.h.b16 %v7926
    %v7980 = vunpack.c.l.b16 %v7927
    %v7981 = vunpack.c.h.b16 %v7927
    %v7982 = vunpack.c.l.b16 %v7928
    %v7983 = vunpack.c.h.b16 %v7928
    %v7984 = vunpack.c.l.b16 %v7929
    %v7985 = vunpack.c.h.b16 %v7929
    %v7986 = vunpack.c.l.b16 %v7930
    %v7987 = vpack.c.b16 %v7960, %v7951
    %v7988 = vpack.c.b16 %v7961, %v7952
    %v7989 = vpack.c.b16 %v7962, %v7953
    %v7990 = vpack.c.b16 %v7963, %v7954
    %v7991 = vpack.c.b16 %v7964, %v7955
    %v7992 = vpack.c.b16 %v7965, %v7956
    %v7993 = vpack.c.b16 %v7966, %v7957
    %v7994 = vpack.c.b16 %v7967, %v7958
    %v7995 = vpack.c.b16 %v7968, %v7959
    %v7996 = vpack.c.b16 %v7978, %v7969
    %v7997 = vpack.c.b16 %v7979, %v7970
    %v7998 = vpack.c.b16 %v7980, %v7971
    %v7999 = vpack.c.b16 %v7981, %v7972
    %v8000 = vpack.c.b16 %v7982, %v7973
    %v8001 = vpack.c.b16 %v7983, %v7974
    %v8002 = vpack.c.b16 %v7984, %v7975
    %v8003 = vpack.c.b16 %v7985, %v7976
    %v8004 = vpack.c.b16 %v7986, %v7977
    %8023 = vmatprep.subr.bf16.mxu0 %v4990
    %8024 = vmatpush1.bf16.msra.mxu0 %v4989
    %8025 = vmatprep.subr.bf16.mxu0 %v4998
    %8026 = vmatpush1.bf16.msra.mxu0 %v4997
    %8027 = vmatprep.subr.bf16.mxu0 %v5006
    %8028 = vmatpush1.bf16.msra.mxu0 %v5005
    %8029 = vmatprep.subr.bf16.mxu0 %v5014
    %8030 = vmatpush1.bf16.msra.mxu0 %v5013
    %8031 = vmatprep.subr.bf16.mxu0 %v5022
    %8032 = vmatpush1.bf16.msra.mxu0 %v5021
    %8033 = vmatprep.subr.bf16.mxu0 %v5030
    %8034 = vmatpush1.bf16.msra.mxu0 %v5029
    %8035 = vmatprep.subr.bf16.mxu0 %v5038
    %8036 = vmatpush1.bf16.msra.mxu0 %v5037
    %8037 = vmatprep.subr.bf16.mxu0 %v5046
    %8038 = vmatpush1.bf16.msra.mxu0 %v5045
    %8039 = vmatprep.subr.bf16.mxu0 %v5054
    %8040 = vmatpush1.bf16.msra.mxu0 %v5053
    %8041 = vmatprep.subr.bf16.mxu0 %v5062
    %8042 = vmatpush1.bf16.msra.mxu0 %v5061
    %8043 = vmatprep.subr.bf16.mxu0 %v5070
    %8044 = vmatpush1.bf16.msra.mxu0 %v5069
    %8045 = vmatprep.subr.bf16.mxu0 %v5078
    %8046 = vmatpush1.bf16.msra.mxu0 %v5077
    %8047 = vmatprep.subr.bf16.mxu0 %v5086
    %8048 = vmatpush1.bf16.msra.mxu0 %v5085
    %8049 = vmatprep.subr.bf16.mxu0 %v5094
    %8050 = vmatpush1.bf16.msra.mxu0 %v5093
    %8051 = vmatprep.subr.bf16.mxu0 %v5102
    %8052 = vmatpush1.bf16.msra.mxu0 %v5101
    %8053 = vmatprep.subr.bf16.mxu0 %v5110
    %8054 = vmatpush1.bf16.msra.mxu0 %v5109
    %8055 = vmatprep.mubr.bf16.mxu0 %v7988
    %8056 = vmatmul.mubr.bf16.gmra.mrb[0].mxu0 %v7987
    %v8057 = vpop.f32.mrb[0].mxu0
    %v8058 = vadd.f32 0.0, %v8057
    %v8059 = vpop.f32.mrb[0].mxu0
    %v8060 = vadd.f32 0.0, %v8059
    %v8061 = vpop.f32.mrb[0].mxu0
    %v8062 = vadd.f32 0.0, %v8061
    %v8063 = vpop.f32.mrb[0].mxu0
    %v8064 = vadd.f32 0.0, %v8063
    %8065 = vmatprep.mubr.bf16.mxu0 %v7997
    %8066 = vmatmul.mubr.bf16.gmra.mrb[0].mxu0 %v7996
    %v8067 = vpop.f32.mrb[0].mxu0
    %v8068 = vadd.f32 0.0, %v8067
    %v8069 = vpop.f32.mrb[0].mxu0
    %v8070 = vadd.f32 0.0, %v8069
    %v8071 = vpop.f32.mrb[0].mxu0
    %v8072 = vadd.f32 0.0, %v8071
    %v8073 = vpop.f32.mrb[0].mxu0
    %v8074 = vadd.f32 0.0, %v8073
    %8075 = vdwg.mxu0
    %8076 = vmatprep.subr.bf16.mxu0 %v5118
    %8077 = vmatpush1.bf16.msra.mxu0 %v5117
    %8078 = vmatprep.subr.bf16.mxu0 %v5126
    %8079 = vmatpush1.bf16.msra.mxu0 %v5125
    %8080 = vmatprep.subr.bf16.mxu0 %v5134
    %8081 = vmatpush1.bf16.msra.mxu0 %v5133
    %8082 = vmatprep.subr.bf16.mxu0 %v5142
    %8083 = vmatpush1.bf16.msra.mxu0 %v5141
    %8084 = vmatprep.subr.bf16.mxu0 %v5150
    %8085 = vmatpush1.bf16.msra.mxu0 %v5149
    %8086 = vmatprep.subr.bf16.mxu0 %v5158
    %8087 = vmatpush1.bf16.msra.mxu0 %v5157
    %8088 = vmatprep.subr.bf16.mxu0 %v5166
    %8089 = vmatpush1.bf16.msra.mxu0 %v5165
    %8090 = vmatprep.subr.bf16.mxu0 %v5174
    %8091 = vmatpush1.bf16.msra.mxu0 %v5173
    %8092 = vmatprep.subr.bf16.mxu0 %v5182
    %8093 = vmatpush1.bf16.msra.mxu0 %v5181
    %8094 = vmatprep.subr.bf16.mxu0 %v5190
    %8095 = vmatpush1.bf16.msra.mxu0 %v5189
    %8096 = vmatprep.subr.bf16.mxu0 %v5198
    %8097 = vmatpush1.bf16.msra.mxu0 %v5197
    %8098 = vmatprep.subr.bf16.mxu0 %v5206
    %8099 = vmatpush1.bf16.msra.mxu0 %v5205
    %8100 = vmatprep.subr.bf16.mxu0 %v5214
    %8101 = vmatpush1.bf16.msra.mxu0 %v5213
    %8102 = vmatprep.subr.bf16.mxu0 %v5222
    %8103 = vmatpush1.bf16.msra.mxu0 %v5221
    %8104 = vmatprep.subr.bf16.mxu0 %v5230
    %8105 = vmatpush1.bf16.msra.mxu0 %v5229
    %8106 = vmatprep.subr.bf16.mxu0 %v5238
    %8107 = vmatpush1.bf16.msra.mxu0 %v5237
    %8108 = vmatprep.mubr.bf16.mxu0 %v7990
    %8109 = vmatmul.mubr.bf16.gmra.mrb[0].mxu0 %v7989
    %v8110 = vpop.f32.mrb[0].mxu0
    %v8111 = vadd.f32 %v8058, %v8110
    %v8112 = vpop.f32.mrb[0].mxu0
    %v8113 = vadd.f32 %v8060, %v8112
    %v8114 = vpop.f32.mrb[0].mxu0
    %v8115 = vadd.f32 %v8062, %v8114
    %v8116 = vpop.f32.mrb[0].mxu0
    %v8117 = vadd.f32 %v8064, %v8116
    %8118 = vmatprep.mubr.bf16.mxu0 %v7999
    %8119 = vmatmul.mubr.bf16.gmra.mrb[0].mxu0 %v7998
    %v8120 = vpop.f32.mrb[0].mxu0
    %v8121 = vadd.f32 %v8068, %v8120
    %v8122 = vpop.f32.mrb[0].mxu0
    %v8123 = vadd.f32 %v8070, %v8122
    %v8124 = vpop.f32.mrb[0].mxu0
    %v8125 = vadd.f32 %v8072, %v8124
    %v8126 = vpop.f32.mrb[0].mxu0
    %v8127 = vadd.f32 %v8074, %v8126
    %8128 = vdwg.mxu0
    %8129 = vmatprep.subr.bf16.mxu0 %v5246
    %8130 = vmatpush1.bf16.msra.mxu0 %v5245
    %8131 = vmatprep.subr.bf16.mxu0 %v5254
    %8132 = vmatpush1.bf16.msra.mxu0 %v5253
    %8133 = vmatprep.subr.bf16.mxu0 %v5262
    %8134 = vmatpush1.bf16.msra.mxu0 %v5261
    %8135 = vmatprep.subr.bf16.mxu0 %v5270
    %8136 = vmatpush1.bf16.msra.mxu0 %v5269
    %8137 = vmatprep.subr.bf16.mxu0 %v5278
    %8138 = vmatpush1.bf16.msra.mxu0 %v5277
    %8139 = vmatprep.subr.bf16.mxu0 %v5286
    %8140 = vmatpush1.bf16.msra.mxu0 %v5285
    %8141 = vmatprep.subr.bf16.mxu0 %v5294
    %8142 = vmatpush1.bf16.msra.mxu0 %v5293
    %8143 = vmatprep.subr.bf16.mxu0 %v5302
    %8144 = vmatpush1.bf16.msra.mxu0 %v5301
    %8145 = vmatprep.subr.bf16.mxu0 %v5310
    %8146 = vmatpush1.bf16.msra.mxu0 %v5309
    %8147 = vmatprep.subr.bf16.mxu0 %v5318
    %8148 = vmatpush1.bf16.msra.mxu0 %v5317
    %8149 = vmatprep.subr.bf16.mxu0 %v5326
    %8150 = vmatpush1.bf16.msra.mxu0 %v5325
    %8151 = vmatprep.subr.bf16.mxu0 %v5334
    %8152 = vmatpush1.bf16.msra.mxu0 %v5333
    %8153 = vmatprep.subr.bf16.mxu0 %v5342
    %8154 = vmatpush1.bf16.msra.mxu0 %v5341
    %8155 = vmatprep.subr.bf16.mxu0 %v5350
    %8156 = vmatpush1.bf16.msra.mxu0 %v5349
    %8157 = vmatprep.subr.bf16.mxu0 %v5358
    %8158 = vmatpush1.bf16.msra.mxu0 %v5357
    %8159 = vmatprep.subr.bf16.mxu0 %v5366
    %8160 = vmatpush1.bf16.msra.mxu0 %v5365
    %8161 = vmatprep.mubr.bf16.mxu0 %v7992
    %8162 = vmatmul.mubr.bf16.gmra.mrb[0].mxu0 %v7991
    %v8163 = vpop.f32.mrb[0].mxu0
    %v8164 = vadd.f32 %v8111, %v8163
    %v8165 = vpop.f32.mrb[0].mxu0
    %v8166 = vadd.f32 %v8113, %v8165
    %v8167 = vpop.f32.mrb[0].mxu0
    %v8168 = vadd.f32 %v8115, %v8167
    %v8169 = vpop.f32.mrb[0].mxu0
    %v8170 = vadd.f32 %v8117, %v8169
    %8171 = vmatprep.mubr.bf16.mxu0 %v8001
    %8172 = vmatmul.mubr.bf16.gmra.mrb[0].mxu0 %v8000
    %v8173 = vpop.f32.mrb[0].mxu0
    %v8174 = vadd.f32 %v8121, %v8173
    %v8175 = vpop.f32.mrb[0].mxu0
    %v8176 = vadd.f32 %v8123, %v8175
    %v8177 = vpop.f32.mrb[0].mxu0
    %v8178 = vadd.f32 %v8125, %v8177
    %v8179 = vpop.f32.mrb[0].mxu0
    %v8180 = vadd.f32 %v8127, %v8179
    %8181 = vdwg.mxu0
    %8182 = vmatprep.subr.bf16.mxu0 %v5374
    %8183 = vmatpush1.bf16.msra.mxu0 %v5373
    %8184 = vmatprep.subr.bf16.mxu0 %v5382
    %8185 = vmatpush1.bf16.msra.mxu0 %v5381
    %8186 = vmatprep.subr.bf16.mxu0 %v5390
    %8187 = vmatpush1.bf16.msra.mxu0 %v5389
    %8188 = vmatprep.subr.bf16.mxu0 %v5398
    %8189 = vmatpush1.bf16.msra.mxu0 %v5397
    %8190 = vmatprep.subr.bf16.mxu0 %v5406
    %8191 = vmatpush1.bf16.msra.mxu0 %v5405
    %8192 = vmatprep.subr.bf16.mxu0 %v5414
    %8193 = vmatpush1.bf16.msra.mxu0 %v5413
    %8194 = vmatprep.subr.bf16.mxu0 %v5422
    %8195 = vmatpush1.bf16.msra.mxu0 %v5421
    %8196 = vmatprep.subr.bf16.mxu0 %v5430
    %8197 = vmatpush1.bf16.msra.mxu0 %v5429
    %8198 = vmatprep.subr.bf16.mxu0 %v5438
    %8199 = vmatpush1.bf16.msra.mxu0 %v5437
    %8200 = vmatprep.subr.bf16.mxu0 %v5446
    %8201 = vmatpush1.bf16.msra.mxu0 %v5445
    %8202 = vmatprep.subr.bf16.mxu0 %v5454
    %8203 = vmatpush1.bf16.msra.mxu0 %v5453
    %8204 = vmatprep.subr.bf16.mxu0 %v5462
    %8205 = vmatpush1.bf16.msra.mxu0 %v5461
    %8206 = vmatprep.subr.bf16.mxu0 %v5470
    %8207 = vmatpush1.bf16.msra.mxu0 %v5469
    %8208 = vmatprep.subr.bf16.mxu0 %v5478
    %8209 = vmatpush1.bf16.msra.mxu0 %v5477
    %8210 = vmatprep.subr.bf16.mxu0 %v5486
    %8211 = vmatpush1.bf16.msra.mxu0 %v5485
    %8212 = vmatprep.subr.bf16.mxu0 %v5494
    %8213 = vmatpush1.bf16.msra.mxu0 %v5493
    %8214 = vmatprep.mubr.bf16.mxu0 %v7994
    %8215 = vmatmul.mubr.bf16.gmra.mrb[0].mxu0 %v7993
    %v8216 = vpop.f32.mrb[0].mxu0
    %v8217 = vadd.f32 %v8164, %v8216
    %v8218 = vpop.f32.mrb[0].mxu0
    %v8219 = vadd.f32 %v8166, %v8218
    %v8220 = vpop.f32.mrb[0].mxu0
    %v8221 = vadd.f32 %v8168, %v8220
    %v8222 = vpop.f32.mrb[0].mxu0
    %v8223 = vadd.f32 %v8170, %v8222
    %8224 = vmatprep.mubr.bf16.mxu0 %v8003
    %8225 = vmatmul.mubr.bf16.gmra.mrb[0].mxu0 %v8002
    %v8226 = vpop.f32.mrb[0].mxu0
    %v8227 = vadd.f32 %v8174, %v8226
    %v8228 = vpop.f32.mrb[0].mxu0
    %v8229 = vadd.f32 %v8176, %v8228
    %v8230 = vpop.f32.mrb[0].mxu0
    %v8231 = vadd.f32 %v8178, %v8230
    %v8232 = vpop.f32.mrb[0].mxu0
    %v8233 = vadd.f32 %v8180, %v8232
    %8234 = vdwg.mxu0
    %8235 = vmatprep.subr.bf16.mxu0 %v5502
    %8236 = vmatpush1.bf16.msra.mxu0 %v5501
    %8237 = vmatprep.subr.bf16.mxu0 %v5510
    %8238 = vmatpush1.bf16.msra.mxu0 %v5509
    %8239 = vmatprep.subr.bf16.mxu0 %v5518
    %8240 = vmatpush1.bf16.msra.mxu0 %v5517
    %8241 = vmatprep.subr.bf16.mxu0 %v5526
    %8242 = vmatpush1.bf16.msra.mxu0 %v5525
    %8243 = vmatprep.subr.bf16.mxu0 %v5534
    %8244 = vmatpush1.bf16.msra.mxu0 %v5533
    %8245 = vmatprep.subr.bf16.mxu0 %v5542
    %8246 = vmatpush1.bf16.msra.mxu0 %v5541
    %8247 = vmatprep.subr.bf16.mxu0 %v5550
    %8248 = vmatpush1.bf16.msra.mxu0 %v5549
    %8249 = vmatprep.subr.bf16.mxu0 %v5558
    %8250 = vmatpush1.bf16.msra.mxu0 %v5557
    %8251 = vmatprep.subr.bf16.mxu0 0
    %8252 = vmatpush1.bf16.msra.mxu0 0
    %8253 = vmatprep.subr.bf16.mxu0 0
    %8254 = vmatpush1.bf16.msra.mxu0 0
    %8255 = vmatprep.subr.bf16.mxu0 0
    %8256 = vmatpush1.bf16.msra.mxu0 0
    %8257 = vmatprep.subr.bf16.mxu0 0
    %8258 = vmatpush1.bf16.msra.mxu0 0
    %8259 = vmatprep.subr.bf16.mxu0 0
    %8260 = vmatpush1.bf16.msra.mxu0 0
    %8261 = vmatprep.subr.bf16.mxu0 0
    %8262 = vmatpush1.bf16.msra.mxu0 0
    %8263 = vmatprep.subr.bf16.mxu0 0
    %8264 = vmatpush1.bf16.msra.mxu0 0
    %8265 = vmatprep.subr.bf16.mxu0 0
    %8266 = vmatpush1.bf16.msra.mxu0 0
    %8267 = vmatprep.mubr.bf16.mxu0 0
    %8268 = vmatmul.mubr.bf16.gmra.mrb[0].mxu0 %v7995
    %v8269 = vpop.f32.mrb[0].mxu0
    %v8270 = vadd.f32 %v8217, %v8269
    %v8271 = vpop.f32.mrb[0].mxu0
    %v8272 = vadd.f32 %v8219, %v8271
    %v8273 = vpop.f32.mrb[0].mxu0
    %v8274 = vadd.f32 %v8221, %v8273
    %v8275 = vpop.f32.mrb[0].mxu0
    %v8276 = vadd.f32 %v8223, %v8275
    %8277 = vmatprep.mubr.bf16.mxu0 0
    %8278 = vmatmul.mubr.bf16.gmra.mrb[0].mxu0 %v8004
    %v8279 = vpop.f32.mrb[0].mxu0
    %v8280 = vadd.f32 %v8227, %v8279
    %v8281 = vpop.f32.mrb[0].mxu0
    %v8282 = vadd.f32 %v8229, %v8281
    %v8283 = vpop.f32.mrb[0].mxu0
    %v8284 = vadd.f32 %v8231, %v8283
    %v8285 = vpop.f32.mrb[0].mxu0
    %v8286 = vadd.f32 %v8233, %v8285
    %8287 = vdwg.mxu0
    %8288 = vmatprep.subr.bf16.mxu0 %v4992
    %8289 = vmatpush1.bf16.msra.mxu0 %v4991
    %8290 = vmatprep.subr.bf16.mxu0 %v5000
    %8291 = vmatpush1.bf16.msra.mxu0 %v4999
    %8292 = vmatprep.subr.bf16.mxu0 %v5008
    %8293 = vmatpush1.bf16.msra.mxu0 %v5007
    %8294 = vmatprep.subr.bf16.mxu0 %v5016
    %8295 = vmatpush1.bf16.msra.mxu0 %v5015
    %8296 = vmatprep.subr.bf16.mxu0 %v5024
    %8297 = vmatpush1.bf16.msra.mxu0 %v5023
    %8298 = vmatprep.subr.bf16.mxu0 %v5032
    %8299 = vmatpush1.bf16.msra.mxu0 %v5031
    %8300 = vmatprep.subr.bf16.mxu0 %v5040
    %8301 = vmatpush1.bf16.msra.mxu0 %v5039
    %8302 = vmatprep.subr.bf16.mxu0 %v5048
    %8303 = vmatpush1.bf16.msra.mxu0 %v5047
    %8304 = vmatprep.subr.bf16.mxu0 %v5056
    %8305 = vmatpush1.bf16.msra.mxu0 %v5055
    %8306 = vmatprep.subr.bf16.mxu0 %v5064
    %8307 = vmatpush1.bf16.msra.mxu0 %v5063
    %8308 = vmatprep.subr.bf16.mxu0 %v5072
    %8309 = vmatpush1.bf16.msra.mxu0 %v5071
    %8310 = vmatprep.subr.bf16.mxu0 %v5080
    %8311 = vmatpush1.bf16.msra.mxu0 %v5079
    %8312 = vmatprep.subr.bf16.mxu0 %v5088
    %8313 = vmatpush1.bf16.msra.mxu0 %v5087
    %8314 = vmatprep.subr.bf16.mxu0 %v5096
    %8315 = vmatpush1.bf16.msra.mxu0 %v5095
    %8316 = vmatprep.subr.bf16.mxu0 %v5104
    %8317 = vmatpush1.bf16.msra.mxu0 %v5103
    %8318 = vmatprep.subr.bf16.mxu0 %v5112
    %8319 = vmatpush1.bf16.msra.mxu0 %v5111
    %8320 = vmatprep.mubr.bf16.mxu0 %v7988
    %8321 = vmatmul.mubr.bf16.gmra.mrb[0].mxu0 %v7987
    %v8322 = vpop.f32.mrb[0].mxu0
    %v8323 = vadd.f32 0.0, %v8322
    %v8324 = vpop.f32.mrb[0].mxu0
    %v8325 = vadd.f32 0.0, %v8324
    %v8326 = vpop.f32.mrb[0].mxu0
    %v8327 = vadd.f32 0.0, %v8326
    %v8328 = vpop.f32.mrb[0].mxu0
    %v8329 = vadd.f32 0.0, %v8328
    %8330 = vmatprep.mubr.bf16.mxu0 %v7997
    %8331 = vmatmul.mubr.bf16.gmra.mrb[0].mxu0 %v7996
    %v8332 = vpop.f32.mrb[0].mxu0
    %v8333 = vadd.f32 0.0, %v8332
    %v8334 = vpop.f32.mrb[0].mxu0
    %v8335 = vadd.f32 0.0, %v8334
    %v8336 = vpop.f32.mrb[0].mxu0
    %v8337 = vadd.f32 0.0, %v8336
    %v8338 = vpop.f32.mrb[0].mxu0
    %v8339 = vadd.f32 0.0, %v8338
    %8340 = vdwg.mxu0
    %8341 = vmatprep.subr.bf16.mxu0 %v5120
    %8342 = vmatpush1.bf16.msra.mxu0 %v5119
    %8343 = vmatprep.subr.bf16.mxu0 %v5128
    %8344 = vmatpush1.bf16.msra.mxu0 %v5127
    %8345 = vmatprep.subr.bf16.mxu0 %v5136
    %8346 = vmatpush1.bf16.msra.mxu0 %v5135
    %8347 = vmatprep.subr.bf16.mxu0 %v5144
    %8348 = vmatpush1.bf16.msra.mxu0 %v5143
    %8349 = vmatprep.subr.bf16.mxu0 %v5152
    %8350 = vmatpush1.bf16.msra.mxu0 %v5151
    %8351 = vmatprep.subr.bf16.mxu0 %v5160
    %8352 = vmatpush1.bf16.msra.mxu0 %v5159
    %8353 = vmatprep.subr.bf16.mxu0 %v5168
    %8354 = vmatpush1.bf16.msra.mxu0 %v5167
    %8355 = vmatprep.subr.bf16.mxu0 %v5176
    %8356 = vmatpush1.bf16.msra.mxu0 %v5175
    %8357 = vmatprep.subr.bf16.mxu0 %v5184
    %8358 = vmatpush1.bf16.msra.mxu0 %v5183
    %8359 = vmatprep.subr.bf16.mxu0 %v5192
    %8360 = vmatpush1.bf16.msra.mxu0 %v5191
    %8361 = vmatprep.subr.bf16.mxu0 %v5200
    %8362 = vmatpush1.bf16.msra.mxu0 %v5199
    %8363 = vmatprep.subr.bf16.mxu0 %v5208
    %8364 = vmatpush1.bf16.msra.mxu0 %v5207
    %8365 = vmatprep.subr.bf16.mxu0 %v5216
    %8366 = vmatpush1.bf16.msra.mxu0 %v5215
    %8367 = vmatprep.subr.bf16.mxu0 %v5224
    %8368 = vmatpush1.bf16.msra.mxu0 %v5223
    %8369 = vmatprep.subr.bf16.mxu0 %v5232
    %8370 = vmatpush1.bf16.msra.mxu0 %v5231
    %8371 = vmatprep.subr.bf16.mxu0 %v5240
    %8372 = vmatpush1.bf16.msra.mxu0 %v5239
    %8373 = vmatprep.mubr.bf16.mxu0 %v7990
    %8374 = vmatmul.mubr.bf16.gmra.mrb[0].mxu0 %v7989
    %v8375 = vpop.f32.mrb[0].mxu0
    %v8376 = vadd.f32 %v8323, %v8375
    %v8377 = vpop.f32.mrb[0].mxu0
    %v8378 = vadd.f32 %v8325, %v8377
    %v8379 = vpop.f32.mrb[0].mxu0
    %v8380 = vadd.f32 %v8327, %v8379
    %v8381 = vpop.f32.mrb[0].mxu0
    %v8382 = vadd.f32 %v8329, %v8381
    %8383 = vmatprep.mubr.bf16.mxu0 %v7999
    %8384 = vmatmul.mubr.bf16.gmra.mrb[0].mxu0 %v7998
    %v8385 = vpop.f32.mrb[0].mxu0
    %v8386 = vadd.f32 %v8333, %v8385
    %v8387 = vpop.f32.mrb[0].mxu0
    %v8388 = vadd.f32 %v8335, %v8387
    %v8389 = vpop.f32.mrb[0].mxu0
    %v8390 = vadd.f32 %v8337, %v8389
    %v8391 = vpop.f32.mrb[0].mxu0
    %v8392 = vadd.f32 %v8339, %v8391
    %8393 = vdwg.mxu0
    %8394 = vmatprep.subr.bf16.mxu0 %v5248
    %8395 = vmatpush1.bf16.msra.mxu0 %v5247
    %8396 = vmatprep.subr.bf16.mxu0 %v5256
    %8397 = vmatpush1.bf16.msra.mxu0 %v5255
    %8398 = vmatprep.subr.bf16.mxu0 %v5264
    %8399 = vmatpush1.bf16.msra.mxu0 %v5263
    %8400 = vmatprep.subr.bf16.mxu0 %v5272
    %8401 = vmatpush1.bf16.msra.mxu0 %v5271
    %8402 = vmatprep.subr.bf16.mxu0 %v5280
    %8403 = vmatpush1.bf16.msra.mxu0 %v5279
    %8404 = vmatprep.subr.bf16.mxu0 %v5288
    %8405 = vmatpush1.bf16.msra.mxu0 %v5287
    %8406 = vmatprep.subr.bf16.mxu0 %v5296
    %8407 = vmatpush1.bf16.msra.mxu0 %v5295
    %8408 = vmatprep.subr.bf16.mxu0 %v5304
    %8409 = vmatpush1.bf16.msra.mxu0 %v5303
    %8410 = vmatprep.subr.bf16.mxu0 %v5312
    %8411 = vmatpush1.bf16.msra.mxu0 %v5311
    %8412 = vmatprep.subr.bf16.mxu0 %v5320
    %8413 = vmatpush1.bf16.msra.mxu0 %v5319
    %8414 = vmatprep.subr.bf16.mxu0 %v5328
    %8415 = vmatpush1.bf16.msra.mxu0 %v5327
    %8416 = vmatprep.subr.bf16.mxu0 %v5336
    %8417 = vmatpush1.bf16.msra.mxu0 %v5335
    %8418 = vmatprep.subr.bf16.mxu0 %v5344
    %8419 = vmatpush1.bf16.msra.mxu0 %v5343
    %8420 = vmatprep.subr.bf16.mxu0 %v5352
    %8421 = vmatpush1.bf16.msra.mxu0 %v5351
    %8422 = vmatprep.subr.bf16.mxu0 %v5360
    %8423 = vmatpush1.bf16.msra.mxu0 %v5359
    %8424 = vmatprep.subr.bf16.mxu0 %v5368
    %8425 = vmatpush1.bf16.msra.mxu0 %v5367
    %8426 = vmatprep.mubr.bf16.mxu0 %v7992
    %8427 = vmatmul.mubr.bf16.gmra.mrb[0].mxu0 %v7991
    %v8428 = vpop.f32.mrb[0].mxu0
    %v8429 = vadd.f32 %v8376, %v8428
    %v8430 = vpop.f32.mrb[0].mxu0
    %v8431 = vadd.f32 %v8378, %v8430
    %v8432 = vpop.f32.mrb[0].mxu0
    %v8433 = vadd.f32 %v8380, %v8432
    %v8434 = vpop.f32.mrb[0].mxu0
    %v8435 = vadd.f32 %v8382, %v8434
    %8436 = vmatprep.mubr.bf16.mxu0 %v8001
    %8437 = vmatmul.mubr.bf16.gmra.mrb[0].mxu0 %v8000
    %v8438 = vpop.f32.mrb[0].mxu0
    %v8439 = vadd.f32 %v8386, %v8438
    %v8440 = vpop.f32.mrb[0].mxu0
    %v8441 = vadd.f32 %v8388, %v8440
    %v8442 = vpop.f32.mrb[0].mxu0
    %v8443 = vadd.f32 %v8390, %v8442
    %v8444 = vpop.f32.mrb[0].mxu0
    %v8445 = vadd.f32 %v8392, %v8444
    %8446 = vdwg.mxu0
    %8447 = vmatprep.subr.bf16.mxu0 %v5376
    %8448 = vmatpush1.bf16.msra.mxu0 %v5375
    %8449 = vmatprep.subr.bf16.mxu0 %v5384
    %8450 = vmatpush1.bf16.msra.mxu0 %v5383
    %8451 = vmatprep.subr.bf16.mxu0 %v5392
    %8452 = vmatpush1.bf16.msra.mxu0 %v5391
    %8453 = vmatprep.subr.bf16.mxu0 %v5400
    %8454 = vmatpush1.bf16.msra.mxu0 %v5399
    %8455 = vmatprep.subr.bf16.mxu0 %v5408
    %8456 = vmatpush1.bf16.msra.mxu0 %v5407
    %8457 = vmatprep.subr.bf16.mxu0 %v5416
    %8458 = vmatpush1.bf16.msra.mxu0 %v5415
    %8459 = vmatprep.subr.bf16.mxu0 %v5424
    %8460 = vmatpush1.bf16.msra.mxu0 %v5423
    %8461 = vmatprep.subr.bf16.mxu0 %v5432
    %8462 = vmatpush1.bf16.msra.mxu0 %v5431
    %8463 = vmatprep.subr.bf16.mxu0 %v5440
    %8464 = vmatpush1.bf16.msra.mxu0 %v5439
    %8465 = vmatprep.subr.bf16.mxu0 %v5448
    %8466 = vmatpush1.bf16.msra.mxu0 %v5447
    %8467 = vmatprep.subr.bf16.mxu0 %v5456
    %8468 = vmatpush1.bf16.msra.mxu0 %v5455
    %8469 = vmatprep.subr.bf16.mxu0 %v5464
    %8470 = vmatpush1.bf16.msra.mxu0 %v5463
    %8471 = vmatprep.subr.bf16.mxu0 %v5472
    %8472 = vmatpush1.bf16.msra.mxu0 %v5471
    %8473 = vmatprep.subr.bf16.mxu0 %v5480
    %8474 = vmatpush1.bf16.msra.mxu0 %v5479
    %8475 = vmatprep.subr.bf16.mxu0 %v5488
    %8476 = vmatpush1.bf16.msra.mxu0 %v5487
    %8477 = vmatprep.subr.bf16.mxu0 %v5496
    %8478 = vmatpush1.bf16.msra.mxu0 %v5495
    %8479 = vmatprep.mubr.bf16.mxu0 %v7994
    %8480 = vmatmul.mubr.bf16.gmra.mrb[0].mxu0 %v7993
    %v8481 = vpop.f32.mrb[0].mxu0
    %v8482 = vadd.f32 %v8429, %v8481
    %v8483 = vpop.f32.mrb[0].mxu0
    %v8484 = vadd.f32 %v8431, %v8483
    %v8485 = vpop.f32.mrb[0].mxu0
    %v8486 = vadd.f32 %v8433, %v8485
    %v8487 = vpop.f32.mrb[0].mxu0
    %v8488 = vadd.f32 %v8435, %v8487
    %8489 = vmatprep.mubr.bf16.mxu0 %v8003
    %8490 = vmatmul.mubr.bf16.gmra.mrb[0].mxu0 %v8002
    %v8491 = vpop.f32.mrb[0].mxu0
    %v8492 = vadd.f32 %v8439, %v8491
    %v8493 = vpop.f32.mrb[0].mxu0
    %v8494 = vadd.f32 %v8441, %v8493
    %v8495 = vpop.f32.mrb[0].mxu0
    %v8496 = vadd.f32 %v8443, %v8495
    %v8497 = vpop.f32.mrb[0].mxu0
    %v8498 = vadd.f32 %v8445, %v8497
    %8499 = vdwg.mxu0
    %8500 = vmatprep.subr.bf16.mxu0 %v5504
    %8501 = vmatpush1.bf16.msra.mxu0 %v5503
    %8502 = vmatprep.subr.bf16.mxu0 %v5512
    %8503 = vmatpush1.bf16.msra.mxu0 %v5511
    %8504 = vmatprep.subr.bf16.mxu0 %v5520
    %8505 = vmatpush1.bf16.msra.mxu0 %v5519
    %8506 = vmatprep.subr.bf16.mxu0 %v5528
    %8507 = vmatpush1.bf16.msra.mxu0 %v5527
    %8508 = vmatprep.subr.bf16.mxu0 %v5536
    %8509 = vmatpush1.bf16.msra.mxu0 %v5535
    %8510 = vmatprep.subr.bf16.mxu0 %v5544
    %8511 = vmatpush1.bf16.msra.mxu0 %v5543
    %8512 = vmatprep.subr.bf16.mxu0 %v5552
    %8513 = vmatpush1.bf16.msra.mxu0 %v5551
    %8514 = vmatprep.subr.bf16.mxu0 %v5560
    %8515 = vmatpush1.bf16.msra.mxu0 %v5559
    %8516 = vmatprep.subr.bf16.mxu0 0
    %8517 = vmatpush1.bf16.msra.mxu0 0
    %8518 = vmatprep.subr.bf16.mxu0 0
    %8519 = vmatpush1.bf16.msra.mxu0 0
    %8520 = vmatprep.subr.bf16.mxu0 0
    %8521 = vmatpush1.bf16.msra.mxu0 0
    %8522 = vmatprep.subr.bf16.mxu0 0
    %8523 = vmatpush1.bf16.msra.mxu0 0
    %8524 = vmatprep.subr.bf16.mxu0 0
    %8525 = vmatpush1.bf16.msra.mxu0 0
    %8526 = vmatprep.subr.bf16.mxu0 0
    %8527 = vmatpush1.bf16.msra.mxu0 0
    %8528 = vmatprep.subr.bf16.mxu0 0
    %8529 = vmatpush1.bf16.msra.mxu0 0
    %8530 = vmatprep.subr.bf16.mxu0 0
    %8531 = vmatpush1.bf16.msra.mxu0 0
    %8532 = vmatprep.mubr.bf16.mxu0 0
    %8533 = vmatmul.mubr.bf16.gmra.mrb[0].mxu0 %v7995
    %v8534 = vpop.f32.mrb[0].mxu0
    %v8535 = vadd.f32 %v8482, %v8534
    %v8536 = vpop.f32.mrb[0].mxu0
    %v8537 = vadd.f32 %v8484, %v8536
    %v8538 = vpop.f32.mrb[0].mxu0
    %v8539 = vadd.f32 %v8486, %v8538
    %v8540 = vpop.f32.mrb[0].mxu0
    %v8541 = vadd.f32 %v8488, %v8540
    %8542 = vmatprep.mubr.bf16.mxu0 0
    %8543 = vmatmul.mubr.bf16.gmra.mrb[0].mxu0 %v8004
    %v8544 = vpop.f32.mrb[0].mxu0
    %v8545 = vadd.f32 %v8492, %v8544
    %v8546 = vpop.f32.mrb[0].mxu0
    %v8547 = vadd.f32 %v8494, %v8546
    %v8548 = vpop.f32.mrb[0].mxu0
    %v8549 = vadd.f32 %v8496, %v8548
    %v8550 = vpop.f32.mrb[0].mxu0
    %v8551 = vadd.f32 %v8498, %v8550
    %8552 = vdwg.mxu0
    %8553 = vmatprep.subr.bf16.mxu0 %v4994
    %8554 = vmatpush1.bf16.msra.mxu0 %v4993
    %8555 = vmatprep.subr.bf16.mxu0 %v5002
    %8556 = vmatpush1.bf16.msra.mxu0 %v5001
    %8557 = vmatprep.subr.bf16.mxu0 %v5010
    %8558 = vmatpush1.bf16.msra.mxu0 %v5009
    %8559 = vmatprep.subr.bf16.mxu0 %v5018
    %8560 = vmatpush1.bf16.msra.mxu0 %v5017
    %8561 = vmatprep.subr.bf16.mxu0 %v5026
    %8562 = vmatpush1.bf16.msra.mxu0 %v5025
    %8563 = vmatprep.subr.bf16.mxu0 %v5034
    %8564 = vmatpush1.bf16.msra.mxu0 %v5033
    %8565 = vmatprep.subr.bf16.mxu0 %v5042
    %8566 = vmatpush1.bf16.msra.mxu0 %v5041
    %8567 = vmatprep.subr.bf16.mxu0 %v5050
    %8568 = vmatpush1.bf16.msra.mxu0 %v5049
    %8569 = vmatprep.subr.bf16.mxu0 %v5058
    %8570 = vmatpush1.bf16.msra.mxu0 %v5057
    %8571 = vmatprep.subr.bf16.mxu0 %v5066
    %8572 = vmatpush1.bf16.msra.mxu0 %v5065
    %8573 = vmatprep.subr.bf16.mxu0 %v5074
    %8574 = vmatpush1.bf16.msra.mxu0 %v5073
    %8575 = vmatprep.subr.bf16.mxu0 %v5082
    %8576 = vmatpush1.bf16.msra.mxu0 %v5081
    %8577 = vmatprep.subr.bf16.mxu0 %v5090
    %8578 = vmatpush1.bf16.msra.mxu0 %v5089
    %8579 = vmatprep.subr.bf16.mxu0 %v5098
    %8580 = vmatpush1.bf16.msra.mxu0 %v5097
    %8581 = vmatprep.subr.bf16.mxu0 %v5106
    %8582 = vmatpush1.bf16.msra.mxu0 %v5105
    %8583 = vmatprep.subr.bf16.mxu0 %v5114
    %8584 = vmatpush1.bf16.msra.mxu0 %v5113
    %8585 = vmatprep.mubr.bf16.mxu0 %v7988
    %8586 = vmatmul.mubr.bf16.gmra.mrb[0].mxu0 %v7987
    %v8587 = vpop.f32.mrb[0].mxu0
    %v8588 = vadd.f32 0.0, %v8587
    %v8589 = vpop.f32.mrb[0].mxu0
    %v8590 = vadd.f32 0.0, %v8589
    %v8591 = vpop.f32.mrb[0].mxu0
    %v8592 = vadd.f32 0.0, %v8591
    %v8593 = vpop.f32.mrb[0].mxu0
    %v8594 = vadd.f32 0.0, %v8593
    %8595 = vmatprep.mubr.bf16.mxu0 %v7997
    %8596 = vmatmul.mubr.bf16.gmra.mrb[0].mxu0 %v7996
    %v8597 = vpop.f32.mrb[0].mxu0
    %v8598 = vadd.f32 0.0, %v8597
    %v8599 = vpop.f32.mrb[0].mxu0
    %v8600 = vadd.f32 0.0, %v8599
    %v8601 = vpop.f32.mrb[0].mxu0
    %v8602 = vadd.f32 0.0, %v8601
    %v8603 = vpop.f32.mrb[0].mxu0
    %v8604 = vadd.f32 0.0, %v8603
    %8605 = vdwg.mxu0
    %8606 = vmatprep.subr.bf16.mxu0 %v5122
    %8607 = vmatpush1.bf16.msra.mxu0 %v5121
    %8608 = vmatprep.subr.bf16.mxu0 %v5130
    %8609 = vmatpush1.bf16.msra.mxu0 %v5129
    %8610 = vmatprep.subr.bf16.mxu0 %v5138
    %8611 = vmatpush1.bf16.msra.mxu0 %v5137
    %8612 = vmatprep.subr.bf16.mxu0 %v5146
    %8613 = vmatpush1.bf16.msra.mxu0 %v5145
    %8614 = vmatprep.subr.bf16.mxu0 %v5154
    %8615 = vmatpush1.bf16.msra.mxu0 %v5153
    %8616 = vmatprep.subr.bf16.mxu0 %v5162
    %8617 = vmatpush1.bf16.msra.mxu0 %v5161
    %8618 = vmatprep.subr.bf16.mxu0 %v5170
    %8619 = vmatpush1.bf16.msra.mxu0 %v5169
    %8620 = vmatprep.subr.bf16.mxu0 %v5178
    %8621 = vmatpush1.bf16.msra.mxu0 %v5177
    %8622 = vmatprep.subr.bf16.mxu0 %v5186
    %8623 = vmatpush1.bf16.msra.mxu0 %v5185
    %8624 = vmatprep.subr.bf16.mxu0 %v5194
    %8625 = vmatpush1.bf16.msra.mxu0 %v5193
    %8626 = vmatprep.subr.bf16.mxu0 %v5202
    %8627 = vmatpush1.bf16.msra.mxu0 %v5201
    %8628 = vmatprep.subr.bf16.mxu0 %v5210
    %8629 = vmatpush1.bf16.msra.mxu0 %v5209
    %8630 = vmatprep.subr.bf16.mxu0 %v5218
    %8631 = vmatpush1.bf16.msra.mxu0 %v5217
    %8632 = vmatprep.subr.bf16.mxu0 %v5226
    %8633 = vmatpush1.bf16.msra.mxu0 %v5225
    %8634 = vmatprep.subr.bf16.mxu0 %v5234
    %8635 = vmatpush1.bf16.msra.mxu0 %v5233
    %8636 = vmatprep.subr.bf16.mxu0 %v5242
    %8637 = vmatpush1.bf16.msra.mxu0 %v5241
    %8638 = vmatprep.mubr.bf16.mxu0 %v7990
    %8639 = vmatmul.mubr.bf16.gmra.mrb[0].mxu0 %v7989
    %v8640 = vpop.f32.mrb[0].mxu0
    %v8641 = vadd.f32 %v8588, %v8640
    %v8642 = vpop.f32.mrb[0].mxu0
    %v8643 = vadd.f32 %v8590, %v8642
    %v8644 = vpop.f32.mrb[0].mxu0
    %v8645 = vadd.f32 %v8592, %v8644
    %v8646 = vpop.f32.mrb[0].mxu0
    %v8647 = vadd.f32 %v8594, %v8646
    %8648 = vmatprep.mubr.bf16.mxu0 %v7999
    %8649 = vmatmul.mubr.bf16.gmra.mrb[0].mxu0 %v7998
    %v8650 = vpop.f32.mrb[0].mxu0
    %v8651 = vadd.f32 %v8598, %v8650
    %v8652 = vpop.f32.mrb[0].mxu0
    %v8653 = vadd.f32 %v8600, %v8652
    %v8654 = vpop.f32.mrb[0].mxu0
    %v8655 = vadd.f32 %v8602, %v8654
    %v8656 = vpop.f32.mrb[0].mxu0
    %v8657 = vadd.f32 %v8604, %v8656
    %8658 = vdwg.mxu0
    %8659 = vmatprep.subr.bf16.mxu0 %v5250
    %8660 = vmatpush1.bf16.msra.mxu0 %v5249
    %8661 = vmatprep.subr.bf16.mxu0 %v5258
    %8662 = vmatpush1.bf16.msra.mxu0 %v5257
    %8663 = vmatprep.subr.bf16.mxu0 %v5266
    %8664 = vmatpush1.bf16.msra.mxu0 %v5265
    %8665 = vmatprep.subr.bf16.mxu0 %v5274
    %8666 = vmatpush1.bf16.msra.mxu0 %v5273
    %8667 = vmatprep.subr.bf16.mxu0 %v5282
    %8668 = vmatpush1.bf16.msra.mxu0 %v5281
    %8669 = vmatprep.subr.bf16.mxu0 %v5290
    %8670 = vmatpush1.bf16.msra.mxu0 %v5289
    %8671 = vmatprep.subr.bf16.mxu0 %v5298
    %8672 = vmatpush1.bf16.msra.mxu0 %v5297
    %8673 = vmatprep.subr.bf16.mxu0 %v5306
    %8674 = vmatpush1.bf16.msra.mxu0 %v5305
    %8675 = vmatprep.subr.bf16.mxu0 %v5314
    %8676 = vmatpush1.bf16.msra.mxu0 %v5313
    %8677 = vmatprep.subr.bf16.mxu0 %v5322
    %8678 = vmatpush1.bf16.msra.mxu0 %v5321
    %8679 = vmatprep.subr.bf16.mxu0 %v5330
    %8680 = vmatpush1.bf16.msra.mxu0 %v5329
    %8681 = vmatprep.subr.bf16.mxu0 %v5338
    %8682 = vmatpush1.bf16.msra.mxu0 %v5337
    %8683 = vmatprep.subr.bf16.mxu0 %v5346
    %8684 = vmatpush1.bf16.msra.mxu0 %v5345
    %8685 = vmatprep.subr.bf16.mxu0 %v5354
    %8686 = vmatpush1.bf16.msra.mxu0 %v5353
    %8687 = vmatprep.subr.bf16.mxu0 %v5362
    %8688 = vmatpush1.bf16.msra.mxu0 %v5361
    %8689 = vmatprep.subr.bf16.mxu0 %v5370
    %8690 = vmatpush1.bf16.msra.mxu0 %v5369
    %8691 = vmatprep.mubr.bf16.mxu0 %v7992
    %8692 = vmatmul.mubr.bf16.gmra.mrb[0].mxu0 %v7991
    %v8693 = vpop.f32.mrb[0].mxu0
    %v8694 = vadd.f32 %v8641, %v8693
    %v8695 = vpop.f32.mrb[0].mxu0
    %v8696 = vadd.f32 %v8643, %v8695
    %v8697 = vpop.f32.mrb[0].mxu0
    %v8698 = vadd.f32 %v8645, %v8697
    %v8699 = vpop.f32.mrb[0].mxu0
    %v8700 = vadd.f32 %v8647, %v8699
    %8701 = vmatprep.mubr.bf16.mxu0 %v8001
    %8702 = vmatmul.mubr.bf16.gmra.mrb[0].mxu0 %v8000
    %v8703 = vpop.f32.mrb[0].mxu0
    %v8704 = vadd.f32 %v8651, %v8703
    %v8705 = vpop.f32.mrb[0].mxu0
    %v8706 = vadd.f32 %v8653, %v8705
    %v8707 = vpop.f32.mrb[0].mxu0
    %v8708 = vadd.f32 %v8655, %v8707
    %v8709 = vpop.f32.mrb[0].mxu0
    %v8710 = vadd.f32 %v8657, %v8709
    %8711 = vdwg.mxu0
    %8712 = vmatprep.subr.bf16.mxu0 %v5378
    %8713 = vmatpush1.bf16.msra.mxu0 %v5377
    %8714 = vmatprep.subr.bf16.mxu0 %v5386
    %8715 = vmatpush1.bf16.msra.mxu0 %v5385
    %8716 = vmatprep.subr.bf16.mxu0 %v5394
    %8717 = vmatpush1.bf16.msra.mxu0 %v5393
    %8718 = vmatprep.subr.bf16.mxu0 %v5402
    %8719 = vmatpush1.bf16.msra.mxu0 %v5401
    %8720 = vmatprep.subr.bf16.mxu0 %v5410
    %8721 = vmatpush1.bf16.msra.mxu0 %v5409
    %8722 = vmatprep.subr.bf16.mxu0 %v5418
    %8723 = vmatpush1.bf16.msra.mxu0 %v5417
    %8724 = vmatprep.subr.bf16.mxu0 %v5426
    %8725 = vmatpush1.bf16.msra.mxu0 %v5425
    %8726 = vmatprep.subr.bf16.mxu0 %v5434
    %8727 = vmatpush1.bf16.msra.mxu0 %v5433
    %8728 = vmatprep.subr.bf16.mxu0 %v5442
    %8729 = vmatpush1.bf16.msra.mxu0 %v5441
    %8730 = vmatprep.subr.bf16.mxu0 %v5450
    %8731 = vmatpush1.bf16.msra.mxu0 %v5449
    %8732 = vmatprep.subr.bf16.mxu0 %v5458
    %8733 = vmatpush1.bf16.msra.mxu0 %v5457
    %8734 = vmatprep.subr.bf16.mxu0 %v5466
    %8735 = vmatpush1.bf16.msra.mxu0 %v5465
    %8736 = vmatprep.subr.bf16.mxu0 %v5474
    %8737 = vmatpush1.bf16.msra.mxu0 %v5473
    %8738 = vmatprep.subr.bf16.mxu0 %v5482
    %8739 = vmatpush1.bf16.msra.mxu0 %v5481
    %8740 = vmatprep.subr.bf16.mxu0 %v5490
    %8741 = vmatpush1.bf16.msra.mxu0 %v5489
    %8742 = vmatprep.subr.bf16.mxu0 %v5498
    %8743 = vmatpush1.bf16.msra.mxu0 %v5497
    %8744 = vmatprep.mubr.bf16.mxu0 %v7994
    %8745 = vmatmul.mubr.bf16.gmra.mrb[0].mxu0 %v7993
    %v8746 = vpop.f32.mrb[0].mxu0
    %v8747 = vadd.f32 %v8694, %v8746
    %v8748 = vpop.f32.mrb[0].mxu0
    %v8749 = vadd.f32 %v8696, %v8748
    %v8750 = vpop.f32.mrb[0].mxu0
    %v8751 = vadd.f32 %v8698, %v8750
    %v8752 = vpop.f32.mrb[0].mxu0
    %v8753 = vadd.f32 %v8700, %v8752
    %8754 = vmatprep.mubr.bf16.mxu0 %v8003
    %8755 = vmatmul.mubr.bf16.gmra.mrb[0].mxu0 %v8002
    %v8756 = vpop.f32.mrb[0].mxu0
    %v8757 = vadd.f32 %v8704, %v8756
    %v8758 = vpop.f32.mrb[0].mxu0
    %v8759 = vadd.f32 %v8706, %v8758
    %v8760 = vpop.f32.mrb[0].mxu0
    %v8761 = vadd.f32 %v8708, %v8760
    %v8762 = vpop.f32.mrb[0].mxu0
    %v8763 = vadd.f32 %v8710, %v8762
    %8764 = vdwg.mxu0
    %8765 = vmatprep.subr.bf16.mxu0 %v5506
    %8766 = vmatpush1.bf16.msra.mxu0 %v5505
    %8767 = vmatprep.subr.bf16.mxu0 %v5514
    %8768 = vmatpush1.bf16.msra.mxu0 %v5513
    %8769 = vmatprep.subr.bf16.mxu0 %v5522
    %8770 = vmatpush1.bf16.msra.mxu0 %v5521
    %8771 = vmatprep.subr.bf16.mxu0 %v5530
    %8772 = vmatpush1.bf16.msra.mxu0 %v5529
    %8773 = vmatprep.subr.bf16.mxu0 %v5538
    %8774 = vmatpush1.bf16.msra.mxu0 %v5537
    %8775 = vmatprep.subr.bf16.mxu0 %v5546
    %8776 = vmatpush1.bf16.msra.mxu0 %v5545
    %8777 = vmatprep.subr.bf16.mxu0 %v5554
    %8778 = vmatpush1.bf16.msra.mxu0 %v5553
    %8779 = vmatprep.subr.bf16.mxu0 %v5562
    %8780 = vmatpush1.bf16.msra.mxu0 %v5561
    %8781 = vmatprep.subr.bf16.mxu0 0
    %8782 = vmatpush1.bf16.msra.mxu0 0
    %8783 = vmatprep.subr.bf16.mxu0 0
    %8784 = vmatpush1.bf16.msra.mxu0 0
    %8785 = vmatprep.subr.bf16.mxu0 0
    %8786 = vmatpush1.bf16.msra.mxu0 0
    %8787 = vmatprep.subr.bf16.mxu0 0
    %8788 = vmatpush1.bf16.msra.mxu0 0
    %8789 = vmatprep.subr.bf16.mxu0 0
    %8790 = vmatpush1.bf16.msra.mxu0 0
    %8791 = vmatprep.subr.bf16.mxu0 0
    %8792 = vmatpush1.bf16.msra.mxu0 0
    %8793 = vmatprep.subr.bf16.mxu0 0
    %8794 = vmatpush1.bf16.msra.mxu0 0
    %8795 = vmatprep.subr.bf16.mxu0 0
    %8796 = vmatpush1.bf16.msra.mxu0 0
    %8797 = vmatprep.mubr.bf16.mxu0 0
    %8798 = vmatmul.mubr.bf16.gmra.mrb[0].mxu0 %v7995
    %v8799 = vpop.f32.mrb[0].mxu0
    %v8800 = vadd.f32 %v8747, %v8799
    %v8801 = vpop.f32.mrb[0].mxu0
    %v8802 = vadd.f32 %v8749, %v8801
    %v8803 = vpop.f32.mrb[0].mxu0
    %v8804 = vadd.f32 %v8751, %v8803
    %v8805 = vpop.f32.mrb[0].mxu0
    %v8806 = vadd.f32 %v8753, %v8805
    %8807 = vmatprep.mubr.bf16.mxu0 0
    %8808 = vmatmul.mubr.bf16.gmra.mrb[0].mxu0 %v8004
    %v8809 = vpop.f32.mrb[0].mxu0
    %v8810 = vadd.f32 %v8757, %v8809
    %v8811 = vpop.f32.mrb[0].mxu0
    %v8812 = vadd.f32 %v8759, %v8811
    %v8813 = vpop.f32.mrb[0].mxu0
    %v8814 = vadd.f32 %v8761, %v8813
    %v8815 = vpop.f32.mrb[0].mxu0
    %v8816 = vadd.f32 %v8763, %v8815
    %8817 = vdwg.mxu0
    %8818 = vmatprep.subr.bf16.mxu0 %v4996
    %8819 = vmatpush1.bf16.msra.mxu0 %v4995
    %8820 = vmatprep.subr.bf16.mxu0 %v5004
    %8821 = vmatpush1.bf16.msra.mxu0 %v5003
    %8822 = vmatprep.subr.bf16.mxu0 %v5012
    %8823 = vmatpush1.bf16.msra.mxu0 %v5011
    %8824 = vmatprep.subr.bf16.mxu0 %v5020
    %8825 = vmatpush1.bf16.msra.mxu0 %v5019
    %8826 = vmatprep.subr.bf16.mxu0 %v5028
    %8827 = vmatpush1.bf16.msra.mxu0 %v5027
    %8828 = vmatprep.subr.bf16.mxu0 %v5036
    %8829 = vmatpush1.bf16.msra.mxu0 %v5035
    %8830 = vmatprep.subr.bf16.mxu0 %v5044
    %8831 = vmatpush1.bf16.msra.mxu0 %v5043
    %8832 = vmatprep.subr.bf16.mxu0 %v5052
    %8833 = vmatpush1.bf16.msra.mxu0 %v5051
    %8834 = vmatprep.subr.bf16.mxu0 %v5060
    %8835 = vmatpush1.bf16.msra.mxu0 %v5059
    %8836 = vmatprep.subr.bf16.mxu0 %v5068
    %8837 = vmatpush1.bf16.msra.mxu0 %v5067
    %8838 = vmatprep.subr.bf16.mxu0 %v5076
    %8839 = vmatpush1.bf16.msra.mxu0 %v5075
    %8840 = vmatprep.subr.bf16.mxu0 %v5084
    %8841 = vmatpush1.bf16.msra.mxu0 %v5083
    %8842 = vmatprep.subr.bf16.mxu0 %v5092
    %8843 = vmatpush1.bf16.msra.mxu0 %v5091
    %8844 = vmatprep.subr.bf16.mxu0 %v5100
    %8845 = vmatpush1.bf16.msra.mxu0 %v5099
    %8846 = vmatprep.subr.bf16.mxu0 %v5108
    %8847 = vmatpush1.bf16.msra.mxu0 %v5107
    %8848 = vmatprep.subr.bf16.mxu0 %v5116
    %8849 = vmatpush1.bf16.msra.mxu0 %v5115
    %8850 = vmatprep.mubr.bf16.mxu0 %v7988
    %8851 = vmatmul.mubr.bf16.gmra.mrb[0].mxu0 %v7987
    %v8852 = vpop.f32.mrb[0].mxu0
    %v8853 = vadd.f32 0.0, %v8852
    %v8854 = vpop.f32.mrb[0].mxu0
    %v8855 = vadd.f32 0.0, %v8854
    %v8856 = vpop.f32.mrb[0].mxu0
    %v8857 = vadd.f32 0.0, %v8856
    %v8858 = vpop.f32.mrb[0].mxu0
    %v8859 = vadd.f32 0.0, %v8858
    %8860 = vmatprep.mubr.bf16.mxu0 %v7997
    %8861 = vmatmul.mubr.bf16.gmra.mrb[0].mxu0 %v7996
    %v8862 = vpop.f32.mrb[0].mxu0
    %v8863 = vadd.f32 0.0, %v8862
    %v8864 = vpop.f32.mrb[0].mxu0
    %v8865 = vadd.f32 0.0, %v8864
    %v8866 = vpop.f32.mrb[0].mxu0
    %v8867 = vadd.f32 0.0, %v8866
    %v8868 = vpop.f32.mrb[0].mxu0
    %v8869 = vadd.f32 0.0, %v8868
    %8870 = vdwg.mxu0
    %8871 = vmatprep.subr.bf16.mxu0 %v5124
    %8872 = vmatpush1.bf16.msra.mxu0 %v5123
    %8873 = vmatprep.subr.bf16.mxu0 %v5132
    %8874 = vmatpush1.bf16.msra.mxu0 %v5131
    %8875 = vmatprep.subr.bf16.mxu0 %v5140
    %8876 = vmatpush1.bf16.msra.mxu0 %v5139
    %8877 = vmatprep.subr.bf16.mxu0 %v5148
    %8878 = vmatpush1.bf16.msra.mxu0 %v5147
    %8879 = vmatprep.subr.bf16.mxu0 %v5156
    %8880 = vmatpush1.bf16.msra.mxu0 %v5155
    %8881 = vmatprep.subr.bf16.mxu0 %v5164
    %8882 = vmatpush1.bf16.msra.mxu0 %v5163
    %8883 = vmatprep.subr.bf16.mxu0 %v5172
    %8884 = vmatpush1.bf16.msra.mxu0 %v5171
    %8885 = vmatprep.subr.bf16.mxu0 %v5180
    %8886 = vmatpush1.bf16.msra.mxu0 %v5179
    %8887 = vmatprep.subr.bf16.mxu0 %v5188
    %8888 = vmatpush1.bf16.msra.mxu0 %v5187
    %8889 = vmatprep.subr.bf16.mxu0 %v5196
    %8890 = vmatpush1.bf16.msra.mxu0 %v5195
    %8891 = vmatprep.subr.bf16.mxu0 %v5204
    %8892 = vmatpush1.bf16.msra.mxu0 %v5203
    %8893 = vmatprep.subr.bf16.mxu0 %v5212
    %8894 = vmatpush1.bf16.msra.mxu0 %v5211
    %8895 = vmatprep.subr.bf16.mxu0 %v5220
    %8896 = vmatpush1.bf16.msra.mxu0 %v5219
    %8897 = vmatprep.subr.bf16.mxu0 %v5228
    %8898 = vmatpush1.bf16.msra.mxu0 %v5227
    %8899 = vmatprep.subr.bf16.mxu0 %v5236
    %8900 = vmatpush1.bf16.msra.mxu0 %v5235
    %8901 = vmatprep.subr.bf16.mxu0 %v5244
    %8902 = vmatpush1.bf16.msra.mxu0 %v5243
    %8903 = vmatprep.mubr.bf16.mxu0 %v7990
    %8904 = vmatmul.mubr.bf16.gmra.mrb[0].mxu0 %v7989
    %v8905 = vpop.f32.mrb[0].mxu0
    %v8906 = vadd.f32 %v8853, %v8905
    %v8907 = vpop.f32.mrb[0].mxu0
    %v8908 = vadd.f32 %v8855, %v8907
    %v8909 = vpop.f32.mrb[0].mxu0
    %v8910 = vadd.f32 %v8857, %v8909
    %v8911 = vpop.f32.mrb[0].mxu0
    %v8912 = vadd.f32 %v8859, %v8911
    %8913 = vmatprep.mubr.bf16.mxu0 %v7999
    %8914 = vmatmul.mubr.bf16.gmra.mrb[0].mxu0 %v7998
    %v8915 = vpop.f32.mrb[0].mxu0
    %v8916 = vadd.f32 %v8863, %v8915
    %v8917 = vpop.f32.mrb[0].mxu0
    %v8918 = vadd.f32 %v8865, %v8917
    %v8919 = vpop.f32.mrb[0].mxu0
    %v8920 = vadd.f32 %v8867, %v8919
    %v8921 = vpop.f32.mrb[0].mxu0
    %v8922 = vadd.f32 %v8869, %v8921
    %8923 = vdwg.mxu0
    %8924 = vmatprep.subr.bf16.mxu0 %v5252
    %8925 = vmatpush1.bf16.msra.mxu0 %v5251
    %8926 = vmatprep.subr.bf16.mxu0 %v5260
    %8927 = vmatpush1.bf16.msra.mxu0 %v5259
    %8928 = vmatprep.subr.bf16.mxu0 %v5268
    %8929 = vmatpush1.bf16.msra.mxu0 %v5267
    %8930 = vmatprep.subr.bf16.mxu0 %v5276
    %8931 = vmatpush1.bf16.msra.mxu0 %v5275
    %8932 = vmatprep.subr.bf16.mxu0 %v5284
    %8933 = vmatpush1.bf16.msra.mxu0 %v5283
    %8934 = vmatprep.subr.bf16.mxu0 %v5292
    %8935 = vmatpush1.bf16.msra.mxu0 %v5291
    %8936 = vmatprep.subr.bf16.mxu0 %v5300
    %8937 = vmatpush1.bf16.msra.mxu0 %v5299
    %8938 = vmatprep.subr.bf16.mxu0 %v5308
    %8939 = vmatpush1.bf16.msra.mxu0 %v5307
    %8940 = vmatprep.subr.bf16.mxu0 %v5316
    %8941 = vmatpush1.bf16.msra.mxu0 %v5315
    %8942 = vmatprep.subr.bf16.mxu0 %v5324
    %8943 = vmatpush1.bf16.msra.mxu0 %v5323
    %8944 = vmatprep.subr.bf16.mxu0 %v5332
    %8945 = vmatpush1.bf16.msra.mxu0 %v5331
    %8946 = vmatprep.subr.bf16.mxu0 %v5340
    %8947 = vmatpush1.bf16.msra.mxu0 %v5339
    %8948 = vmatprep.subr.bf16.mxu0 %v5348
    %8949 = vmatpush1.bf16.msra.mxu0 %v5347
    %8950 = vmatprep.subr.bf16.mxu0 %v5356
    %8951 = vmatpush1.bf16.msra.mxu0 %v5355
    %8952 = vmatprep.subr.bf16.mxu0 %v5364
    %8953 = vmatpush1.bf16.msra.mxu0 %v5363
    %8954 = vmatprep.subr.bf16.mxu0 %v5372
    %8955 = vmatpush1.bf16.msra.mxu0 %v5371
    %8956 = vmatprep.mubr.bf16.mxu0 %v7992
    %8957 = vmatmul.mubr.bf16.gmra.mrb[0].mxu0 %v7991
    %v8958 = vpop.f32.mrb[0].mxu0
    %v8959 = vadd.f32 %v8906, %v8958
    %v8960 = vpop.f32.mrb[0].mxu0
    %v8961 = vadd.f32 %v8908, %v8960
    %v8962 = vpop.f32.mrb[0].mxu0
    %v8963 = vadd.f32 %v8910, %v8962
    %v8964 = vpop.f32.mrb[0].mxu0
    %v8965 = vadd.f32 %v8912, %v8964
    %8966 = vmatprep.mubr.bf16.mxu0 %v8001
    %8967 = vmatmul.mubr.bf16.gmra.mrb[0].mxu0 %v8000
    %v8968 = vpop.f32.mrb[0].mxu0
    %v8969 = vadd.f32 %v8916, %v8968
    %v8970 = vpop.f32.mrb[0].mxu0
    %v8971 = vadd.f32 %v8918, %v8970
    %v8972 = vpop.f32.mrb[0].mxu0
    %v8973 = vadd.f32 %v8920, %v8972
    %v8974 = vpop.f32.mrb[0].mxu0
    %v8975 = vadd.f32 %v8922, %v8974
    %8976 = vdwg.mxu0
    %8977 = vmatprep.subr.bf16.mxu0 %v5380
    %8978 = vmatpush1.bf16.msra.mxu0 %v5379
    %8979 = vmatprep.subr.bf16.mxu0 %v5388
    %8980 = vmatpush1.bf16.msra.mxu0 %v5387
    %8981 = vmatprep.subr.bf16.mxu0 %v5396
    %8982 = vmatpush1.bf16.msra.mxu0 %v5395
    %8983 = vmatprep.subr.bf16.mxu0 %v5404
    %8984 = vmatpush1.bf16.msra.mxu0 %v5403
    %8985 = vmatprep.subr.bf16.mxu0 %v5412
    %8986 = vmatpush1.bf16.msra.mxu0 %v5411
    %8987 = vmatprep.subr.bf16.mxu0 %v5420
    %8988 = vmatpush1.bf16.msra.mxu0 %v5419
    %8989 = vmatprep.subr.bf16.mxu0 %v5428
    %8990 = vmatpush1.bf16.msra.mxu0 %v5427
    %8991 = vmatprep.subr.bf16.mxu0 %v5436
    %8992 = vmatpush1.bf16.msra.mxu0 %v5435
    %8993 = vmatprep.subr.bf16.mxu0 %v5444
    %8994 = vmatpush1.bf16.msra.mxu0 %v5443
    %8995 = vmatprep.subr.bf16.mxu0 %v5452
    %8996 = vmatpush1.bf16.msra.mxu0 %v5451
    %8997 = vmatprep.subr.bf16.mxu0 %v5460
    %8998 = vmatpush1.bf16.msra.mxu0 %v5459
    %8999 = vmatprep.subr.bf16.mxu0 %v5468
    %9000 = vmatpush1.bf16.msra.mxu0 %v5467
    %9001 = vmatprep.subr.bf16.mxu0 %v5476
    %9002 = vmatpush1.bf16.msra.mxu0 %v5475
    %9003 = vmatprep.subr.bf16.mxu0 %v5484
    %9004 = vmatpush1.bf16.msra.mxu0 %v5483
    %9005 = vmatprep.subr.bf16.mxu0 %v5492
    %9006 = vmatpush1.bf16.msra.mxu0 %v5491
    %9007 = vmatprep.subr.bf16.mxu0 %v5500
    %9008 = vmatpush1.bf16.msra.mxu0 %v5499
    %9009 = vmatprep.mubr.bf16.mxu0 %v7994
    %9010 = vmatmul.mubr.bf16.gmra.mrb[0].mxu0 %v7993
    %v9011 = vpop.f32.mrb[0].mxu0
    %v9012 = vadd.f32 %v8959, %v9011
    %v9013 = vpop.f32.mrb[0].mxu0
    %v9014 = vadd.f32 %v8961, %v9013
    %v9015 = vpop.f32.mrb[0].mxu0
    %v9016 = vadd.f32 %v8963, %v9015
    %v9017 = vpop.f32.mrb[0].mxu0
    %v9018 = vadd.f32 %v8965, %v9017
    %9019 = vmatprep.mubr.bf16.mxu0 %v8003
    %9020 = vmatmul.mubr.bf16.gmra.mrb[0].mxu0 %v8002
    %v9021 = vpop.f32.mrb[0].mxu0
    %v9022 = vadd.f32 %v8969, %v9021
    %v9023 = vpop.f32.mrb[0].mxu0
    %v9024 = vadd.f32 %v8971, %v9023
    %v9025 = vpop.f32.mrb[0].mxu0
    %v9026 = vadd.f32 %v8973, %v9025
    %v9027 = vpop.f32.mrb[0].mxu0
    %v9028 = vadd.f32 %v8975, %v9027
    %9029 = vdwg.mxu0
    %9030 = vmatprep.subr.bf16.mxu0 %v5508
    %9031 = vmatpush1.bf16.msra.mxu0 %v5507
    %9032 = vmatprep.subr.bf16.mxu0 %v5516
    %9033 = vmatpush1.bf16.msra.mxu0 %v5515
    %9034 = vmatprep.subr.bf16.mxu0 %v5524
    %9035 = vmatpush1.bf16.msra.mxu0 %v5523
    %9036 = vmatprep.subr.bf16.mxu0 %v5532
    %9037 = vmatpush1.bf16.msra.mxu0 %v5531
    %9038 = vmatprep.subr.bf16.mxu0 %v5540
    %9039 = vmatpush1.bf16.msra.mxu0 %v5539
    %9040 = vmatprep.subr.bf16.mxu0 %v5548
    %9041 = vmatpush1.bf16.msra.mxu0 %v5547
    %9042 = vmatprep.subr.bf16.mxu0 %v5556
    %9043 = vmatpush1.bf16.msra.mxu0 %v5555
    %9044 = vmatprep.subr.bf16.mxu0 %v5564
    %9045 = vmatpush1.bf16.msra.mxu0 %v5563
    %9046 = vmatprep.subr.bf16.mxu0 0
    %9047 = vmatpush1.bf16.msra.mxu0 0
    %9048 = vmatprep.subr.bf16.mxu0 0
    %9049 = vmatpush1.bf16.msra.mxu0 0
    %9050 = vmatprep.subr.bf16.mxu0 0
    %9051 = vmatpush1.bf16.msra.mxu0 0
    %9052 = vmatprep.subr.bf16.mxu0 0
    %9053 = vmatpush1.bf16.msra.mxu0 0
    %9054 = vmatprep.subr.bf16.mxu0 0
    %9055 = vmatpush1.bf16.msra.mxu0 0
    %9056 = vmatprep.subr.bf16.mxu0 0
    %9057 = vmatpush1.bf16.msra.mxu0 0
    %9058 = vmatprep.subr.bf16.mxu0 0
    %9059 = vmatpush1.bf16.msra.mxu0 0
    %9060 = vmatprep.subr.bf16.mxu0 0
    %9061 = vmatpush1.bf16.msra.mxu0 0
    %9062 = vmatprep.mubr.bf16.mxu0 0
    %9063 = vmatmul.mubr.bf16.gmra.mrb[0].mxu0 %v7995
    %v9064 = vpop.f32.mrb[0].mxu0
    %v9065 = vadd.f32 %v9012, %v9064
    %v9066 = vpop.f32.mrb[0].mxu0
    %v9067 = vadd.f32 %v9014, %v9066
    %v9068 = vpop.f32.mrb[0].mxu0
    %v9069 = vadd.f32 %v9016, %v9068
    %v9070 = vpop.f32.mrb[0].mxu0
    %v9071 = vadd.f32 %v9018, %v9070
    %9072 = vmatprep.mubr.bf16.mxu0 0
    %9073 = vmatmul.mubr.bf16.gmra.mrb[0].mxu0 %v8004
    %v9074 = vpop.f32.mrb[0].mxu0
    %v9075 = vadd.f32 %v9022, %v9074
    %v9076 = vpop.f32.mrb[0].mxu0
    %v9077 = vadd.f32 %v9024, %v9076
    %v9078 = vpop.f32.mrb[0].mxu0
    %v9079 = vadd.f32 %v9026, %v9078
    %v9080 = vpop.f32.mrb[0].mxu0
    %v9081 = vadd.f32 %v9028, %v9080
    %9082 = vdwg.mxu0
    %v9083 = vadd.f32 %v7097, %v8270
    %v9084 = vadd.f32 %v7099, %v8272
    %v9085 = vadd.f32 %v7362, %v8535
    %v9086 = vadd.f32 %v7364, %v8537
    %v9087 = vadd.f32 %v7627, %v8800
    %v9088 = vadd.f32 %v7629, %v8802
    %v9089 = vadd.f32 %v7892, %v9065
    %v9090 = vadd.f32 %v7894, %v9067
    %v9091 = vadd.f32 %v7101, %v8274
    %v9092 = vadd.f32 %v7103, %v8276
    %v9093 = vadd.f32 %v7366, %v8539
    %v9094 = vadd.f32 %v7368, %v8541
    %v9095 = vadd.f32 %v7631, %v8804
    %v9096 = vadd.f32 %v7633, %v8806
    %v9097 = vadd.f32 %v7896, %v9069
    %v9098 = vadd.f32 %v7898, %v9071
    %v9099 = vadd.f32 %v7107, %v8280
    %v9100 = vadd.f32 %v7109, %v8282
    %v9101 = vadd.f32 %v7372, %v8545
    %v9102 = vadd.f32 %v7374, %v8547
    %v9103 = vadd.f32 %v7637, %v8810
    %v9104 = vadd.f32 %v7639, %v8812
    %v9105 = vadd.f32 %v7902, %v9075
    %v9106 = vadd.f32 %v7904, %v9077
    %v9107 = vadd.f32 %v7111, %v8284
    %v9108 = vadd.f32 %v7113, %v8286
    %v9109 = vadd.f32 %v7376, %v8549
    %v9110 = vadd.f32 %v7378, %v8551
    %v9111 = vadd.f32 %v7641, %v8814
    %v9112 = vadd.f32 %v7643, %v8816
    %v9113 = vadd.f32 %v7906, %v9079
    %v9114 = vadd.f32 %v7908, %v9081
    %9115 = vst [vmem:[#allocation8] sm:$0xff] %v9083
    %9116 = vst [vmem:[#allocation8 + $0x8] sm:$0xff] %v9084
    %9117 = vst [vmem:[#allocation8 + $0x10] sm:$0xff] %v9085
    %9118 = vst [vmem:[#allocation8 + $0x18] sm:$0xff] %v9086
    %9119 = vst [vmem:[#allocation8 + $0x20] sm:$0xff] %v9087
    %9120 = vst [vmem:[#allocation8 + $0x28] sm:$0xff] %v9088
    %9121 = vst [vmem:[#allocation8 + $0x30] sm:$0xff] %v9089
    %9122 = vst [vmem:[#allocation8 + $0x38] sm:$0xff] %v9090
    %9123 = vst [vmem:[#allocation8 + $0x40] sm:$0xff] %v9091
    %9124 = vst [vmem:[#allocation8 + $0x48] sm:$0xff] %v9092
    %9125 = vst [vmem:[#allocation8 + $0x50] sm:$0xff] %v9093
    %9126 = vst [vmem:[#allocation8 + $0x58] sm:$0xff] %v9094
    %9127 = vst [vmem:[#allocation8 + $0x60] sm:$0xff] %v9095
    %9128 = vst [vmem:[#allocation8 + $0x68] sm:$0xff] %v9096
    %9129 = vst [vmem:[#allocation8 + $0x70] sm:$0xff] %v9097
    %9130 = vst [vmem:[#allocation8 + $0x78] sm:$0xff] %v9098
    %9131 = vst [vmem:[#allocation8 + $0x80] sm:$0xff] %v9099
    %9132 = vst [vmem:[#allocation8 + $0x88] sm:$0xff] %v9100
    %9133 = vst [vmem:[#allocation8 + $0x90] sm:$0xff] %v9101
    %9134 = vst [vmem:[#allocation8 + $0x98] sm:$0xff] %v9102
    %9135 = vst [vmem:[#allocation8 + $0xa0] sm:$0xff] %v9103
    %9136 = vst [vmem:[#allocation8 + $0xa8] sm:$0xff] %v9104
    %9137 = vst [vmem:[#allocation8 + $0xb0] sm:$0xff] %v9105
    %9138 = vst [vmem:[#allocation8 + $0xb8] sm:$0xff] %v9106
    %9139 = vst [vmem:[#allocation8 + $0xc0] sm:$0xff] %v9107
    %9140 = vst [vmem:[#allocation8 + $0xc8] sm:$0xff] %v9108
    %9141 = vst [vmem:[#allocation8 + $0xd0] sm:$0xff] %v9109
    %9142 = vst [vmem:[#allocation8 + $0xd8] sm:$0xff] %v9110
    %9143 = vst [vmem:[#allocation8 + $0xe0] sm:$0xff] %v9111
    %9144 = vst [vmem:[#allocation8 + $0xe8] sm:$0xff] %v9112
    %9145 = vst [vmem:[#allocation8 + $0xf0] sm:$0xff] %v9113
    %9146 = vst [vmem:[#allocation8 + $0xf8] sm:$0xff] %v9114
    // Predicated region
    $region18: #{tpu_custom_call.1} parent=1 // pred_check
      _
    $region19: #{tpu_custom_call.1} parent=1 // pred_check_branch
      %9148 = sbr.rel (0) target = $region21
    $region20: #{tpu_custom_call.1} parent=1 // pred_region
      %s9150 = ssub.s32 4096, 4096
      %9151 = vsyncadd [#allocation5], %s9150
      %s9152 = sshll.u32 [#allocation8], 4
      %s9153 = int_to_ptr.vmem [resolvable:$true] %s9152
      %9158 = dma.vmem_to_hbm [thread:$0]  %s9153, 4096, %s2, [#allocation5], 1024, 1024, 64
    $region21: #{tpu_custom_call.1} parent=1 // pred_fallthru
      _
    // Predicated region
    $region22: #{tpu_custom_call.1} parent=1 // pred_check
      _
    $region23: #{tpu_custom_call.1} parent=1 // pred_check_branch
      %9160 = sbr.rel (0) target = $region25
    $region24: #{tpu_custom_call.1} parent=1 // pred_region
      %9161 = dma.done [#allocation5], 4096
    $region25: #{tpu_custom_call.1} parent=1 // pred_fallthru
      _
    %9162 = vsyncpa [#allocation4], 1
    %9163 = vsyncpa [#allocation7], 1
    %9164 = vsyncpa [#allocation5], 1

</llo_original>
